<compile_context>
chip_gen: v7x
topology: tpu7x:2x2x1
jax: 0.10.0
libtpu: 0.0.40
codegen_flags: <defaults>
</compile_context>

<pallas_src>
import functools
import math

import jax
import jax.numpy as jnp
from jax import lax
from jax.experimental import pallas as pl

# ---------------- config (mirrors ESCapsHGAT __init__) -------------------
BATCH = 2
SEQ = 8
VOCAB = 50
PRETRAIN_HID = 32          # self.pretrain.config.hidden_size
HID_DIM = 32               # config.hid_dim
NUM_LAYERS = 2             # config.num_layers
NUM_CAPSULES = 4           # config.num_capsules
NUM_ROUTING = 3            # config.num_routing
CLASS_SIZE = 5             # config.class_size
LEAKY_ALPHA = 0.1          # alpha of HyperGraphAttentionLayerSparse


# ---------------- small in-kernel helpers ---------------------------------
def _sigmoid(y):
    # exp on EUP + approx reciprocal on EUP -> no VALU divide.
    return pl.reciprocal(1.0 + jnp.exp(-y), approx=True)


def _softmax_lane(s):
    s = s - jnp.max(s, axis=-1, keepdims=True)
    e = jnp.exp(s)
    return e * pl.reciprocal(jnp.sum(e, axis=-1, keepdims=True), approx=True)


def _squash(s, eps=1e-8):
    sq = jnp.sum(s * s, axis=-1, keepdims=True)
    scale = sq * pl.reciprocal(1.0 + sq, approx=True) * lax.rsqrt(sq + eps)
    return scale * s


def _masked_attn(q, k, v, mask, scale, leaky_alpha):
    # NOTE: mask = sigmoid(mu mu^T) is strictly positive, so `mask > 0` keeps
    # everything (same behaviour as the reference dense analog).
    s = lax.dot_general(q, k, (((1,), (1,)), ((), ())),
                        preferred_element_type=jnp.float32) * scale
    s = jnp.where(s > 0, s, leaky_alpha * s)
    s = jnp.where(mask > 0, s, -1e9)
    p = _softmax_lane(s)
    return jnp.dot(p, v, preferred_element_type=jnp.float32)


def _capsule_routing(x2, w_flat, batch, seq, num_capsules, dim, num_routing):
    """x2: (batch*seq, K); w_flat: (K, num_capsules*dim) -> list of (NC, dim)."""
    # Single wide MXU push for all capsules of all batch rows.
    u_all = jnp.dot(x2, w_flat, preferred_element_type=jnp.float32)  # (B*S, NC*D)
    outs = []
    for b in range(batch):
        ub = u_all[b * seq:(b + 1) * seq]                              # (S, NC*D)
        u = [ub[:, j * dim:(j + 1) * dim] for j in range(num_capsules)]
        blog = jnp.zeros((seq, num_capsules), jnp.float32)             # routing logits
        v = None
        for r in range(num_routing):
            c = _softmax_lane(blog)                                    # softmax over capsules
            s = [jnp.sum(c[:, j:j + 1] * u[j], axis=0, keepdims=True)  # (1, D)
                 for j in range(num_capsules)]
            v = [_squash(sj) for sj in s]
            if r + 1 < num_routing:                                    # last update unused
                blog = blog + jnp.concatenate(
                    [jnp.sum(u[j] * v[j], axis=-1, keepdims=True)
                     for j in range(num_capsules)], axis=-1)
        outs.append(jnp.concatenate(v, axis=0))                        # (NC, D)
    return outs


# ---------------- the fused forward kernel --------------------------------
def _escaps_kernel(emb_ref, adj_ref,
                   enc_w_ref, enc_b_ref,
                   poolcaps_w_ref, graphcaps_w_ref,
                   vae0_w1_ref, vae0_wmu_ref, vae1_w1_ref, vae1_wmu_ref,
                   gcn_w_ref, gcn_b_ref,
                   hg_w1_ref, hg_b1_ref, hg_w2_ref, hg_w3_ref,
                   att_wq_ref, att_bq_ref, att_wkv_ref, att_bkv_ref,
                   sfu_wgo_ref, sfu_bgo_ref,
                   pred_w_ref, pred_b_ref,
                   logits_ref, atts_ref,
                   *, batch, seq, hid, num_capsules, num_routing,
                   num_layers, leaky_alpha):
    scale = 1.0 / math.sqrt(hid)

    # --- pretrained encoder stub: tanh projection of masked embeddings ---
    outs2 = jnp.tanh(jnp.dot(emb_ref[...], enc_w_ref[...],
                             preferred_element_type=jnp.float32) + enc_b_ref[...])  # (B*S, H)

    # --- poolcaps on encoder output ---
    caps_hid = _capsule_routing(outs2, poolcaps_w_ref[...], batch, seq,
                                num_capsules, hid, num_routing)          # list of (NC, H)

    vae_w1 = [vae0_w1_ref[...], vae1_w1_ref[...]]
    vae_wmu = [vae0_wmu_ref[...], vae1_wmu_ref[...]]

    g2 = outs2                                                           # (B*S, H)
    for k in range(num_layers):
        # ----- VGAE (eval mode: z = mu, no reparameterization noise) -----
        h2 = jnp.dot(g2, vae_w1[k], preferred_element_type=jnp.float32)  # folded-rows linear
        h_rows = []
        for b in range(batch):
            h_rows.append(jnp.maximum(
                jnp.dot(adj_ref[b], h2[b * seq:(b + 1) * seq],
                        preferred_element_type=jnp.float32), 0.0))       # GCN1 + relu
        h2 = jnp.concatenate(h_rows, axis=0)
        mu2 = jnp.dot(h2, vae_wmu[k], preferred_element_type=jnp.float32)
        amats = []
        for b in range(batch):
            mub = jnp.dot(adj_ref[b], mu2[b * seq:(b + 1) * seq],
                          preferred_element_type=jnp.float32)            # (S, H)
            sc = lax.dot_general(mub, mub, (((1,), (1,)), ((), ())),
                                 preferred_element_type=jnp.float32)     # mu @ mu^T in-kernel
            amats.append(_sigmoid(sc))                                   # (S, S), symmetric

        if k == 0:
            # ----- GraphConvolution: out = A @ (x @ W) + b -----
            xw = jnp.dot(g2, gcn_w_ref[...], preferred_element_type=jnp.float32)
            g_rows = [jnp.dot(amats[b], xw[b * seq:(b + 1) * seq],
                              preferred_element_type=jnp.float32) + gcn_b_ref[...]
                      for b in range(batch)]
        else:
            # ----- HyperGraphAttentionLayerSparse (dense analog) -----
            # TODO(synk): the sparse node<->hyperedge scatter attention is realized
            # as two dense masked-attention passes over AMat.
            x_att2 = jnp.dot(g2, hg_w2_ref[...], preferred_element_type=jnp.float32)
            x_tr2 = (jnp.dot(g2, hg_w1_ref[...], preferred_element_type=jnp.float32)
                     + hg_b1_ref[...])
            g_rows = []
            for b in range(batch):
                xa = x_att2[b * seq:(b + 1) * seq]
                xt = x_tr2[b * seq:(b + 1) * seq]
                amat = amats[b]
                edge = _masked_attn(xa, xa, xt, amat, scale, leaky_alpha)
                edge_att = jnp.dot(edge, hg_w3_ref[...],
                                   preferred_element_type=jnp.float32)
                # AMat is symmetric (sigmoid of mu mu^T), so AMat^T == AMat.
                node = _masked_attn(xa, edge_att, edge, amat, scale, leaky_alpha)
                g_rows.append(jnp.where(node > 0, node,
                                        jnp.exp(jnp.minimum(node, 0.0)) - 1.0))  # ELU
        g2 = jnp.concatenate(g_rows, axis=0)

    # --- graphcaps on final graph features ---
    g_caps = _capsule_routing(g2, graphcaps_w_ref[...], batch, seq,
                              num_capsules, hid, num_routing)            # list of (NC, H)

    # --- MutiAttentionLayer + SFU + classifier head (tiny, per-batch) ---
    for b in range(batch):
        gc = g_caps[b]                                                   # query source (NC, H)
        pc = caps_hid[b]                                                 # key/value source (NC, H)
        q = (jnp.dot(gc, att_wq_ref[...], preferred_element_type=jnp.float32)
             + att_bq_ref[...])
        kv = (jnp.dot(pc, att_wkv_ref[...], preferred_element_type=jnp.float32)
              + att_bkv_ref[...])                                        # fused K|V (NC, 2H)
        kk = kv[:, :hid]
        vv = kv[:, hid:]
        sc = lax.dot_general(q, kk, (((1,), (1,)), ((), ())),
                             preferred_element_type=jnp.float32) * scale
        p = _softmax_lane(sc)                                            # (NC, NC)
        att = jnp.dot(p, vv, preferred_element_type=jnp.float32)         # (NC, H)
        atts_ref[b] = p

        # SFU: gate/output projections fused into one (4H, 2H) matmul.
        m = jnp.concatenate([att, gc, att * gc, att - gc], axis=-1)      # (NC, 4H)
        go = (jnp.dot(m, sfu_wgo_ref[...], preferred_element_type=jnp.float32)
              + sfu_bgo_ref[...])                                        # (NC, 2H)
        gate = _sigmoid(go[:, :hid])
        o = jnp.tanh(go[:, hid:])
        mix = gate * o + (1.0 - gate) * att                              # (NC, H)

        pooled = jnp.sum(mix, axis=0, keepdims=True)                     # == .sum(dim=1)
        logits = (jnp.dot(pooled, pred_w_ref[...],
                          preferred_element_type=jnp.float32) + pred_b_ref[...])
        logits = logits - jnp.max(logits, axis=-1, keepdims=True)
        logits_ref[b] = logits - jnp.log(jnp.sum(jnp.exp(logits), axis=-1,
                                                 keepdims=True))


# ---------------- deterministic parameter construction --------------------
def init_params(key):
    def nxt():
        nonlocal key
        key, sub = jax.random.split(key)
        return sub

    def dense(shape, scale=0.1):
        return scale * jax.random.normal(nxt(), shape, jnp.float32)

    params = {}
    # pretrained encoder stub (embedding + projection)
    params["embed"] = dense((VOCAB, PRETRAIN_HID), 0.5)
    params["enc_w"] = dense((PRETRAIN_HID, PRETRAIN_HID))
    params["enc_b"] = dense((PRETRAIN_HID,))
    # capsule layers
    params["poolcaps_w"] = dense((NUM_CAPSULES, PRETRAIN_HID, HID_DIM))
    params["graphcaps_w"] = dense((NUM_CAPSULES, HID_DIM, HID_DIM))
    # VGAE per layer (GCN encoder weights; decoder is sigmoid(z z^T))
    params["vae"] = []
    for k in range(NUM_LAYERS):
        in_dim = PRETRAIN_HID if k == 0 else HID_DIM
        params["vae"].append({"w1": dense((in_dim, HID_DIM)),
                              "w_mu": dense((HID_DIM, HID_DIM)),
                              "w_logvar": dense((HID_DIM, HID_DIM))})  # unused (eval: z = mu)
    # graph layers
    params["gcn_w"] = dense((PRETRAIN_HID, HID_DIM))
    params["gcn_b"] = dense((HID_DIM,))
    params["hgat"] = []
    for _ in range(1, NUM_LAYERS):
        params["hgat"].append({"w1": dense((HID_DIM, HID_DIM)),
                               "b1": dense((HID_DIM,)),
                               "w2": dense((HID_DIM, HID_DIM)),
                               "w3": dense((HID_DIM, HID_DIM))})
    # MutiAttentionLayer
    params["att"] = {"wq": dense((HID_DIM, HID_DIM)), "bq": dense((HID_DIM,)),
                     "wk": dense((HID_DIM, HID_DIM)), "bk": dense((HID_DIM,)),
                     "wv": dense((HID_DIM, HID_DIM)), "bv": dense((HID_DIM,))}
    # SFU
    params["sfu"] = {"wg": dense((4 * HID_DIM, HID_DIM)), "bg": dense((HID_DIM,)),
                     "wo": dense((4 * HID_DIM, HID_DIM)), "bo": dense((HID_DIM,))}
    # classifier
    params["pred_w"] = dense((HID_DIM, CLASS_SIZE))
    params["pred_b"] = dense((CLASS_SIZE,))
    return params


# ---------------- ESCapsHGAT.forward --------------------------------------
@functools.partial(jax.jit, static_argnames=("att_output",))
def escaps_hgat_forward(params, input_ids, attention_mask, adjmat, att_output=False):
    assert NUM_LAYERS == 2, "fused kernel signature is specialized to 2 layers"
    B, S = input_ids.shape
    H = HID_DIM

    # TODO(synk): AutoModel.from_pretrained has no Pallas equivalent without a
    # checkpoint; stubbed as embedding lookup + in-kernel tanh projection.
    emb = params["embed"][input_ids] * attention_mask[..., None].astype(jnp.float32)
    emb2 = emb.reshape(B * S, PRETRAIN_HID).astype(jnp.float32)
    adj = adjmat.astype(jnp.float32)

    ap, sp = params["att"], params["sfu"]
    args = (
        emb2, adj,
        params["enc_w"], params["enc_b"].reshape(1, -1),
        # capsule weights packed as (K, NC*D) for a single wide MXU push
        jnp.transpose(params["poolcaps_w"], (1, 0, 2)).reshape(PRETRAIN_HID,
                                                               NUM_CAPSULES * H),
        jnp.transpose(params["graphcaps_w"], (1, 0, 2)).reshape(H, NUM_CAPSULES * H),
        params["vae"][0]["w1"], params["vae"][0]["w_mu"],
        params["vae"][1]["w1"], params["vae"][1]["w_mu"],
        params["gcn_w"], params["gcn_b"].reshape(1, -1),
        params["hgat"][0]["w1"], params["hgat"][0]["b1"].reshape(1, -1),
        params["hgat"][0]["w2"], params["hgat"][0]["w3"],
        ap["wq"], ap["bq"].reshape(1, -1),
        jnp.concatenate([ap["wk"], ap["wv"]], axis=1),                    # fused K|V
        jnp.concatenate([ap["bk"], ap["bv"]], axis=0).reshape(1, -1),
        jnp.concatenate([sp["wg"], sp["wo"]], axis=1),                    # fused SFU gates
        jnp.concatenate([sp["bg"], sp["bo"]], axis=0).reshape(1, -1),
        params["pred_w"], params["pred_b"].reshape(1, -1),
    )

    kernel = functools.partial(
        _escaps_kernel, batch=B, seq=S, hid=H, num_capsules=NUM_CAPSULES,
        num_routing=NUM_ROUTING, num_layers=NUM_LAYERS, leaky_alpha=LEAKY_ALPHA)

    logits, atts = pl.pallas_call(
        kernel,
        out_shape=(jax.ShapeDtypeStruct((B, 1, CLASS_SIZE), jnp.float32),
                   jax.ShapeDtypeStruct((B, NUM_CAPSULES, NUM_CAPSULES), jnp.float32)),
    )(*args)
    logits = logits[:, 0, :]
    if att_output:
        return logits, atts
    return logits


if __name__ == "__main__":
    key = jax.random.PRNGKey(0)
    kp, ki, ka = jax.random.split(key, 3)
    params = init_params(kp)
    input_ids = jax.random.randint(ki, (BATCH, SEQ), 0, VOCAB, dtype=jnp.int32)
    attention_mask = jnp.ones((BATCH, SEQ), jnp.float32)
    adjmat = (jax.random.uniform(ka, (BATCH, SEQ, SEQ)) > 0.5).astype(jnp.float32)
    adjmat = jnp.maximum(adjmat, jnp.eye(SEQ, dtype=jnp.float32)[None])   # self loops

    logits = escaps_hgat_forward(params, input_ids, attention_mask, adjmat)
    logits = jax.block_until_ready(logits)
    assert logits.shape == (BATCH, CLASS_SIZE)
    assert bool(jnp.all(jnp.isfinite(logits)))
    print("KERNEL_OK")
</pallas_src>

<mosaic_0001>
module attributes {stable_mosaic.version = 11 : i64} {
  func.func @_escaps_kernel(%arg0: memref<16x32xf32, #tpu.memory_space<vmem>>, %arg1: memref<2x8x8xf32, #tpu.memory_space<vmem>>, %arg2: memref<32x32xf32, #tpu.memory_space<vmem>>, %arg3: memref<1x32xf32, #tpu.memory_space<vmem>>, %arg4: memref<32x128xf32, #tpu.memory_space<vmem>>, %arg5: memref<32x128xf32, #tpu.memory_space<vmem>>, %arg6: memref<32x32xf32, #tpu.memory_space<vmem>>, %arg7: memref<32x32xf32, #tpu.memory_space<vmem>>, %arg8: memref<32x32xf32, #tpu.memory_space<vmem>>, %arg9: memref<32x32xf32, #tpu.memory_space<vmem>>, %arg10: memref<32x32xf32, #tpu.memory_space<vmem>>, %arg11: memref<1x32xf32, #tpu.memory_space<vmem>>, %arg12: memref<32x32xf32, #tpu.memory_space<vmem>>, %arg13: memref<1x32xf32, #tpu.memory_space<vmem>>, %arg14: memref<32x32xf32, #tpu.memory_space<vmem>>, %arg15: memref<32x32xf32, #tpu.memory_space<vmem>>, %arg16: memref<32x32xf32, #tpu.memory_space<vmem>>, %arg17: memref<1x32xf32, #tpu.memory_space<vmem>>, %arg18: memref<32x64xf32, #tpu.memory_space<vmem>>, %arg19: memref<1x64xf32, #tpu.memory_space<vmem>>, %arg20: memref<128x64xf32, #tpu.memory_space<vmem>>, %arg21: memref<1x64xf32, #tpu.memory_space<vmem>>, %arg22: memref<32x5xf32, #tpu.memory_space<vmem>>, %arg23: memref<1x5xf32, #tpu.memory_space<vmem>>, %arg24: memref<2x1x5xf32, #tpu.memory_space<vmem>>, %arg25: memref<2x4x4xf32, #tpu.memory_space<vmem>>) attributes {dimension_semantics = [], scalar_prefetch = 0 : i64, scratch_operands = 0 : i64, tpu.core_type = #tpu.core_type<tc>} {
    %c0 = arith.constant 0 : index
    %c0_0 = arith.constant 0 : index
    %0 = vector.load %arg0[%c0, %c0_0] : memref<16x32xf32, #tpu.memory_space<vmem>>, vector<16x32xf32>
    %c0_1 = arith.constant 0 : index
    %c0_2 = arith.constant 0 : index
    %1 = vector.load %arg2[%c0_1, %c0_2] : memref<32x32xf32, #tpu.memory_space<vmem>>, vector<32x32xf32>
    %cst = arith.constant dense<0.000000e+00> : vector<16x32xf32>
    %2 = tpu.matmul %0, %1, %cst {dimension_numbers = #tpu.dot_dimension_numbers<[1], [0], [0], [1], [0, 0, 1, 1], [], []>} : vector<16x32xf32>, vector<32x32xf32>, vector<16x32xf32> -> vector<16x32xf32>
    %c0_3 = arith.constant 0 : index
    %c0_4 = arith.constant 0 : index
    %3 = vector.load %arg3[%c0_3, %c0_4] : memref<1x32xf32, #tpu.memory_space<vmem>>, vector<1x32xf32>
    %4 = vector.broadcast %3 : vector<1x32xf32> to vector<16x32xf32>
    %5 = arith.addf %2, %4 : vector<16x32xf32>
    %6 = math.tanh %5 : vector<16x32xf32>
    %c0_5 = arith.constant 0 : index
    %c0_6 = arith.constant 0 : index
    %7 = vector.load %arg4[%c0_5, %c0_6] : memref<32x128xf32, #tpu.memory_space<vmem>>, vector<32x128xf32>
    %cst_7 = arith.constant dense<0.000000e+00> : vector<16x128xf32>
    %8 = tpu.matmul %6, %7, %cst_7 {dimension_numbers = #tpu.dot_dimension_numbers<[1], [0], [0], [1], [0, 0, 1, 1], [], []>} : vector<16x32xf32>, vector<32x128xf32>, vector<16x128xf32> -> vector<16x128xf32>
    %9 = vector.extract_strided_slice %8 {offsets = [0, 0], sizes = [8, 128], strides = [1, 1]} : vector<16x128xf32> to vector<8x128xf32>
    %10 = vector.extract_strided_slice %9 {offsets = [0, 0], sizes = [8, 32], strides = [1, 1]} : vector<8x128xf32> to vector<8x32xf32>
    %11 = vector.extract_strided_slice %9 {offsets = [0, 32], sizes = [8, 32], strides = [1, 1]} : vector<8x128xf32> to vector<8x32xf32>
    %12 = vector.extract_strided_slice %9 {offsets = [0, 64], sizes = [8, 32], strides = [1, 1]} : vector<8x128xf32> to vector<8x32xf32>
    %13 = vector.extract_strided_slice %9 {offsets = [0, 96], sizes = [8, 32], strides = [1, 1]} : vector<8x128xf32> to vector<8x32xf32>
    %cst_8 = arith.constant 0.000000e+00 : f32
    %14 = vector.broadcast %cst_8 : f32 to vector<8x4xf32>
    %cst_9 = arith.constant dense<0xFF800000> : vector<8xf32>
    %15 = vector.multi_reduction <maximumf>, %14, %cst_9 [1] : vector<8x4xf32> to vector<8xf32>
    %16 = vector.shape_cast %15 : vector<8xf32> to vector<8x1xf32>
    %17 = vector.broadcast %16 : vector<8x1xf32> to vector<8x4xf32>
    %18 = arith.subf %14, %17 : vector<8x4xf32>
    %19 = math.exp %18 : vector<8x4xf32>
    %cst_10 = arith.constant dense<0.000000e+00> : vector<8xf32>
    %20 = vector.multi_reduction <add>, %19, %cst_10 [1] : vector<8x4xf32> to vector<8xf32>
    %21 = vector.shape_cast %20 : vector<8xf32> to vector<8x1xf32>
    %22 = tpu.reciprocal %21 {approx = true} : vector<8x1xf32> -> vector<8x1xf32>
    %23 = vector.broadcast %22 : vector<8x1xf32> to vector<8x4xf32>
    %24 = arith.mulf %19, %23 : vector<8x4xf32>
    %25 = vector.extract_strided_slice %24 {offsets = [0, 0], sizes = [8, 1], strides = [1, 1]} : vector<8x4xf32> to vector<8x1xf32>
    %26 = vector.broadcast %25 : vector<8x1xf32> to vector<8x32xf32>
    %27 = arith.mulf %26, %10 : vector<8x32xf32>
    %cst_11 = arith.constant dense<0.000000e+00> : vector<32xf32>
    %28 = vector.multi_reduction <add>, %27, %cst_11 [0] : vector<8x32xf32> to vector<32xf32>
    %29 = vector.shape_cast %28 : vector<32xf32> to vector<1x32xf32>
    %30 = vector.extract_strided_slice %24 {offsets = [0, 1], sizes = [8, 1], strides = [1, 1]} : vector<8x4xf32> to vector<8x1xf32>
    %31 = vector.broadcast %30 : vector<8x1xf32> to vector<8x32xf32>
    %32 = arith.mulf %31, %11 : vector<8x32xf32>
    %cst_12 = arith.constant dense<0.000000e+00> : vector<32xf32>
    %33 = vector.multi_reduction <add>, %32, %cst_12 [0] : vector<8x32xf32> to vector<32xf32>
    %34 = vector.shape_cast %33 : vector<32xf32> to vector<1x32xf32>
    %35 = vector.extract_strided_slice %24 {offsets = [0, 2], sizes = [8, 1], strides = [1, 1]} : vector<8x4xf32> to vector<8x1xf32>
    %36 = vector.broadcast %35 : vector<8x1xf32> to vector<8x32xf32>
    %37 = arith.mulf %36, %12 : vector<8x32xf32>
    %cst_13 = arith.constant dense<0.000000e+00> : vector<32xf32>
    %38 = vector.multi_reduction <add>, %37, %cst_13 [0] : vector<8x32xf32> to vector<32xf32>
    %39 = vector.shape_cast %38 : vector<32xf32> to vector<1x32xf32>
    %40 = vector.extract_strided_slice %24 {offsets = [0, 3], sizes = [8, 1], strides = [1, 1]} : vector<8x4xf32> to vector<8x1xf32>
    %41 = vector.broadcast %40 : vector<8x1xf32> to vector<8x32xf32>
    %42 = arith.mulf %41, %13 : vector<8x32xf32>
    %cst_14 = arith.constant dense<0.000000e+00> : vector<32xf32>
    %43 = vector.multi_reduction <add>, %42, %cst_14 [0] : vector<8x32xf32> to vector<32xf32>
    %44 = vector.shape_cast %43 : vector<32xf32> to vector<1x32xf32>
    %45 = arith.mulf %29, %29 : vector<1x32xf32>
    %cst_15 = arith.constant dense<0.000000e+00> : vector<1xf32>
    %46 = vector.multi_reduction <add>, %45, %cst_15 [1] : vector<1x32xf32> to vector<1xf32>
    %47 = vector.shape_cast %46 : vector<1xf32> to vector<1x1xf32>
    %cst_16 = arith.constant 1.000000e+00 : f32
    %48 = vector.broadcast %cst_16 : f32 to vector<1x1xf32>
    %49 = arith.addf %48, %47 : vector<1x1xf32>
    %50 = tpu.reciprocal %49 {approx = true} : vector<1x1xf32> -> vector<1x1xf32>
    %51 = arith.mulf %47, %50 : vector<1x1xf32>
    %cst_17 = arith.constant 9.99999993E-9 : f32
    %52 = vector.broadcast %cst_17 : f32 to vector<1x1xf32>
    %53 = arith.addf %47, %52 : vector<1x1xf32>
    %54 = math.rsqrt %53 : vector<1x1xf32>
    %55 = arith.mulf %51, %54 : vector<1x1xf32>
    %56 = vector.broadcast %55 : vector<1x1xf32> to vector<1x32xf32>
    %57 = arith.mulf %56, %29 : vector<1x32xf32>
    %58 = arith.mulf %34, %34 : vector<1x32xf32>
    %cst_18 = arith.constant dense<0.000000e+00> : vector<1xf32>
    %59 = vector.multi_reduction <add>, %58, %cst_18 [1] : vector<1x32xf32> to vector<1xf32>
    %60 = vector.shape_cast %59 : vector<1xf32> to vector<1x1xf32>
    %cst_19 = arith.constant 1.000000e+00 : f32
    %61 = vector.broadcast %cst_19 : f32 to vector<1x1xf32>
    %62 = arith.addf %61, %60 : vector<1x1xf32>
    %63 = tpu.reciprocal %62 {approx = true} : vector<1x1xf32> -> vector<1x1xf32>
    %64 = arith.mulf %60, %63 : vector<1x1xf32>
    %cst_20 = arith.constant 9.99999993E-9 : f32
    %65 = vector.broadcast %cst_20 : f32 to vector<1x1xf32>
    %66 = arith.addf %60, %65 : vector<1x1xf32>
    %67 = math.rsqrt %66 : vector<1x1xf32>
    %68 = arith.mulf %64, %67 : vector<1x1xf32>
    %69 = vector.broadcast %68 : vector<1x1xf32> to vector<1x32xf32>
    %70 = arith.mulf %69, %34 : vector<1x32xf32>
    %71 = arith.mulf %39, %39 : vector<1x32xf32>
    %cst_21 = arith.constant dense<0.000000e+00> : vector<1xf32>
    %72 = vector.multi_reduction <add>, %71, %cst_21 [1] : vector<1x32xf32> to vector<1xf32>
    %73 = vector.shape_cast %72 : vector<1xf32> to vector<1x1xf32>
    %cst_22 = arith.constant 1.000000e+00 : f32
    %74 = vector.broadcast %cst_22 : f32 to vector<1x1xf32>
    %75 = arith.addf %74, %73 : vector<1x1xf32>
    %76 = tpu.reciprocal %75 {approx = true} : vector<1x1xf32> -> vector<1x1xf32>
    %77 = arith.mulf %73, %76 : vector<1x1xf32>
    %cst_23 = arith.constant 9.99999993E-9 : f32
    %78 = vector.broadcast %cst_23 : f32 to vector<1x1xf32>
    %79 = arith.addf %73, %78 : vector<1x1xf32>
    %80 = math.rsqrt %79 : vector<1x1xf32>
    %81 = arith.mulf %77, %80 : vector<1x1xf32>
    %82 = vector.broadcast %81 : vector<1x1xf32> to vector<1x32xf32>
    %83 = arith.mulf %82, %39 : vector<1x32xf32>
    %84 = arith.mulf %44, %44 : vector<1x32xf32>
    %cst_24 = arith.constant dense<0.000000e+00> : vector<1xf32>
    %85 = vector.multi_reduction <add>, %84, %cst_24 [1] : vector<1x32xf32> to vector<1xf32>
    %86 = vector.shape_cast %85 : vector<1xf32> to vector<1x1xf32>
    %cst_25 = arith.constant 1.000000e+00 : f32
    %87 = vector.broadcast %cst_25 : f32 to vector<1x1xf32>
    %88 = arith.addf %87, %86 : vector<1x1xf32>
    %89 = tpu.reciprocal %88 {approx = true} : vector<1x1xf32> -> vector<1x1xf32>
    %90 = arith.mulf %86, %89 : vector<1x1xf32>
    %cst_26 = arith.constant 9.99999993E-9 : f32
    %91 = vector.broadcast %cst_26 : f32 to vector<1x1xf32>
    %92 = arith.addf %86, %91 : vector<1x1xf32>
    %93 = math.rsqrt %92 : vector<1x1xf32>
    %94 = arith.mulf %90, %93 : vector<1x1xf32>
    %95 = vector.broadcast %94 : vector<1x1xf32> to vector<1x32xf32>
    %96 = arith.mulf %95, %44 : vector<1x32xf32>
    %97 = vector.broadcast %57 : vector<1x32xf32> to vector<8x32xf32>
    %98 = arith.mulf %10, %97 : vector<8x32xf32>
    %cst_27 = arith.constant dense<0.000000e+00> : vector<8xf32>
    %99 = vector.multi_reduction <add>, %98, %cst_27 [1] : vector<8x32xf32> to vector<8xf32>
    %100 = vector.shape_cast %99 : vector<8xf32> to vector<8x1xf32>
    %101 = vector.broadcast %70 : vector<1x32xf32> to vector<8x32xf32>
    %102 = arith.mulf %11, %101 : vector<8x32xf32>
    %cst_28 = arith.constant dense<0.000000e+00> : vector<8xf32>
    %103 = vector.multi_reduction <add>, %102, %cst_28 [1] : vector<8x32xf32> to vector<8xf32>
    %104 = vector.shape_cast %103 : vector<8xf32> to vector<8x1xf32>
    %105 = vector.broadcast %83 : vector<1x32xf32> to vector<8x32xf32>
    %106 = arith.mulf %12, %105 : vector<8x32xf32>
    %cst_29 = arith.constant dense<0.000000e+00> : vector<8xf32>
    %107 = vector.multi_reduction <add>, %106, %cst_29 [1] : vector<8x32xf32> to vector<8xf32>
    %108 = vector.shape_cast %107 : vector<8xf32> to vector<8x1xf32>
    %109 = vector.broadcast %96 : vector<1x32xf32> to vector<8x32xf32>
    %110 = arith.mulf %13, %109 : vector<8x32xf32>
    %cst_30 = arith.constant dense<0.000000e+00> : vector<8xf32>
    %111 = vector.multi_reduction <add>, %110, %cst_30 [1] : vector<8x32xf32> to vector<8xf32>
    %112 = vector.shape_cast %111 : vector<8xf32> to vector<8x1xf32>
    %113 = tpu.concatenate %100, %104, %108, %112 in 1 : vector<8x1xf32>, vector<8x1xf32>, vector<8x1xf32>, vector<8x1xf32> -> vector<8x4xf32>
    %114 = arith.addf %14, %113 : vector<8x4xf32>
    %cst_31 = arith.constant dense<0xFF800000> : vector<8xf32>
    %115 = vector.multi_reduction <maximumf>, %114, %cst_31 [1] : vector<8x4xf32> to vector<8xf32>
    %116 = vector.shape_cast %115 : vector<8xf32> to vector<8x1xf32>
    %117 = vector.broadcast %116 : vector<8x1xf32> to vector<8x4xf32>
    %118 = arith.subf %114, %117 : vector<8x4xf32>
    %119 = math.exp %118 : vector<8x4xf32>
    %cst_32 = arith.constant dense<0.000000e+00> : vector<8xf32>
    %120 = vector.multi_reduction <add>, %119, %cst_32 [1] : vector<8x4xf32> to vector<8xf32>
    %121 = vector.shape_cast %120 : vector<8xf32> to vector<8x1xf32>
    %122 = tpu.reciprocal %121 {approx = true} : vector<8x1xf32> -> vector<8x1xf32>
    %123 = vector.broadcast %122 : vector<8x1xf32> to vector<8x4xf32>
    %124 = arith.mulf %119, %123 : vector<8x4xf32>
    %125 = vector.extract_strided_slice %124 {offsets = [0, 0], sizes = [8, 1], strides = [1, 1]} : vector<8x4xf32> to vector<8x1xf32>
    %126 = vector.broadcast %125 : vector<8x1xf32> to vector<8x32xf32>
    %127 = arith.mulf %126, %10 : vector<8x32xf32>
    %cst_33 = arith.constant dense<0.000000e+00> : vector<32xf32>
    %128 = vector.multi_reduction <add>, %127, %cst_33 [0] : vector<8x32xf32> to vector<32xf32>
    %129 = vector.shape_cast %128 : vector<32xf32> to vector<1x32xf32>
    %130 = vector.extract_strided_slice %124 {offsets = [0, 1], sizes = [8, 1], strides = [1, 1]} : vector<8x4xf32> to vector<8x1xf32>
    %131 = vector.broadcast %130 : vector<8x1xf32> to vector<8x32xf32>
    %132 = arith.mulf %131, %11 : vector<8x32xf32>
    %cst_34 = arith.constant dense<0.000000e+00> : vector<32xf32>
    %133 = vector.multi_reduction <add>, %132, %cst_34 [0] : vector<8x32xf32> to vector<32xf32>
    %134 = vector.shape_cast %133 : vector<32xf32> to vector<1x32xf32>
    %135 = vector.extract_strided_slice %124 {offsets = [0, 2], sizes = [8, 1], strides = [1, 1]} : vector<8x4xf32> to vector<8x1xf32>
    %136 = vector.broadcast %135 : vector<8x1xf32> to vector<8x32xf32>
    %137 = arith.mulf %136, %12 : vector<8x32xf32>
    %cst_35 = arith.constant dense<0.000000e+00> : vector<32xf32>
    %138 = vector.multi_reduction <add>, %137, %cst_35 [0] : vector<8x32xf32> to vector<32xf32>
    %139 = vector.shape_cast %138 : vector<32xf32> to vector<1x32xf32>
    %140 = vector.extract_strided_slice %124 {offsets = [0, 3], sizes = [8, 1], strides = [1, 1]} : vector<8x4xf32> to vector<8x1xf32>
    %141 = vector.broadcast %140 : vector<8x1xf32> to vector<8x32xf32>
    %142 = arith.mulf %141, %13 : vector<8x32xf32>
    %cst_36 = arith.constant dense<0.000000e+00> : vector<32xf32>
    %143 = vector.multi_reduction <add>, %142, %cst_36 [0] : vector<8x32xf32> to vector<32xf32>
    %144 = vector.shape_cast %143 : vector<32xf32> to vector<1x32xf32>
    %145 = arith.mulf %129, %129 : vector<1x32xf32>
    %cst_37 = arith.constant dense<0.000000e+00> : vector<1xf32>
    %146 = vector.multi_reduction <add>, %145, %cst_37 [1] : vector<1x32xf32> to vector<1xf32>
    %147 = vector.shape_cast %146 : vector<1xf32> to vector<1x1xf32>
    %cst_38 = arith.constant 1.000000e+00 : f32
    %148 = vector.broadcast %cst_38 : f32 to vector<1x1xf32>
    %149 = arith.addf %148, %147 : vector<1x1xf32>
    %150 = tpu.reciprocal %149 {approx = true} : vector<1x1xf32> -> vector<1x1xf32>
    %151 = arith.mulf %147, %150 : vector<1x1xf32>
    %cst_39 = arith.constant 9.99999993E-9 : f32
    %152 = vector.broadcast %cst_39 : f32 to vector<1x1xf32>
    %153 = arith.addf %147, %152 : vector<1x1xf32>
    %154 = math.rsqrt %153 : vector<1x1xf32>
    %155 = arith.mulf %151, %154 : vector<1x1xf32>
    %156 = vector.broadcast %155 : vector<1x1xf32> to vector<1x32xf32>
    %157 = arith.mulf %156, %129 : vector<1x32xf32>
    %158 = arith.mulf %134, %134 : vector<1x32xf32>
    %cst_40 = arith.constant dense<0.000000e+00> : vector<1xf32>
    %159 = vector.multi_reduction <add>, %158, %cst_40 [1] : vector<1x32xf32> to vector<1xf32>
    %160 = vector.shape_cast %159 : vector<1xf32> to vector<1x1xf32>
    %cst_41 = arith.constant 1.000000e+00 : f32
    %161 = vector.broadcast %cst_41 : f32 to vector<1x1xf32>
    %162 = arith.addf %161, %160 : vector<1x1xf32>
    %163 = tpu.reciprocal %162 {approx = true} : vector<1x1xf32> -> vector<1x1xf32>
    %164 = arith.mulf %160, %163 : vector<1x1xf32>
    %cst_42 = arith.constant 9.99999993E-9 : f32
    %165 = vector.broadcast %cst_42 : f32 to vector<1x1xf32>
    %166 = arith.addf %160, %165 : vector<1x1xf32>
    %167 = math.rsqrt %166 : vector<1x1xf32>
    %168 = arith.mulf %164, %167 : vector<1x1xf32>
    %169 = vector.broadcast %168 : vector<1x1xf32> to vector<1x32xf32>
    %170 = arith.mulf %169, %134 : vector<1x32xf32>
    %171 = arith.mulf %139, %139 : vector<1x32xf32>
    %cst_43 = arith.constant dense<0.000000e+00> : vector<1xf32>
    %172 = vector.multi_reduction <add>, %171, %cst_43 [1] : vector<1x32xf32> to vector<1xf32>
    %173 = vector.shape_cast %172 : vector<1xf32> to vector<1x1xf32>
    %cst_44 = arith.constant 1.000000e+00 : f32
    %174 = vector.broadcast %cst_44 : f32 to vector<1x1xf32>
    %175 = arith.addf %174, %173 : vector<1x1xf32>
    %176 = tpu.reciprocal %175 {approx = true} : vector<1x1xf32> -> vector<1x1xf32>
    %177 = arith.mulf %173, %176 : vector<1x1xf32>
    %cst_45 = arith.constant 9.99999993E-9 : f32
    %178 = vector.broadcast %cst_45 : f32 to vector<1x1xf32>
    %179 = arith.addf %173, %178 : vector<1x1xf32>
    %180 = math.rsqrt %179 : vector<1x1xf32>
    %181 = arith.mulf %177, %180 : vector<1x1xf32>
    %182 = vector.broadcast %181 : vector<1x1xf32> to vector<1x32xf32>
    %183 = arith.mulf %182, %139 : vector<1x32xf32>
    %184 = arith.mulf %144, %144 : vector<1x32xf32>
    %cst_46 = arith.constant dense<0.000000e+00> : vector<1xf32>
    %185 = vector.multi_reduction <add>, %184, %cst_46 [1] : vector<1x32xf32> to vector<1xf32>
    %186 = vector.shape_cast %185 : vector<1xf32> to vector<1x1xf32>
    %cst_47 = arith.constant 1.000000e+00 : f32
    %187 = vector.broadcast %cst_47 : f32 to vector<1x1xf32>
    %188 = arith.addf %187, %186 : vector<1x1xf32>
    %189 = tpu.reciprocal %188 {approx = true} : vector<1x1xf32> -> vector<1x1xf32>
    %190 = arith.mulf %186, %189 : vector<1x1xf32>
    %cst_48 = arith.constant 9.99999993E-9 : f32
    %191 = vector.broadcast %cst_48 : f32 to vector<1x1xf32>
    %192 = arith.addf %186, %191 : vector<1x1xf32>
    %193 = math.rsqrt %192 : vector<1x1xf32>
    %194 = arith.mulf %190, %193 : vector<1x1xf32>
    %195 = vector.broadcast %194 : vector<1x1xf32> to vector<1x32xf32>
    %196 = arith.mulf %195, %144 : vector<1x32xf32>
    %197 = vector.broadcast %157 : vector<1x32xf32> to vector<8x32xf32>
    %198 = arith.mulf %10, %197 : vector<8x32xf32>
    %cst_49 = arith.constant dense<0.000000e+00> : vector<8xf32>
    %199 = vector.multi_reduction <add>, %198, %cst_49 [1] : vector<8x32xf32> to vector<8xf32>
    %200 = vector.shape_cast %199 : vector<8xf32> to vector<8x1xf32>
    %201 = vector.broadcast %170 : vector<1x32xf32> to vector<8x32xf32>
    %202 = arith.mulf %11, %201 : vector<8x32xf32>
    %cst_50 = arith.constant dense<0.000000e+00> : vector<8xf32>
    %203 = vector.multi_reduction <add>, %202, %cst_50 [1] : vector<8x32xf32> to vector<8xf32>
    %204 = vector.shape_cast %203 : vector<8xf32> to vector<8x1xf32>
    %205 = vector.broadcast %183 : vector<1x32xf32> to vector<8x32xf32>
    %206 = arith.mulf %12, %205 : vector<8x32xf32>
    %cst_51 = arith.constant dense<0.000000e+00> : vector<8xf32>
    %207 = vector.multi_reduction <add>, %206, %cst_51 [1] : vector<8x32xf32> to vector<8xf32>
    %208 = vector.shape_cast %207 : vector<8xf32> to vector<8x1xf32>
    %209 = vector.broadcast %196 : vector<1x32xf32> to vector<8x32xf32>
    %210 = arith.mulf %13, %209 : vector<8x32xf32>
    %cst_52 = arith.constant dense<0.000000e+00> : vector<8xf32>
    %211 = vector.multi_reduction <add>, %210, %cst_52 [1] : vector<8x32xf32> to vector<8xf32>
    %212 = vector.shape_cast %211 : vector<8xf32> to vector<8x1xf32>
    %213 = tpu.concatenate %200, %204, %208, %212 in 1 : vector<8x1xf32>, vector<8x1xf32>, vector<8x1xf32>, vector<8x1xf32> -> vector<8x4xf32>
    %214 = arith.addf %114, %213 : vector<8x4xf32>
    %cst_53 = arith.constant dense<0xFF800000> : vector<8xf32>
    %215 = vector.multi_reduction <maximumf>, %214, %cst_53 [1] : vector<8x4xf32> to vector<8xf32>
    %216 = vector.shape_cast %215 : vector<8xf32> to vector<8x1xf32>
    %217 = vector.broadcast %216 : vector<8x1xf32> to vector<8x4xf32>
    %218 = arith.subf %214, %217 : vector<8x4xf32>
    %219 = math.exp %218 : vector<8x4xf32>
    %cst_54 = arith.constant dense<0.000000e+00> : vector<8xf32>
    %220 = vector.multi_reduction <add>, %219, %cst_54 [1] : vector<8x4xf32> to vector<8xf32>
    %221 = vector.shape_cast %220 : vector<8xf32> to vector<8x1xf32>
    %222 = tpu.reciprocal %221 {approx = true} : vector<8x1xf32> -> vector<8x1xf32>
    %223 = vector.broadcast %222 : vector<8x1xf32> to vector<8x4xf32>
    %224 = arith.mulf %219, %223 : vector<8x4xf32>
    %225 = vector.extract_strided_slice %224 {offsets = [0, 0], sizes = [8, 1], strides = [1, 1]} : vector<8x4xf32> to vector<8x1xf32>
    %226 = vector.broadcast %225 : vector<8x1xf32> to vector<8x32xf32>
    %227 = arith.mulf %226, %10 : vector<8x32xf32>
    %cst_55 = arith.constant dense<0.000000e+00> : vector<32xf32>
    %228 = vector.multi_reduction <add>, %227, %cst_55 [0] : vector<8x32xf32> to vector<32xf32>
    %229 = vector.shape_cast %228 : vector<32xf32> to vector<1x32xf32>
    %230 = vector.extract_strided_slice %224 {offsets = [0, 1], sizes = [8, 1], strides = [1, 1]} : vector<8x4xf32> to vector<8x1xf32>
    %231 = vector.broadcast %230 : vector<8x1xf32> to vector<8x32xf32>
    %232 = arith.mulf %231, %11 : vector<8x32xf32>
    %cst_56 = arith.constant dense<0.000000e+00> : vector<32xf32>
    %233 = vector.multi_reduction <add>, %232, %cst_56 [0] : vector<8x32xf32> to vector<32xf32>
    %234 = vector.shape_cast %233 : vector<32xf32> to vector<1x32xf32>
    %235 = vector.extract_strided_slice %224 {offsets = [0, 2], sizes = [8, 1], strides = [1, 1]} : vector<8x4xf32> to vector<8x1xf32>
    %236 = vector.broadcast %235 : vector<8x1xf32> to vector<8x32xf32>
    %237 = arith.mulf %236, %12 : vector<8x32xf32>
    %cst_57 = arith.constant dense<0.000000e+00> : vector<32xf32>
    %238 = vector.multi_reduction <add>, %237, %cst_57 [0] : vector<8x32xf32> to vector<32xf32>
    %239 = vector.shape_cast %238 : vector<32xf32> to vector<1x32xf32>
    %240 = vector.extract_strided_slice %224 {offsets = [0, 3], sizes = [8, 1], strides = [1, 1]} : vector<8x4xf32> to vector<8x1xf32>
    %241 = vector.broadcast %240 : vector<8x1xf32> to vector<8x32xf32>
    %242 = arith.mulf %241, %13 : vector<8x32xf32>
    %cst_58 = arith.constant dense<0.000000e+00> : vector<32xf32>
    %243 = vector.multi_reduction <add>, %242, %cst_58 [0] : vector<8x32xf32> to vector<32xf32>
    %244 = vector.shape_cast %243 : vector<32xf32> to vector<1x32xf32>
    %245 = arith.mulf %229, %229 : vector<1x32xf32>
    %cst_59 = arith.constant dense<0.000000e+00> : vector<1xf32>
    %246 = vector.multi_reduction <add>, %245, %cst_59 [1] : vector<1x32xf32> to vector<1xf32>
    %247 = vector.shape_cast %246 : vector<1xf32> to vector<1x1xf32>
    %cst_60 = arith.constant 1.000000e+00 : f32
    %248 = vector.broadcast %cst_60 : f32 to vector<1x1xf32>
    %249 = arith.addf %248, %247 : vector<1x1xf32>
    %250 = tpu.reciprocal %249 {approx = true} : vector<1x1xf32> -> vector<1x1xf32>
    %251 = arith.mulf %247, %250 : vector<1x1xf32>
    %cst_61 = arith.constant 9.99999993E-9 : f32
    %252 = vector.broadcast %cst_61 : f32 to vector<1x1xf32>
    %253 = arith.addf %247, %252 : vector<1x1xf32>
    %254 = math.rsqrt %253 : vector<1x1xf32>
    %255 = arith.mulf %251, %254 : vector<1x1xf32>
    %256 = vector.broadcast %255 : vector<1x1xf32> to vector<1x32xf32>
    %257 = arith.mulf %256, %229 : vector<1x32xf32>
    %258 = arith.mulf %234, %234 : vector<1x32xf32>
    %cst_62 = arith.constant dense<0.000000e+00> : vector<1xf32>
    %259 = vector.multi_reduction <add>, %258, %cst_62 [1] : vector<1x32xf32> to vector<1xf32>
    %260 = vector.shape_cast %259 : vector<1xf32> to vector<1x1xf32>
    %cst_63 = arith.constant 1.000000e+00 : f32
    %261 = vector.broadcast %cst_63 : f32 to vector<1x1xf32>
    %262 = arith.addf %261, %260 : vector<1x1xf32>
    %263 = tpu.reciprocal %262 {approx = true} : vector<1x1xf32> -> vector<1x1xf32>
    %264 = arith.mulf %260, %263 : vector<1x1xf32>
    %cst_64 = arith.constant 9.99999993E-9 : f32
    %265 = vector.broadcast %cst_64 : f32 to vector<1x1xf32>
    %266 = arith.addf %260, %265 : vector<1x1xf32>
    %267 = math.rsqrt %266 : vector<1x1xf32>
    %268 = arith.mulf %264, %267 : vector<1x1xf32>
    %269 = vector.broadcast %268 : vector<1x1xf32> to vector<1x32xf32>
    %270 = arith.mulf %269, %234 : vector<1x32xf32>
    %271 = arith.mulf %239, %239 : vector<1x32xf32>
    %cst_65 = arith.constant dense<0.000000e+00> : vector<1xf32>
    %272 = vector.multi_reduction <add>, %271, %cst_65 [1] : vector<1x32xf32> to vector<1xf32>
    %273 = vector.shape_cast %272 : vector<1xf32> to vector<1x1xf32>
    %cst_66 = arith.constant 1.000000e+00 : f32
    %274 = vector.broadcast %cst_66 : f32 to vector<1x1xf32>
    %275 = arith.addf %274, %273 : vector<1x1xf32>
    %276 = tpu.reciprocal %275 {approx = true} : vector<1x1xf32> -> vector<1x1xf32>
    %277 = arith.mulf %273, %276 : vector<1x1xf32>
    %cst_67 = arith.constant 9.99999993E-9 : f32
    %278 = vector.broadcast %cst_67 : f32 to vector<1x1xf32>
    %279 = arith.addf %273, %278 : vector<1x1xf32>
    %280 = math.rsqrt %279 : vector<1x1xf32>
    %281 = arith.mulf %277, %280 : vector<1x1xf32>
    %282 = vector.broadcast %281 : vector<1x1xf32> to vector<1x32xf32>
    %283 = arith.mulf %282, %239 : vector<1x32xf32>
    %284 = arith.mulf %244, %244 : vector<1x32xf32>
    %cst_68 = arith.constant dense<0.000000e+00> : vector<1xf32>
    %285 = vector.multi_reduction <add>, %284, %cst_68 [1] : vector<1x32xf32> to vector<1xf32>
    %286 = vector.shape_cast %285 : vector<1xf32> to vector<1x1xf32>
    %cst_69 = arith.constant 1.000000e+00 : f32
    %287 = vector.broadcast %cst_69 : f32 to vector<1x1xf32>
    %288 = arith.addf %287, %286 : vector<1x1xf32>
    %289 = tpu.reciprocal %288 {approx = true} : vector<1x1xf32> -> vector<1x1xf32>
    %290 = arith.mulf %286, %289 : vector<1x1xf32>
    %cst_70 = arith.constant 9.99999993E-9 : f32
    %291 = vector.broadcast %cst_70 : f32 to vector<1x1xf32>
    %292 = arith.addf %286, %291 : vector<1x1xf32>
    %293 = math.rsqrt %292 : vector<1x1xf32>
    %294 = arith.mulf %290, %293 : vector<1x1xf32>
    %295 = vector.broadcast %294 : vector<1x1xf32> to vector<1x32xf32>
    %296 = arith.mulf %295, %244 : vector<1x32xf32>
    %297 = tpu.concatenate %257, %270, %283, %296 in 0 : vector<1x32xf32>, vector<1x32xf32>, vector<1x32xf32>, vector<1x32xf32> -> vector<4x32xf32>
    %298 = vector.extract_strided_slice %8 {offsets = [8, 0], sizes = [8, 128], strides = [1, 1]} : vector<16x128xf32> to vector<8x128xf32>
    %299 = vector.extract_strided_slice %298 {offsets = [0, 0], sizes = [8, 32], strides = [1, 1]} : vector<8x128xf32> to vector<8x32xf32>
    %300 = vector.extract_strided_slice %298 {offsets = [0, 32], sizes = [8, 32], strides = [1, 1]} : vector<8x128xf32> to vector<8x32xf32>
    %301 = vector.extract_strided_slice %298 {offsets = [0, 64], sizes = [8, 32], strides = [1, 1]} : vector<8x128xf32> to vector<8x32xf32>
    %302 = vector.extract_strided_slice %298 {offsets = [0, 96], sizes = [8, 32], strides = [1, 1]} : vector<8x128xf32> to vector<8x32xf32>
    %cst_71 = arith.constant 0.000000e+00 : f32
    %303 = vector.broadcast %cst_71 : f32 to vector<8x4xf32>
    %cst_72 = arith.constant dense<0xFF800000> : vector<8xf32>
    %304 = vector.multi_reduction <maximumf>, %303, %cst_72 [1] : vector<8x4xf32> to vector<8xf32>
    %305 = vector.shape_cast %304 : vector<8xf32> to vector<8x1xf32>
    %306 = vector.broadcast %305 : vector<8x1xf32> to vector<8x4xf32>
    %307 = arith.subf %303, %306 : vector<8x4xf32>
    %308 = math.exp %307 : vector<8x4xf32>
    %cst_73 = arith.constant dense<0.000000e+00> : vector<8xf32>
    %309 = vector.multi_reduction <add>, %308, %cst_73 [1] : vector<8x4xf32> to vector<8xf32>
    %310 = vector.shape_cast %309 : vector<8xf32> to vector<8x1xf32>
    %311 = tpu.reciprocal %310 {approx = true} : vector<8x1xf32> -> vector<8x1xf32>
    %312 = vector.broadcast %311 : vector<8x1xf32> to vector<8x4xf32>
    %313 = arith.mulf %308, %312 : vector<8x4xf32>
    %314 = vector.extract_strided_slice %313 {offsets = [0, 0], sizes = [8, 1], strides = [1, 1]} : vector<8x4xf32> to vector<8x1xf32>
    %315 = vector.broadcast %314 : vector<8x1xf32> to vector<8x32xf32>
    %316 = arith.mulf %315, %299 : vector<8x32xf32>
    %cst_74 = arith.constant dense<0.000000e+00> : vector<32xf32>
    %317 = vector.multi_reduction <add>, %316, %cst_74 [0] : vector<8x32xf32> to vector<32xf32>
    %318 = vector.shape_cast %317 : vector<32xf32> to vector<1x32xf32>
    %319 = vector.extract_strided_slice %313 {offsets = [0, 1], sizes = [8, 1], strides = [1, 1]} : vector<8x4xf32> to vector<8x1xf32>
    %320 = vector.broadcast %319 : vector<8x1xf32> to vector<8x32xf32>
    %321 = arith.mulf %320, %300 : vector<8x32xf32>
    %cst_75 = arith.constant dense<0.000000e+00> : vector<32xf32>
    %322 = vector.multi_reduction <add>, %321, %cst_75 [0] : vector<8x32xf32> to vector<32xf32>
    %323 = vector.shape_cast %322 : vector<32xf32> to vector<1x32xf32>
    %324 = vector.extract_strided_slice %313 {offsets = [0, 2], sizes = [8, 1], strides = [1, 1]} : vector<8x4xf32> to vector<8x1xf32>
    %325 = vector.broadcast %324 : vector<8x1xf32> to vector<8x32xf32>
    %326 = arith.mulf %325, %301 : vector<8x32xf32>
    %cst_76 = arith.constant dense<0.000000e+00> : vector<32xf32>
    %327 = vector.multi_reduction <add>, %326, %cst_76 [0] : vector<8x32xf32> to vector<32xf32>
    %328 = vector.shape_cast %327 : vector<32xf32> to vector<1x32xf32>
    %329 = vector.extract_strided_slice %313 {offsets = [0, 3], sizes = [8, 1], strides = [1, 1]} : vector<8x4xf32> to vector<8x1xf32>
    %330 = vector.broadcast %329 : vector<8x1xf32> to vector<8x32xf32>
    %331 = arith.mulf %330, %302 : vector<8x32xf32>
    %cst_77 = arith.constant dense<0.000000e+00> : vector<32xf32>
    %332 = vector.multi_reduction <add>, %331, %cst_77 [0] : vector<8x32xf32> to vector<32xf32>
    %333 = vector.shape_cast %332 : vector<32xf32> to vector<1x32xf32>
    %334 = arith.mulf %318, %318 : vector<1x32xf32>
    %cst_78 = arith.constant dense<0.000000e+00> : vector<1xf32>
    %335 = vector.multi_reduction <add>, %334, %cst_78 [1] : vector<1x32xf32> to vector<1xf32>
    %336 = vector.shape_cast %335 : vector<1xf32> to vector<1x1xf32>
    %cst_79 = arith.constant 1.000000e+00 : f32
    %337 = vector.broadcast %cst_79 : f32 to vector<1x1xf32>
    %338 = arith.addf %337, %336 : vector<1x1xf32>
    %339 = tpu.reciprocal %338 {approx = true} : vector<1x1xf32> -> vector<1x1xf32>
    %340 = arith.mulf %336, %339 : vector<1x1xf32>
    %cst_80 = arith.constant 9.99999993E-9 : f32
    %341 = vector.broadcast %cst_80 : f32 to vector<1x1xf32>
    %342 = arith.addf %336, %341 : vector<1x1xf32>
    %343 = math.rsqrt %342 : vector<1x1xf32>
    %344 = arith.mulf %340, %343 : vector<1x1xf32>
    %345 = vector.broadcast %344 : vector<1x1xf32> to vector<1x32xf32>
    %346 = arith.mulf %345, %318 : vector<1x32xf32>
    %347 = arith.mulf %323, %323 : vector<1x32xf32>
    %cst_81 = arith.constant dense<0.000000e+00> : vector<1xf32>
    %348 = vector.multi_reduction <add>, %347, %cst_81 [1] : vector<1x32xf32> to vector<1xf32>
    %349 = vector.shape_cast %348 : vector<1xf32> to vector<1x1xf32>
    %cst_82 = arith.constant 1.000000e+00 : f32
    %350 = vector.broadcast %cst_82 : f32 to vector<1x1xf32>
    %351 = arith.addf %350, %349 : vector<1x1xf32>
    %352 = tpu.reciprocal %351 {approx = true} : vector<1x1xf32> -> vector<1x1xf32>
    %353 = arith.mulf %349, %352 : vector<1x1xf32>
    %cst_83 = arith.constant 9.99999993E-9 : f32
    %354 = vector.broadcast %cst_83 : f32 to vector<1x1xf32>
    %355 = arith.addf %349, %354 : vector<1x1xf32>
    %356 = math.rsqrt %355 : vector<1x1xf32>
    %357 = arith.mulf %353, %356 : vector<1x1xf32>
    %358 = vector.broadcast %357 : vector<1x1xf32> to vector<1x32xf32>
    %359 = arith.mulf %358, %323 : vector<1x32xf32>
    %360 = arith.mulf %328, %328 : vector<1x32xf32>
    %cst_84 = arith.constant dense<0.000000e+00> : vector<1xf32>
    %361 = vector.multi_reduction <add>, %360, %cst_84 [1] : vector<1x32xf32> to vector<1xf32>
    %362 = vector.shape_cast %361 : vector<1xf32> to vector<1x1xf32>
    %cst_85 = arith.constant 1.000000e+00 : f32
    %363 = vector.broadcast %cst_85 : f32 to vector<1x1xf32>
    %364 = arith.addf %363, %362 : vector<1x1xf32>
    %365 = tpu.reciprocal %364 {approx = true} : vector<1x1xf32> -> vector<1x1xf32>
    %366 = arith.mulf %362, %365 : vector<1x1xf32>
    %cst_86 = arith.constant 9.99999993E-9 : f32
    %367 = vector.broadcast %cst_86 : f32 to vector<1x1xf32>
    %368 = arith.addf %362, %367 : vector<1x1xf32>
    %369 = math.rsqrt %368 : vector<1x1xf32>
    %370 = arith.mulf %366, %369 : vector<1x1xf32>
    %371 = vector.broadcast %370 : vector<1x1xf32> to vector<1x32xf32>
    %372 = arith.mulf %371, %328 : vector<1x32xf32>
    %373 = arith.mulf %333, %333 : vector<1x32xf32>
    %cst_87 = arith.constant dense<0.000000e+00> : vector<1xf32>
    %374 = vector.multi_reduction <add>, %373, %cst_87 [1] : vector<1x32xf32> to vector<1xf32>
    %375 = vector.shape_cast %374 : vector<1xf32> to vector<1x1xf32>
    %cst_88 = arith.constant 1.000000e+00 : f32
    %376 = vector.broadcast %cst_88 : f32 to vector<1x1xf32>
    %377 = arith.addf %376, %375 : vector<1x1xf32>
    %378 = tpu.reciprocal %377 {approx = true} : vector<1x1xf32> -> vector<1x1xf32>
    %379 = arith.mulf %375, %378 : vector<1x1xf32>
    %cst_89 = arith.constant 9.99999993E-9 : f32
    %380 = vector.broadcast %cst_89 : f32 to vector<1x1xf32>
    %381 = arith.addf %375, %380 : vector<1x1xf32>
    %382 = math.rsqrt %381 : vector<1x1xf32>
    %383 = arith.mulf %379, %382 : vector<1x1xf32>
    %384 = vector.broadcast %383 : vector<1x1xf32> to vector<1x32xf32>
    %385 = arith.mulf %384, %333 : vector<1x32xf32>
    %386 = vector.broadcast %346 : vector<1x32xf32> to vector<8x32xf32>
    %387 = arith.mulf %299, %386 : vector<8x32xf32>
    %cst_90 = arith.constant dense<0.000000e+00> : vector<8xf32>
    %388 = vector.multi_reduction <add>, %387, %cst_90 [1] : vector<8x32xf32> to vector<8xf32>
    %389 = vector.shape_cast %388 : vector<8xf32> to vector<8x1xf32>
    %390 = vector.broadcast %359 : vector<1x32xf32> to vector<8x32xf32>
    %391 = arith.mulf %300, %390 : vector<8x32xf32>
    %cst_91 = arith.constant dense<0.000000e+00> : vector<8xf32>
    %392 = vector.multi_reduction <add>, %391, %cst_91 [1] : vector<8x32xf32> to vector<8xf32>
    %393 = vector.shape_cast %392 : vector<8xf32> to vector<8x1xf32>
    %394 = vector.broadcast %372 : vector<1x32xf32> to vector<8x32xf32>
    %395 = arith.mulf %301, %394 : vector<8x32xf32>
    %cst_92 = arith.constant dense<0.000000e+00> : vector<8xf32>
    %396 = vector.multi_reduction <add>, %395, %cst_92 [1] : vector<8x32xf32> to vector<8xf32>
    %397 = vector.shape_cast %396 : vector<8xf32> to vector<8x1xf32>
    %398 = vector.broadcast %385 : vector<1x32xf32> to vector<8x32xf32>
    %399 = arith.mulf %302, %398 : vector<8x32xf32>
    %cst_93 = arith.constant dense<0.000000e+00> : vector<8xf32>
    %400 = vector.multi_reduction <add>, %399, %cst_93 [1] : vector<8x32xf32> to vector<8xf32>
    %401 = vector.shape_cast %400 : vector<8xf32> to vector<8x1xf32>
    %402 = tpu.concatenate %389, %393, %397, %401 in 1 : vector<8x1xf32>, vector<8x1xf32>, vector<8x1xf32>, vector<8x1xf32> -> vector<8x4xf32>
    %403 = arith.addf %303, %402 : vector<8x4xf32>
    %cst_94 = arith.constant dense<0xFF800000> : vector<8xf32>
    %404 = vector.multi_reduction <maximumf>, %403, %cst_94 [1] : vector<8x4xf32> to vector<8xf32>
    %405 = vector.shape_cast %404 : vector<8xf32> to vector<8x1xf32>
    %406 = vector.broadcast %405 : vector<8x1xf32> to vector<8x4xf32>
    %407 = arith.subf %403, %406 : vector<8x4xf32>
    %408 = math.exp %407 : vector<8x4xf32>
    %cst_95 = arith.constant dense<0.000000e+00> : vector<8xf32>
    %409 = vector.multi_reduction <add>, %408, %cst_95 [1] : vector<8x4xf32> to vector<8xf32>
    %410 = vector.shape_cast %409 : vector<8xf32> to vector<8x1xf32>
    %411 = tpu.reciprocal %410 {approx = true} : vector<8x1xf32> -> vector<8x1xf32>
    %412 = vector.broadcast %411 : vector<8x1xf32> to vector<8x4xf32>
    %413 = arith.mulf %408, %412 : vector<8x4xf32>
    %414 = vector.extract_strided_slice %413 {offsets = [0, 0], sizes = [8, 1], strides = [1, 1]} : vector<8x4xf32> to vector<8x1xf32>
    %415 = vector.broadcast %414 : vector<8x1xf32> to vector<8x32xf32>
    %416 = arith.mulf %415, %299 : vector<8x32xf32>
    %cst_96 = arith.constant dense<0.000000e+00> : vector<32xf32>
    %417 = vector.multi_reduction <add>, %416, %cst_96 [0] : vector<8x32xf32> to vector<32xf32>
    %418 = vector.shape_cast %417 : vector<32xf32> to vector<1x32xf32>
    %419 = vector.extract_strided_slice %413 {offsets = [0, 1], sizes = [8, 1], strides = [1, 1]} : vector<8x4xf32> to vector<8x1xf32>
    %420 = vector.broadcast %419 : vector<8x1xf32> to vector<8x32xf32>
    %421 = arith.mulf %420, %300 : vector<8x32xf32>
    %cst_97 = arith.constant dense<0.000000e+00> : vector<32xf32>
    %422 = vector.multi_reduction <add>, %421, %cst_97 [0] : vector<8x32xf32> to vector<32xf32>
    %423 = vector.shape_cast %422 : vector<32xf32> to vector<1x32xf32>
    %424 = vector.extract_strided_slice %413 {offsets = [0, 2], sizes = [8, 1], strides = [1, 1]} : vector<8x4xf32> to vector<8x1xf32>
    %425 = vector.broadcast %424 : vector<8x1xf32> to vector<8x32xf32>
    %426 = arith.mulf %425, %301 : vector<8x32xf32>
    %cst_98 = arith.constant dense<0.000000e+00> : vector<32xf32>
    %427 = vector.multi_reduction <add>, %426, %cst_98 [0] : vector<8x32xf32> to vector<32xf32>
    %428 = vector.shape_cast %427 : vector<32xf32> to vector<1x32xf32>
    %429 = vector.extract_strided_slice %413 {offsets = [0, 3], sizes = [8, 1], strides = [1, 1]} : vector<8x4xf32> to vector<8x1xf32>
    %430 = vector.broadcast %429 : vector<8x1xf32> to vector<8x32xf32>
    %431 = arith.mulf %430, %302 : vector<8x32xf32>
    %cst_99 = arith.constant dense<0.000000e+00> : vector<32xf32>
    %432 = vector.multi_reduction <add>, %431, %cst_99 [0] : vector<8x32xf32> to vector<32xf32>
    %433 = vector.shape_cast %432 : vector<32xf32> to vector<1x32xf32>
    %434 = arith.mulf %418, %418 : vector<1x32xf32>
    %cst_100 = arith.constant dense<0.000000e+00> : vector<1xf32>
    %435 = vector.multi_reduction <add>, %434, %cst_100 [1] : vector<1x32xf32> to vector<1xf32>
    %436 = vector.shape_cast %435 : vector<1xf32> to vector<1x1xf32>
    %cst_101 = arith.constant 1.000000e+00 : f32
    %437 = vector.broadcast %cst_101 : f32 to vector<1x1xf32>
    %438 = arith.addf %437, %436 : vector<1x1xf32>
    %439 = tpu.reciprocal %438 {approx = true} : vector<1x1xf32> -> vector<1x1xf32>
    %440 = arith.mulf %436, %439 : vector<1x1xf32>
    %cst_102 = arith.constant 9.99999993E-9 : f32
    %441 = vector.broadcast %cst_102 : f32 to vector<1x1xf32>
    %442 = arith.addf %436, %441 : vector<1x1xf32>
    %443 = math.rsqrt %442 : vector<1x1xf32>
    %444 = arith.mulf %440, %443 : vector<1x1xf32>
    %445 = vector.broadcast %444 : vector<1x1xf32> to vector<1x32xf32>
    %446 = arith.mulf %445, %418 : vector<1x32xf32>
    %447 = arith.mulf %423, %423 : vector<1x32xf32>
    %cst_103 = arith.constant dense<0.000000e+00> : vector<1xf32>
    %448 = vector.multi_reduction <add>, %447, %cst_103 [1] : vector<1x32xf32> to vector<1xf32>
    %449 = vector.shape_cast %448 : vector<1xf32> to vector<1x1xf32>
    %cst_104 = arith.constant 1.000000e+00 : f32
    %450 = vector.broadcast %cst_104 : f32 to vector<1x1xf32>
    %451 = arith.addf %450, %449 : vector<1x1xf32>
    %452 = tpu.reciprocal %451 {approx = true} : vector<1x1xf32> -> vector<1x1xf32>
    %453 = arith.mulf %449, %452 : vector<1x1xf32>
    %cst_105 = arith.constant 9.99999993E-9 : f32
    %454 = vector.broadcast %cst_105 : f32 to vector<1x1xf32>
    %455 = arith.addf %449, %454 : vector<1x1xf32>
    %456 = math.rsqrt %455 : vector<1x1xf32>
    %457 = arith.mulf %453, %456 : vector<1x1xf32>
    %458 = vector.broadcast %457 : vector<1x1xf32> to vector<1x32xf32>
    %459 = arith.mulf %458, %423 : vector<1x32xf32>
    %460 = arith.mulf %428, %428 : vector<1x32xf32>
    %cst_106 = arith.constant dense<0.000000e+00> : vector<1xf32>
    %461 = vector.multi_reduction <add>, %460, %cst_106 [1] : vector<1x32xf32> to vector<1xf32>
    %462 = vector.shape_cast %461 : vector<1xf32> to vector<1x1xf32>
    %cst_107 = arith.constant 1.000000e+00 : f32
    %463 = vector.broadcast %cst_107 : f32 to vector<1x1xf32>
    %464 = arith.addf %463, %462 : vector<1x1xf32>
    %465 = tpu.reciprocal %464 {approx = true} : vector<1x1xf32> -> vector<1x1xf32>
    %466 = arith.mulf %462, %465 : vector<1x1xf32>
    %cst_108 = arith.constant 9.99999993E-9 : f32
    %467 = vector.broadcast %cst_108 : f32 to vector<1x1xf32>
    %468 = arith.addf %462, %467 : vector<1x1xf32>
    %469 = math.rsqrt %468 : vector<1x1xf32>
    %470 = arith.mulf %466, %469 : vector<1x1xf32>
    %471 = vector.broadcast %470 : vector<1x1xf32> to vector<1x32xf32>
    %472 = arith.mulf %471, %428 : vector<1x32xf32>
    %473 = arith.mulf %433, %433 : vector<1x32xf32>
    %cst_109 = arith.constant dense<0.000000e+00> : vector<1xf32>
    %474 = vector.multi_reduction <add>, %473, %cst_109 [1] : vector<1x32xf32> to vector<1xf32>
    %475 = vector.shape_cast %474 : vector<1xf32> to vector<1x1xf32>
    %cst_110 = arith.constant 1.000000e+00 : f32
    %476 = vector.broadcast %cst_110 : f32 to vector<1x1xf32>
    %477 = arith.addf %476, %475 : vector<1x1xf32>
    %478 = tpu.reciprocal %477 {approx = true} : vector<1x1xf32> -> vector<1x1xf32>
    %479 = arith.mulf %475, %478 : vector<1x1xf32>
    %cst_111 = arith.constant 9.99999993E-9 : f32
    %480 = vector.broadcast %cst_111 : f32 to vector<1x1xf32>
    %481 = arith.addf %475, %480 : vector<1x1xf32>
    %482 = math.rsqrt %481 : vector<1x1xf32>
    %483 = arith.mulf %479, %482 : vector<1x1xf32>
    %484 = vector.broadcast %483 : vector<1x1xf32> to vector<1x32xf32>
    %485 = arith.mulf %484, %433 : vector<1x32xf32>
    %486 = vector.broadcast %446 : vector<1x32xf32> to vector<8x32xf32>
    %487 = arith.mulf %299, %486 : vector<8x32xf32>
    %cst_112 = arith.constant dense<0.000000e+00> : vector<8xf32>
    %488 = vector.multi_reduction <add>, %487, %cst_112 [1] : vector<8x32xf32> to vector<8xf32>
    %489 = vector.shape_cast %488 : vector<8xf32> to vector<8x1xf32>
    %490 = vector.broadcast %459 : vector<1x32xf32> to vector<8x32xf32>
    %491 = arith.mulf %300, %490 : vector<8x32xf32>
    %cst_113 = arith.constant dense<0.000000e+00> : vector<8xf32>
    %492 = vector.multi_reduction <add>, %491, %cst_113 [1] : vector<8x32xf32> to vector<8xf32>
    %493 = vector.shape_cast %492 : vector<8xf32> to vector<8x1xf32>
    %494 = vector.broadcast %472 : vector<1x32xf32> to vector<8x32xf32>
    %495 = arith.mulf %301, %494 : vector<8x32xf32>
    %cst_114 = arith.constant dense<0.000000e+00> : vector<8xf32>
    %496 = vector.multi_reduction <add>, %495, %cst_114 [1] : vector<8x32xf32> to vector<8xf32>
    %497 = vector.shape_cast %496 : vector<8xf32> to vector<8x1xf32>
    %498 = vector.broadcast %485 : vector<1x32xf32> to vector<8x32xf32>
    %499 = arith.mulf %302, %498 : vector<8x32xf32>
    %cst_115 = arith.constant dense<0.000000e+00> : vector<8xf32>
    %500 = vector.multi_reduction <add>, %499, %cst_115 [1] : vector<8x32xf32> to vector<8xf32>
    %501 = vector.shape_cast %500 : vector<8xf32> to vector<8x1xf32>
    %502 = tpu.concatenate %489, %493, %497, %501 in 1 : vector<8x1xf32>, vector<8x1xf32>, vector<8x1xf32>, vector<8x1xf32> -> vector<8x4xf32>
    %503 = arith.addf %403, %502 : vector<8x4xf32>
    %cst_116 = arith.constant dense<0xFF800000> : vector<8xf32>
    %504 = vector.multi_reduction <maximumf>, %503, %cst_116 [1] : vector<8x4xf32> to vector<8xf32>
    %505 = vector.shape_cast %504 : vector<8xf32> to vector<8x1xf32>
    %506 = vector.broadcast %505 : vector<8x1xf32> to vector<8x4xf32>
    %507 = arith.subf %503, %506 : vector<8x4xf32>
    %508 = math.exp %507 : vector<8x4xf32>
    %cst_117 = arith.constant dense<0.000000e+00> : vector<8xf32>
    %509 = vector.multi_reduction <add>, %508, %cst_117 [1] : vector<8x4xf32> to vector<8xf32>
    %510 = vector.shape_cast %509 : vector<8xf32> to vector<8x1xf32>
    %511 = tpu.reciprocal %510 {approx = true} : vector<8x1xf32> -> vector<8x1xf32>
    %512 = vector.broadcast %511 : vector<8x1xf32> to vector<8x4xf32>
    %513 = arith.mulf %508, %512 : vector<8x4xf32>
    %514 = vector.extract_strided_slice %513 {offsets = [0, 0], sizes = [8, 1], strides = [1, 1]} : vector<8x4xf32> to vector<8x1xf32>
    %515 = vector.broadcast %514 : vector<8x1xf32> to vector<8x32xf32>
    %516 = arith.mulf %515, %299 : vector<8x32xf32>
    %cst_118 = arith.constant dense<0.000000e+00> : vector<32xf32>
    %517 = vector.multi_reduction <add>, %516, %cst_118 [0] : vector<8x32xf32> to vector<32xf32>
    %518 = vector.shape_cast %517 : vector<32xf32> to vector<1x32xf32>
    %519 = vector.extract_strided_slice %513 {offsets = [0, 1], sizes = [8, 1], strides = [1, 1]} : vector<8x4xf32> to vector<8x1xf32>
    %520 = vector.broadcast %519 : vector<8x1xf32> to vector<8x32xf32>
    %521 = arith.mulf %520, %300 : vector<8x32xf32>
    %cst_119 = arith.constant dense<0.000000e+00> : vector<32xf32>
    %522 = vector.multi_reduction <add>, %521, %cst_119 [0] : vector<8x32xf32> to vector<32xf32>
    %523 = vector.shape_cast %522 : vector<32xf32> to vector<1x32xf32>
    %524 = vector.extract_strided_slice %513 {offsets = [0, 2], sizes = [8, 1], strides = [1, 1]} : vector<8x4xf32> to vector<8x1xf32>
    %525 = vector.broadcast %524 : vector<8x1xf32> to vector<8x32xf32>
    %526 = arith.mulf %525, %301 : vector<8x32xf32>
    %cst_120 = arith.constant dense<0.000000e+00> : vector<32xf32>
    %527 = vector.multi_reduction <add>, %526, %cst_120 [0] : vector<8x32xf32> to vector<32xf32>
    %528 = vector.shape_cast %527 : vector<32xf32> to vector<1x32xf32>
    %529 = vector.extract_strided_slice %513 {offsets = [0, 3], sizes = [8, 1], strides = [1, 1]} : vector<8x4xf32> to vector<8x1xf32>
    %530 = vector.broadcast %529 : vector<8x1xf32> to vector<8x32xf32>
    %531 = arith.mulf %530, %302 : vector<8x32xf32>
    %cst_121 = arith.constant dense<0.000000e+00> : vector<32xf32>
    %532 = vector.multi_reduction <add>, %531, %cst_121 [0] : vector<8x32xf32> to vector<32xf32>
    %533 = vector.shape_cast %532 : vector<32xf32> to vector<1x32xf32>
    %534 = arith.mulf %518, %518 : vector<1x32xf32>
    %cst_122 = arith.constant dense<0.000000e+00> : vector<1xf32>
    %535 = vector.multi_reduction <add>, %534, %cst_122 [1] : vector<1x32xf32> to vector<1xf32>
    %536 = vector.shape_cast %535 : vector<1xf32> to vector<1x1xf32>
    %cst_123 = arith.constant 1.000000e+00 : f32
    %537 = vector.broadcast %cst_123 : f32 to vector<1x1xf32>
    %538 = arith.addf %537, %536 : vector<1x1xf32>
    %539 = tpu.reciprocal %538 {approx = true} : vector<1x1xf32> -> vector<1x1xf32>
    %540 = arith.mulf %536, %539 : vector<1x1xf32>
    %cst_124 = arith.constant 9.99999993E-9 : f32
    %541 = vector.broadcast %cst_124 : f32 to vector<1x1xf32>
    %542 = arith.addf %536, %541 : vector<1x1xf32>
    %543 = math.rsqrt %542 : vector<1x1xf32>
    %544 = arith.mulf %540, %543 : vector<1x1xf32>
    %545 = vector.broadcast %544 : vector<1x1xf32> to vector<1x32xf32>
    %546 = arith.mulf %545, %518 : vector<1x32xf32>
    %547 = arith.mulf %523, %523 : vector<1x32xf32>
    %cst_125 = arith.constant dense<0.000000e+00> : vector<1xf32>
    %548 = vector.multi_reduction <add>, %547, %cst_125 [1] : vector<1x32xf32> to vector<1xf32>
    %549 = vector.shape_cast %548 : vector<1xf32> to vector<1x1xf32>
    %cst_126 = arith.constant 1.000000e+00 : f32
    %550 = vector.broadcast %cst_126 : f32 to vector<1x1xf32>
    %551 = arith.addf %550, %549 : vector<1x1xf32>
    %552 = tpu.reciprocal %551 {approx = true} : vector<1x1xf32> -> vector<1x1xf32>
    %553 = arith.mulf %549, %552 : vector<1x1xf32>
    %cst_127 = arith.constant 9.99999993E-9 : f32
    %554 = vector.broadcast %cst_127 : f32 to vector<1x1xf32>
    %555 = arith.addf %549, %554 : vector<1x1xf32>
    %556 = math.rsqrt %555 : vector<1x1xf32>
    %557 = arith.mulf %553, %556 : vector<1x1xf32>
    %558 = vector.broadcast %557 : vector<1x1xf32> to vector<1x32xf32>
    %559 = arith.mulf %558, %523 : vector<1x32xf32>
    %560 = arith.mulf %528, %528 : vector<1x32xf32>
    %cst_128 = arith.constant dense<0.000000e+00> : vector<1xf32>
    %561 = vector.multi_reduction <add>, %560, %cst_128 [1] : vector<1x32xf32> to vector<1xf32>
    %562 = vector.shape_cast %561 : vector<1xf32> to vector<1x1xf32>
    %cst_129 = arith.constant 1.000000e+00 : f32
    %563 = vector.broadcast %cst_129 : f32 to vector<1x1xf32>
    %564 = arith.addf %563, %562 : vector<1x1xf32>
    %565 = tpu.reciprocal %564 {approx = true} : vector<1x1xf32> -> vector<1x1xf32>
    %566 = arith.mulf %562, %565 : vector<1x1xf32>
    %cst_130 = arith.constant 9.99999993E-9 : f32
    %567 = vector.broadcast %cst_130 : f32 to vector<1x1xf32>
    %568 = arith.addf %562, %567 : vector<1x1xf32>
    %569 = math.rsqrt %568 : vector<1x1xf32>
    %570 = arith.mulf %566, %569 : vector<1x1xf32>
    %571 = vector.broadcast %570 : vector<1x1xf32> to vector<1x32xf32>
    %572 = arith.mulf %571, %528 : vector<1x32xf32>
    %573 = arith.mulf %533, %533 : vector<1x32xf32>
    %cst_131 = arith.constant dense<0.000000e+00> : vector<1xf32>
    %574 = vector.multi_reduction <add>, %573, %cst_131 [1] : vector<1x32xf32> to vector<1xf32>
    %575 = vector.shape_cast %574 : vector<1xf32> to vector<1x1xf32>
    %cst_132 = arith.constant 1.000000e+00 : f32
    %576 = vector.broadcast %cst_132 : f32 to vector<1x1xf32>
    %577 = arith.addf %576, %575 : vector<1x1xf32>
    %578 = tpu.reciprocal %577 {approx = true} : vector<1x1xf32> -> vector<1x1xf32>
    %579 = arith.mulf %575, %578 : vector<1x1xf32>
    %cst_133 = arith.constant 9.99999993E-9 : f32
    %580 = vector.broadcast %cst_133 : f32 to vector<1x1xf32>
    %581 = arith.addf %575, %580 : vector<1x1xf32>
    %582 = math.rsqrt %581 : vector<1x1xf32>
    %583 = arith.mulf %579, %582 : vector<1x1xf32>
    %584 = vector.broadcast %583 : vector<1x1xf32> to vector<1x32xf32>
    %585 = arith.mulf %584, %533 : vector<1x32xf32>
    %586 = tpu.concatenate %546, %559, %572, %585 in 0 : vector<1x32xf32>, vector<1x32xf32>, vector<1x32xf32>, vector<1x32xf32> -> vector<4x32xf32>
    %c0_134 = arith.constant 0 : index
    %c0_135 = arith.constant 0 : index
    %587 = vector.load %arg6[%c0_134, %c0_135] : memref<32x32xf32, #tpu.memory_space<vmem>>, vector<32x32xf32>
    %c0_136 = arith.constant 0 : index
    %c0_137 = arith.constant 0 : index
    %588 = vector.load %arg8[%c0_136, %c0_137] : memref<32x32xf32, #tpu.memory_space<vmem>>, vector<32x32xf32>
    %c0_138 = arith.constant 0 : index
    %c0_139 = arith.constant 0 : index
    %589 = vector.load %arg7[%c0_138, %c0_139] : memref<32x32xf32, #tpu.memory_space<vmem>>, vector<32x32xf32>
    %c0_140 = arith.constant 0 : index
    %c0_141 = arith.constant 0 : index
    %590 = vector.load %arg9[%c0_140, %c0_141] : memref<32x32xf32, #tpu.memory_space<vmem>>, vector<32x32xf32>
    %cst_142 = arith.constant dense<0.000000e+00> : vector<16x32xf32>
    %591 = tpu.matmul %6, %587, %cst_142 {dimension_numbers = #tpu.dot_dimension_numbers<[1], [0], [0], [1], [0, 0, 1, 1], [], []>} : vector<16x32xf32>, vector<32x32xf32>, vector<16x32xf32> -> vector<16x32xf32>
    %c0_143 = arith.constant 0 : index
    %c0_144 = arith.constant 0 : index
    %c0_145 = arith.constant 0 : index
    %592 = vector.load %arg1[%c0_143, %c0_144, %c0_145] : memref<2x8x8xf32, #tpu.memory_space<vmem>>, vector<1x8x8xf32>
    %593 = vector.shape_cast %592 : vector<1x8x8xf32> to vector<8x8xf32>
    %594 = vector.extract_strided_slice %591 {offsets = [0, 0], sizes = [8, 32], strides = [1, 1]} : vector<16x32xf32> to vector<8x32xf32>
    %cst_146 = arith.constant dense<0.000000e+00> : vector<8x32xf32>
    %595 = tpu.matmul %593, %594, %cst_146 {dimension_numbers = #tpu.dot_dimension_numbers<[1], [0], [0], [1], [0, 0, 1, 1], [], []>} : vector<8x8xf32>, vector<8x32xf32>, vector<8x32xf32> -> vector<8x32xf32>
    %cst_147 = arith.constant 0.000000e+00 : f32
    %596 = vector.broadcast %cst_147 : f32 to vector<8x32xf32>
    %597 = arith.maximumf %595, %596 : vector<8x32xf32>
    %c1 = arith.constant 1 : index
    %c0_148 = arith.constant 0 : index
    %c0_149 = arith.constant 0 : index
    %598 = vector.load %arg1[%c1, %c0_148, %c0_149] : memref<2x8x8xf32, #tpu.memory_space<vmem>>, vector<1x8x8xf32>
    %599 = vector.shape_cast %598 : vector<1x8x8xf32> to vector<8x8xf32>
    %600 = vector.extract_strided_slice %591 {offsets = [8, 0], sizes = [8, 32], strides = [1, 1]} : vector<16x32xf32> to vector<8x32xf32>
    %cst_150 = arith.constant dense<0.000000e+00> : vector<8x32xf32>
    %601 = tpu.matmul %599, %600, %cst_150 {dimension_numbers = #tpu.dot_dimension_numbers<[1], [0], [0], [1], [0, 0, 1, 1], [], []>} : vector<8x8xf32>, vector<8x32xf32>, vector<8x32xf32> -> vector<8x32xf32>
    %cst_151 = arith.constant 0.000000e+00 : f32
    %602 = vector.broadcast %cst_151 : f32 to vector<8x32xf32>
    %603 = arith.maximumf %601, %602 : vector<8x32xf32>
    %604 = tpu.concatenate %597, %603 in 0 : vector<8x32xf32>, vector<8x32xf32> -> vector<16x32xf32>
    %cst_152 = arith.constant dense<0.000000e+00> : vector<16x32xf32>
    %605 = tpu.matmul %604, %589, %cst_152 {dimension_numbers = #tpu.dot_dimension_numbers<[1], [0], [0], [1], [0, 0, 1, 1], [], []>} : vector<16x32xf32>, vector<32x32xf32>, vector<16x32xf32> -> vector<16x32xf32>
    %c0_153 = arith.constant 0 : index
    %c0_154 = arith.constant 0 : index
    %c0_155 = arith.constant 0 : index
    %606 = vector.load %arg1[%c0_153, %c0_154, %c0_155] : memref<2x8x8xf32, #tpu.memory_space<vmem>>, vector<1x8x8xf32>
    %607 = vector.shape_cast %606 : vector<1x8x8xf32> to vector<8x8xf32>
    %608 = vector.extract_strided_slice %605 {offsets = [0, 0], sizes = [8, 32], strides = [1, 1]} : vector<16x32xf32> to vector<8x32xf32>
    %cst_156 = arith.constant dense<0.000000e+00> : vector<8x32xf32>
    %609 = tpu.matmul %607, %608, %cst_156 {dimension_numbers = #tpu.dot_dimension_numbers<[1], [0], [0], [1], [0, 0, 1, 1], [], []>} : vector<8x8xf32>, vector<8x32xf32>, vector<8x32xf32> -> vector<8x32xf32>
    %cst_157 = arith.constant dense<0.000000e+00> : vector<8x8xf32>
    %610 = tpu.matmul %609, %609, %cst_157 {dimension_numbers = #tpu.dot_dimension_numbers<[1], [1], [0], [0], [0, 0, 1, 0], [], []>} : vector<8x32xf32>, vector<8x32xf32>, vector<8x8xf32> -> vector<8x8xf32>
    %cst_158 = arith.constant 0.000000e+00 : f32
    %611 = vector.broadcast %cst_158 : f32 to vector<8x8xf32>
    %612 = arith.subf %611, %610 : vector<8x8xf32>
    %613 = math.exp %612 : vector<8x8xf32>
    %cst_159 = arith.constant 1.000000e+00 : f32
    %614 = vector.broadcast %cst_159 : f32 to vector<8x8xf32>
    %615 = arith.addf %614, %613 : vector<8x8xf32>
    %616 = tpu.reciprocal %615 {approx = true} : vector<8x8xf32> -> vector<8x8xf32>
    %c1_160 = arith.constant 1 : index
    %c0_161 = arith.constant 0 : index
    %c0_162 = arith.constant 0 : index
    %617 = vector.load %arg1[%c1_160, %c0_161, %c0_162] : memref<2x8x8xf32, #tpu.memory_space<vmem>>, vector<1x8x8xf32>
    %618 = vector.shape_cast %617 : vector<1x8x8xf32> to vector<8x8xf32>
    %619 = vector.extract_strided_slice %605 {offsets = [8, 0], sizes = [8, 32], strides = [1, 1]} : vector<16x32xf32> to vector<8x32xf32>
    %cst_163 = arith.constant dense<0.000000e+00> : vector<8x32xf32>
    %620 = tpu.matmul %618, %619, %cst_163 {dimension_numbers = #tpu.dot_dimension_numbers<[1], [0], [0], [1], [0, 0, 1, 1], [], []>} : vector<8x8xf32>, vector<8x32xf32>, vector<8x32xf32> -> vector<8x32xf32>
    %cst_164 = arith.constant dense<0.000000e+00> : vector<8x8xf32>
    %621 = tpu.matmul %620, %620, %cst_164 {dimension_numbers = #tpu.dot_dimension_numbers<[1], [1], [0], [0], [0, 0, 1, 0], [], []>} : vector<8x32xf32>, vector<8x32xf32>, vector<8x8xf32> -> vector<8x8xf32>
    %cst_165 = arith.constant 0.000000e+00 : f32
    %622 = vector.broadcast %cst_165 : f32 to vector<8x8xf32>
    %623 = arith.subf %622, %621 : vector<8x8xf32>
    %624 = math.exp %623 : vector<8x8xf32>
    %cst_166 = arith.constant 1.000000e+00 : f32
    %625 = vector.broadcast %cst_166 : f32 to vector<8x8xf32>
    %626 = arith.addf %625, %624 : vector<8x8xf32>
    %627 = tpu.reciprocal %626 {approx = true} : vector<8x8xf32> -> vector<8x8xf32>
    %c0_167 = arith.constant 0 : index
    %c0_168 = arith.constant 0 : index
    %628 = vector.load %arg10[%c0_167, %c0_168] : memref<32x32xf32, #tpu.memory_space<vmem>>, vector<32x32xf32>
    %cst_169 = arith.constant dense<0.000000e+00> : vector<16x32xf32>
    %629 = tpu.matmul %6, %628, %cst_169 {dimension_numbers = #tpu.dot_dimension_numbers<[1], [0], [0], [1], [0, 0, 1, 1], [], []>} : vector<16x32xf32>, vector<32x32xf32>, vector<16x32xf32> -> vector<16x32xf32>
    %630 = vector.extract_strided_slice %629 {offsets = [0, 0], sizes = [8, 32], strides = [1, 1]} : vector<16x32xf32> to vector<8x32xf32>
    %cst_170 = arith.constant dense<0.000000e+00> : vector<8x32xf32>
    %631 = tpu.matmul %616, %630, %cst_170 {dimension_numbers = #tpu.dot_dimension_numbers<[1], [0], [0], [1], [0, 0, 1, 1], [], []>} : vector<8x8xf32>, vector<8x32xf32>, vector<8x32xf32> -> vector<8x32xf32>
    %c0_171 = arith.constant 0 : index
    %c0_172 = arith.constant 0 : index
    %632 = vector.load %arg11[%c0_171, %c0_172] : memref<1x32xf32, #tpu.memory_space<vmem>>, vector<1x32xf32>
    %633 = vector.broadcast %632 : vector<1x32xf32> to vector<8x32xf32>
    %634 = arith.addf %631, %633 : vector<8x32xf32>
    %635 = vector.extract_strided_slice %629 {offsets = [8, 0], sizes = [8, 32], strides = [1, 1]} : vector<16x32xf32> to vector<8x32xf32>
    %cst_173 = arith.constant dense<0.000000e+00> : vector<8x32xf32>
    %636 = tpu.matmul %627, %635, %cst_173 {dimension_numbers = #tpu.dot_dimension_numbers<[1], [0], [0], [1], [0, 0, 1, 1], [], []>} : vector<8x8xf32>, vector<8x32xf32>, vector<8x32xf32> -> vector<8x32xf32>
    %c0_174 = arith.constant 0 : index
    %c0_175 = arith.constant 0 : index
    %637 = vector.load %arg11[%c0_174, %c0_175] : memref<1x32xf32, #tpu.memory_space<vmem>>, vector<1x32xf32>
    %638 = vector.broadcast %637 : vector<1x32xf32> to vector<8x32xf32>
    %639 = arith.addf %636, %638 : vector<8x32xf32>
    %640 = tpu.concatenate %634, %639 in 0 : vector<8x32xf32>, vector<8x32xf32> -> vector<16x32xf32>
    %cst_176 = arith.constant dense<0.000000e+00> : vector<16x32xf32>
    %641 = tpu.matmul %640, %588, %cst_176 {dimension_numbers = #tpu.dot_dimension_numbers<[1], [0], [0], [1], [0, 0, 1, 1], [], []>} : vector<16x32xf32>, vector<32x32xf32>, vector<16x32xf32> -> vector<16x32xf32>
    %c0_177 = arith.constant 0 : index
    %c0_178 = arith.constant 0 : index
    %c0_179 = arith.constant 0 : index
    %642 = vector.load %arg1[%c0_177, %c0_178, %c0_179] : memref<2x8x8xf32, #tpu.memory_space<vmem>>, vector<1x8x8xf32>
    %643 = vector.shape_cast %642 : vector<1x8x8xf32> to vector<8x8xf32>
    %644 = vector.extract_strided_slice %641 {offsets = [0, 0], sizes = [8, 32], strides = [1, 1]} : vector<16x32xf32> to vector<8x32xf32>
    %cst_180 = arith.constant dense<0.000000e+00> : vector<8x32xf32>
    %645 = tpu.matmul %643, %644, %cst_180 {dimension_numbers = #tpu.dot_dimension_numbers<[1], [0], [0], [1], [0, 0, 1, 1], [], []>} : vector<8x8xf32>, vector<8x32xf32>, vector<8x32xf32> -> vector<8x32xf32>
    %cst_181 = arith.constant 0.000000e+00 : f32
    %646 = vector.broadcast %cst_181 : f32 to vector<8x32xf32>
    %647 = arith.maximumf %645, %646 : vector<8x32xf32>
    %c1_182 = arith.constant 1 : index
    %c0_183 = arith.constant 0 : index
    %c0_184 = arith.constant 0 : index
    %648 = vector.load %arg1[%c1_182, %c0_183, %c0_184] : memref<2x8x8xf32, #tpu.memory_space<vmem>>, vector<1x8x8xf32>
    %649 = vector.shape_cast %648 : vector<1x8x8xf32> to vector<8x8xf32>
    %650 = vector.extract_strided_slice %641 {offsets = [8, 0], sizes = [8, 32], strides = [1, 1]} : vector<16x32xf32> to vector<8x32xf32>
    %cst_185 = arith.constant dense<0.000000e+00> : vector<8x32xf32>
    %651 = tpu.matmul %649, %650, %cst_185 {dimension_numbers = #tpu.dot_dimension_numbers<[1], [0], [0], [1], [0, 0, 1, 1], [], []>} : vector<8x8xf32>, vector<8x32xf32>, vector<8x32xf32> -> vector<8x32xf32>
    %cst_186 = arith.constant 0.000000e+00 : f32
    %652 = vector.broadcast %cst_186 : f32 to vector<8x32xf32>
    %653 = arith.maximumf %651, %652 : vector<8x32xf32>
    %654 = tpu.concatenate %647, %653 in 0 : vector<8x32xf32>, vector<8x32xf32> -> vector<16x32xf32>
    %cst_187 = arith.constant dense<0.000000e+00> : vector<16x32xf32>
    %655 = tpu.matmul %654, %590, %cst_187 {dimension_numbers = #tpu.dot_dimension_numbers<[1], [0], [0], [1], [0, 0, 1, 1], [], []>} : vector<16x32xf32>, vector<32x32xf32>, vector<16x32xf32> -> vector<16x32xf32>
    %c0_188 = arith.constant 0 : index
    %c0_189 = arith.constant 0 : index
    %c0_190 = arith.constant 0 : index
    %656 = vector.load %arg1[%c0_188, %c0_189, %c0_190] : memref<2x8x8xf32, #tpu.memory_space<vmem>>, vector<1x8x8xf32>
    %657 = vector.shape_cast %656 : vector<1x8x8xf32> to vector<8x8xf32>
    %658 = vector.extract_strided_slice %655 {offsets = [0, 0], sizes = [8, 32], strides = [1, 1]} : vector<16x32xf32> to vector<8x32xf32>
    %cst_191 = arith.constant dense<0.000000e+00> : vector<8x32xf32>
    %659 = tpu.matmul %657, %658, %cst_191 {dimension_numbers = #tpu.dot_dimension_numbers<[1], [0], [0], [1], [0, 0, 1, 1], [], []>} : vector<8x8xf32>, vector<8x32xf32>, vector<8x32xf32> -> vector<8x32xf32>
    %cst_192 = arith.constant dense<0.000000e+00> : vector<8x8xf32>
    %660 = tpu.matmul %659, %659, %cst_192 {dimension_numbers = #tpu.dot_dimension_numbers<[1], [1], [0], [0], [0, 0, 1, 0], [], []>} : vector<8x32xf32>, vector<8x32xf32>, vector<8x8xf32> -> vector<8x8xf32>
    %cst_193 = arith.constant 0.000000e+00 : f32
    %661 = vector.broadcast %cst_193 : f32 to vector<8x8xf32>
    %662 = arith.subf %661, %660 : vector<8x8xf32>
    %663 = math.exp %662 : vector<8x8xf32>
    %cst_194 = arith.constant 1.000000e+00 : f32
    %664 = vector.broadcast %cst_194 : f32 to vector<8x8xf32>
    %665 = arith.addf %664, %663 : vector<8x8xf32>
    %666 = tpu.reciprocal %665 {approx = true} : vector<8x8xf32> -> vector<8x8xf32>
    %c1_195 = arith.constant 1 : index
    %c0_196 = arith.constant 0 : index
    %c0_197 = arith.constant 0 : index
    %667 = vector.load %arg1[%c1_195, %c0_196, %c0_197] : memref<2x8x8xf32, #tpu.memory_space<vmem>>, vector<1x8x8xf32>
    %668 = vector.shape_cast %667 : vector<1x8x8xf32> to vector<8x8xf32>
    %669 = vector.extract_strided_slice %655 {offsets = [8, 0], sizes = [8, 32], strides = [1, 1]} : vector<16x32xf32> to vector<8x32xf32>
    %cst_198 = arith.constant dense<0.000000e+00> : vector<8x32xf32>
    %670 = tpu.matmul %668, %669, %cst_198 {dimension_numbers = #tpu.dot_dimension_numbers<[1], [0], [0], [1], [0, 0, 1, 1], [], []>} : vector<8x8xf32>, vector<8x32xf32>, vector<8x32xf32> -> vector<8x32xf32>
    %cst_199 = arith.constant dense<0.000000e+00> : vector<8x8xf32>
    %671 = tpu.matmul %670, %670, %cst_199 {dimension_numbers = #tpu.dot_dimension_numbers<[1], [1], [0], [0], [0, 0, 1, 0], [], []>} : vector<8x32xf32>, vector<8x32xf32>, vector<8x8xf32> -> vector<8x8xf32>
    %cst_200 = arith.constant 0.000000e+00 : f32
    %672 = vector.broadcast %cst_200 : f32 to vector<8x8xf32>
    %673 = arith.subf %672, %671 : vector<8x8xf32>
    %674 = math.exp %673 : vector<8x8xf32>
    %cst_201 = arith.constant 1.000000e+00 : f32
    %675 = vector.broadcast %cst_201 : f32 to vector<8x8xf32>
    %676 = arith.addf %675, %674 : vector<8x8xf32>
    %677 = tpu.reciprocal %676 {approx = true} : vector<8x8xf32> -> vector<8x8xf32>
    %c0_202 = arith.constant 0 : index
    %c0_203 = arith.constant 0 : index
    %678 = vector.load %arg14[%c0_202, %c0_203] : memref<32x32xf32, #tpu.memory_space<vmem>>, vector<32x32xf32>
    %cst_204 = arith.constant dense<0.000000e+00> : vector<16x32xf32>
    %679 = tpu.matmul %640, %678, %cst_204 {dimension_numbers = #tpu.dot_dimension_numbers<[1], [0], [0], [1], [0, 0, 1, 1], [], []>} : vector<16x32xf32>, vector<32x32xf32>, vector<16x32xf32> -> vector<16x32xf32>
    %c0_205 = arith.constant 0 : index
    %c0_206 = arith.constant 0 : index
    %680 = vector.load %arg12[%c0_205, %c0_206] : memref<32x32xf32, #tpu.memory_space<vmem>>, vector<32x32xf32>
    %cst_207 = arith.constant dense<0.000000e+00> : vector<16x32xf32>
    %681 = tpu.matmul %640, %680, %cst_207 {dimension_numbers = #tpu.dot_dimension_numbers<[1], [0], [0], [1], [0, 0, 1, 1], [], []>} : vector<16x32xf32>, vector<32x32xf32>, vector<16x32xf32> -> vector<16x32xf32>
    %c0_208 = arith.constant 0 : index
    %c0_209 = arith.constant 0 : index
    %682 = vector.load %arg13[%c0_208, %c0_209] : memref<1x32xf32, #tpu.memory_space<vmem>>, vector<1x32xf32>
    %683 = vector.broadcast %682 : vector<1x32xf32> to vector<16x32xf32>
    %684 = arith.addf %681, %683 : vector<16x32xf32>
    %685 = vector.extract_strided_slice %679 {offsets = [0, 0], sizes = [8, 32], strides = [1, 1]} : vector<16x32xf32> to vector<8x32xf32>
    %686 = vector.extract_strided_slice %684 {offsets = [0, 0], sizes = [8, 32], strides = [1, 1]} : vector<16x32xf32> to vector<8x32xf32>
    %cst_210 = arith.constant dense<0.000000e+00> : vector<8x8xf32>
    %687 = tpu.matmul %685, %685, %cst_210 {dimension_numbers = #tpu.dot_dimension_numbers<[1], [1], [0], [0], [0, 0, 1, 0], [], []>} : vector<8x32xf32>, vector<8x32xf32>, vector<8x8xf32> -> vector<8x8xf32>
    %cst_211 = arith.constant 0.176776692 : f32
    %688 = vector.broadcast %cst_211 : f32 to vector<8x8xf32>
    %689 = arith.mulf %687, %688 : vector<8x8xf32>
    %cst_212 = arith.constant 0.000000e+00 : f32
    %690 = vector.broadcast %cst_212 : f32 to vector<8x8xf32>
    %691 = arith.cmpf ogt, %689, %690 : vector<8x8xf32>
    %cst_213 = arith.constant 1.000000e-01 : f32
    %692 = vector.broadcast %cst_213 : f32 to vector<8x8xf32>
    %693 = arith.mulf %692, %689 : vector<8x8xf32>
    %694 = arith.select %691, %689, %693 : vector<8x8xi1>, vector<8x8xf32>
    %cst_214 = arith.constant 0.000000e+00 : f32
    %695 = vector.broadcast %cst_214 : f32 to vector<8x8xf32>
    %696 = arith.cmpf ogt, %666, %695 : vector<8x8xf32>
    %cst_215 = arith.constant -1.000000e+09 : f32
    %697 = vector.broadcast %cst_215 : f32 to vector<8x8xf32>
    %698 = arith.select %696, %694, %697 : vector<8x8xi1>, vector<8x8xf32>
    %cst_216 = arith.constant dense<0xFF800000> : vector<8xf32>
    %699 = vector.multi_reduction <maximumf>, %698, %cst_216 [1] : vector<8x8xf32> to vector<8xf32>
    %700 = vector.shape_cast %699 : vector<8xf32> to vector<8x1xf32>
    %701 = vector.broadcast %700 : vector<8x1xf32> to vector<8x8xf32>
    %702 = arith.subf %698, %701 : vector<8x8xf32>
    %703 = math.exp %702 : vector<8x8xf32>
    %cst_217 = arith.constant dense<0.000000e+00> : vector<8xf32>
    %704 = vector.multi_reduction <add>, %703, %cst_217 [1] : vector<8x8xf32> to vector<8xf32>
    %705 = vector.shape_cast %704 : vector<8xf32> to vector<8x1xf32>
    %706 = tpu.reciprocal %705 {approx = true} : vector<8x1xf32> -> vector<8x1xf32>
    %707 = vector.broadcast %706 : vector<8x1xf32> to vector<8x8xf32>
    %708 = arith.mulf %703, %707 : vector<8x8xf32>
    %cst_218 = arith.constant dense<0.000000e+00> : vector<8x32xf32>
    %709 = tpu.matmul %708, %686, %cst_218 {dimension_numbers = #tpu.dot_dimension_numbers<[1], [0], [0], [1], [0, 0, 1, 1], [], []>} : vector<8x8xf32>, vector<8x32xf32>, vector<8x32xf32> -> vector<8x32xf32>
    %c0_219 = arith.constant 0 : index
    %c0_220 = arith.constant 0 : index
    %710 = vector.load %arg15[%c0_219, %c0_220] : memref<32x32xf32, #tpu.memory_space<vmem>>, vector<32x32xf32>
    %cst_221 = arith.constant dense<0.000000e+00> : vector<8x32xf32>
    %711 = tpu.matmul %709, %710, %cst_221 {dimension_numbers = #tpu.dot_dimension_numbers<[1], [0], [0], [1], [0, 0, 1, 1], [], []>} : vector<8x32xf32>, vector<32x32xf32>, vector<8x32xf32> -> vector<8x32xf32>
    %cst_222 = arith.constant dense<0.000000e+00> : vector<8x8xf32>
    %712 = tpu.matmul %685, %711, %cst_222 {dimension_numbers = #tpu.dot_dimension_numbers<[1], [1], [0], [0], [0, 0, 1, 0], [], []>} : vector<8x32xf32>, vector<8x32xf32>, vector<8x8xf32> -> vector<8x8xf32>
    %cst_223 = arith.constant 0.176776692 : f32
    %713 = vector.broadcast %cst_223 : f32 to vector<8x8xf32>
    %714 = arith.mulf %712, %713 : vector<8x8xf32>
    %cst_224 = arith.constant 0.000000e+00 : f32
    %715 = vector.broadcast %cst_224 : f32 to vector<8x8xf32>
    %716 = arith.cmpf ogt, %714, %715 : vector<8x8xf32>
    %cst_225 = arith.constant 1.000000e-01 : f32
    %717 = vector.broadcast %cst_225 : f32 to vector<8x8xf32>
    %718 = arith.mulf %717, %714 : vector<8x8xf32>
    %719 = arith.select %716, %714, %718 : vector<8x8xi1>, vector<8x8xf32>
    %cst_226 = arith.constant 0.000000e+00 : f32
    %720 = vector.broadcast %cst_226 : f32 to vector<8x8xf32>
    %721 = arith.cmpf ogt, %666, %720 : vector<8x8xf32>
    %cst_227 = arith.constant -1.000000e+09 : f32
    %722 = vector.broadcast %cst_227 : f32 to vector<8x8xf32>
    %723 = arith.select %721, %719, %722 : vector<8x8xi1>, vector<8x8xf32>
    %cst_228 = arith.constant dense<0xFF800000> : vector<8xf32>
    %724 = vector.multi_reduction <maximumf>, %723, %cst_228 [1] : vector<8x8xf32> to vector<8xf32>
    %725 = vector.shape_cast %724 : vector<8xf32> to vector<8x1xf32>
    %726 = vector.broadcast %725 : vector<8x1xf32> to vector<8x8xf32>
    %727 = arith.subf %723, %726 : vector<8x8xf32>
    %728 = math.exp %727 : vector<8x8xf32>
    %cst_229 = arith.constant dense<0.000000e+00> : vector<8xf32>
    %729 = vector.multi_reduction <add>, %728, %cst_229 [1] : vector<8x8xf32> to vector<8xf32>
    %730 = vector.shape_cast %729 : vector<8xf32> to vector<8x1xf32>
    %731 = tpu.reciprocal %730 {approx = true} : vector<8x1xf32> -> vector<8x1xf32>
    %732 = vector.broadcast %731 : vector<8x1xf32> to vector<8x8xf32>
    %733 = arith.mulf %728, %732 : vector<8x8xf32>
    %cst_230 = arith.constant dense<0.000000e+00> : vector<8x32xf32>
    %734 = tpu.matmul %733, %709, %cst_230 {dimension_numbers = #tpu.dot_dimension_numbers<[1], [0], [0], [1], [0, 0, 1, 1], [], []>} : vector<8x8xf32>, vector<8x32xf32>, vector<8x32xf32> -> vector<8x32xf32>
    %cst_231 = arith.constant 0.000000e+00 : f32
    %735 = vector.broadcast %cst_231 : f32 to vector<8x32xf32>
    %736 = arith.cmpf ogt, %734, %735 : vector<8x32xf32>
    %cst_232 = arith.constant 0.000000e+00 : f32
    %737 = vector.broadcast %cst_232 : f32 to vector<8x32xf32>
    %738 = arith.minimumf %734, %737 : vector<8x32xf32>
    %739 = math.exp %738 : vector<8x32xf32>
    %cst_233 = arith.constant 1.000000e+00 : f32
    %740 = vector.broadcast %cst_233 : f32 to vector<8x32xf32>
    %741 = arith.subf %739, %740 : vector<8x32xf32>
    %742 = arith.select %736, %734, %741 : vector<8x32xi1>, vector<8x32xf32>
    %743 = vector.extract_strided_slice %679 {offsets = [8, 0], sizes = [8, 32], strides = [1, 1]} : vector<16x32xf32> to vector<8x32xf32>
    %744 = vector.extract_strided_slice %684 {offsets = [8, 0], sizes = [8, 32], strides = [1, 1]} : vector<16x32xf32> to vector<8x32xf32>
    %cst_234 = arith.constant dense<0.000000e+00> : vector<8x8xf32>
    %745 = tpu.matmul %743, %743, %cst_234 {dimension_numbers = #tpu.dot_dimension_numbers<[1], [1], [0], [0], [0, 0, 1, 0], [], []>} : vector<8x32xf32>, vector<8x32xf32>, vector<8x8xf32> -> vector<8x8xf32>
    %cst_235 = arith.constant 0.176776692 : f32
    %746 = vector.broadcast %cst_235 : f32 to vector<8x8xf32>
    %747 = arith.mulf %745, %746 : vector<8x8xf32>
    %cst_236 = arith.constant 0.000000e+00 : f32
    %748 = vector.broadcast %cst_236 : f32 to vector<8x8xf32>
    %749 = arith.cmpf ogt, %747, %748 : vector<8x8xf32>
    %cst_237 = arith.constant 1.000000e-01 : f32
    %750 = vector.broadcast %cst_237 : f32 to vector<8x8xf32>
    %751 = arith.mulf %750, %747 : vector<8x8xf32>
    %752 = arith.select %749, %747, %751 : vector<8x8xi1>, vector<8x8xf32>
    %cst_238 = arith.constant 0.000000e+00 : f32
    %753 = vector.broadcast %cst_238 : f32 to vector<8x8xf32>
    %754 = arith.cmpf ogt, %677, %753 : vector<8x8xf32>
    %cst_239 = arith.constant -1.000000e+09 : f32
    %755 = vector.broadcast %cst_239 : f32 to vector<8x8xf32>
    %756 = arith.select %754, %752, %755 : vector<8x8xi1>, vector<8x8xf32>
    %cst_240 = arith.constant dense<0xFF800000> : vector<8xf32>
    %757 = vector.multi_reduction <maximumf>, %756, %cst_240 [1] : vector<8x8xf32> to vector<8xf32>
    %758 = vector.shape_cast %757 : vector<8xf32> to vector<8x1xf32>
    %759 = vector.broadcast %758 : vector<8x1xf32> to vector<8x8xf32>
    %760 = arith.subf %756, %759 : vector<8x8xf32>
    %761 = math.exp %760 : vector<8x8xf32>
    %cst_241 = arith.constant dense<0.000000e+00> : vector<8xf32>
    %762 = vector.multi_reduction <add>, %761, %cst_241 [1] : vector<8x8xf32> to vector<8xf32>
    %763 = vector.shape_cast %762 : vector<8xf32> to vector<8x1xf32>
    %764 = tpu.reciprocal %763 {approx = true} : vector<8x1xf32> -> vector<8x1xf32>
    %765 = vector.broadcast %764 : vector<8x1xf32> to vector<8x8xf32>
    %766 = arith.mulf %761, %765 : vector<8x8xf32>
    %cst_242 = arith.constant dense<0.000000e+00> : vector<8x32xf32>
    %767 = tpu.matmul %766, %744, %cst_242 {dimension_numbers = #tpu.dot_dimension_numbers<[1], [0], [0], [1], [0, 0, 1, 1], [], []>} : vector<8x8xf32>, vector<8x32xf32>, vector<8x32xf32> -> vector<8x32xf32>
    %c0_243 = arith.constant 0 : index
    %c0_244 = arith.constant 0 : index
    %768 = vector.load %arg15[%c0_243, %c0_244] : memref<32x32xf32, #tpu.memory_space<vmem>>, vector<32x32xf32>
    %cst_245 = arith.constant dense<0.000000e+00> : vector<8x32xf32>
    %769 = tpu.matmul %767, %768, %cst_245 {dimension_numbers = #tpu.dot_dimension_numbers<[1], [0], [0], [1], [0, 0, 1, 1], [], []>} : vector<8x32xf32>, vector<32x32xf32>, vector<8x32xf32> -> vector<8x32xf32>
    %cst_246 = arith.constant dense<0.000000e+00> : vector<8x8xf32>
    %770 = tpu.matmul %743, %769, %cst_246 {dimension_numbers = #tpu.dot_dimension_numbers<[1], [1], [0], [0], [0, 0, 1, 0], [], []>} : vector<8x32xf32>, vector<8x32xf32>, vector<8x8xf32> -> vector<8x8xf32>
    %cst_247 = arith.constant 0.176776692 : f32
    %771 = vector.broadcast %cst_247 : f32 to vector<8x8xf32>
    %772 = arith.mulf %770, %771 : vector<8x8xf32>
    %cst_248 = arith.constant 0.000000e+00 : f32
    %773 = vector.broadcast %cst_248 : f32 to vector<8x8xf32>
    %774 = arith.cmpf ogt, %772, %773 : vector<8x8xf32>
    %cst_249 = arith.constant 1.000000e-01 : f32
    %775 = vector.broadcast %cst_249 : f32 to vector<8x8xf32>
    %776 = arith.mulf %775, %772 : vector<8x8xf32>
    %777 = arith.select %774, %772, %776 : vector<8x8xi1>, vector<8x8xf32>
    %cst_250 = arith.constant 0.000000e+00 : f32
    %778 = vector.broadcast %cst_250 : f32 to vector<8x8xf32>
    %779 = arith.cmpf ogt, %677, %778 : vector<8x8xf32>
    %cst_251 = arith.constant -1.000000e+09 : f32
    %780 = vector.broadcast %cst_251 : f32 to vector<8x8xf32>
    %781 = arith.select %779, %777, %780 : vector<8x8xi1>, vector<8x8xf32>
    %cst_252 = arith.constant dense<0xFF800000> : vector<8xf32>
    %782 = vector.multi_reduction <maximumf>, %781, %cst_252 [1] : vector<8x8xf32> to vector<8xf32>
    %783 = vector.shape_cast %782 : vector<8xf32> to vector<8x1xf32>
    %784 = vector.broadcast %783 : vector<8x1xf32> to vector<8x8xf32>
    %785 = arith.subf %781, %784 : vector<8x8xf32>
    %786 = math.exp %785 : vector<8x8xf32>
    %cst_253 = arith.constant dense<0.000000e+00> : vector<8xf32>
    %787 = vector.multi_reduction <add>, %786, %cst_253 [1] : vector<8x8xf32> to vector<8xf32>
    %788 = vector.shape_cast %787 : vector<8xf32> to vector<8x1xf32>
    %789 = tpu.reciprocal %788 {approx = true} : vector<8x1xf32> -> vector<8x1xf32>
    %790 = vector.broadcast %789 : vector<8x1xf32> to vector<8x8xf32>
    %791 = arith.mulf %786, %790 : vector<8x8xf32>
    %cst_254 = arith.constant dense<0.000000e+00> : vector<8x32xf32>
    %792 = tpu.matmul %791, %767, %cst_254 {dimension_numbers = #tpu.dot_dimension_numbers<[1], [0], [0], [1], [0, 0, 1, 1], [], []>} : vector<8x8xf32>, vector<8x32xf32>, vector<8x32xf32> -> vector<8x32xf32>
    %cst_255 = arith.constant 0.000000e+00 : f32
    %793 = vector.broadcast %cst_255 : f32 to vector<8x32xf32>
    %794 = arith.cmpf ogt, %792, %793 : vector<8x32xf32>
    %cst_256 = arith.constant 0.000000e+00 : f32
    %795 = vector.broadcast %cst_256 : f32 to vector<8x32xf32>
    %796 = arith.minimumf %792, %795 : vector<8x32xf32>
    %797 = math.exp %796 : vector<8x32xf32>
    %cst_257 = arith.constant 1.000000e+00 : f32
    %798 = vector.broadcast %cst_257 : f32 to vector<8x32xf32>
    %799 = arith.subf %797, %798 : vector<8x32xf32>
    %800 = arith.select %794, %792, %799 : vector<8x32xi1>, vector<8x32xf32>
    %801 = tpu.concatenate %742, %800 in 0 : vector<8x32xf32>, vector<8x32xf32> -> vector<16x32xf32>
    %c0_258 = arith.constant 0 : index
    %c0_259 = arith.constant 0 : index
    %802 = vector.load %arg5[%c0_258, %c0_259] : memref<32x128xf32, #tpu.memory_space<vmem>>, vector<32x128xf32>
    %cst_260 = arith.constant dense<0.000000e+00> : vector<16x128xf32>
    %803 = tpu.matmul %801, %802, %cst_260 {dimension_numbers = #tpu.dot_dimension_numbers<[1], [0], [0], [1], [0, 0, 1, 1], [], []>} : vector<16x32xf32>, vector<32x128xf32>, vector<16x128xf32> -> vector<16x128xf32>
    %804 = vector.extract_strided_slice %803 {offsets = [0, 0], sizes = [8, 128], strides = [1, 1]} : vector<16x128xf32> to vector<8x128xf32>
    %805 = vector.extract_strided_slice %804 {offsets = [0, 0], sizes = [8, 32], strides = [1, 1]} : vector<8x128xf32> to vector<8x32xf32>
    %806 = vector.extract_strided_slice %804 {offsets = [0, 32], sizes = [8, 32], strides = [1, 1]} : vector<8x128xf32> to vector<8x32xf32>
    %807 = vector.extract_strided_slice %804 {offsets = [0, 64], sizes = [8, 32], strides = [1, 1]} : vector<8x128xf32> to vector<8x32xf32>
    %808 = vector.extract_strided_slice %804 {offsets = [0, 96], sizes = [8, 32], strides = [1, 1]} : vector<8x128xf32> to vector<8x32xf32>
    %cst_261 = arith.constant 0.000000e+00 : f32
    %809 = vector.broadcast %cst_261 : f32 to vector<8x4xf32>
    %cst_262 = arith.constant dense<0xFF800000> : vector<8xf32>
    %810 = vector.multi_reduction <maximumf>, %809, %cst_262 [1] : vector<8x4xf32> to vector<8xf32>
    %811 = vector.shape_cast %810 : vector<8xf32> to vector<8x1xf32>
    %812 = vector.broadcast %811 : vector<8x1xf32> to vector<8x4xf32>
    %813 = arith.subf %809, %812 : vector<8x4xf32>
    %814 = math.exp %813 : vector<8x4xf32>
    %cst_263 = arith.constant dense<0.000000e+00> : vector<8xf32>
    %815 = vector.multi_reduction <add>, %814, %cst_263 [1] : vector<8x4xf32> to vector<8xf32>
    %816 = vector.shape_cast %815 : vector<8xf32> to vector<8x1xf32>
    %817 = tpu.reciprocal %816 {approx = true} : vector<8x1xf32> -> vector<8x1xf32>
    %818 = vector.broadcast %817 : vector<8x1xf32> to vector<8x4xf32>
    %819 = arith.mulf %814, %818 : vector<8x4xf32>
    %820 = vector.extract_strided_slice %819 {offsets = [0, 0], sizes = [8, 1], strides = [1, 1]} : vector<8x4xf32> to vector<8x1xf32>
    %821 = vector.broadcast %820 : vector<8x1xf32> to vector<8x32xf32>
    %822 = arith.mulf %821, %805 : vector<8x32xf32>
    %cst_264 = arith.constant dense<0.000000e+00> : vector<32xf32>
    %823 = vector.multi_reduction <add>, %822, %cst_264 [0] : vector<8x32xf32> to vector<32xf32>
    %824 = vector.shape_cast %823 : vector<32xf32> to vector<1x32xf32>
    %825 = vector.extract_strided_slice %819 {offsets = [0, 1], sizes = [8, 1], strides = [1, 1]} : vector<8x4xf32> to vector<8x1xf32>
    %826 = vector.broadcast %825 : vector<8x1xf32> to vector<8x32xf32>
    %827 = arith.mulf %826, %806 : vector<8x32xf32>
    %cst_265 = arith.constant dense<0.000000e+00> : vector<32xf32>
    %828 = vector.multi_reduction <add>, %827, %cst_265 [0] : vector<8x32xf32> to vector<32xf32>
    %829 = vector.shape_cast %828 : vector<32xf32> to vector<1x32xf32>
    %830 = vector.extract_strided_slice %819 {offsets = [0, 2], sizes = [8, 1], strides = [1, 1]} : vector<8x4xf32> to vector<8x1xf32>
    %831 = vector.broadcast %830 : vector<8x1xf32> to vector<8x32xf32>
    %832 = arith.mulf %831, %807 : vector<8x32xf32>
    %cst_266 = arith.constant dense<0.000000e+00> : vector<32xf32>
    %833 = vector.multi_reduction <add>, %832, %cst_266 [0] : vector<8x32xf32> to vector<32xf32>
    %834 = vector.shape_cast %833 : vector<32xf32> to vector<1x32xf32>
    %835 = vector.extract_strided_slice %819 {offsets = [0, 3], sizes = [8, 1], strides = [1, 1]} : vector<8x4xf32> to vector<8x1xf32>
    %836 = vector.broadcast %835 : vector<8x1xf32> to vector<8x32xf32>
    %837 = arith.mulf %836, %808 : vector<8x32xf32>
    %cst_267 = arith.constant dense<0.000000e+00> : vector<32xf32>
    %838 = vector.multi_reduction <add>, %837, %cst_267 [0] : vector<8x32xf32> to vector<32xf32>
    %839 = vector.shape_cast %838 : vector<32xf32> to vector<1x32xf32>
    %840 = arith.mulf %824, %824 : vector<1x32xf32>
    %cst_268 = arith.constant dense<0.000000e+00> : vector<1xf32>
    %841 = vector.multi_reduction <add>, %840, %cst_268 [1] : vector<1x32xf32> to vector<1xf32>
    %842 = vector.shape_cast %841 : vector<1xf32> to vector<1x1xf32>
    %cst_269 = arith.constant 1.000000e+00 : f32
    %843 = vector.broadcast %cst_269 : f32 to vector<1x1xf32>
    %844 = arith.addf %843, %842 : vector<1x1xf32>
    %845 = tpu.reciprocal %844 {approx = true} : vector<1x1xf32> -> vector<1x1xf32>
    %846 = arith.mulf %842, %845 : vector<1x1xf32>
    %cst_270 = arith.constant 9.99999993E-9 : f32
    %847 = vector.broadcast %cst_270 : f32 to vector<1x1xf32>
    %848 = arith.addf %842, %847 : vector<1x1xf32>
    %849 = math.rsqrt %848 : vector<1x1xf32>
    %850 = arith.mulf %846, %849 : vector<1x1xf32>
    %851 = vector.broadcast %850 : vector<1x1xf32> to vector<1x32xf32>
    %852 = arith.mulf %851, %824 : vector<1x32xf32>
    %853 = arith.mulf %829, %829 : vector<1x32xf32>
    %cst_271 = arith.constant dense<0.000000e+00> : vector<1xf32>
    %854 = vector.multi_reduction <add>, %853, %cst_271 [1] : vector<1x32xf32> to vector<1xf32>
    %855 = vector.shape_cast %854 : vector<1xf32> to vector<1x1xf32>
    %cst_272 = arith.constant 1.000000e+00 : f32
    %856 = vector.broadcast %cst_272 : f32 to vector<1x1xf32>
    %857 = arith.addf %856, %855 : vector<1x1xf32>
    %858 = tpu.reciprocal %857 {approx = true} : vector<1x1xf32> -> vector<1x1xf32>
    %859 = arith.mulf %855, %858 : vector<1x1xf32>
    %cst_273 = arith.constant 9.99999993E-9 : f32
    %860 = vector.broadcast %cst_273 : f32 to vector<1x1xf32>
    %861 = arith.addf %855, %860 : vector<1x1xf32>
    %862 = math.rsqrt %861 : vector<1x1xf32>
    %863 = arith.mulf %859, %862 : vector<1x1xf32>
    %864 = vector.broadcast %863 : vector<1x1xf32> to vector<1x32xf32>
    %865 = arith.mulf %864, %829 : vector<1x32xf32>
    %866 = arith.mulf %834, %834 : vector<1x32xf32>
    %cst_274 = arith.constant dense<0.000000e+00> : vector<1xf32>
    %867 = vector.multi_reduction <add>, %866, %cst_274 [1] : vector<1x32xf32> to vector<1xf32>
    %868 = vector.shape_cast %867 : vector<1xf32> to vector<1x1xf32>
    %cst_275 = arith.constant 1.000000e+00 : f32
    %869 = vector.broadcast %cst_275 : f32 to vector<1x1xf32>
    %870 = arith.addf %869, %868 : vector<1x1xf32>
    %871 = tpu.reciprocal %870 {approx = true} : vector<1x1xf32> -> vector<1x1xf32>
    %872 = arith.mulf %868, %871 : vector<1x1xf32>
    %cst_276 = arith.constant 9.99999993E-9 : f32
    %873 = vector.broadcast %cst_276 : f32 to vector<1x1xf32>
    %874 = arith.addf %868, %873 : vector<1x1xf32>
    %875 = math.rsqrt %874 : vector<1x1xf32>
    %876 = arith.mulf %872, %875 : vector<1x1xf32>
    %877 = vector.broadcast %876 : vector<1x1xf32> to vector<1x32xf32>
    %878 = arith.mulf %877, %834 : vector<1x32xf32>
    %879 = arith.mulf %839, %839 : vector<1x32xf32>
    %cst_277 = arith.constant dense<0.000000e+00> : vector<1xf32>
    %880 = vector.multi_reduction <add>, %879, %cst_277 [1] : vector<1x32xf32> to vector<1xf32>
    %881 = vector.shape_cast %880 : vector<1xf32> to vector<1x1xf32>
    %cst_278 = arith.constant 1.000000e+00 : f32
    %882 = vector.broadcast %cst_278 : f32 to vector<1x1xf32>
    %883 = arith.addf %882, %881 : vector<1x1xf32>
    %884 = tpu.reciprocal %883 {approx = true} : vector<1x1xf32> -> vector<1x1xf32>
    %885 = arith.mulf %881, %884 : vector<1x1xf32>
    %cst_279 = arith.constant 9.99999993E-9 : f32
    %886 = vector.broadcast %cst_279 : f32 to vector<1x1xf32>
    %887 = arith.addf %881, %886 : vector<1x1xf32>
    %888 = math.rsqrt %887 : vector<1x1xf32>
    %889 = arith.mulf %885, %888 : vector<1x1xf32>
    %890 = vector.broadcast %889 : vector<1x1xf32> to vector<1x32xf32>
    %891 = arith.mulf %890, %839 : vector<1x32xf32>
    %892 = vector.broadcast %852 : vector<1x32xf32> to vector<8x32xf32>
    %893 = arith.mulf %805, %892 : vector<8x32xf32>
    %cst_280 = arith.constant dense<0.000000e+00> : vector<8xf32>
    %894 = vector.multi_reduction <add>, %893, %cst_280 [1] : vector<8x32xf32> to vector<8xf32>
    %895 = vector.shape_cast %894 : vector<8xf32> to vector<8x1xf32>
    %896 = vector.broadcast %865 : vector<1x32xf32> to vector<8x32xf32>
    %897 = arith.mulf %806, %896 : vector<8x32xf32>
    %cst_281 = arith.constant dense<0.000000e+00> : vector<8xf32>
    %898 = vector.multi_reduction <add>, %897, %cst_281 [1] : vector<8x32xf32> to vector<8xf32>
    %899 = vector.shape_cast %898 : vector<8xf32> to vector<8x1xf32>
    %900 = vector.broadcast %878 : vector<1x32xf32> to vector<8x32xf32>
    %901 = arith.mulf %807, %900 : vector<8x32xf32>
    %cst_282 = arith.constant dense<0.000000e+00> : vector<8xf32>
    %902 = vector.multi_reduction <add>, %901, %cst_282 [1] : vector<8x32xf32> to vector<8xf32>
    %903 = vector.shape_cast %902 : vector<8xf32> to vector<8x1xf32>
    %904 = vector.broadcast %891 : vector<1x32xf32> to vector<8x32xf32>
    %905 = arith.mulf %808, %904 : vector<8x32xf32>
    %cst_283 = arith.constant dense<0.000000e+00> : vector<8xf32>
    %906 = vector.multi_reduction <add>, %905, %cst_283 [1] : vector<8x32xf32> to vector<8xf32>
    %907 = vector.shape_cast %906 : vector<8xf32> to vector<8x1xf32>
    %908 = tpu.concatenate %895, %899, %903, %907 in 1 : vector<8x1xf32>, vector<8x1xf32>, vector<8x1xf32>, vector<8x1xf32> -> vector<8x4xf32>
    %909 = arith.addf %809, %908 : vector<8x4xf32>
    %cst_284 = arith.constant dense<0xFF800000> : vector<8xf32>
    %910 = vector.multi_reduction <maximumf>, %909, %cst_284 [1] : vector<8x4xf32> to vector<8xf32>
    %911 = vector.shape_cast %910 : vector<8xf32> to vector<8x1xf32>
    %912 = vector.broadcast %911 : vector<8x1xf32> to vector<8x4xf32>
    %913 = arith.subf %909, %912 : vector<8x4xf32>
    %914 = math.exp %913 : vector<8x4xf32>
    %cst_285 = arith.constant dense<0.000000e+00> : vector<8xf32>
    %915 = vector.multi_reduction <add>, %914, %cst_285 [1] : vector<8x4xf32> to vector<8xf32>
    %916 = vector.shape_cast %915 : vector<8xf32> to vector<8x1xf32>
    %917 = tpu.reciprocal %916 {approx = true} : vector<8x1xf32> -> vector<8x1xf32>
    %918 = vector.broadcast %917 : vector<8x1xf32> to vector<8x4xf32>
    %919 = arith.mulf %914, %918 : vector<8x4xf32>
    %920 = vector.extract_strided_slice %919 {offsets = [0, 0], sizes = [8, 1], strides = [1, 1]} : vector<8x4xf32> to vector<8x1xf32>
    %921 = vector.broadcast %920 : vector<8x1xf32> to vector<8x32xf32>
    %922 = arith.mulf %921, %805 : vector<8x32xf32>
    %cst_286 = arith.constant dense<0.000000e+00> : vector<32xf32>
    %923 = vector.multi_reduction <add>, %922, %cst_286 [0] : vector<8x32xf32> to vector<32xf32>
    %924 = vector.shape_cast %923 : vector<32xf32> to vector<1x32xf32>
    %925 = vector.extract_strided_slice %919 {offsets = [0, 1], sizes = [8, 1], strides = [1, 1]} : vector<8x4xf32> to vector<8x1xf32>
    %926 = vector.broadcast %925 : vector<8x1xf32> to vector<8x32xf32>
    %927 = arith.mulf %926, %806 : vector<8x32xf32>
    %cst_287 = arith.constant dense<0.000000e+00> : vector<32xf32>
    %928 = vector.multi_reduction <add>, %927, %cst_287 [0] : vector<8x32xf32> to vector<32xf32>
    %929 = vector.shape_cast %928 : vector<32xf32> to vector<1x32xf32>
    %930 = vector.extract_strided_slice %919 {offsets = [0, 2], sizes = [8, 1], strides = [1, 1]} : vector<8x4xf32> to vector<8x1xf32>
    %931 = vector.broadcast %930 : vector<8x1xf32> to vector<8x32xf32>
    %932 = arith.mulf %931, %807 : vector<8x32xf32>
    %cst_288 = arith.constant dense<0.000000e+00> : vector<32xf32>
    %933 = vector.multi_reduction <add>, %932, %cst_288 [0] : vector<8x32xf32> to vector<32xf32>
    %934 = vector.shape_cast %933 : vector<32xf32> to vector<1x32xf32>
    %935 = vector.extract_strided_slice %919 {offsets = [0, 3], sizes = [8, 1], strides = [1, 1]} : vector<8x4xf32> to vector<8x1xf32>
    %936 = vector.broadcast %935 : vector<8x1xf32> to vector<8x32xf32>
    %937 = arith.mulf %936, %808 : vector<8x32xf32>
    %cst_289 = arith.constant dense<0.000000e+00> : vector<32xf32>
    %938 = vector.multi_reduction <add>, %937, %cst_289 [0] : vector<8x32xf32> to vector<32xf32>
    %939 = vector.shape_cast %938 : vector<32xf32> to vector<1x32xf32>
    %940 = arith.mulf %924, %924 : vector<1x32xf32>
    %cst_290 = arith.constant dense<0.000000e+00> : vector<1xf32>
    %941 = vector.multi_reduction <add>, %940, %cst_290 [1] : vector<1x32xf32> to vector<1xf32>
    %942 = vector.shape_cast %941 : vector<1xf32> to vector<1x1xf32>
    %cst_291 = arith.constant 1.000000e+00 : f32
    %943 = vector.broadcast %cst_291 : f32 to vector<1x1xf32>
    %944 = arith.addf %943, %942 : vector<1x1xf32>
    %945 = tpu.reciprocal %944 {approx = true} : vector<1x1xf32> -> vector<1x1xf32>
    %946 = arith.mulf %942, %945 : vector<1x1xf32>
    %cst_292 = arith.constant 9.99999993E-9 : f32
    %947 = vector.broadcast %cst_292 : f32 to vector<1x1xf32>
    %948 = arith.addf %942, %947 : vector<1x1xf32>
    %949 = math.rsqrt %948 : vector<1x1xf32>
    %950 = arith.mulf %946, %949 : vector<1x1xf32>
    %951 = vector.broadcast %950 : vector<1x1xf32> to vector<1x32xf32>
    %952 = arith.mulf %951, %924 : vector<1x32xf32>
    %953 = arith.mulf %929, %929 : vector<1x32xf32>
    %cst_293 = arith.constant dense<0.000000e+00> : vector<1xf32>
    %954 = vector.multi_reduction <add>, %953, %cst_293 [1] : vector<1x32xf32> to vector<1xf32>
    %955 = vector.shape_cast %954 : vector<1xf32> to vector<1x1xf32>
    %cst_294 = arith.constant 1.000000e+00 : f32
    %956 = vector.broadcast %cst_294 : f32 to vector<1x1xf32>
    %957 = arith.addf %956, %955 : vector<1x1xf32>
    %958 = tpu.reciprocal %957 {approx = true} : vector<1x1xf32> -> vector<1x1xf32>
    %959 = arith.mulf %955, %958 : vector<1x1xf32>
    %cst_295 = arith.constant 9.99999993E-9 : f32
    %960 = vector.broadcast %cst_295 : f32 to vector<1x1xf32>
    %961 = arith.addf %955, %960 : vector<1x1xf32>
    %962 = math.rsqrt %961 : vector<1x1xf32>
    %963 = arith.mulf %959, %962 : vector<1x1xf32>
    %964 = vector.broadcast %963 : vector<1x1xf32> to vector<1x32xf32>
    %965 = arith.mulf %964, %929 : vector<1x32xf32>
    %966 = arith.mulf %934, %934 : vector<1x32xf32>
    %cst_296 = arith.constant dense<0.000000e+00> : vector<1xf32>
    %967 = vector.multi_reduction <add>, %966, %cst_296 [1] : vector<1x32xf32> to vector<1xf32>
    %968 = vector.shape_cast %967 : vector<1xf32> to vector<1x1xf32>
    %cst_297 = arith.constant 1.000000e+00 : f32
    %969 = vector.broadcast %cst_297 : f32 to vector<1x1xf32>
    %970 = arith.addf %969, %968 : vector<1x1xf32>
    %971 = tpu.reciprocal %970 {approx = true} : vector<1x1xf32> -> vector<1x1xf32>
    %972 = arith.mulf %968, %971 : vector<1x1xf32>
    %cst_298 = arith.constant 9.99999993E-9 : f32
    %973 = vector.broadcast %cst_298 : f32 to vector<1x1xf32>
    %974 = arith.addf %968, %973 : vector<1x1xf32>
    %975 = math.rsqrt %974 : vector<1x1xf32>
    %976 = arith.mulf %972, %975 : vector<1x1xf32>
    %977 = vector.broadcast %976 : vector<1x1xf32> to vector<1x32xf32>
    %978 = arith.mulf %977, %934 : vector<1x32xf32>
    %979 = arith.mulf %939, %939 : vector<1x32xf32>
    %cst_299 = arith.constant dense<0.000000e+00> : vector<1xf32>
    %980 = vector.multi_reduction <add>, %979, %cst_299 [1] : vector<1x32xf32> to vector<1xf32>
    %981 = vector.shape_cast %980 : vector<1xf32> to vector<1x1xf32>
    %cst_300 = arith.constant 1.000000e+00 : f32
    %982 = vector.broadcast %cst_300 : f32 to vector<1x1xf32>
    %983 = arith.addf %982, %981 : vector<1x1xf32>
    %984 = tpu.reciprocal %983 {approx = true} : vector<1x1xf32> -> vector<1x1xf32>
    %985 = arith.mulf %981, %984 : vector<1x1xf32>
    %cst_301 = arith.constant 9.99999993E-9 : f32
    %986 = vector.broadcast %cst_301 : f32 to vector<1x1xf32>
    %987 = arith.addf %981, %986 : vector<1x1xf32>
    %988 = math.rsqrt %987 : vector<1x1xf32>
    %989 = arith.mulf %985, %988 : vector<1x1xf32>
    %990 = vector.broadcast %989 : vector<1x1xf32> to vector<1x32xf32>
    %991 = arith.mulf %990, %939 : vector<1x32xf32>
    %992 = vector.broadcast %952 : vector<1x32xf32> to vector<8x32xf32>
    %993 = arith.mulf %805, %992 : vector<8x32xf32>
    %cst_302 = arith.constant dense<0.000000e+00> : vector<8xf32>
    %994 = vector.multi_reduction <add>, %993, %cst_302 [1] : vector<8x32xf32> to vector<8xf32>
    %995 = vector.shape_cast %994 : vector<8xf32> to vector<8x1xf32>
    %996 = vector.broadcast %965 : vector<1x32xf32> to vector<8x32xf32>
    %997 = arith.mulf %806, %996 : vector<8x32xf32>
    %cst_303 = arith.constant dense<0.000000e+00> : vector<8xf32>
    %998 = vector.multi_reduction <add>, %997, %cst_303 [1] : vector<8x32xf32> to vector<8xf32>
    %999 = vector.shape_cast %998 : vector<8xf32> to vector<8x1xf32>
    %1000 = vector.broadcast %978 : vector<1x32xf32> to vector<8x32xf32>
    %1001 = arith.mulf %807, %1000 : vector<8x32xf32>
    %cst_304 = arith.constant dense<0.000000e+00> : vector<8xf32>
    %1002 = vector.multi_reduction <add>, %1001, %cst_304 [1] : vector<8x32xf32> to vector<8xf32>
    %1003 = vector.shape_cast %1002 : vector<8xf32> to vector<8x1xf32>
    %1004 = vector.broadcast %991 : vector<1x32xf32> to vector<8x32xf32>
    %1005 = arith.mulf %808, %1004 : vector<8x32xf32>
    %cst_305 = arith.constant dense<0.000000e+00> : vector<8xf32>
    %1006 = vector.multi_reduction <add>, %1005, %cst_305 [1] : vector<8x32xf32> to vector<8xf32>
    %1007 = vector.shape_cast %1006 : vector<8xf32> to vector<8x1xf32>
    %1008 = tpu.concatenate %995, %999, %1003, %1007 in 1 : vector<8x1xf32>, vector<8x1xf32>, vector<8x1xf32>, vector<8x1xf32> -> vector<8x4xf32>
    %1009 = arith.addf %909, %1008 : vector<8x4xf32>
    %cst_306 = arith.constant dense<0xFF800000> : vector<8xf32>
    %1010 = vector.multi_reduction <maximumf>, %1009, %cst_306 [1] : vector<8x4xf32> to vector<8xf32>
    %1011 = vector.shape_cast %1010 : vector<8xf32> to vector<8x1xf32>
    %1012 = vector.broadcast %1011 : vector<8x1xf32> to vector<8x4xf32>
    %1013 = arith.subf %1009, %1012 : vector<8x4xf32>
    %1014 = math.exp %1013 : vector<8x4xf32>
    %cst_307 = arith.constant dense<0.000000e+00> : vector<8xf32>
    %1015 = vector.multi_reduction <add>, %1014, %cst_307 [1] : vector<8x4xf32> to vector<8xf32>
    %1016 = vector.shape_cast %1015 : vector<8xf32> to vector<8x1xf32>
    %1017 = tpu.reciprocal %1016 {approx = true} : vector<8x1xf32> -> vector<8x1xf32>
    %1018 = vector.broadcast %1017 : vector<8x1xf32> to vector<8x4xf32>
    %1019 = arith.mulf %1014, %1018 : vector<8x4xf32>
    %1020 = vector.extract_strided_slice %1019 {offsets = [0, 0], sizes = [8, 1], strides = [1, 1]} : vector<8x4xf32> to vector<8x1xf32>
    %1021 = vector.broadcast %1020 : vector<8x1xf32> to vector<8x32xf32>
    %1022 = arith.mulf %1021, %805 : vector<8x32xf32>
    %cst_308 = arith.constant dense<0.000000e+00> : vector<32xf32>
    %1023 = vector.multi_reduction <add>, %1022, %cst_308 [0] : vector<8x32xf32> to vector<32xf32>
    %1024 = vector.shape_cast %1023 : vector<32xf32> to vector<1x32xf32>
    %1025 = vector.extract_strided_slice %1019 {offsets = [0, 1], sizes = [8, 1], strides = [1, 1]} : vector<8x4xf32> to vector<8x1xf32>
    %1026 = vector.broadcast %1025 : vector<8x1xf32> to vector<8x32xf32>
    %1027 = arith.mulf %1026, %806 : vector<8x32xf32>
    %cst_309 = arith.constant dense<0.000000e+00> : vector<32xf32>
    %1028 = vector.multi_reduction <add>, %1027, %cst_309 [0] : vector<8x32xf32> to vector<32xf32>
    %1029 = vector.shape_cast %1028 : vector<32xf32> to vector<1x32xf32>
    %1030 = vector.extract_strided_slice %1019 {offsets = [0, 2], sizes = [8, 1], strides = [1, 1]} : vector<8x4xf32> to vector<8x1xf32>
    %1031 = vector.broadcast %1030 : vector<8x1xf32> to vector<8x32xf32>
    %1032 = arith.mulf %1031, %807 : vector<8x32xf32>
    %cst_310 = arith.constant dense<0.000000e+00> : vector<32xf32>
    %1033 = vector.multi_reduction <add>, %1032, %cst_310 [0] : vector<8x32xf32> to vector<32xf32>
    %1034 = vector.shape_cast %1033 : vector<32xf32> to vector<1x32xf32>
    %1035 = vector.extract_strided_slice %1019 {offsets = [0, 3], sizes = [8, 1], strides = [1, 1]} : vector<8x4xf32> to vector<8x1xf32>
    %1036 = vector.broadcast %1035 : vector<8x1xf32> to vector<8x32xf32>
    %1037 = arith.mulf %1036, %808 : vector<8x32xf32>
    %cst_311 = arith.constant dense<0.000000e+00> : vector<32xf32>
    %1038 = vector.multi_reduction <add>, %1037, %cst_311 [0] : vector<8x32xf32> to vector<32xf32>
    %1039 = vector.shape_cast %1038 : vector<32xf32> to vector<1x32xf32>
    %1040 = arith.mulf %1024, %1024 : vector<1x32xf32>
    %cst_312 = arith.constant dense<0.000000e+00> : vector<1xf32>
    %1041 = vector.multi_reduction <add>, %1040, %cst_312 [1] : vector<1x32xf32> to vector<1xf32>
    %1042 = vector.shape_cast %1041 : vector<1xf32> to vector<1x1xf32>
    %cst_313 = arith.constant 1.000000e+00 : f32
    %1043 = vector.broadcast %cst_313 : f32 to vector<1x1xf32>
    %1044 = arith.addf %1043, %1042 : vector<1x1xf32>
    %1045 = tpu.reciprocal %1044 {approx = true} : vector<1x1xf32> -> vector<1x1xf32>
    %1046 = arith.mulf %1042, %1045 : vector<1x1xf32>
    %cst_314 = arith.constant 9.99999993E-9 : f32
    %1047 = vector.broadcast %cst_314 : f32 to vector<1x1xf32>
    %1048 = arith.addf %1042, %1047 : vector<1x1xf32>
    %1049 = math.rsqrt %1048 : vector<1x1xf32>
    %1050 = arith.mulf %1046, %1049 : vector<1x1xf32>
    %1051 = vector.broadcast %1050 : vector<1x1xf32> to vector<1x32xf32>
    %1052 = arith.mulf %1051, %1024 : vector<1x32xf32>
    %1053 = arith.mulf %1029, %1029 : vector<1x32xf32>
    %cst_315 = arith.constant dense<0.000000e+00> : vector<1xf32>
    %1054 = vector.multi_reduction <add>, %1053, %cst_315 [1] : vector<1x32xf32> to vector<1xf32>
    %1055 = vector.shape_cast %1054 : vector<1xf32> to vector<1x1xf32>
    %cst_316 = arith.constant 1.000000e+00 : f32
    %1056 = vector.broadcast %cst_316 : f32 to vector<1x1xf32>
    %1057 = arith.addf %1056, %1055 : vector<1x1xf32>
    %1058 = tpu.reciprocal %1057 {approx = true} : vector<1x1xf32> -> vector<1x1xf32>
    %1059 = arith.mulf %1055, %1058 : vector<1x1xf32>
    %cst_317 = arith.constant 9.99999993E-9 : f32
    %1060 = vector.broadcast %cst_317 : f32 to vector<1x1xf32>
    %1061 = arith.addf %1055, %1060 : vector<1x1xf32>
    %1062 = math.rsqrt %1061 : vector<1x1xf32>
    %1063 = arith.mulf %1059, %1062 : vector<1x1xf32>
    %1064 = vector.broadcast %1063 : vector<1x1xf32> to vector<1x32xf32>
    %1065 = arith.mulf %1064, %1029 : vector<1x32xf32>
    %1066 = arith.mulf %1034, %1034 : vector<1x32xf32>
    %cst_318 = arith.constant dense<0.000000e+00> : vector<1xf32>
    %1067 = vector.multi_reduction <add>, %1066, %cst_318 [1] : vector<1x32xf32> to vector<1xf32>
    %1068 = vector.shape_cast %1067 : vector<1xf32> to vector<1x1xf32>
    %cst_319 = arith.constant 1.000000e+00 : f32
    %1069 = vector.broadcast %cst_319 : f32 to vector<1x1xf32>
    %1070 = arith.addf %1069, %1068 : vector<1x1xf32>
    %1071 = tpu.reciprocal %1070 {approx = true} : vector<1x1xf32> -> vector<1x1xf32>
    %1072 = arith.mulf %1068, %1071 : vector<1x1xf32>
    %cst_320 = arith.constant 9.99999993E-9 : f32
    %1073 = vector.broadcast %cst_320 : f32 to vector<1x1xf32>
    %1074 = arith.addf %1068, %1073 : vector<1x1xf32>
    %1075 = math.rsqrt %1074 : vector<1x1xf32>
    %1076 = arith.mulf %1072, %1075 : vector<1x1xf32>
    %1077 = vector.broadcast %1076 : vector<1x1xf32> to vector<1x32xf32>
    %1078 = arith.mulf %1077, %1034 : vector<1x32xf32>
    %1079 = arith.mulf %1039, %1039 : vector<1x32xf32>
    %cst_321 = arith.constant dense<0.000000e+00> : vector<1xf32>
    %1080 = vector.multi_reduction <add>, %1079, %cst_321 [1] : vector<1x32xf32> to vector<1xf32>
    %1081 = vector.shape_cast %1080 : vector<1xf32> to vector<1x1xf32>
    %cst_322 = arith.constant 1.000000e+00 : f32
    %1082 = vector.broadcast %cst_322 : f32 to vector<1x1xf32>
    %1083 = arith.addf %1082, %1081 : vector<1x1xf32>
    %1084 = tpu.reciprocal %1083 {approx = true} : vector<1x1xf32> -> vector<1x1xf32>
    %1085 = arith.mulf %1081, %1084 : vector<1x1xf32>
    %cst_323 = arith.constant 9.99999993E-9 : f32
    %1086 = vector.broadcast %cst_323 : f32 to vector<1x1xf32>
    %1087 = arith.addf %1081, %1086 : vector<1x1xf32>
    %1088 = math.rsqrt %1087 : vector<1x1xf32>
    %1089 = arith.mulf %1085, %1088 : vector<1x1xf32>
    %1090 = vector.broadcast %1089 : vector<1x1xf32> to vector<1x32xf32>
    %1091 = arith.mulf %1090, %1039 : vector<1x32xf32>
    %1092 = tpu.concatenate %1052, %1065, %1078, %1091 in 0 : vector<1x32xf32>, vector<1x32xf32>, vector<1x32xf32>, vector<1x32xf32> -> vector<4x32xf32>
    %1093 = vector.extract_strided_slice %803 {offsets = [8, 0], sizes = [8, 128], strides = [1, 1]} : vector<16x128xf32> to vector<8x128xf32>
    %1094 = vector.extract_strided_slice %1093 {offsets = [0, 0], sizes = [8, 32], strides = [1, 1]} : vector<8x128xf32> to vector<8x32xf32>
    %1095 = vector.extract_strided_slice %1093 {offsets = [0, 32], sizes = [8, 32], strides = [1, 1]} : vector<8x128xf32> to vector<8x32xf32>
    %1096 = vector.extract_strided_slice %1093 {offsets = [0, 64], sizes = [8, 32], strides = [1, 1]} : vector<8x128xf32> to vector<8x32xf32>
    %1097 = vector.extract_strided_slice %1093 {offsets = [0, 96], sizes = [8, 32], strides = [1, 1]} : vector<8x128xf32> to vector<8x32xf32>
    %cst_324 = arith.constant 0.000000e+00 : f32
    %1098 = vector.broadcast %cst_324 : f32 to vector<8x4xf32>
    %cst_325 = arith.constant dense<0xFF800000> : vector<8xf32>
    %1099 = vector.multi_reduction <maximumf>, %1098, %cst_325 [1] : vector<8x4xf32> to vector<8xf32>
    %1100 = vector.shape_cast %1099 : vector<8xf32> to vector<8x1xf32>
    %1101 = vector.broadcast %1100 : vector<8x1xf32> to vector<8x4xf32>
    %1102 = arith.subf %1098, %1101 : vector<8x4xf32>
    %1103 = math.exp %1102 : vector<8x4xf32>
    %cst_326 = arith.constant dense<0.000000e+00> : vector<8xf32>
    %1104 = vector.multi_reduction <add>, %1103, %cst_326 [1] : vector<8x4xf32> to vector<8xf32>
    %1105 = vector.shape_cast %1104 : vector<8xf32> to vector<8x1xf32>
    %1106 = tpu.reciprocal %1105 {approx = true} : vector<8x1xf32> -> vector<8x1xf32>
    %1107 = vector.broadcast %1106 : vector<8x1xf32> to vector<8x4xf32>
    %1108 = arith.mulf %1103, %1107 : vector<8x4xf32>
    %1109 = vector.extract_strided_slice %1108 {offsets = [0, 0], sizes = [8, 1], strides = [1, 1]} : vector<8x4xf32> to vector<8x1xf32>
    %1110 = vector.broadcast %1109 : vector<8x1xf32> to vector<8x32xf32>
    %1111 = arith.mulf %1110, %1094 : vector<8x32xf32>
    %cst_327 = arith.constant dense<0.000000e+00> : vector<32xf32>
    %1112 = vector.multi_reduction <add>, %1111, %cst_327 [0] : vector<8x32xf32> to vector<32xf32>
    %1113 = vector.shape_cast %1112 : vector<32xf32> to vector<1x32xf32>
    %1114 = vector.extract_strided_slice %1108 {offsets = [0, 1], sizes = [8, 1], strides = [1, 1]} : vector<8x4xf32> to vector<8x1xf32>
    %1115 = vector.broadcast %1114 : vector<8x1xf32> to vector<8x32xf32>
    %1116 = arith.mulf %1115, %1095 : vector<8x32xf32>
    %cst_328 = arith.constant dense<0.000000e+00> : vector<32xf32>
    %1117 = vector.multi_reduction <add>, %1116, %cst_328 [0] : vector<8x32xf32> to vector<32xf32>
    %1118 = vector.shape_cast %1117 : vector<32xf32> to vector<1x32xf32>
    %1119 = vector.extract_strided_slice %1108 {offsets = [0, 2], sizes = [8, 1], strides = [1, 1]} : vector<8x4xf32> to vector<8x1xf32>
    %1120 = vector.broadcast %1119 : vector<8x1xf32> to vector<8x32xf32>
    %1121 = arith.mulf %1120, %1096 : vector<8x32xf32>
    %cst_329 = arith.constant dense<0.000000e+00> : vector<32xf32>
    %1122 = vector.multi_reduction <add>, %1121, %cst_329 [0] : vector<8x32xf32> to vector<32xf32>
    %1123 = vector.shape_cast %1122 : vector<32xf32> to vector<1x32xf32>
    %1124 = vector.extract_strided_slice %1108 {offsets = [0, 3], sizes = [8, 1], strides = [1, 1]} : vector<8x4xf32> to vector<8x1xf32>
    %1125 = vector.broadcast %1124 : vector<8x1xf32> to vector<8x32xf32>
    %1126 = arith.mulf %1125, %1097 : vector<8x32xf32>
    %cst_330 = arith.constant dense<0.000000e+00> : vector<32xf32>
    %1127 = vector.multi_reduction <add>, %1126, %cst_330 [0] : vector<8x32xf32> to vector<32xf32>
    %1128 = vector.shape_cast %1127 : vector<32xf32> to vector<1x32xf32>
    %1129 = arith.mulf %1113, %1113 : vector<1x32xf32>
    %cst_331 = arith.constant dense<0.000000e+00> : vector<1xf32>
    %1130 = vector.multi_reduction <add>, %1129, %cst_331 [1] : vector<1x32xf32> to vector<1xf32>
    %1131 = vector.shape_cast %1130 : vector<1xf32> to vector<1x1xf32>
    %cst_332 = arith.constant 1.000000e+00 : f32
    %1132 = vector.broadcast %cst_332 : f32 to vector<1x1xf32>
    %1133 = arith.addf %1132, %1131 : vector<1x1xf32>
    %1134 = tpu.reciprocal %1133 {approx = true} : vector<1x1xf32> -> vector<1x1xf32>
    %1135 = arith.mulf %1131, %1134 : vector<1x1xf32>
    %cst_333 = arith.constant 9.99999993E-9 : f32
    %1136 = vector.broadcast %cst_333 : f32 to vector<1x1xf32>
    %1137 = arith.addf %1131, %1136 : vector<1x1xf32>
    %1138 = math.rsqrt %1137 : vector<1x1xf32>
    %1139 = arith.mulf %1135, %1138 : vector<1x1xf32>
    %1140 = vector.broadcast %1139 : vector<1x1xf32> to vector<1x32xf32>
    %1141 = arith.mulf %1140, %1113 : vector<1x32xf32>
    %1142 = arith.mulf %1118, %1118 : vector<1x32xf32>
    %cst_334 = arith.constant dense<0.000000e+00> : vector<1xf32>
    %1143 = vector.multi_reduction <add>, %1142, %cst_334 [1] : vector<1x32xf32> to vector<1xf32>
    %1144 = vector.shape_cast %1143 : vector<1xf32> to vector<1x1xf32>
    %cst_335 = arith.constant 1.000000e+00 : f32
    %1145 = vector.broadcast %cst_335 : f32 to vector<1x1xf32>
    %1146 = arith.addf %1145, %1144 : vector<1x1xf32>
    %1147 = tpu.reciprocal %1146 {approx = true} : vector<1x1xf32> -> vector<1x1xf32>
    %1148 = arith.mulf %1144, %1147 : vector<1x1xf32>
    %cst_336 = arith.constant 9.99999993E-9 : f32
    %1149 = vector.broadcast %cst_336 : f32 to vector<1x1xf32>
    %1150 = arith.addf %1144, %1149 : vector<1x1xf32>
    %1151 = math.rsqrt %1150 : vector<1x1xf32>
    %1152 = arith.mulf %1148, %1151 : vector<1x1xf32>
    %1153 = vector.broadcast %1152 : vector<1x1xf32> to vector<1x32xf32>
    %1154 = arith.mulf %1153, %1118 : vector<1x32xf32>
    %1155 = arith.mulf %1123, %1123 : vector<1x32xf32>
    %cst_337 = arith.constant dense<0.000000e+00> : vector<1xf32>
    %1156 = vector.multi_reduction <add>, %1155, %cst_337 [1] : vector<1x32xf32> to vector<1xf32>
    %1157 = vector.shape_cast %1156 : vector<1xf32> to vector<1x1xf32>
    %cst_338 = arith.constant 1.000000e+00 : f32
    %1158 = vector.broadcast %cst_338 : f32 to vector<1x1xf32>
    %1159 = arith.addf %1158, %1157 : vector<1x1xf32>
    %1160 = tpu.reciprocal %1159 {approx = true} : vector<1x1xf32> -> vector<1x1xf32>
    %1161 = arith.mulf %1157, %1160 : vector<1x1xf32>
    %cst_339 = arith.constant 9.99999993E-9 : f32
    %1162 = vector.broadcast %cst_339 : f32 to vector<1x1xf32>
    %1163 = arith.addf %1157, %1162 : vector<1x1xf32>
    %1164 = math.rsqrt %1163 : vector<1x1xf32>
    %1165 = arith.mulf %1161, %1164 : vector<1x1xf32>
    %1166 = vector.broadcast %1165 : vector<1x1xf32> to vector<1x32xf32>
    %1167 = arith.mulf %1166, %1123 : vector<1x32xf32>
    %1168 = arith.mulf %1128, %1128 : vector<1x32xf32>
    %cst_340 = arith.constant dense<0.000000e+00> : vector<1xf32>
    %1169 = vector.multi_reduction <add>, %1168, %cst_340 [1] : vector<1x32xf32> to vector<1xf32>
    %1170 = vector.shape_cast %1169 : vector<1xf32> to vector<1x1xf32>
    %cst_341 = arith.constant 1.000000e+00 : f32
    %1171 = vector.broadcast %cst_341 : f32 to vector<1x1xf32>
    %1172 = arith.addf %1171, %1170 : vector<1x1xf32>
    %1173 = tpu.reciprocal %1172 {approx = true} : vector<1x1xf32> -> vector<1x1xf32>
    %1174 = arith.mulf %1170, %1173 : vector<1x1xf32>
    %cst_342 = arith.constant 9.99999993E-9 : f32
    %1175 = vector.broadcast %cst_342 : f32 to vector<1x1xf32>
    %1176 = arith.addf %1170, %1175 : vector<1x1xf32>
    %1177 = math.rsqrt %1176 : vector<1x1xf32>
    %1178 = arith.mulf %1174, %1177 : vector<1x1xf32>
    %1179 = vector.broadcast %1178 : vector<1x1xf32> to vector<1x32xf32>
    %1180 = arith.mulf %1179, %1128 : vector<1x32xf32>
    %1181 = vector.broadcast %1141 : vector<1x32xf32> to vector<8x32xf32>
    %1182 = arith.mulf %1094, %1181 : vector<8x32xf32>
    %cst_343 = arith.constant dense<0.000000e+00> : vector<8xf32>
    %1183 = vector.multi_reduction <add>, %1182, %cst_343 [1] : vector<8x32xf32> to vector<8xf32>
    %1184 = vector.shape_cast %1183 : vector<8xf32> to vector<8x1xf32>
    %1185 = vector.broadcast %1154 : vector<1x32xf32> to vector<8x32xf32>
    %1186 = arith.mulf %1095, %1185 : vector<8x32xf32>
    %cst_344 = arith.constant dense<0.000000e+00> : vector<8xf32>
    %1187 = vector.multi_reduction <add>, %1186, %cst_344 [1] : vector<8x32xf32> to vector<8xf32>
    %1188 = vector.shape_cast %1187 : vector<8xf32> to vector<8x1xf32>
    %1189 = vector.broadcast %1167 : vector<1x32xf32> to vector<8x32xf32>
    %1190 = arith.mulf %1096, %1189 : vector<8x32xf32>
    %cst_345 = arith.constant dense<0.000000e+00> : vector<8xf32>
    %1191 = vector.multi_reduction <add>, %1190, %cst_345 [1] : vector<8x32xf32> to vector<8xf32>
    %1192 = vector.shape_cast %1191 : vector<8xf32> to vector<8x1xf32>
    %1193 = vector.broadcast %1180 : vector<1x32xf32> to vector<8x32xf32>
    %1194 = arith.mulf %1097, %1193 : vector<8x32xf32>
    %cst_346 = arith.constant dense<0.000000e+00> : vector<8xf32>
    %1195 = vector.multi_reduction <add>, %1194, %cst_346 [1] : vector<8x32xf32> to vector<8xf32>
    %1196 = vector.shape_cast %1195 : vector<8xf32> to vector<8x1xf32>
    %1197 = tpu.concatenate %1184, %1188, %1192, %1196 in 1 : vector<8x1xf32>, vector<8x1xf32>, vector<8x1xf32>, vector<8x1xf32> -> vector<8x4xf32>
    %1198 = arith.addf %1098, %1197 : vector<8x4xf32>
    %cst_347 = arith.constant dense<0xFF800000> : vector<8xf32>
    %1199 = vector.multi_reduction <maximumf>, %1198, %cst_347 [1] : vector<8x4xf32> to vector<8xf32>
    %1200 = vector.shape_cast %1199 : vector<8xf32> to vector<8x1xf32>
    %1201 = vector.broadcast %1200 : vector<8x1xf32> to vector<8x4xf32>
    %1202 = arith.subf %1198, %1201 : vector<8x4xf32>
    %1203 = math.exp %1202 : vector<8x4xf32>
    %cst_348 = arith.constant dense<0.000000e+00> : vector<8xf32>
    %1204 = vector.multi_reduction <add>, %1203, %cst_348 [1] : vector<8x4xf32> to vector<8xf32>
    %1205 = vector.shape_cast %1204 : vector<8xf32> to vector<8x1xf32>
    %1206 = tpu.reciprocal %1205 {approx = true} : vector<8x1xf32> -> vector<8x1xf32>
    %1207 = vector.broadcast %1206 : vector<8x1xf32> to vector<8x4xf32>
    %1208 = arith.mulf %1203, %1207 : vector<8x4xf32>
    %1209 = vector.extract_strided_slice %1208 {offsets = [0, 0], sizes = [8, 1], strides = [1, 1]} : vector<8x4xf32> to vector<8x1xf32>
    %1210 = vector.broadcast %1209 : vector<8x1xf32> to vector<8x32xf32>
    %1211 = arith.mulf %1210, %1094 : vector<8x32xf32>
    %cst_349 = arith.constant dense<0.000000e+00> : vector<32xf32>
    %1212 = vector.multi_reduction <add>, %1211, %cst_349 [0] : vector<8x32xf32> to vector<32xf32>
    %1213 = vector.shape_cast %1212 : vector<32xf32> to vector<1x32xf32>
    %1214 = vector.extract_strided_slice %1208 {offsets = [0, 1], sizes = [8, 1], strides = [1, 1]} : vector<8x4xf32> to vector<8x1xf32>
    %1215 = vector.broadcast %1214 : vector<8x1xf32> to vector<8x32xf32>
    %1216 = arith.mulf %1215, %1095 : vector<8x32xf32>
    %cst_350 = arith.constant dense<0.000000e+00> : vector<32xf32>
    %1217 = vector.multi_reduction <add>, %1216, %cst_350 [0] : vector<8x32xf32> to vector<32xf32>
    %1218 = vector.shape_cast %1217 : vector<32xf32> to vector<1x32xf32>
    %1219 = vector.extract_strided_slice %1208 {offsets = [0, 2], sizes = [8, 1], strides = [1, 1]} : vector<8x4xf32> to vector<8x1xf32>
    %1220 = vector.broadcast %1219 : vector<8x1xf32> to vector<8x32xf32>
    %1221 = arith.mulf %1220, %1096 : vector<8x32xf32>
    %cst_351 = arith.constant dense<0.000000e+00> : vector<32xf32>
    %1222 = vector.multi_reduction <add>, %1221, %cst_351 [0] : vector<8x32xf32> to vector<32xf32>
    %1223 = vector.shape_cast %1222 : vector<32xf32> to vector<1x32xf32>
    %1224 = vector.extract_strided_slice %1208 {offsets = [0, 3], sizes = [8, 1], strides = [1, 1]} : vector<8x4xf32> to vector<8x1xf32>
    %1225 = vector.broadcast %1224 : vector<8x1xf32> to vector<8x32xf32>
    %1226 = arith.mulf %1225, %1097 : vector<8x32xf32>
    %cst_352 = arith.constant dense<0.000000e+00> : vector<32xf32>
    %1227 = vector.multi_reduction <add>, %1226, %cst_352 [0] : vector<8x32xf32> to vector<32xf32>
    %1228 = vector.shape_cast %1227 : vector<32xf32> to vector<1x32xf32>
    %1229 = arith.mulf %1213, %1213 : vector<1x32xf32>
    %cst_353 = arith.constant dense<0.000000e+00> : vector<1xf32>
    %1230 = vector.multi_reduction <add>, %1229, %cst_353 [1] : vector<1x32xf32> to vector<1xf32>
    %1231 = vector.shape_cast %1230 : vector<1xf32> to vector<1x1xf32>
    %cst_354 = arith.constant 1.000000e+00 : f32
    %1232 = vector.broadcast %cst_354 : f32 to vector<1x1xf32>
    %1233 = arith.addf %1232, %1231 : vector<1x1xf32>
    %1234 = tpu.reciprocal %1233 {approx = true} : vector<1x1xf32> -> vector<1x1xf32>
    %1235 = arith.mulf %1231, %1234 : vector<1x1xf32>
    %cst_355 = arith.constant 9.99999993E-9 : f32
    %1236 = vector.broadcast %cst_355 : f32 to vector<1x1xf32>
    %1237 = arith.addf %1231, %1236 : vector<1x1xf32>
    %1238 = math.rsqrt %1237 : vector<1x1xf32>
    %1239 = arith.mulf %1235, %1238 : vector<1x1xf32>
    %1240 = vector.broadcast %1239 : vector<1x1xf32> to vector<1x32xf32>
    %1241 = arith.mulf %1240, %1213 : vector<1x32xf32>
    %1242 = arith.mulf %1218, %1218 : vector<1x32xf32>
    %cst_356 = arith.constant dense<0.000000e+00> : vector<1xf32>
    %1243 = vector.multi_reduction <add>, %1242, %cst_356 [1] : vector<1x32xf32> to vector<1xf32>
    %1244 = vector.shape_cast %1243 : vector<1xf32> to vector<1x1xf32>
    %cst_357 = arith.constant 1.000000e+00 : f32
    %1245 = vector.broadcast %cst_357 : f32 to vector<1x1xf32>
    %1246 = arith.addf %1245, %1244 : vector<1x1xf32>
    %1247 = tpu.reciprocal %1246 {approx = true} : vector<1x1xf32> -> vector<1x1xf32>
    %1248 = arith.mulf %1244, %1247 : vector<1x1xf32>
    %cst_358 = arith.constant 9.99999993E-9 : f32
    %1249 = vector.broadcast %cst_358 : f32 to vector<1x1xf32>
    %1250 = arith.addf %1244, %1249 : vector<1x1xf32>
    %1251 = math.rsqrt %1250 : vector<1x1xf32>
    %1252 = arith.mulf %1248, %1251 : vector<1x1xf32>
    %1253 = vector.broadcast %1252 : vector<1x1xf32> to vector<1x32xf32>
    %1254 = arith.mulf %1253, %1218 : vector<1x32xf32>
    %1255 = arith.mulf %1223, %1223 : vector<1x32xf32>
    %cst_359 = arith.constant dense<0.000000e+00> : vector<1xf32>
    %1256 = vector.multi_reduction <add>, %1255, %cst_359 [1] : vector<1x32xf32> to vector<1xf32>
    %1257 = vector.shape_cast %1256 : vector<1xf32> to vector<1x1xf32>
    %cst_360 = arith.constant 1.000000e+00 : f32
    %1258 = vector.broadcast %cst_360 : f32 to vector<1x1xf32>
    %1259 = arith.addf %1258, %1257 : vector<1x1xf32>
    %1260 = tpu.reciprocal %1259 {approx = true} : vector<1x1xf32> -> vector<1x1xf32>
    %1261 = arith.mulf %1257, %1260 : vector<1x1xf32>
    %cst_361 = arith.constant 9.99999993E-9 : f32
    %1262 = vector.broadcast %cst_361 : f32 to vector<1x1xf32>
    %1263 = arith.addf %1257, %1262 : vector<1x1xf32>
    %1264 = math.rsqrt %1263 : vector<1x1xf32>
    %1265 = arith.mulf %1261, %1264 : vector<1x1xf32>
    %1266 = vector.broadcast %1265 : vector<1x1xf32> to vector<1x32xf32>
    %1267 = arith.mulf %1266, %1223 : vector<1x32xf32>
    %1268 = arith.mulf %1228, %1228 : vector<1x32xf32>
    %cst_362 = arith.constant dense<0.000000e+00> : vector<1xf32>
    %1269 = vector.multi_reduction <add>, %1268, %cst_362 [1] : vector<1x32xf32> to vector<1xf32>
    %1270 = vector.shape_cast %1269 : vector<1xf32> to vector<1x1xf32>
    %cst_363 = arith.constant 1.000000e+00 : f32
    %1271 = vector.broadcast %cst_363 : f32 to vector<1x1xf32>
    %1272 = arith.addf %1271, %1270 : vector<1x1xf32>
    %1273 = tpu.reciprocal %1272 {approx = true} : vector<1x1xf32> -> vector<1x1xf32>
    %1274 = arith.mulf %1270, %1273 : vector<1x1xf32>
    %cst_364 = arith.constant 9.99999993E-9 : f32
    %1275 = vector.broadcast %cst_364 : f32 to vector<1x1xf32>
    %1276 = arith.addf %1270, %1275 : vector<1x1xf32>
    %1277 = math.rsqrt %1276 : vector<1x1xf32>
    %1278 = arith.mulf %1274, %1277 : vector<1x1xf32>
    %1279 = vector.broadcast %1278 : vector<1x1xf32> to vector<1x32xf32>
    %1280 = arith.mulf %1279, %1228 : vector<1x32xf32>
    %1281 = vector.broadcast %1241 : vector<1x32xf32> to vector<8x32xf32>
    %1282 = arith.mulf %1094, %1281 : vector<8x32xf32>
    %cst_365 = arith.constant dense<0.000000e+00> : vector<8xf32>
    %1283 = vector.multi_reduction <add>, %1282, %cst_365 [1] : vector<8x32xf32> to vector<8xf32>
    %1284 = vector.shape_cast %1283 : vector<8xf32> to vector<8x1xf32>
    %1285 = vector.broadcast %1254 : vector<1x32xf32> to vector<8x32xf32>
    %1286 = arith.mulf %1095, %1285 : vector<8x32xf32>
    %cst_366 = arith.constant dense<0.000000e+00> : vector<8xf32>
    %1287 = vector.multi_reduction <add>, %1286, %cst_366 [1] : vector<8x32xf32> to vector<8xf32>
    %1288 = vector.shape_cast %1287 : vector<8xf32> to vector<8x1xf32>
    %1289 = vector.broadcast %1267 : vector<1x32xf32> to vector<8x32xf32>
    %1290 = arith.mulf %1096, %1289 : vector<8x32xf32>
    %cst_367 = arith.constant dense<0.000000e+00> : vector<8xf32>
    %1291 = vector.multi_reduction <add>, %1290, %cst_367 [1] : vector<8x32xf32> to vector<8xf32>
    %1292 = vector.shape_cast %1291 : vector<8xf32> to vector<8x1xf32>
    %1293 = vector.broadcast %1280 : vector<1x32xf32> to vector<8x32xf32>
    %1294 = arith.mulf %1097, %1293 : vector<8x32xf32>
    %cst_368 = arith.constant dense<0.000000e+00> : vector<8xf32>
    %1295 = vector.multi_reduction <add>, %1294, %cst_368 [1] : vector<8x32xf32> to vector<8xf32>
    %1296 = vector.shape_cast %1295 : vector<8xf32> to vector<8x1xf32>
    %1297 = tpu.concatenate %1284, %1288, %1292, %1296 in 1 : vector<8x1xf32>, vector<8x1xf32>, vector<8x1xf32>, vector<8x1xf32> -> vector<8x4xf32>
    %1298 = arith.addf %1198, %1297 : vector<8x4xf32>
    %cst_369 = arith.constant dense<0xFF800000> : vector<8xf32>
    %1299 = vector.multi_reduction <maximumf>, %1298, %cst_369 [1] : vector<8x4xf32> to vector<8xf32>
    %1300 = vector.shape_cast %1299 : vector<8xf32> to vector<8x1xf32>
    %1301 = vector.broadcast %1300 : vector<8x1xf32> to vector<8x4xf32>
    %1302 = arith.subf %1298, %1301 : vector<8x4xf32>
    %1303 = math.exp %1302 : vector<8x4xf32>
    %cst_370 = arith.constant dense<0.000000e+00> : vector<8xf32>
    %1304 = vector.multi_reduction <add>, %1303, %cst_370 [1] : vector<8x4xf32> to vector<8xf32>
    %1305 = vector.shape_cast %1304 : vector<8xf32> to vector<8x1xf32>
    %1306 = tpu.reciprocal %1305 {approx = true} : vector<8x1xf32> -> vector<8x1xf32>
    %1307 = vector.broadcast %1306 : vector<8x1xf32> to vector<8x4xf32>
    %1308 = arith.mulf %1303, %1307 : vector<8x4xf32>
    %1309 = vector.extract_strided_slice %1308 {offsets = [0, 0], sizes = [8, 1], strides = [1, 1]} : vector<8x4xf32> to vector<8x1xf32>
    %1310 = vector.broadcast %1309 : vector<8x1xf32> to vector<8x32xf32>
    %1311 = arith.mulf %1310, %1094 : vector<8x32xf32>
    %cst_371 = arith.constant dense<0.000000e+00> : vector<32xf32>
    %1312 = vector.multi_reduction <add>, %1311, %cst_371 [0] : vector<8x32xf32> to vector<32xf32>
    %1313 = vector.shape_cast %1312 : vector<32xf32> to vector<1x32xf32>
    %1314 = vector.extract_strided_slice %1308 {offsets = [0, 1], sizes = [8, 1], strides = [1, 1]} : vector<8x4xf32> to vector<8x1xf32>
    %1315 = vector.broadcast %1314 : vector<8x1xf32> to vector<8x32xf32>
    %1316 = arith.mulf %1315, %1095 : vector<8x32xf32>
    %cst_372 = arith.constant dense<0.000000e+00> : vector<32xf32>
    %1317 = vector.multi_reduction <add>, %1316, %cst_372 [0] : vector<8x32xf32> to vector<32xf32>
    %1318 = vector.shape_cast %1317 : vector<32xf32> to vector<1x32xf32>
    %1319 = vector.extract_strided_slice %1308 {offsets = [0, 2], sizes = [8, 1], strides = [1, 1]} : vector<8x4xf32> to vector<8x1xf32>
    %1320 = vector.broadcast %1319 : vector<8x1xf32> to vector<8x32xf32>
    %1321 = arith.mulf %1320, %1096 : vector<8x32xf32>
    %cst_373 = arith.constant dense<0.000000e+00> : vector<32xf32>
    %1322 = vector.multi_reduction <add>, %1321, %cst_373 [0] : vector<8x32xf32> to vector<32xf32>
    %1323 = vector.shape_cast %1322 : vector<32xf32> to vector<1x32xf32>
    %1324 = vector.extract_strided_slice %1308 {offsets = [0, 3], sizes = [8, 1], strides = [1, 1]} : vector<8x4xf32> to vector<8x1xf32>
    %1325 = vector.broadcast %1324 : vector<8x1xf32> to vector<8x32xf32>
    %1326 = arith.mulf %1325, %1097 : vector<8x32xf32>
    %cst_374 = arith.constant dense<0.000000e+00> : vector<32xf32>
    %1327 = vector.multi_reduction <add>, %1326, %cst_374 [0] : vector<8x32xf32> to vector<32xf32>
    %1328 = vector.shape_cast %1327 : vector<32xf32> to vector<1x32xf32>
    %1329 = arith.mulf %1313, %1313 : vector<1x32xf32>
    %cst_375 = arith.constant dense<0.000000e+00> : vector<1xf32>
    %1330 = vector.multi_reduction <add>, %1329, %cst_375 [1] : vector<1x32xf32> to vector<1xf32>
    %1331 = vector.shape_cast %1330 : vector<1xf32> to vector<1x1xf32>
    %cst_376 = arith.constant 1.000000e+00 : f32
    %1332 = vector.broadcast %cst_376 : f32 to vector<1x1xf32>
    %1333 = arith.addf %1332, %1331 : vector<1x1xf32>
    %1334 = tpu.reciprocal %1333 {approx = true} : vector<1x1xf32> -> vector<1x1xf32>
    %1335 = arith.mulf %1331, %1334 : vector<1x1xf32>
    %cst_377 = arith.constant 9.99999993E-9 : f32
    %1336 = vector.broadcast %cst_377 : f32 to vector<1x1xf32>
    %1337 = arith.addf %1331, %1336 : vector<1x1xf32>
    %1338 = math.rsqrt %1337 : vector<1x1xf32>
    %1339 = arith.mulf %1335, %1338 : vector<1x1xf32>
    %1340 = vector.broadcast %1339 : vector<1x1xf32> to vector<1x32xf32>
    %1341 = arith.mulf %1340, %1313 : vector<1x32xf32>
    %1342 = arith.mulf %1318, %1318 : vector<1x32xf32>
    %cst_378 = arith.constant dense<0.000000e+00> : vector<1xf32>
    %1343 = vector.multi_reduction <add>, %1342, %cst_378 [1] : vector<1x32xf32> to vector<1xf32>
    %1344 = vector.shape_cast %1343 : vector<1xf32> to vector<1x1xf32>
    %cst_379 = arith.constant 1.000000e+00 : f32
    %1345 = vector.broadcast %cst_379 : f32 to vector<1x1xf32>
    %1346 = arith.addf %1345, %1344 : vector<1x1xf32>
    %1347 = tpu.reciprocal %1346 {approx = true} : vector<1x1xf32> -> vector<1x1xf32>
    %1348 = arith.mulf %1344, %1347 : vector<1x1xf32>
    %cst_380 = arith.constant 9.99999993E-9 : f32
    %1349 = vector.broadcast %cst_380 : f32 to vector<1x1xf32>
    %1350 = arith.addf %1344, %1349 : vector<1x1xf32>
    %1351 = math.rsqrt %1350 : vector<1x1xf32>
    %1352 = arith.mulf %1348, %1351 : vector<1x1xf32>
    %1353 = vector.broadcast %1352 : vector<1x1xf32> to vector<1x32xf32>
    %1354 = arith.mulf %1353, %1318 : vector<1x32xf32>
    %1355 = arith.mulf %1323, %1323 : vector<1x32xf32>
    %cst_381 = arith.constant dense<0.000000e+00> : vector<1xf32>
    %1356 = vector.multi_reduction <add>, %1355, %cst_381 [1] : vector<1x32xf32> to vector<1xf32>
    %1357 = vector.shape_cast %1356 : vector<1xf32> to vector<1x1xf32>
    %cst_382 = arith.constant 1.000000e+00 : f32
    %1358 = vector.broadcast %cst_382 : f32 to vector<1x1xf32>
    %1359 = arith.addf %1358, %1357 : vector<1x1xf32>
    %1360 = tpu.reciprocal %1359 {approx = true} : vector<1x1xf32> -> vector<1x1xf32>
    %1361 = arith.mulf %1357, %1360 : vector<1x1xf32>
    %cst_383 = arith.constant 9.99999993E-9 : f32
    %1362 = vector.broadcast %cst_383 : f32 to vector<1x1xf32>
    %1363 = arith.addf %1357, %1362 : vector<1x1xf32>
    %1364 = math.rsqrt %1363 : vector<1x1xf32>
    %1365 = arith.mulf %1361, %1364 : vector<1x1xf32>
    %1366 = vector.broadcast %1365 : vector<1x1xf32> to vector<1x32xf32>
    %1367 = arith.mulf %1366, %1323 : vector<1x32xf32>
    %1368 = arith.mulf %1328, %1328 : vector<1x32xf32>
    %cst_384 = arith.constant dense<0.000000e+00> : vector<1xf32>
    %1369 = vector.multi_reduction <add>, %1368, %cst_384 [1] : vector<1x32xf32> to vector<1xf32>
    %1370 = vector.shape_cast %1369 : vector<1xf32> to vector<1x1xf32>
    %cst_385 = arith.constant 1.000000e+00 : f32
    %1371 = vector.broadcast %cst_385 : f32 to vector<1x1xf32>
    %1372 = arith.addf %1371, %1370 : vector<1x1xf32>
    %1373 = tpu.reciprocal %1372 {approx = true} : vector<1x1xf32> -> vector<1x1xf32>
    %1374 = arith.mulf %1370, %1373 : vector<1x1xf32>
    %cst_386 = arith.constant 9.99999993E-9 : f32
    %1375 = vector.broadcast %cst_386 : f32 to vector<1x1xf32>
    %1376 = arith.addf %1370, %1375 : vector<1x1xf32>
    %1377 = math.rsqrt %1376 : vector<1x1xf32>
    %1378 = arith.mulf %1374, %1377 : vector<1x1xf32>
    %1379 = vector.broadcast %1378 : vector<1x1xf32> to vector<1x32xf32>
    %1380 = arith.mulf %1379, %1328 : vector<1x32xf32>
    %1381 = tpu.concatenate %1341, %1354, %1367, %1380 in 0 : vector<1x32xf32>, vector<1x32xf32>, vector<1x32xf32>, vector<1x32xf32> -> vector<4x32xf32>
    %c0_387 = arith.constant 0 : index
    %c0_388 = arith.constant 0 : index
    %1382 = vector.load %arg16[%c0_387, %c0_388] : memref<32x32xf32, #tpu.memory_space<vmem>>, vector<32x32xf32>
    %cst_389 = arith.constant dense<0.000000e+00> : vector<4x32xf32>
    %1383 = tpu.matmul %1092, %1382, %cst_389 {dimension_numbers = #tpu.dot_dimension_numbers<[1], [0], [0], [1], [0, 0, 1, 1], [], []>} : vector<4x32xf32>, vector<32x32xf32>, vector<4x32xf32> -> vector<4x32xf32>
    %c0_390 = arith.constant 0 : index
    %c0_391 = arith.constant 0 : index
    %1384 = vector.load %arg17[%c0_390, %c0_391] : memref<1x32xf32, #tpu.memory_space<vmem>>, vector<1x32xf32>
    %1385 = vector.broadcast %1384 : vector<1x32xf32> to vector<4x32xf32>
    %1386 = arith.addf %1383, %1385 : vector<4x32xf32>
    %c0_392 = arith.constant 0 : index
    %c0_393 = arith.constant 0 : index
    %1387 = vector.load %arg18[%c0_392, %c0_393] : memref<32x64xf32, #tpu.memory_space<vmem>>, vector<32x64xf32>
    %cst_394 = arith.constant dense<0.000000e+00> : vector<4x64xf32>
    %1388 = tpu.matmul %297, %1387, %cst_394 {dimension_numbers = #tpu.dot_dimension_numbers<[1], [0], [0], [1], [0, 0, 1, 1], [], []>} : vector<4x32xf32>, vector<32x64xf32>, vector<4x64xf32> -> vector<4x64xf32>
    %c0_395 = arith.constant 0 : index
    %c0_396 = arith.constant 0 : index
    %1389 = vector.load %arg19[%c0_395, %c0_396] : memref<1x64xf32, #tpu.memory_space<vmem>>, vector<1x64xf32>
    %1390 = vector.broadcast %1389 : vector<1x64xf32> to vector<4x64xf32>
    %1391 = arith.addf %1388, %1390 : vector<4x64xf32>
    %1392 = vector.extract_strided_slice %1391 {offsets = [0, 0], sizes = [4, 32], strides = [1, 1]} : vector<4x64xf32> to vector<4x32xf32>
    %1393 = vector.extract_strided_slice %1391 {offsets = [0, 32], sizes = [4, 32], strides = [1, 1]} : vector<4x64xf32> to vector<4x32xf32>
    %cst_397 = arith.constant dense<0.000000e+00> : vector<4x4xf32>
    %1394 = tpu.matmul %1386, %1392, %cst_397 {dimension_numbers = #tpu.dot_dimension_numbers<[1], [1], [0], [0], [0, 0, 1, 0], [], []>} : vector<4x32xf32>, vector<4x32xf32>, vector<4x4xf32> -> vector<4x4xf32>
    %cst_398 = arith.constant 0.176776692 : f32
    %1395 = vector.broadcast %cst_398 : f32 to vector<4x4xf32>
    %1396 = arith.mulf %1394, %1395 : vector<4x4xf32>
    %cst_399 = arith.constant dense<0xFF800000> : vector<4xf32>
    %1397 = vector.multi_reduction <maximumf>, %1396, %cst_399 [1] : vector<4x4xf32> to vector<4xf32>
    %1398 = vector.shape_cast %1397 : vector<4xf32> to vector<4x1xf32>
    %1399 = vector.broadcast %1398 : vector<4x1xf32> to vector<4x4xf32>
    %1400 = arith.subf %1396, %1399 : vector<4x4xf32>
    %1401 = math.exp %1400 : vector<4x4xf32>
    %cst_400 = arith.constant dense<0.000000e+00> : vector<4xf32>
    %1402 = vector.multi_reduction <add>, %1401, %cst_400 [1] : vector<4x4xf32> to vector<4xf32>
    %1403 = vector.shape_cast %1402 : vector<4xf32> to vector<4x1xf32>
    %1404 = tpu.reciprocal %1403 {approx = true} : vector<4x1xf32> -> vector<4x1xf32>
    %1405 = vector.broadcast %1404 : vector<4x1xf32> to vector<4x4xf32>
    %1406 = arith.mulf %1401, %1405 : vector<4x4xf32>
    %cst_401 = arith.constant dense<0.000000e+00> : vector<4x32xf32>
    %1407 = tpu.matmul %1406, %1393, %cst_401 {dimension_numbers = #tpu.dot_dimension_numbers<[1], [0], [0], [1], [0, 0, 1, 1], [], []>} : vector<4x4xf32>, vector<4x32xf32>, vector<4x32xf32> -> vector<4x32xf32>
    %c0_402 = arith.constant 0 : index
    %c0_403 = arith.constant 0 : index
    %c0_404 = arith.constant 0 : index
    %1408 = vector.load %arg25[%c0_402, %c0_403, %c0_404] : memref<2x4x4xf32, #tpu.memory_space<vmem>>, vector<1x4x4xf32>
    %1409 = vector.shape_cast %1408 : vector<1x4x4xf32> to vector<4x4xf32>
    %1410 = vector.shape_cast %1406 : vector<4x4xf32> to vector<1x4x4xf32>
    tpu.vector_store %arg25[%c0_402, %c0_403, %c0_404], %1410 {strides = array<i32>} : memref<2x4x4xf32, #tpu.memory_space<vmem>>, vector<1x4x4xf32>,
    %1411 = arith.mulf %1407, %1092 : vector<4x32xf32>
    %1412 = arith.subf %1407, %1092 : vector<4x32xf32>
    %1413 = tpu.concatenate %1407, %1092, %1411, %1412 in 1 : vector<4x32xf32>, vector<4x32xf32>, vector<4x32xf32>, vector<4x32xf32> -> vector<4x128xf32>
    %c0_405 = arith.constant 0 : index
    %c0_406 = arith.constant 0 : index
    %1414 = vector.load %arg20[%c0_405, %c0_406] : memref<128x64xf32, #tpu.memory_space<vmem>>, vector<128x64xf32>
    %cst_407 = arith.constant dense<0.000000e+00> : vector<4x64xf32>
    %1415 = tpu.matmul %1413, %1414, %cst_407 {dimension_numbers = #tpu.dot_dimension_numbers<[1], [0], [0], [1], [0, 0, 1, 1], [], []>} : vector<4x128xf32>, vector<128x64xf32>, vector<4x64xf32> -> vector<4x64xf32>
    %c0_408 = arith.constant 0 : index
    %c0_409 = arith.constant 0 : index
    %1416 = vector.load %arg21[%c0_408, %c0_409] : memref<1x64xf32, #tpu.memory_space<vmem>>, vector<1x64xf32>
    %1417 = vector.broadcast %1416 : vector<1x64xf32> to vector<4x64xf32>
    %1418 = arith.addf %1415, %1417 : vector<4x64xf32>
    %1419 = vector.extract_strided_slice %1418 {offsets = [0, 0], sizes = [4, 32], strides = [1, 1]} : vector<4x64xf32> to vector<4x32xf32>
    %cst_410 = arith.constant 0.000000e+00 : f32
    %1420 = vector.broadcast %cst_410 : f32 to vector<4x32xf32>
    %1421 = arith.subf %1420, %1419 : vector<4x32xf32>
    %1422 = math.exp %1421 : vector<4x32xf32>
    %cst_411 = arith.constant 1.000000e+00 : f32
    %1423 = vector.broadcast %cst_411 : f32 to vector<4x32xf32>
    %1424 = arith.addf %1423, %1422 : vector<4x32xf32>
    %1425 = tpu.reciprocal %1424 {approx = true} : vector<4x32xf32> -> vector<4x32xf32>
    %1426 = vector.extract_strided_slice %1418 {offsets = [0, 32], sizes = [4, 32], strides = [1, 1]} : vector<4x64xf32> to vector<4x32xf32>
    %1427 = math.tanh %1426 : vector<4x32xf32>
    %1428 = arith.mulf %1425, %1427 : vector<4x32xf32>
    %cst_412 = arith.constant 1.000000e+00 : f32
    %1429 = vector.broadcast %cst_412 : f32 to vector<4x32xf32>
    %1430 = arith.subf %1429, %1425 : vector<4x32xf32>
    %1431 = arith.mulf %1430, %1407 : vector<4x32xf32>
    %1432 = arith.addf %1428, %1431 : vector<4x32xf32>
    %cst_413 = arith.constant dense<0.000000e+00> : vector<32xf32>
    %1433 = vector.multi_reduction <add>, %1432, %cst_413 [0] : vector<4x32xf32> to vector<32xf32>
    %1434 = vector.shape_cast %1433 : vector<32xf32> to vector<1x32xf32>
    %c0_414 = arith.constant 0 : index
    %c0_415 = arith.constant 0 : index
    %1435 = vector.load %arg22[%c0_414, %c0_415] : memref<32x5xf32, #tpu.memory_space<vmem>>, vector<32x5xf32>
    %cst_416 = arith.constant dense<0.000000e+00> : vector<1x5xf32>
    %1436 = tpu.matmul %1434, %1435, %cst_416 {dimension_numbers = #tpu.dot_dimension_numbers<[1], [0], [0], [1], [0, 0, 1, 1], [], []>} : vector<1x32xf32>, vector<32x5xf32>, vector<1x5xf32> -> vector<1x5xf32>
    %c0_417 = arith.constant 0 : index
    %c0_418 = arith.constant 0 : index
    %1437 = vector.load %arg23[%c0_417, %c0_418] : memref<1x5xf32, #tpu.memory_space<vmem>>, vector<1x5xf32>
    %1438 = arith.addf %1436, %1437 : vector<1x5xf32>
    %cst_419 = arith.constant dense<0xFF800000> : vector<1xf32>
    %1439 = vector.multi_reduction <maximumf>, %1438, %cst_419 [1] : vector<1x5xf32> to vector<1xf32>
    %1440 = vector.shape_cast %1439 : vector<1xf32> to vector<1x1xf32>
    %1441 = vector.broadcast %1440 : vector<1x1xf32> to vector<1x5xf32>
    %1442 = arith.subf %1438, %1441 : vector<1x5xf32>
    %1443 = math.exp %1442 : vector<1x5xf32>
    %cst_420 = arith.constant dense<0.000000e+00> : vector<1xf32>
    %1444 = vector.multi_reduction <add>, %1443, %cst_420 [1] : vector<1x5xf32> to vector<1xf32>
    %1445 = vector.shape_cast %1444 : vector<1xf32> to vector<1x1xf32>
    %1446 = math.log %1445 : vector<1x1xf32>
    %1447 = vector.broadcast %1446 : vector<1x1xf32> to vector<1x5xf32>
    %1448 = arith.subf %1442, %1447 : vector<1x5xf32>
    %c0_421 = arith.constant 0 : index
    %c0_422 = arith.constant 0 : index
    %c0_423 = arith.constant 0 : index
    %1449 = vector.load %arg24[%c0_421, %c0_422, %c0_423] : memref<2x1x5xf32, #tpu.memory_space<vmem>>, vector<1x1x5xf32>
    %1450 = vector.shape_cast %1449 : vector<1x1x5xf32> to vector<1x5xf32>
    %1451 = vector.shape_cast %1448 : vector<1x5xf32> to vector<1x1x5xf32>
    tpu.vector_store %arg24[%c0_421, %c0_422, %c0_423], %1451 {strides = array<i32>} : memref<2x1x5xf32, #tpu.memory_space<vmem>>, vector<1x1x5xf32>,
    %c0_424 = arith.constant 0 : index
    %c0_425 = arith.constant 0 : index
    %1452 = vector.load %arg16[%c0_424, %c0_425] : memref<32x32xf32, #tpu.memory_space<vmem>>, vector<32x32xf32>
    %cst_426 = arith.constant dense<0.000000e+00> : vector<4x32xf32>
    %1453 = tpu.matmul %1381, %1452, %cst_426 {dimension_numbers = #tpu.dot_dimension_numbers<[1], [0], [0], [1], [0, 0, 1, 1], [], []>} : vector<4x32xf32>, vector<32x32xf32>, vector<4x32xf32> -> vector<4x32xf32>
    %c0_427 = arith.constant 0 : index
    %c0_428 = arith.constant 0 : index
    %1454 = vector.load %arg17[%c0_427, %c0_428] : memref<1x32xf32, #tpu.memory_space<vmem>>, vector<1x32xf32>
    %1455 = vector.broadcast %1454 : vector<1x32xf32> to vector<4x32xf32>
    %1456 = arith.addf %1453, %1455 : vector<4x32xf32>
    %c0_429 = arith.constant 0 : index
    %c0_430 = arith.constant 0 : index
    %1457 = vector.load %arg18[%c0_429, %c0_430] : memref<32x64xf32, #tpu.memory_space<vmem>>, vector<32x64xf32>
    %cst_431 = arith.constant dense<0.000000e+00> : vector<4x64xf32>
    %1458 = tpu.matmul %586, %1457, %cst_431 {dimension_numbers = #tpu.dot_dimension_numbers<[1], [0], [0], [1], [0, 0, 1, 1], [], []>} : vector<4x32xf32>, vector<32x64xf32>, vector<4x64xf32> -> vector<4x64xf32>
    %c0_432 = arith.constant 0 : index
    %c0_433 = arith.constant 0 : index
    %1459 = vector.load %arg19[%c0_432, %c0_433] : memref<1x64xf32, #tpu.memory_space<vmem>>, vector<1x64xf32>
    %1460 = vector.broadcast %1459 : vector<1x64xf32> to vector<4x64xf32>
    %1461 = arith.addf %1458, %1460 : vector<4x64xf32>
    %1462 = vector.extract_strided_slice %1461 {offsets = [0, 0], sizes = [4, 32], strides = [1, 1]} : vector<4x64xf32> to vector<4x32xf32>
    %1463 = vector.extract_strided_slice %1461 {offsets = [0, 32], sizes = [4, 32], strides = [1, 1]} : vector<4x64xf32> to vector<4x32xf32>
    %cst_434 = arith.constant dense<0.000000e+00> : vector<4x4xf32>
    %1464 = tpu.matmul %1456, %1462, %cst_434 {dimension_numbers = #tpu.dot_dimension_numbers<[1], [1], [0], [0], [0, 0, 1, 0], [], []>} : vector<4x32xf32>, vector<4x32xf32>, vector<4x4xf32> -> vector<4x4xf32>
    %cst_435 = arith.constant 0.176776692 : f32
    %1465 = vector.broadcast %cst_435 : f32 to vector<4x4xf32>
    %1466 = arith.mulf %1464, %1465 : vector<4x4xf32>
    %cst_436 = arith.constant dense<0xFF800000> : vector<4xf32>
    %1467 = vector.multi_reduction <maximumf>, %1466, %cst_436 [1] : vector<4x4xf32> to vector<4xf32>
    %1468 = vector.shape_cast %1467 : vector<4xf32> to vector<4x1xf32>
    %1469 = vector.broadcast %1468 : vector<4x1xf32> to vector<4x4xf32>
    %1470 = arith.subf %1466, %1469 : vector<4x4xf32>
    %1471 = math.exp %1470 : vector<4x4xf32>
    %cst_437 = arith.constant dense<0.000000e+00> : vector<4xf32>
    %1472 = vector.multi_reduction <add>, %1471, %cst_437 [1] : vector<4x4xf32> to vector<4xf32>
    %1473 = vector.shape_cast %1472 : vector<4xf32> to vector<4x1xf32>
    %1474 = tpu.reciprocal %1473 {approx = true} : vector<4x1xf32> -> vector<4x1xf32>
    %1475 = vector.broadcast %1474 : vector<4x1xf32> to vector<4x4xf32>
    %1476 = arith.mulf %1471, %1475 : vector<4x4xf32>
    %cst_438 = arith.constant dense<0.000000e+00> : vector<4x32xf32>
    %1477 = tpu.matmul %1476, %1463, %cst_438 {dimension_numbers = #tpu.dot_dimension_numbers<[1], [0], [0], [1], [0, 0, 1, 1], [], []>} : vector<4x4xf32>, vector<4x32xf32>, vector<4x32xf32> -> vector<4x32xf32>
    %c1_439 = arith.constant 1 : index
    %c0_440 = arith.constant 0 : index
    %c0_441 = arith.constant 0 : index
    %1478 = vector.load %arg25[%c1_439, %c0_440, %c0_441] : memref<2x4x4xf32, #tpu.memory_space<vmem>>, vector<1x4x4xf32>
    %1479 = vector.shape_cast %1478 : vector<1x4x4xf32> to vector<4x4xf32>
    %1480 = vector.shape_cast %1476 : vector<4x4xf32> to vector<1x4x4xf32>
    tpu.vector_store %arg25[%c1_439, %c0_440, %c0_441], %1480 {strides = array<i32>} : memref<2x4x4xf32, #tpu.memory_space<vmem>>, vector<1x4x4xf32>,
    %1481 = arith.mulf %1477, %1381 : vector<4x32xf32>
    %1482 = arith.subf %1477, %1381 : vector<4x32xf32>
    %1483 = tpu.concatenate %1477, %1381, %1481, %1482 in 1 : vector<4x32xf32>, vector<4x32xf32>, vector<4x32xf32>, vector<4x32xf32> -> vector<4x128xf32>
    %c0_442 = arith.constant 0 : index
    %c0_443 = arith.constant 0 : index
    %1484 = vector.load %arg20[%c0_442, %c0_443] : memref<128x64xf32, #tpu.memory_space<vmem>>, vector<128x64xf32>
    %cst_444 = arith.constant dense<0.000000e+00> : vector<4x64xf32>
    %1485 = tpu.matmul %1483, %1484, %cst_444 {dimension_numbers = #tpu.dot_dimension_numbers<[1], [0], [0], [1], [0, 0, 1, 1], [], []>} : vector<4x128xf32>, vector<128x64xf32>, vector<4x64xf32> -> vector<4x64xf32>
    %c0_445 = arith.constant 0 : index
    %c0_446 = arith.constant 0 : index
    %1486 = vector.load %arg21[%c0_445, %c0_446] : memref<1x64xf32, #tpu.memory_space<vmem>>, vector<1x64xf32>
    %1487 = vector.broadcast %1486 : vector<1x64xf32> to vector<4x64xf32>
    %1488 = arith.addf %1485, %1487 : vector<4x64xf32>
    %1489 = vector.extract_strided_slice %1488 {offsets = [0, 0], sizes = [4, 32], strides = [1, 1]} : vector<4x64xf32> to vector<4x32xf32>
    %cst_447 = arith.constant 0.000000e+00 : f32
    %1490 = vector.broadcast %cst_447 : f32 to vector<4x32xf32>
    %1491 = arith.subf %1490, %1489 : vector<4x32xf32>
    %1492 = math.exp %1491 : vector<4x32xf32>
    %cst_448 = arith.constant 1.000000e+00 : f32
    %1493 = vector.broadcast %cst_448 : f32 to vector<4x32xf32>
    %1494 = arith.addf %1493, %1492 : vector<4x32xf32>
    %1495 = tpu.reciprocal %1494 {approx = true} : vector<4x32xf32> -> vector<4x32xf32>
    %1496 = vector.extract_strided_slice %1488 {offsets = [0, 32], sizes = [4, 32], strides = [1, 1]} : vector<4x64xf32> to vector<4x32xf32>
    %1497 = math.tanh %1496 : vector<4x32xf32>
    %1498 = arith.mulf %1495, %1497 : vector<4x32xf32>
    %cst_449 = arith.constant 1.000000e+00 : f32
    %1499 = vector.broadcast %cst_449 : f32 to vector<4x32xf32>
    %1500 = arith.subf %1499, %1495 : vector<4x32xf32>
    %1501 = arith.mulf %1500, %1477 : vector<4x32xf32>
    %1502 = arith.addf %1498, %1501 : vector<4x32xf32>
    %cst_450 = arith.constant dense<0.000000e+00> : vector<32xf32>
    %1503 = vector.multi_reduction <add>, %1502, %cst_450 [0] : vector<4x32xf32> to vector<32xf32>
    %1504 = vector.shape_cast %1503 : vector<32xf32> to vector<1x32xf32>
    %c0_451 = arith.constant 0 : index
    %c0_452 = arith.constant 0 : index
    %1505 = vector.load %arg22[%c0_451, %c0_452] : memref<32x5xf32, #tpu.memory_space<vmem>>, vector<32x5xf32>
    %cst_453 = arith.constant dense<0.000000e+00> : vector<1x5xf32>
    %1506 = tpu.matmul %1504, %1505, %cst_453 {dimension_numbers = #tpu.dot_dimension_numbers<[1], [0], [0], [1], [0, 0, 1, 1], [], []>} : vector<1x32xf32>, vector<32x5xf32>, vector<1x5xf32> -> vector<1x5xf32>
    %c0_454 = arith.constant 0 : index
    %c0_455 = arith.constant 0 : index
    %1507 = vector.load %arg23[%c0_454, %c0_455] : memref<1x5xf32, #tpu.memory_space<vmem>>, vector<1x5xf32>
    %1508 = arith.addf %1506, %1507 : vector<1x5xf32>
    %cst_456 = arith.constant dense<0xFF800000> : vector<1xf32>
    %1509 = vector.multi_reduction <maximumf>, %1508, %cst_456 [1] : vector<1x5xf32> to vector<1xf32>
    %1510 = vector.shape_cast %1509 : vector<1xf32> to vector<1x1xf32>
    %1511 = vector.broadcast %1510 : vector<1x1xf32> to vector<1x5xf32>
    %1512 = arith.subf %1508, %1511 : vector<1x5xf32>
    %1513 = math.exp %1512 : vector<1x5xf32>
    %cst_457 = arith.constant dense<0.000000e+00> : vector<1xf32>
    %1514 = vector.multi_reduction <add>, %1513, %cst_457 [1] : vector<1x5xf32> to vector<1xf32>
    %1515 = vector.shape_cast %1514 : vector<1xf32> to vector<1x1xf32>
    %1516 = math.log %1515 : vector<1x1xf32>
    %1517 = vector.broadcast %1516 : vector<1x1xf32> to vector<1x5xf32>
    %1518 = arith.subf %1512, %1517 : vector<1x5xf32>
    %c1_458 = arith.constant 1 : index
    %c0_459 = arith.constant 0 : index
    %c0_460 = arith.constant 0 : index
    %1519 = vector.load %arg24[%c1_458, %c0_459, %c0_460] : memref<2x1x5xf32, #tpu.memory_space<vmem>>, vector<1x1x5xf32>
    %1520 = vector.shape_cast %1519 : vector<1x1x5xf32> to vector<1x5xf32>
    %1521 = vector.shape_cast %1518 : vector<1x5xf32> to vector<1x1x5xf32>
    tpu.vector_store %arg24[%c1_458, %c0_459, %c0_460], %1521 {strides = array<i32>} : memref<2x1x5xf32, #tpu.memory_space<vmem>>, vector<1x1x5xf32>,
    return
  }
}

</mosaic_0001>

<llo_original>
// kernel: escaps_hgat_forward.1
$region0: #{escaps_hgat_forward.1}
  #allocation0 [shape = 'u32[]', space=smem, size = 0x4, offset = 0x4, fixed_abs, tag = 'smem constant byte address 0x4 - core index']
  #allocation1 [shape = 'u32[144,128]{1,0:T(1,128)}', space=vmem, size = 0x12000, scoped, tag = 'internal scratch']
  %s0 = inlined_call_operand.vmem [shape: f32[16,32], index: 0, kind: input, shape index: {}]
  %s1 = inlined_call_operand.vmem [shape: f32[2,8,8], index: 1, kind: input, shape index: {}]
  %s2 = inlined_call_operand.vmem [shape: f32[32,32], index: 2, kind: input, shape index: {}]
  %s3 = inlined_call_operand.vmem [shape: f32[1,32], index: 3, kind: input, shape index: {}]
  %s4 = inlined_call_operand.vmem [shape: f32[32,128], index: 4, kind: input, shape index: {}]
  %s5 = inlined_call_operand.vmem [shape: f32[32,128], index: 5, kind: input, shape index: {}]
  %s6 = inlined_call_operand.vmem [shape: f32[32,32], index: 6, kind: input, shape index: {}]
  %s7 = inlined_call_operand.vmem [shape: f32[32,32], index: 7, kind: input, shape index: {}]
  %s8 = inlined_call_operand.vmem [shape: f32[32,32], index: 8, kind: input, shape index: {}]
  %s9 = inlined_call_operand.vmem [shape: f32[32,32], index: 9, kind: input, shape index: {}]
  %s10 = inlined_call_operand.vmem [shape: f32[32,32], index: 10, kind: input, shape index: {}]
  %s11 = inlined_call_operand.vmem [shape: f32[1,32], index: 11, kind: input, shape index: {}]
  %s12 = inlined_call_operand.vmem [shape: f32[32,32], index: 12, kind: input, shape index: {}]
  %s13 = inlined_call_operand.vmem [shape: f32[1,32], index: 13, kind: input, shape index: {}]
  %s14 = inlined_call_operand.vmem [shape: f32[32,32], index: 14, kind: input, shape index: {}]
  %s15 = inlined_call_operand.vmem [shape: f32[32,32], index: 15, kind: input, shape index: {}]
  %s16 = inlined_call_operand.vmem [shape: f32[32,32], index: 16, kind: input, shape index: {}]
  %s17 = inlined_call_operand.vmem [shape: f32[1,32], index: 17, kind: input, shape index: {}]
  %s18 = inlined_call_operand.vmem [shape: f32[32,64], index: 18, kind: input, shape index: {}]
  %s19 = inlined_call_operand.vmem [shape: f32[1,64], index: 19, kind: input, shape index: {}]
  %s20 = inlined_call_operand.vmem [shape: f32[128,64], index: 20, kind: input, shape index: {}]
  %s21 = inlined_call_operand.vmem [shape: f32[1,64], index: 21, kind: input, shape index: {}]
  %s22 = inlined_call_operand.vmem [shape: f32[32,5], index: 22, kind: input, shape index: {}]
  %s23 = inlined_call_operand.vmem [shape: f32[1,5], index: 23, kind: input, shape index: {}]
  %s24 = inlined_call_operand.hbm [shape: f32[2,1,5], index: 24, kind: output, shape index: {0}]
  %s25 = inlined_call_operand.hbm [shape: f32[2,4,4], index: 25, kind: output, shape index: {1}]
  %26 = xla_tuple %s24, %s25
  %s27 = sld [smem:[#allocation0]]
  $region114: #{escaps_hgat_forward.1} parent=0
    _
  %s29 = ssub.s32 1, %s27
  %s30 = scalar_select 0, %s29, %s27
  $region1: #{escaps_hgat_forward.1} parent=0
    #allocation2 [shape = 'u8[1024]{0}', space=vmem, size = 0x400, scoped, tag = 'output window, operand 0, single buffered']
    #allocation3 [shape = 's32[1]{0}', space=sflag, size = 0x4, scoped, tag = 'scoped memory for escaps_hgat_forward.1']
    #allocation4 [shape = 'u8[4096]{0}', space=vmem, size = 0x1000, scoped, tag = 'output window, operand 1, single buffered']
    #allocation5 [shape = 's32[1]{0}', space=sflag, size = 0x4, scoped, tag = 'scoped memory for escaps_hgat_forward.1']
    %31 = vsyncpa [#allocation3], 0
    %32 = vsyncpa [#allocation5], 0
    // Predicated region
    $region2: #{escaps_hgat_forward.1} parent=1 // pred_check
      _
    $region3: #{escaps_hgat_forward.1} parent=1 // pred_check_branch
      %34 = sbr.rel (0) target = $region5
    $region4: #{escaps_hgat_forward.1} parent=1 // pred_region
      _
    $region5: #{escaps_hgat_forward.1} parent=1 // pred_fallthru
      _
    // Predicated region
    $region6: #{escaps_hgat_forward.1} parent=1 // pred_check
      _
    $region7: #{escaps_hgat_forward.1} parent=1 // pred_check_branch
      %36 = sbr.rel (0) target = $region9
    $region8: #{escaps_hgat_forward.1} parent=1 // pred_region
      _
    $region9: #{escaps_hgat_forward.1} parent=1 // pred_fallthru
      _
    // Predicated region
    $region10: #{escaps_hgat_forward.1} parent=1 // pred_check
      _
    $region11: #{escaps_hgat_forward.1} parent=1 // pred_check_branch
      %38 = sbr.rel (0) target = $region13
    $region12: #{escaps_hgat_forward.1} parent=1 // pred_region
      _
    $region13: #{escaps_hgat_forward.1} parent=1 // pred_fallthru
      _
    // Predicated region
    $region14: #{escaps_hgat_forward.1} parent=1 // pred_check
      _
    $region15: #{escaps_hgat_forward.1} parent=1 // pred_check_branch
      %40 = sbr.rel (0) target = $region17
    $region16: #{escaps_hgat_forward.1} parent=1 // pred_region
      _
    $region17: #{escaps_hgat_forward.1} parent=1 // pred_fallthru
      _
    // Predicated region
    $region18: #{escaps_hgat_forward.1} parent=1 // pred_check
      _
    $region19: #{escaps_hgat_forward.1} parent=1 // pred_check_branch
      %42 = sbr.rel (0) target = $region21
    $region20: #{escaps_hgat_forward.1} parent=1 // pred_region
      _
    $region21: #{escaps_hgat_forward.1} parent=1 // pred_fallthru
      _
    // Predicated region
    $region22: #{escaps_hgat_forward.1} parent=1 // pred_check
      _
    $region23: #{escaps_hgat_forward.1} parent=1 // pred_check_branch
      %44 = sbr.rel (0) target = $region25
    $region24: #{escaps_hgat_forward.1} parent=1 // pred_region
      _
    $region25: #{escaps_hgat_forward.1} parent=1 // pred_fallthru
      _
    // Predicated region
    $region26: #{escaps_hgat_forward.1} parent=1 // pred_check
      _
    $region27: #{escaps_hgat_forward.1} parent=1 // pred_check_branch
      %46 = sbr.rel (0) target = $region29
    $region28: #{escaps_hgat_forward.1} parent=1 // pred_region
      _
    $region29: #{escaps_hgat_forward.1} parent=1 // pred_fallthru
      _
    // Predicated region
    $region30: #{escaps_hgat_forward.1} parent=1 // pred_check
      _
    $region31: #{escaps_hgat_forward.1} parent=1 // pred_check_branch
      %48 = sbr.rel (0) target = $region33
    $region32: #{escaps_hgat_forward.1} parent=1 // pred_region
      _
    $region33: #{escaps_hgat_forward.1} parent=1 // pred_fallthru
      _
    // Predicated region
    $region34: #{escaps_hgat_forward.1} parent=1 // pred_check
      _
    $region35: #{escaps_hgat_forward.1} parent=1 // pred_check_branch
      %50 = sbr.rel (0) target = $region37
    $region36: #{escaps_hgat_forward.1} parent=1 // pred_region
      _
    $region37: #{escaps_hgat_forward.1} parent=1 // pred_fallthru
      _
    // Predicated region
    $region38: #{escaps_hgat_forward.1} parent=1 // pred_check
      _
    $region39: #{escaps_hgat_forward.1} parent=1 // pred_check_branch
      %52 = sbr.rel (0) target = $region41
    $region40: #{escaps_hgat_forward.1} parent=1 // pred_region
      _
    $region41: #{escaps_hgat_forward.1} parent=1 // pred_fallthru
      _
    // Predicated region
    $region42: #{escaps_hgat_forward.1} parent=1 // pred_check
      _
    $region43: #{escaps_hgat_forward.1} parent=1 // pred_check_branch
      %54 = sbr.rel (0) target = $region45
    $region44: #{escaps_hgat_forward.1} parent=1 // pred_region
      _
    $region45: #{escaps_hgat_forward.1} parent=1 // pred_fallthru
      _
    // Predicated region
    $region46: #{escaps_hgat_forward.1} parent=1 // pred_check
      _
    $region47: #{escaps_hgat_forward.1} parent=1 // pred_check_branch
      %56 = sbr.rel (0) target = $region49
    $region48: #{escaps_hgat_forward.1} parent=1 // pred_region
      _
    $region49: #{escaps_hgat_forward.1} parent=1 // pred_fallthru
      _
    // Predicated region
    $region50: #{escaps_hgat_forward.1} parent=1 // pred_check
      _
    $region51: #{escaps_hgat_forward.1} parent=1 // pred_check_branch
      %58 = sbr.rel (0) target = $region53
    $region52: #{escaps_hgat_forward.1} parent=1 // pred_region
      _
    $region53: #{escaps_hgat_forward.1} parent=1 // pred_fallthru
      _
    // Predicated region
    $region54: #{escaps_hgat_forward.1} parent=1 // pred_check
      _
    $region55: #{escaps_hgat_forward.1} parent=1 // pred_check_branch
      %60 = sbr.rel (0) target = $region57
    $region56: #{escaps_hgat_forward.1} parent=1 // pred_region
      _
    $region57: #{escaps_hgat_forward.1} parent=1 // pred_fallthru
      _
    // Predicated region
    $region58: #{escaps_hgat_forward.1} parent=1 // pred_check
      _
    $region59: #{escaps_hgat_forward.1} parent=1 // pred_check_branch
      %62 = sbr.rel (0) target = $region61
    $region60: #{escaps_hgat_forward.1} parent=1 // pred_region
      _
    $region61: #{escaps_hgat_forward.1} parent=1 // pred_fallthru
      _
    // Predicated region
    $region62: #{escaps_hgat_forward.1} parent=1 // pred_check
      _
    $region63: #{escaps_hgat_forward.1} parent=1 // pred_check_branch
      %64 = sbr.rel (0) target = $region65
    $region64: #{escaps_hgat_forward.1} parent=1 // pred_region
      _
    $region65: #{escaps_hgat_forward.1} parent=1 // pred_fallthru
      _
    // Predicated region
    $region66: #{escaps_hgat_forward.1} parent=1 // pred_check
      _
    $region67: #{escaps_hgat_forward.1} parent=1 // pred_check_branch
      %66 = sbr.rel (0) target = $region69
    $region68: #{escaps_hgat_forward.1} parent=1 // pred_region
      _
    $region69: #{escaps_hgat_forward.1} parent=1 // pred_fallthru
      _
    // Predicated region
    $region70: #{escaps_hgat_forward.1} parent=1 // pred_check
      _
    $region71: #{escaps_hgat_forward.1} parent=1 // pred_check_branch
      %68 = sbr.rel (0) target = $region73
    $region72: #{escaps_hgat_forward.1} parent=1 // pred_region
      _
    $region73: #{escaps_hgat_forward.1} parent=1 // pred_fallthru
      _
    // Predicated region
    $region74: #{escaps_hgat_forward.1} parent=1 // pred_check
      _
    $region75: #{escaps_hgat_forward.1} parent=1 // pred_check_branch
      %70 = sbr.rel (0) target = $region77
    $region76: #{escaps_hgat_forward.1} parent=1 // pred_region
      _
    $region77: #{escaps_hgat_forward.1} parent=1 // pred_fallthru
      _
    // Predicated region
    $region78: #{escaps_hgat_forward.1} parent=1 // pred_check
      _
    $region79: #{escaps_hgat_forward.1} parent=1 // pred_check_branch
      %72 = sbr.rel (0) target = $region81
    $region80: #{escaps_hgat_forward.1} parent=1 // pred_region
      _
    $region81: #{escaps_hgat_forward.1} parent=1 // pred_fallthru
      _
    // Predicated region
    $region82: #{escaps_hgat_forward.1} parent=1 // pred_check
      _
    $region83: #{escaps_hgat_forward.1} parent=1 // pred_check_branch
      %74 = sbr.rel (0) target = $region85
    $region84: #{escaps_hgat_forward.1} parent=1 // pred_region
      _
    $region85: #{escaps_hgat_forward.1} parent=1 // pred_fallthru
      _
    // Predicated region
    $region86: #{escaps_hgat_forward.1} parent=1 // pred_check
      _
    $region87: #{escaps_hgat_forward.1} parent=1 // pred_check_branch
      %76 = sbr.rel (0) target = $region89
    $region88: #{escaps_hgat_forward.1} parent=1 // pred_region
      _
    $region89: #{escaps_hgat_forward.1} parent=1 // pred_fallthru
      _
    // Predicated region
    $region90: #{escaps_hgat_forward.1} parent=1 // pred_check
      _
    $region91: #{escaps_hgat_forward.1} parent=1 // pred_check_branch
      %78 = sbr.rel (0) target = $region93
    $region92: #{escaps_hgat_forward.1} parent=1 // pred_region
      _
    $region93: #{escaps_hgat_forward.1} parent=1 // pred_fallthru
      _
    // Predicated region
    $region94: #{escaps_hgat_forward.1} parent=1 // pred_check
      _
    $region95: #{escaps_hgat_forward.1} parent=1 // pred_check_branch
      %80 = sbr.rel (0) target = $region97
    $region96: #{escaps_hgat_forward.1} parent=1 // pred_region
      _
    $region97: #{escaps_hgat_forward.1} parent=1 // pred_fallthru
      _
    %v81 = vld [vmem:[%s0] sm:$0xff]
    %v82 = vld [vmem:[%s0 + $0x8] sm:$0xff]
    %v83 = vld [vmem:[%s2] sm:$0xff]
    %v84 = vld [vmem:[%s2 + $0x8] sm:$0xff]
    %v85 = vld [vmem:[%s2 + $0x10] sm:$0xff]
    %v86 = vld [vmem:[%s2 + $0x18] sm:$0xff]
    %v87 = vld [vmem:[%s3] sm:$0x1]
    %v89 = vlaneseq
    %v90 = vshrl.u32 %v89, 7
    %v91 = vsub.s32 0, %v90
    %v92 = vrot.slane %v87, %v91
    %vm94 = vcmask 261120
    %v96 = vsel %vm94, %v81, 0
    %v99 = vsel %vm94, %v82, 0
    %101 = vmatprep.subr.mxu0 0.0
    %102 = vmatpush1.msra.mxu0 %v83
    %103 = vmatprep.subr.mxu0 0.0
    %104 = vmatpush1.msra.mxu0 %v84
    %105 = vmatprep.subr.mxu0 0.0
    %106 = vmatpush1.msra.mxu0 %v85
    %107 = vmatprep.subr.mxu0 0.0
    %108 = vmatpush1.msra.mxu0 %v86
    %109 = vmatprep.subr.mxu0 0.0
    %110 = vmatpush1.msra.mxu0 0.0
    %111 = vmatprep.subr.mxu0 0.0
    %112 = vmatpush1.msra.mxu0 0.0
    %113 = vmatprep.subr.mxu0 0.0
    %114 = vmatpush1.msra.mxu0 0.0
    %115 = vmatprep.subr.mxu0 0.0
    %116 = vmatpush1.msra.mxu0 0.0
    %117 = vmatprep.subr.mxu0 0.0
    %118 = vmatpush1.msra.mxu0 0.0
    %119 = vmatprep.subr.mxu0 0.0
    %120 = vmatpush1.msra.mxu0 0.0
    %121 = vmatprep.subr.mxu0 0.0
    %122 = vmatpush1.msra.mxu0 0.0
    %123 = vmatprep.subr.mxu0 0.0
    %124 = vmatpush1.msra.mxu0 0.0
    %125 = vmatprep.subr.mxu0 0.0
    %126 = vmatpush1.msra.mxu0 0.0
    %127 = vmatprep.subr.mxu0 0.0
    %128 = vmatpush1.msra.mxu0 0.0
    %129 = vmatprep.subr.mxu0 0.0
    %130 = vmatpush1.msra.mxu0 0.0
    %131 = vmatprep.subr.mxu0 0.0
    %132 = vmatpush1.msra.mxu0 0.0
    %133 = vmatprep.subr.mxu0 0.0
    %134 = vmatpush1.msra.mxu0 0.0
    %135 = vmatprep.subr.mxu0 0.0
    %136 = vmatpush1.msra.mxu0 0.0
    %137 = vmatprep.subr.mxu0 0.0
    %138 = vmatpush1.msra.mxu0 0.0
    %139 = vmatprep.subr.mxu0 0.0
    %140 = vmatpush1.msra.mxu0 0.0
    %141 = vmatprep.subr.mxu0 0.0
    %142 = vmatpush1.msra.mxu0 0.0
    %143 = vmatprep.subr.mxu0 0.0
    %144 = vmatpush1.msra.mxu0 0.0
    %145 = vmatprep.subr.mxu0 0.0
    %146 = vmatpush1.msra.mxu0 0.0
    %147 = vmatprep.subr.mxu0 0.0
    %148 = vmatpush1.msra.mxu0 0.0
    %149 = vmatprep.subr.mxu0 0.0
    %150 = vmatpush1.msra.mxu0 0.0
    %151 = vmatprep.subr.mxu0 0.0
    %152 = vmatpush1.msra.mxu0 0.0
    %153 = vmatprep.subr.mxu0 0.0
    %154 = vmatpush1.msra.mxu0 0.0
    %155 = vmatprep.subr.mxu0 0.0
    %156 = vmatpush1.msra.mxu0 0.0
    %157 = vmatprep.subr.mxu0 0.0
    %158 = vmatpush1.msra.mxu0 0.0
    %159 = vmatprep.subr.mxu0 0.0
    %160 = vmatpush1.msra.mxu0 0.0
    %161 = vmatprep.subr.mxu0 0.0
    %162 = vmatpush1.msra.mxu0 0.0
    %163 = vmatprep.subr.mxu0 0.0
    %164 = vmatpush1.msra.mxu0 0.0
    %165 = vmatprep.mubr.f32.mxu0 0.0
    %166 = vmatmul.mubr.f32.gmra.mrb[0].mxu0 %v96
    %v167 = vpop.f32.mrb[0].mxu0
    %v168 = vadd.f32 %v92, %v167
    %v169 = vpop.f32.mrb[0].mxu0
    %170 = vmatprep.mubr.f32.mxu0 0.0
    %171 = vmatmul.mubr.f32.gmra.mrb[0].mxu0 %v99
    %v172 = vpop.f32.mrb[0].mxu0
    %v173 = vadd.f32 %v92, %v172
    %v174 = vpop.f32.mrb[0].mxu0
    %175 = vdwg.mxu0
    %v176 = vtanh.pop %v168
    %v177 = vtanh.pop %v173
    %v178 = vld [vmem:[%s4] sm:$0xff]
    %v179 = vld [vmem:[%s4 + $0x8] sm:$0xff]
    %v180 = vld [vmem:[%s4 + $0x10] sm:$0xff]
    %v181 = vld [vmem:[%s4 + $0x18] sm:$0xff]
    %v183 = vsel %vm94, %v176, 0
    %v186 = vsel %vm94, %v177, 0
    %188 = vmatprep.subr.mxu0 0.0
    %189 = vmatpush1.msra.mxu0 %v178
    %190 = vmatprep.subr.mxu0 0.0
    %191 = vmatpush1.msra.mxu0 %v179
    %192 = vmatprep.subr.mxu0 0.0
    %193 = vmatpush1.msra.mxu0 %v180
    %194 = vmatprep.subr.mxu0 0.0
    %195 = vmatpush1.msra.mxu0 %v181
    %196 = vmatprep.subr.mxu0 0.0
    %197 = vmatpush1.msra.mxu0 0.0
    %198 = vmatprep.subr.mxu0 0.0
    %199 = vmatpush1.msra.mxu0 0.0
    %200 = vmatprep.subr.mxu0 0.0
    %201 = vmatpush1.msra.mxu0 0.0
    %202 = vmatprep.subr.mxu0 0.0
    %203 = vmatpush1.msra.mxu0 0.0
    %204 = vmatprep.subr.mxu0 0.0
    %205 = vmatpush1.msra.mxu0 0.0
    %206 = vmatprep.subr.mxu0 0.0
    %207 = vmatpush1.msra.mxu0 0.0
    %208 = vmatprep.subr.mxu0 0.0
    %209 = vmatpush1.msra.mxu0 0.0
    %210 = vmatprep.subr.mxu0 0.0
    %211 = vmatpush1.msra.mxu0 0.0
    %212 = vmatprep.subr.mxu0 0.0
    %213 = vmatpush1.msra.mxu0 0.0
    %214 = vmatprep.subr.mxu0 0.0
    %215 = vmatpush1.msra.mxu0 0.0
    %216 = vmatprep.subr.mxu0 0.0
    %217 = vmatpush1.msra.mxu0 0.0
    %218 = vmatprep.subr.mxu0 0.0
    %219 = vmatpush1.msra.mxu0 0.0
    %220 = vmatprep.subr.mxu0 0.0
    %221 = vmatpush1.msra.mxu0 0.0
    %222 = vmatprep.subr.mxu0 0.0
    %223 = vmatpush1.msra.mxu0 0.0
    %224 = vmatprep.subr.mxu0 0.0
    %225 = vmatpush1.msra.mxu0 0.0
    %226 = vmatprep.subr.mxu0 0.0
    %227 = vmatpush1.msra.mxu0 0.0
    %228 = vmatprep.subr.mxu0 0.0
    %229 = vmatpush1.msra.mxu0 0.0
    %230 = vmatprep.subr.mxu0 0.0
    %231 = vmatpush1.msra.mxu0 0.0
    %232 = vmatprep.subr.mxu0 0.0
    %233 = vmatpush1.msra.mxu0 0.0
    %234 = vmatprep.subr.mxu0 0.0
    %235 = vmatpush1.msra.mxu0 0.0
    %236 = vmatprep.subr.mxu0 0.0
    %237 = vmatpush1.msra.mxu0 0.0
    %238 = vmatprep.subr.mxu0 0.0
    %239 = vmatpush1.msra.mxu0 0.0
    %240 = vmatprep.subr.mxu0 0.0
    %241 = vmatpush1.msra.mxu0 0.0
    %242 = vmatprep.subr.mxu0 0.0
    %243 = vmatpush1.msra.mxu0 0.0
    %244 = vmatprep.subr.mxu0 0.0
    %245 = vmatpush1.msra.mxu0 0.0
    %246 = vmatprep.subr.mxu0 0.0
    %247 = vmatpush1.msra.mxu0 0.0
    %248 = vmatprep.subr.mxu0 0.0
    %249 = vmatpush1.msra.mxu0 0.0
    %250 = vmatprep.subr.mxu0 0.0
    %251 = vmatpush1.msra.mxu0 0.0
    %252 = vmatprep.mubr.f32.mxu0 0.0
    %253 = vmatmul.mubr.f32.gmra.mrb[0].mxu0 %v183
    %v254 = vpop.f32.mrb[0].mxu0
    %v255 = vadd.f32 0.0, %v254
    %v256 = vpop.f32.mrb[0].mxu0
    %257 = vmatprep.mubr.f32.mxu0 0.0
    %258 = vmatmul.mubr.f32.gmra.mrb[0].mxu0 %v186
    %v259 = vpop.f32.mrb[0].mxu0
    %v260 = vadd.f32 0.0, %v259
    %v261 = vpop.f32.mrb[0].mxu0
    %262 = vdwg.mxu0
    %vm263 = vcmask 31744
    %v264 = vsel %vm263, 1.0, 0.0
    %265 = vadd.xlane.f32.xlu0 %v264
    %v266 = vpop.xlane.xlu0 %265
    %v267 = vrcp.pop %v266
    %v268 = vmul.f32 %v267, %v255
    %v269 = vsel %vm94, %v268, 0.0
    %v270 = vrot.slane %v269, 4
    %v271 = vadd.f32 %v269, %v270
    %v272 = vrot.slane %v271, 2
    %v273 = vadd.f32 %v271, %v272
    %v274 = vrot.slane %v273, 1
    %v275 = vadd.f32 %v273, %v274
    %vm276 = vcmask 523520
    %v277 = vsel %vm276, %v268, 0.0
    %v278 = vrot.slane %v277, 4
    %v279 = vadd.f32 %v277, %v278
    %v280 = vrot.slane %v279, 2
    %v281 = vadd.f32 %v279, %v280
    %v282 = vrot.slane %v281, 1
    %v283 = vadd.f32 %v281, %v282
    %vm284 = vcmask 785920
    %v285 = vsel %vm284, %v268, 0.0
    %v286 = vrot.slane %v285, 4
    %v287 = vadd.f32 %v285, %v286
    %v288 = vrot.slane %v287, 2
    %v289 = vadd.f32 %v287, %v288
    %v290 = vrot.slane %v289, 1
    %v291 = vadd.f32 %v289, %v290
    %vm292 = vcmask 1048320
    %v293 = vsel %vm292, %v268, 0.0
    %v294 = vrot.slane %v293, 4
    %v295 = vadd.f32 %v293, %v294
    %v296 = vrot.slane %v295, 2
    %v297 = vadd.f32 %v295, %v296
    %v298 = vrot.slane %v297, 1
    %v299 = vadd.f32 %v297, %v298
    %v300 = vmul.f32 %v275, %v275
    %v301 = vsel %vm94, %v300, 0.0
    %302 = vadd.xlane.f32.xlu0 %v301
    %v303 = vpop.xlane.xlu0 %302
    %v304 = vadd.f32 %v303, 1.0
    %v305 = vrcp.pop %v304
    %v306 = vmul.f32 %v303, %v305
    %v307 = vadd.f32 %v303, 1e-08
    %v308 = vrsqrt.pop %v307
    %v309 = vmul.f32 %v306, %v308
    %v310 = vmul.f32 %v309, %v275
    %v311 = vmul.f32 %v283, %v283
    %313 = vrot.lane.b32.xlu0 %v311, 96
    %v314 = vpop.permute.xlu0 %313
    %v316 = vsel %vm94, %v314, 0.0
    %317 = vadd.xlane.f32.xlu0 %v316
    %v318 = vpop.xlane.xlu0 %317
    %v319 = vadd.f32 %v318, 1.0
    %v320 = vrcp.pop %v319
    %v321 = vmul.f32 %v318, %v320
    %v322 = vadd.f32 %v318, 1e-08
    %v323 = vrsqrt.pop %v322
    %v324 = vmul.f32 %v321, %v323
    %v325 = vmul.f32 %v324, %v283
    %v326 = vmul.f32 %v291, %v291
    %328 = vrot.lane.b32.xlu0 %v326, 64
    %v329 = vpop.permute.xlu0 %328
    %v331 = vsel %vm94, %v329, 0.0
    %332 = vadd.xlane.f32.xlu0 %v331
    %v333 = vpop.xlane.xlu0 %332
    %v334 = vadd.f32 %v333, 1.0
    %v335 = vrcp.pop %v334
    %v336 = vmul.f32 %v333, %v335
    %v337 = vadd.f32 %v333, 1e-08
    %v338 = vrsqrt.pop %v337
    %v339 = vmul.f32 %v336, %v338
    %v340 = vmul.f32 %v339, %v291
    %v341 = vmul.f32 %v299, %v299
    %343 = vrot.lane.b32.xlu0 %v341, 32
    %v344 = vpop.permute.xlu0 %343
    %v346 = vsel %vm94, %v344, 0.0
    %347 = vadd.xlane.f32.xlu0 %v346
    %v348 = vpop.xlane.xlu0 %347
    %v349 = vadd.f32 %v348, 1.0
    %v350 = vrcp.pop %v349
    %v351 = vmul.f32 %v348, %v350
    %v352 = vadd.f32 %v348, 1e-08
    %v353 = vrsqrt.pop %v352
    %v354 = vmul.f32 %v351, %v353
    %v355 = vmul.f32 %v354, %v299
    %v356 = vmul.f32 %v255, %v310
    %v357 = vsel %vm94, %v356, 0.0
    %358 = vadd.xlane.f32.xlu0 %v357
    %v359 = vpop.xlane.xlu0 %358
    %v360 = vmul.f32 %v255, %v325
    %362 = vrot.lane.b32.xlu0 %v360, 96
    %v363 = vpop.permute.xlu0 %362
    %v365 = vsel %vm94, %v363, 0.0
    %366 = vadd.xlane.f32.xlu0 %v365
    %v367 = vpop.xlane.xlu0 %366
    %v368 = vmul.f32 %v255, %v340
    %370 = vrot.lane.b32.xlu0 %v368, 64
    %v371 = vpop.permute.xlu0 %370
    %v373 = vsel %vm94, %v371, 0.0
    %374 = vadd.xlane.f32.xlu0 %v373
    %v375 = vpop.xlane.xlu0 %374
    %v376 = vmul.f32 %v255, %v355
    %378 = vrot.lane.b32.xlu0 %v376, 32
    %v379 = vpop.permute.xlu0 %378
    %v381 = vsel %vm94, %v379, 0.0
    %382 = vadd.xlane.f32.xlu0 %v381
    %v383 = vpop.xlane.xlu0 %382
    %vm384 = vcmask 7168
    %v385 = vsel %vm384, %v359, %v367
    %vm386 = vcmask 15360
    %v387 = vsel %vm386, %v385, %v375
    %vm388 = vcmask 23552
    %v389 = vsel %vm388, %v387, %v383
    %v390 = vadd.f32 %v389, 0.0
    %v391 = vsel %vm263, %v390, -inf
    %392 = vmax.xlane.f32.xlu0 %v391
    %v393 = vpop.xlane.xlu0 %392
    %v394 = vsub.f32 %v390, %v393
    %v395 = vmul.f32 %v394, 1.442695
    %v396 = vpow.pop %v395
    %v397 = vsel %vm263, %v396, 0.0
    %398 = vadd.xlane.f32.xlu0 %v397
    %v399 = vpop.xlane.xlu0 %398
    %v400 = vrcp.pop %v399
    %v401 = vmul.f32 %v396, %v400
    %403 = vset.pattern.permute.xlu0 0
    %404 = vperm.xlu0 %403, %v401
    %v405 = vpop.permute.xlu0 %404
    %v407 = vmul.f32 %v405, %v255
    %v408 = vsel %vm94, %v407, 0.0
    %v409 = vrot.slane %v408, 4
    %v410 = vadd.f32 %v408, %v409
    %v411 = vrot.slane %v410, 2
    %v412 = vadd.f32 %v410, %v411
    %v413 = vrot.slane %v412, 1
    %v414 = vadd.f32 %v412, %v413
    %415 = vset.pattern.permute.xlu0 1
    %416 = vperm.xlu0 %415, %v401
    %v417 = vpop.permute.xlu0 %416
    %v419 = vmul.f32 %v417, %v255
    %v420 = vsel %vm276, %v419, 0.0
    %v421 = vrot.slane %v420, 4
    %v422 = vadd.f32 %v420, %v421
    %v423 = vrot.slane %v422, 2
    %v424 = vadd.f32 %v422, %v423
    %v425 = vrot.slane %v424, 1
    %v426 = vadd.f32 %v424, %v425
    %427 = vset.pattern.permute.xlu0 2
    %428 = vperm.xlu0 %427, %v401
    %v429 = vpop.permute.xlu0 %428
    %v431 = vmul.f32 %v429, %v255
    %v432 = vsel %vm284, %v431, 0.0
    %v433 = vrot.slane %v432, 4
    %v434 = vadd.f32 %v432, %v433
    %v435 = vrot.slane %v434, 2
    %v436 = vadd.f32 %v434, %v435
    %v437 = vrot.slane %v436, 1
    %v438 = vadd.f32 %v436, %v437
    %439 = vset.pattern.permute.xlu0 3
    %440 = vperm.xlu0 %439, %v401
    %v441 = vpop.permute.xlu0 %440
    %v443 = vmul.f32 %v441, %v255
    %v444 = vsel %vm292, %v443, 0.0
    %v445 = vrot.slane %v444, 4
    %v446 = vadd.f32 %v444, %v445
    %v447 = vrot.slane %v446, 2
    %v448 = vadd.f32 %v446, %v447
    %v449 = vrot.slane %v448, 1
    %v450 = vadd.f32 %v448, %v449
    %v451 = vmul.f32 %v414, %v414
    %v452 = vsel %vm94, %v451, 0.0
    %453 = vadd.xlane.f32.xlu0 %v452
    %v454 = vpop.xlane.xlu0 %453
    %v455 = vadd.f32 %v454, 1.0
    %v456 = vrcp.pop %v455
    %v457 = vmul.f32 %v454, %v456
    %v458 = vadd.f32 %v454, 1e-08
    %v459 = vrsqrt.pop %v458
    %v460 = vmul.f32 %v457, %v459
    %v461 = vmul.f32 %v460, %v414
    %v462 = vmul.f32 %v426, %v426
    %464 = vrot.lane.b32.xlu0 %v462, 96
    %v465 = vpop.permute.xlu0 %464
    %v467 = vsel %vm94, %v465, 0.0
    %468 = vadd.xlane.f32.xlu0 %v467
    %v469 = vpop.xlane.xlu0 %468
    %v470 = vadd.f32 %v469, 1.0
    %v471 = vrcp.pop %v470
    %v472 = vmul.f32 %v469, %v471
    %v473 = vadd.f32 %v469, 1e-08
    %v474 = vrsqrt.pop %v473
    %v475 = vmul.f32 %v472, %v474
    %v476 = vmul.f32 %v475, %v426
    %v477 = vmul.f32 %v438, %v438
    %479 = vrot.lane.b32.xlu0 %v477, 64
    %v480 = vpop.permute.xlu0 %479
    %v482 = vsel %vm94, %v480, 0.0
    %483 = vadd.xlane.f32.xlu0 %v482
    %v484 = vpop.xlane.xlu0 %483
    %v485 = vadd.f32 %v484, 1.0
    %v486 = vrcp.pop %v485
    %v487 = vmul.f32 %v484, %v486
    %v488 = vadd.f32 %v484, 1e-08
    %v489 = vrsqrt.pop %v488
    %v490 = vmul.f32 %v487, %v489
    %v491 = vmul.f32 %v490, %v438
    %v492 = vmul.f32 %v450, %v450
    %494 = vrot.lane.b32.xlu0 %v492, 32
    %v495 = vpop.permute.xlu0 %494
    %v497 = vsel %vm94, %v495, 0.0
    %498 = vadd.xlane.f32.xlu0 %v497
    %v499 = vpop.xlane.xlu0 %498
    %v500 = vadd.f32 %v499, 1.0
    %v501 = vrcp.pop %v500
    %v502 = vmul.f32 %v499, %v501
    %v503 = vadd.f32 %v499, 1e-08
    %v504 = vrsqrt.pop %v503
    %v505 = vmul.f32 %v502, %v504
    %v506 = vmul.f32 %v505, %v450
    %v507 = vmul.f32 %v255, %v461
    %v508 = vsel %vm94, %v507, 0.0
    %509 = vadd.xlane.f32.xlu0 %v508
    %v510 = vpop.xlane.xlu0 %509
    %v511 = vmul.f32 %v255, %v476
    %513 = vrot.lane.b32.xlu0 %v511, 96
    %v514 = vpop.permute.xlu0 %513
    %v516 = vsel %vm94, %v514, 0.0
    %517 = vadd.xlane.f32.xlu0 %v516
    %v518 = vpop.xlane.xlu0 %517
    %v519 = vmul.f32 %v255, %v491
    %521 = vrot.lane.b32.xlu0 %v519, 64
    %v522 = vpop.permute.xlu0 %521
    %v524 = vsel %vm94, %v522, 0.0
    %525 = vadd.xlane.f32.xlu0 %v524
    %v526 = vpop.xlane.xlu0 %525
    %v527 = vmul.f32 %v255, %v506
    %529 = vrot.lane.b32.xlu0 %v527, 32
    %v530 = vpop.permute.xlu0 %529
    %v532 = vsel %vm94, %v530, 0.0
    %533 = vadd.xlane.f32.xlu0 %v532
    %v534 = vpop.xlane.xlu0 %533
    %v535 = vsel %vm384, %v510, %v518
    %v536 = vsel %vm386, %v535, %v526
    %v537 = vsel %vm388, %v536, %v534
    %v538 = vadd.f32 %v390, %v537
    %v539 = vsel %vm263, %v538, -inf
    %540 = vmax.xlane.f32.xlu0 %v539
    %v541 = vpop.xlane.xlu0 %540
    %v542 = vsub.f32 %v538, %v541
    %v543 = vmul.f32 %v542, 1.442695
    %v544 = vpow.pop %v543
    %v545 = vsel %vm263, %v544, 0.0
    %546 = vadd.xlane.f32.xlu0 %v545
    %v547 = vpop.xlane.xlu0 %546
    %v548 = vrcp.pop %v547
    %v549 = vmul.f32 %v544, %v548
    %551 = vset.pattern.permute.xlu0 0
    %552 = vperm.xlu0 %551, %v549
    %v553 = vpop.permute.xlu0 %552
    %v555 = vmul.f32 %v553, %v255
    %v556 = vsel %vm94, %v555, 0.0
    %v557 = vrot.slane %v556, 4
    %v558 = vadd.f32 %v556, %v557
    %v559 = vrot.slane %v558, 2
    %v560 = vadd.f32 %v558, %v559
    %v561 = vrot.slane %v560, 1
    %v562 = vadd.f32 %v560, %v561
    %563 = vset.pattern.permute.xlu0 1
    %564 = vperm.xlu0 %563, %v549
    %v565 = vpop.permute.xlu0 %564
    %v567 = vmul.f32 %v565, %v255
    %v568 = vsel %vm276, %v567, 0.0
    %v569 = vrot.slane %v568, 4
    %v570 = vadd.f32 %v568, %v569
    %v571 = vrot.slane %v570, 2
    %v572 = vadd.f32 %v570, %v571
    %v573 = vrot.slane %v572, 1
    %v574 = vadd.f32 %v572, %v573
    %575 = vset.pattern.permute.xlu0 2
    %576 = vperm.xlu0 %575, %v549
    %v577 = vpop.permute.xlu0 %576
    %v579 = vmul.f32 %v577, %v255
    %v580 = vsel %vm284, %v579, 0.0
    %v581 = vrot.slane %v580, 4
    %v582 = vadd.f32 %v580, %v581
    %v583 = vrot.slane %v582, 2
    %v584 = vadd.f32 %v582, %v583
    %v585 = vrot.slane %v584, 1
    %v586 = vadd.f32 %v584, %v585
    %587 = vset.pattern.permute.xlu0 3
    %588 = vperm.xlu0 %587, %v549
    %v589 = vpop.permute.xlu0 %588
    %v591 = vmul.f32 %v589, %v255
    %v592 = vsel %vm292, %v591, 0.0
    %v593 = vrot.slane %v592, 4
    %v594 = vadd.f32 %v592, %v593
    %v595 = vrot.slane %v594, 2
    %v596 = vadd.f32 %v594, %v595
    %v597 = vrot.slane %v596, 1
    %v598 = vadd.f32 %v596, %v597
    %v599 = vmul.f32 %v562, %v562
    %v600 = vsel %vm94, %v599, 0.0
    %601 = vadd.xlane.f32.xlu0 %v600
    %v602 = vpop.xlane.xlu0 %601
    %v603 = vadd.f32 %v602, 1.0
    %v604 = vrcp.pop %v603
    %v605 = vmul.f32 %v602, %v604
    %v606 = vadd.f32 %v602, 1e-08
    %v607 = vrsqrt.pop %v606
    %v608 = vmul.f32 %v605, %v607
    %v609 = vmul.f32 %v608, %v562
    %v610 = vmul.f32 %v574, %v574
    %612 = vrot.lane.b32.xlu0 %v610, 96
    %v613 = vpop.permute.xlu0 %612
    %v615 = vsel %vm94, %v613, 0.0
    %616 = vadd.xlane.f32.xlu0 %v615
    %v617 = vpop.xlane.xlu0 %616
    %v618 = vadd.f32 %v617, 1.0
    %v619 = vrcp.pop %v618
    %v620 = vmul.f32 %v617, %v619
    %v621 = vadd.f32 %v617, 1e-08
    %v622 = vrsqrt.pop %v621
    %v623 = vmul.f32 %v620, %v622
    %v624 = vmul.f32 %v623, %v574
    %v625 = vmul.f32 %v586, %v586
    %627 = vrot.lane.b32.xlu0 %v625, 64
    %v628 = vpop.permute.xlu0 %627
    %v630 = vsel %vm94, %v628, 0.0
    %631 = vadd.xlane.f32.xlu0 %v630
    %v632 = vpop.xlane.xlu0 %631
    %v633 = vadd.f32 %v632, 1.0
    %v634 = vrcp.pop %v633
    %v635 = vmul.f32 %v632, %v634
    %v636 = vadd.f32 %v632, 1e-08
    %v637 = vrsqrt.pop %v636
    %v638 = vmul.f32 %v635, %v637
    %v639 = vmul.f32 %v638, %v586
    %v640 = vmul.f32 %v598, %v598
    %642 = vrot.lane.b32.xlu0 %v640, 32
    %v643 = vpop.permute.xlu0 %642
    %v645 = vsel %vm94, %v643, 0.0
    %646 = vadd.xlane.f32.xlu0 %v645
    %v647 = vpop.xlane.xlu0 %646
    %v648 = vadd.f32 %v647, 1.0
    %v649 = vrcp.pop %v648
    %v650 = vmul.f32 %v647, %v649
    %v651 = vadd.f32 %v647, 1e-08
    %v652 = vrsqrt.pop %v651
    %v653 = vmul.f32 %v650, %v652
    %v654 = vmul.f32 %v653, %v598
    %656 = vrot.lane.b32.xlu0 %v624, 96
    %v657 = vpop.permute.xlu0 %656
    %660 = vrot.lane.b32.xlu0 %v639, 64
    %v661 = vpop.permute.xlu0 %660
    %664 = vrot.lane.b32.xlu0 %v654, 32
    %v665 = vpop.permute.xlu0 %664
    %vm667 = vcmask 1040384
    %v668 = vsel %vm667, %v609, %v657
    %vm669 = vcmask 1041408
    %v670 = vsel %vm669, %v668, %v661
    %vm671 = vcmask 1042432
    %v672 = vsel %vm671, %v670, %v665
    %v673 = vmul.f32 %v267, %v260
    %v674 = vsel %vm94, %v673, 0.0
    %v675 = vrot.slane %v674, 4
    %v676 = vadd.f32 %v674, %v675
    %v677 = vrot.slane %v676, 2
    %v678 = vadd.f32 %v676, %v677
    %v679 = vrot.slane %v678, 1
    %v680 = vadd.f32 %v678, %v679
    %v681 = vsel %vm276, %v673, 0.0
    %v682 = vrot.slane %v681, 4
    %v683 = vadd.f32 %v681, %v682
    %v684 = vrot.slane %v683, 2
    %v685 = vadd.f32 %v683, %v684
    %v686 = vrot.slane %v685, 1
    %v687 = vadd.f32 %v685, %v686
    %v688 = vsel %vm284, %v673, 0.0
    %v689 = vrot.slane %v688, 4
    %v690 = vadd.f32 %v688, %v689
    %v691 = vrot.slane %v690, 2
    %v692 = vadd.f32 %v690, %v691
    %v693 = vrot.slane %v692, 1
    %v694 = vadd.f32 %v692, %v693
    %v695 = vsel %vm292, %v673, 0.0
    %v696 = vrot.slane %v695, 4
    %v697 = vadd.f32 %v695, %v696
    %v698 = vrot.slane %v697, 2
    %v699 = vadd.f32 %v697, %v698
    %v700 = vrot.slane %v699, 1
    %v701 = vadd.f32 %v699, %v700
    %v702 = vmul.f32 %v680, %v680
    %v703 = vsel %vm94, %v702, 0.0
    %704 = vadd.xlane.f32.xlu0 %v703
    %v705 = vpop.xlane.xlu0 %704
    %v706 = vadd.f32 %v705, 1.0
    %v707 = vrcp.pop %v706
    %v708 = vmul.f32 %v705, %v707
    %v709 = vadd.f32 %v705, 1e-08
    %v710 = vrsqrt.pop %v709
    %v711 = vmul.f32 %v708, %v710
    %v712 = vmul.f32 %v711, %v680
    %v713 = vmul.f32 %v687, %v687
    %715 = vrot.lane.b32.xlu0 %v713, 96
    %v716 = vpop.permute.xlu0 %715
    %v718 = vsel %vm94, %v716, 0.0
    %719 = vadd.xlane.f32.xlu0 %v718
    %v720 = vpop.xlane.xlu0 %719
    %v721 = vadd.f32 %v720, 1.0
    %v722 = vrcp.pop %v721
    %v723 = vmul.f32 %v720, %v722
    %v724 = vadd.f32 %v720, 1e-08
    %v725 = vrsqrt.pop %v724
    %v726 = vmul.f32 %v723, %v725
    %v727 = vmul.f32 %v726, %v687
    %v728 = vmul.f32 %v694, %v694
    %730 = vrot.lane.b32.xlu0 %v728, 64
    %v731 = vpop.permute.xlu0 %730
    %v733 = vsel %vm94, %v731, 0.0
    %734 = vadd.xlane.f32.xlu0 %v733
    %v735 = vpop.xlane.xlu0 %734
    %v736 = vadd.f32 %v735, 1.0
    %v737 = vrcp.pop %v736
    %v738 = vmul.f32 %v735, %v737
    %v739 = vadd.f32 %v735, 1e-08
    %v740 = vrsqrt.pop %v739
    %v741 = vmul.f32 %v738, %v740
    %v742 = vmul.f32 %v741, %v694
    %v743 = vmul.f32 %v701, %v701
    %745 = vrot.lane.b32.xlu0 %v743, 32
    %v746 = vpop.permute.xlu0 %745
    %v748 = vsel %vm94, %v746, 0.0
    %749 = vadd.xlane.f32.xlu0 %v748
    %v750 = vpop.xlane.xlu0 %749
    %v751 = vadd.f32 %v750, 1.0
    %v752 = vrcp.pop %v751
    %v753 = vmul.f32 %v750, %v752
    %v754 = vadd.f32 %v750, 1e-08
    %v755 = vrsqrt.pop %v754
    %v756 = vmul.f32 %v753, %v755
    %v757 = vmul.f32 %v756, %v701
    %v758 = vmul.f32 %v260, %v712
    %v759 = vsel %vm94, %v758, 0.0
    %760 = vadd.xlane.f32.xlu0 %v759
    %v761 = vpop.xlane.xlu0 %760
    %v762 = vmul.f32 %v260, %v727
    %764 = vrot.lane.b32.xlu0 %v762, 96
    %v765 = vpop.permute.xlu0 %764
    %v767 = vsel %vm94, %v765, 0.0
    %768 = vadd.xlane.f32.xlu0 %v767
    %v769 = vpop.xlane.xlu0 %768
    %v770 = vmul.f32 %v260, %v742
    %772 = vrot.lane.b32.xlu0 %v770, 64
    %v773 = vpop.permute.xlu0 %772
    %v775 = vsel %vm94, %v773, 0.0
    %776 = vadd.xlane.f32.xlu0 %v775
    %v777 = vpop.xlane.xlu0 %776
    %v778 = vmul.f32 %v260, %v757
    %780 = vrot.lane.b32.xlu0 %v778, 32
    %v781 = vpop.permute.xlu0 %780
    %v783 = vsel %vm94, %v781, 0.0
    %784 = vadd.xlane.f32.xlu0 %v783
    %v785 = vpop.xlane.xlu0 %784
    %v786 = vsel %vm384, %v761, %v769
    %v787 = vsel %vm386, %v786, %v777
    %v788 = vsel %vm388, %v787, %v785
    %v789 = vadd.f32 %v788, 0.0
    %v790 = vsel %vm263, %v789, -inf
    %791 = vmax.xlane.f32.xlu0 %v790
    %v792 = vpop.xlane.xlu0 %791
    %v793 = vsub.f32 %v789, %v792
    %v794 = vmul.f32 %v793, 1.442695
    %v795 = vpow.pop %v794
    %v796 = vsel %vm263, %v795, 0.0
    %797 = vadd.xlane.f32.xlu0 %v796
    %v798 = vpop.xlane.xlu0 %797
    %v799 = vrcp.pop %v798
    %v800 = vmul.f32 %v795, %v799
    %802 = vset.pattern.permute.xlu0 0
    %803 = vperm.xlu0 %802, %v800
    %v804 = vpop.permute.xlu0 %803
    %v806 = vmul.f32 %v804, %v260
    %v807 = vsel %vm94, %v806, 0.0
    %v808 = vrot.slane %v807, 4
    %v809 = vadd.f32 %v807, %v808
    %v810 = vrot.slane %v809, 2
    %v811 = vadd.f32 %v809, %v810
    %v812 = vrot.slane %v811, 1
    %v813 = vadd.f32 %v811, %v812
    %814 = vset.pattern.permute.xlu0 1
    %815 = vperm.xlu0 %814, %v800
    %v816 = vpop.permute.xlu0 %815
    %v818 = vmul.f32 %v816, %v260
    %v819 = vsel %vm276, %v818, 0.0
    %v820 = vrot.slane %v819, 4
    %v821 = vadd.f32 %v819, %v820
    %v822 = vrot.slane %v821, 2
    %v823 = vadd.f32 %v821, %v822
    %v824 = vrot.slane %v823, 1
    %v825 = vadd.f32 %v823, %v824
    %826 = vset.pattern.permute.xlu0 2
    %827 = vperm.xlu0 %826, %v800
    %v828 = vpop.permute.xlu0 %827
    %v830 = vmul.f32 %v828, %v260
    %v831 = vsel %vm284, %v830, 0.0
    %v832 = vrot.slane %v831, 4
    %v833 = vadd.f32 %v831, %v832
    %v834 = vrot.slane %v833, 2
    %v835 = vadd.f32 %v833, %v834
    %v836 = vrot.slane %v835, 1
    %v837 = vadd.f32 %v835, %v836
    %838 = vset.pattern.permute.xlu0 3
    %839 = vperm.xlu0 %838, %v800
    %v840 = vpop.permute.xlu0 %839
    %v842 = vmul.f32 %v840, %v260
    %v843 = vsel %vm292, %v842, 0.0
    %v844 = vrot.slane %v843, 4
    %v845 = vadd.f32 %v843, %v844
    %v846 = vrot.slane %v845, 2
    %v847 = vadd.f32 %v845, %v846
    %v848 = vrot.slane %v847, 1
    %v849 = vadd.f32 %v847, %v848
    %v850 = vmul.f32 %v813, %v813
    %v851 = vsel %vm94, %v850, 0.0
    %852 = vadd.xlane.f32.xlu0 %v851
    %v853 = vpop.xlane.xlu0 %852
    %v854 = vadd.f32 %v853, 1.0
    %v855 = vrcp.pop %v854
    %v856 = vmul.f32 %v853, %v855
    %v857 = vadd.f32 %v853, 1e-08
    %v858 = vrsqrt.pop %v857
    %v859 = vmul.f32 %v856, %v858
    %v860 = vmul.f32 %v859, %v813
    %v861 = vmul.f32 %v825, %v825
    %863 = vrot.lane.b32.xlu0 %v861, 96
    %v864 = vpop.permute.xlu0 %863
    %v866 = vsel %vm94, %v864, 0.0
    %867 = vadd.xlane.f32.xlu0 %v866
    %v868 = vpop.xlane.xlu0 %867
    %v869 = vadd.f32 %v868, 1.0
    %v870 = vrcp.pop %v869
    %v871 = vmul.f32 %v868, %v870
    %v872 = vadd.f32 %v868, 1e-08
    %v873 = vrsqrt.pop %v872
    %v874 = vmul.f32 %v871, %v873
    %v875 = vmul.f32 %v874, %v825
    %v876 = vmul.f32 %v837, %v837
    %878 = vrot.lane.b32.xlu0 %v876, 64
    %v879 = vpop.permute.xlu0 %878
    %v881 = vsel %vm94, %v879, 0.0
    %882 = vadd.xlane.f32.xlu0 %v881
    %v883 = vpop.xlane.xlu0 %882
    %v884 = vadd.f32 %v883, 1.0
    %v885 = vrcp.pop %v884
    %v886 = vmul.f32 %v883, %v885
    %v887 = vadd.f32 %v883, 1e-08
    %v888 = vrsqrt.pop %v887
    %v889 = vmul.f32 %v886, %v888
    %v890 = vmul.f32 %v889, %v837
    %v891 = vmul.f32 %v849, %v849
    %893 = vrot.lane.b32.xlu0 %v891, 32
    %v894 = vpop.permute.xlu0 %893
    %v896 = vsel %vm94, %v894, 0.0
    %897 = vadd.xlane.f32.xlu0 %v896
    %v898 = vpop.xlane.xlu0 %897
    %v899 = vadd.f32 %v898, 1.0
    %v900 = vrcp.pop %v899
    %v901 = vmul.f32 %v898, %v900
    %v902 = vadd.f32 %v898, 1e-08
    %v903 = vrsqrt.pop %v902
    %v904 = vmul.f32 %v901, %v903
    %v905 = vmul.f32 %v904, %v849
    %v906 = vmul.f32 %v260, %v860
    %v907 = vsel %vm94, %v906, 0.0
    %908 = vadd.xlane.f32.xlu0 %v907
    %v909 = vpop.xlane.xlu0 %908
    %v910 = vmul.f32 %v260, %v875
    %912 = vrot.lane.b32.xlu0 %v910, 96
    %v913 = vpop.permute.xlu0 %912
    %v915 = vsel %vm94, %v913, 0.0
    %916 = vadd.xlane.f32.xlu0 %v915
    %v917 = vpop.xlane.xlu0 %916
    %v918 = vmul.f32 %v260, %v890
    %920 = vrot.lane.b32.xlu0 %v918, 64
    %v921 = vpop.permute.xlu0 %920
    %v923 = vsel %vm94, %v921, 0.0
    %924 = vadd.xlane.f32.xlu0 %v923
    %v925 = vpop.xlane.xlu0 %924
    %v926 = vmul.f32 %v260, %v905
    %928 = vrot.lane.b32.xlu0 %v926, 32
    %v929 = vpop.permute.xlu0 %928
    %v931 = vsel %vm94, %v929, 0.0
    %932 = vadd.xlane.f32.xlu0 %v931
    %v933 = vpop.xlane.xlu0 %932
    %v934 = vsel %vm384, %v909, %v917
    %v935 = vsel %vm386, %v934, %v925
    %v936 = vsel %vm388, %v935, %v933
    %v937 = vadd.f32 %v789, %v936
    %v938 = vsel %vm263, %v937, -inf
    %939 = vmax.xlane.f32.xlu0 %v938
    %v940 = vpop.xlane.xlu0 %939
    %v941 = vsub.f32 %v937, %v940
    %v942 = vmul.f32 %v941, 1.442695
    %v943 = vpow.pop %v942
    %v944 = vsel %vm263, %v943, 0.0
    %945 = vadd.xlane.f32.xlu0 %v944
    %v946 = vpop.xlane.xlu0 %945
    %v947 = vrcp.pop %v946
    %v948 = vmul.f32 %v943, %v947
    %950 = vset.pattern.permute.xlu0 0
    %951 = vperm.xlu0 %950, %v948
    %v952 = vpop.permute.xlu0 %951
    %v954 = vmul.f32 %v952, %v260
    %v955 = vsel %vm94, %v954, 0.0
    %v956 = vrot.slane %v955, 4
    %v957 = vadd.f32 %v955, %v956
    %v958 = vrot.slane %v957, 2
    %v959 = vadd.f32 %v957, %v958
    %v960 = vrot.slane %v959, 1
    %v961 = vadd.f32 %v959, %v960
    %962 = vset.pattern.permute.xlu0 1
    %963 = vperm.xlu0 %962, %v948
    %v964 = vpop.permute.xlu0 %963
    %v966 = vmul.f32 %v964, %v260
    %v967 = vsel %vm276, %v966, 0.0
    %v968 = vrot.slane %v967, 4
    %v969 = vadd.f32 %v967, %v968
    %v970 = vrot.slane %v969, 2
    %v971 = vadd.f32 %v969, %v970
    %v972 = vrot.slane %v971, 1
    %v973 = vadd.f32 %v971, %v972
    %974 = vset.pattern.permute.xlu0 2
    %975 = vperm.xlu0 %974, %v948
    %v976 = vpop.permute.xlu0 %975
    %v978 = vmul.f32 %v976, %v260
    %v979 = vsel %vm284, %v978, 0.0
    %v980 = vrot.slane %v979, 4
    %v981 = vadd.f32 %v979, %v980
    %v982 = vrot.slane %v981, 2
    %v983 = vadd.f32 %v981, %v982
    %v984 = vrot.slane %v983, 1
    %v985 = vadd.f32 %v983, %v984
    %986 = vset.pattern.permute.xlu0 3
    %987 = vperm.xlu0 %986, %v948
    %v988 = vpop.permute.xlu0 %987
    %v990 = vmul.f32 %v988, %v260
    %v991 = vsel %vm292, %v990, 0.0
    %v992 = vrot.slane %v991, 4
    %v993 = vadd.f32 %v991, %v992
    %v994 = vrot.slane %v993, 2
    %v995 = vadd.f32 %v993, %v994
    %v996 = vrot.slane %v995, 1
    %v997 = vadd.f32 %v995, %v996
    %v998 = vmul.f32 %v961, %v961
    %v999 = vsel %vm94, %v998, 0.0
    %1000 = vadd.xlane.f32.xlu0 %v999
    %v1001 = vpop.xlane.xlu0 %1000
    %v1002 = vadd.f32 %v1001, 1.0
    %v1003 = vrcp.pop %v1002
    %v1004 = vmul.f32 %v1001, %v1003
    %v1005 = vadd.f32 %v1001, 1e-08
    %v1006 = vrsqrt.pop %v1005
    %v1007 = vmul.f32 %v1004, %v1006
    %v1008 = vmul.f32 %v1007, %v961
    %v1009 = vmul.f32 %v973, %v973
    %1011 = vrot.lane.b32.xlu0 %v1009, 96
    %v1012 = vpop.permute.xlu0 %1011
    %v1014 = vsel %vm94, %v1012, 0.0
    %1015 = vadd.xlane.f32.xlu0 %v1014
    %v1016 = vpop.xlane.xlu0 %1015
    %v1017 = vadd.f32 %v1016, 1.0
    %v1018 = vrcp.pop %v1017
    %v1019 = vmul.f32 %v1016, %v1018
    %v1020 = vadd.f32 %v1016, 1e-08
    %v1021 = vrsqrt.pop %v1020
    %v1022 = vmul.f32 %v1019, %v1021
    %v1023 = vmul.f32 %v1022, %v973
    %v1024 = vmul.f32 %v985, %v985
    %1026 = vrot.lane.b32.xlu0 %v1024, 64
    %v1027 = vpop.permute.xlu0 %1026
    %v1029 = vsel %vm94, %v1027, 0.0
    %1030 = vadd.xlane.f32.xlu0 %v1029
    %v1031 = vpop.xlane.xlu0 %1030
    %v1032 = vadd.f32 %v1031, 1.0
    %v1033 = vrcp.pop %v1032
    %v1034 = vmul.f32 %v1031, %v1033
    %v1035 = vadd.f32 %v1031, 1e-08
    %v1036 = vrsqrt.pop %v1035
    %v1037 = vmul.f32 %v1034, %v1036
    %v1038 = vmul.f32 %v1037, %v985
    %v1039 = vmul.f32 %v997, %v997
    %1041 = vrot.lane.b32.xlu0 %v1039, 32
    %v1042 = vpop.permute.xlu0 %1041
    %v1044 = vsel %vm94, %v1042, 0.0
    %1045 = vadd.xlane.f32.xlu0 %v1044
    %v1046 = vpop.xlane.xlu0 %1045
    %v1047 = vadd.f32 %v1046, 1.0
    %v1048 = vrcp.pop %v1047
    %v1049 = vmul.f32 %v1046, %v1048
    %v1050 = vadd.f32 %v1046, 1e-08
    %v1051 = vrsqrt.pop %v1050
    %v1052 = vmul.f32 %v1049, %v1051
    %v1053 = vmul.f32 %v1052, %v997
    %1055 = vrot.lane.b32.xlu0 %v1023, 96
    %v1056 = vpop.permute.xlu0 %1055
    %1059 = vrot.lane.b32.xlu0 %v1038, 64
    %v1060 = vpop.permute.xlu0 %1059
    %1063 = vrot.lane.b32.xlu0 %v1053, 32
    %v1064 = vpop.permute.xlu0 %1063
    %v1066 = vsel %vm667, %v1008, %v1056
    %v1067 = vsel %vm669, %v1066, %v1060
    %v1068 = vsel %vm671, %v1067, %v1064
    %v1069 = vld [vmem:[%s6] sm:$0xff]
    %v1070 = vld [vmem:[%s6 + $0x8] sm:$0xff]
    %v1071 = vld [vmem:[%s6 + $0x10] sm:$0xff]
    %v1072 = vld [vmem:[%s6 + $0x18] sm:$0xff]
    %v1073 = vld [vmem:[%s8] sm:$0xff]
    %v1074 = vld [vmem:[%s8 + $0x8] sm:$0xff]
    %v1075 = vld [vmem:[%s8 + $0x10] sm:$0xff]
    %v1076 = vld [vmem:[%s8 + $0x18] sm:$0xff]
    %v1077 = vld [vmem:[%s7] sm:$0xff]
    %v1078 = vld [vmem:[%s7 + $0x8] sm:$0xff]
    %v1079 = vld [vmem:[%s7 + $0x10] sm:$0xff]
    %v1080 = vld [vmem:[%s7 + $0x18] sm:$0xff]
    %v1081 = vld [vmem:[%s9] sm:$0xff]
    %v1082 = vld [vmem:[%s9 + $0x8] sm:$0xff]
    %v1083 = vld [vmem:[%s9 + $0x10] sm:$0xff]
    %v1084 = vld [vmem:[%s9 + $0x18] sm:$0xff]
    %1085 = vmatprep.subr.mxu0 0.0
    %1086 = vmatpush1.msra.mxu0 %v1069
    %1087 = vmatprep.subr.mxu0 0.0
    %1088 = vmatpush1.msra.mxu0 %v1070
    %1089 = vmatprep.subr.mxu0 0.0
    %1090 = vmatpush1.msra.mxu0 %v1071
    %1091 = vmatprep.subr.mxu0 0.0
    %1092 = vmatpush1.msra.mxu0 %v1072
    %1093 = vmatprep.subr.mxu0 0.0
    %1094 = vmatpush1.msra.mxu0 0.0
    %1095 = vmatprep.subr.mxu0 0.0
    %1096 = vmatpush1.msra.mxu0 0.0
    %1097 = vmatprep.subr.mxu0 0.0
    %1098 = vmatpush1.msra.mxu0 0.0
    %1099 = vmatprep.subr.mxu0 0.0
    %1100 = vmatpush1.msra.mxu0 0.0
    %1101 = vmatprep.subr.mxu0 0.0
    %1102 = vmatpush1.msra.mxu0 0.0
    %1103 = vmatprep.subr.mxu0 0.0
    %1104 = vmatpush1.msra.mxu0 0.0
    %1105 = vmatprep.subr.mxu0 0.0
    %1106 = vmatpush1.msra.mxu0 0.0
    %1107 = vmatprep.subr.mxu0 0.0
    %1108 = vmatpush1.msra.mxu0 0.0
    %1109 = vmatprep.subr.mxu0 0.0
    %1110 = vmatpush1.msra.mxu0 0.0
    %1111 = vmatprep.subr.mxu0 0.0
    %1112 = vmatpush1.msra.mxu0 0.0
    %1113 = vmatprep.subr.mxu0 0.0
    %1114 = vmatpush1.msra.mxu0 0.0
    %1115 = vmatprep.subr.mxu0 0.0
    %1116 = vmatpush1.msra.mxu0 0.0
    %1117 = vmatprep.subr.mxu0 0.0
    %1118 = vmatpush1.msra.mxu0 0.0
    %1119 = vmatprep.subr.mxu0 0.0
    %1120 = vmatpush1.msra.mxu0 0.0
    %1121 = vmatprep.subr.mxu0 0.0
    %1122 = vmatpush1.msra.mxu0 0.0
    %1123 = vmatprep.subr.mxu0 0.0
    %1124 = vmatpush1.msra.mxu0 0.0
    %1125 = vmatprep.subr.mxu0 0.0
    %1126 = vmatpush1.msra.mxu0 0.0
    %1127 = vmatprep.subr.mxu0 0.0
    %1128 = vmatpush1.msra.mxu0 0.0
    %1129 = vmatprep.subr.mxu0 0.0
    %1130 = vmatpush1.msra.mxu0 0.0
    %1131 = vmatprep.subr.mxu0 0.0
    %1132 = vmatpush1.msra.mxu0 0.0
    %1133 = vmatprep.subr.mxu0 0.0
    %1134 = vmatpush1.msra.mxu0 0.0
    %1135 = vmatprep.subr.mxu0 0.0
    %1136 = vmatpush1.msra.mxu0 0.0
    %1137 = vmatprep.subr.mxu0 0.0
    %1138 = vmatpush1.msra.mxu0 0.0
    %1139 = vmatprep.subr.mxu0 0.0
    %1140 = vmatpush1.msra.mxu0 0.0
    %1141 = vmatprep.subr.mxu0 0.0
    %1142 = vmatpush1.msra.mxu0 0.0
    %1143 = vmatprep.subr.mxu0 0.0
    %1144 = vmatpush1.msra.mxu0 0.0
    %1145 = vmatprep.subr.mxu0 0.0
    %1146 = vmatpush1.msra.mxu0 0.0
    %1147 = vmatprep.subr.mxu0 0.0
    %1148 = vmatpush1.msra.mxu0 0.0
    %1149 = vmatprep.mubr.f32.mxu0 0.0
    %1150 = vmatmul.mubr.f32.gmra.mrb[0].mxu0 %v183
    %v1151 = vpop.f32.mrb[0].mxu0
    %v1152 = vadd.f32 0.0, %v1151
    %v1153 = vpop.f32.mrb[0].mxu0
    %1154 = vmatprep.mubr.f32.mxu0 0.0
    %1155 = vmatmul.mubr.f32.gmra.mrb[0].mxu0 %v186
    %v1156 = vpop.f32.mrb[0].mxu0
    %v1157 = vadd.f32 0.0, %v1156
    %v1158 = vpop.f32.mrb[0].mxu0
    %1159 = vdwg.mxu0
    %v1160 = vld [vmem:[%s1] sm:$0xff]
    %vm1161 = vcmask 64512
    %v1163 = vsel %vm1161, %v1160, 0
    %1165 = vmatprep.subr.mxu0 0.0
    %1166 = vmatpush1.msra.mxu0 %v1152
    %1167 = vmatprep.subr.mxu0 0.0
    %1168 = vmatpush1.msra.mxu0 0.0
    %1169 = vmatprep.subr.mxu0 0.0
    %1170 = vmatpush1.msra.mxu0 0.0
    %1171 = vmatprep.subr.mxu0 0.0
    %1172 = vmatpush1.msra.mxu0 0.0
    %1173 = vmatprep.subr.mxu0 0.0
    %1174 = vmatpush1.msra.mxu0 0.0
    %1175 = vmatprep.subr.mxu0 0.0
    %1176 = vmatpush1.msra.mxu0 0.0
    %1177 = vmatprep.subr.mxu0 0.0
    %1178 = vmatpush1.msra.mxu0 0.0
    %1179 = vmatprep.subr.mxu0 0.0
    %1180 = vmatpush1.msra.mxu0 0.0
    %1181 = vmatprep.subr.mxu0 0.0
    %1182 = vmatpush1.msra.mxu0 0.0
    %1183 = vmatprep.subr.mxu0 0.0
    %1184 = vmatpush1.msra.mxu0 0.0
    %1185 = vmatprep.subr.mxu0 0.0
    %1186 = vmatpush1.msra.mxu0 0.0
    %1187 = vmatprep.subr.mxu0 0.0
    %1188 = vmatpush1.msra.mxu0 0.0
    %1189 = vmatprep.subr.mxu0 0.0
    %1190 = vmatpush1.msra.mxu0 0.0
    %1191 = vmatprep.subr.mxu0 0.0
    %1192 = vmatpush1.msra.mxu0 0.0
    %1193 = vmatprep.subr.mxu0 0.0
    %1194 = vmatpush1.msra.mxu0 0.0
    %1195 = vmatprep.subr.mxu0 0.0
    %1196 = vmatpush1.msra.mxu0 0.0
    %1197 = vmatprep.subr.mxu0 0.0
    %1198 = vmatpush1.msra.mxu0 0.0
    %1199 = vmatprep.subr.mxu0 0.0
    %1200 = vmatpush1.msra.mxu0 0.0
    %1201 = vmatprep.subr.mxu0 0.0
    %1202 = vmatpush1.msra.mxu0 0.0
    %1203 = vmatprep.subr.mxu0 0.0
    %1204 = vmatpush1.msra.mxu0 0.0
    %1205 = vmatprep.subr.mxu0 0.0
    %1206 = vmatpush1.msra.mxu0 0.0
    %1207 = vmatprep.subr.mxu0 0.0
    %1208 = vmatpush1.msra.mxu0 0.0
    %1209 = vmatprep.subr.mxu0 0.0
    %1210 = vmatpush1.msra.mxu0 0.0
    %1211 = vmatprep.subr.mxu0 0.0
    %1212 = vmatpush1.msra.mxu0 0.0
    %1213 = vmatprep.subr.mxu0 0.0
    %1214 = vmatpush1.msra.mxu0 0.0
    %1215 = vmatprep.subr.mxu0 0.0
    %1216 = vmatpush1.msra.mxu0 0.0
    %1217 = vmatprep.subr.mxu0 0.0
    %1218 = vmatpush1.msra.mxu0 0.0
    %1219 = vmatprep.subr.mxu0 0.0
    %1220 = vmatpush1.msra.mxu0 0.0
    %1221 = vmatprep.subr.mxu0 0.0
    %1222 = vmatpush1.msra.mxu0 0.0
    %1223 = vmatprep.subr.mxu0 0.0
    %1224 = vmatpush1.msra.mxu0 0.0
    %1225 = vmatprep.subr.mxu0 0.0
    %1226 = vmatpush1.msra.mxu0 0.0
    %1227 = vmatprep.subr.mxu0 0.0
    %1228 = vmatpush1.msra.mxu0 0.0
    %1229 = vmatprep.mubr.f32.mxu0 0.0
    %1230 = vmatmul.mubr.f32.gmra.mrb[0].mxu0 %v1163
    %v1231 = vpop.f32.mrb[0].mxu0
    %v1232 = vadd.f32 0.0, %v1231
    %v1233 = vpop.f32.mrb[0].mxu0
    %1234 = vdwg.mxu0
    %v1235 = vmax.f32 %v1232, 0.0
    %s1236 = scalar_lea.vmem %s1, 8
    %v1237 = vld [vmem:[%s1236] sm:$0xff]
    %v1239 = vsel %vm1161, %v1237, 0
    %1241 = vmatprep.subr.mxu0 0.0
    %1242 = vmatpush1.msra.mxu0 %v1157
    %1243 = vmatprep.subr.mxu0 0.0
    %1244 = vmatpush1.msra.mxu0 0.0
    %1245 = vmatprep.subr.mxu0 0.0
    %1246 = vmatpush1.msra.mxu0 0.0
    %1247 = vmatprep.subr.mxu0 0.0
    %1248 = vmatpush1.msra.mxu0 0.0
    %1249 = vmatprep.subr.mxu0 0.0
    %1250 = vmatpush1.msra.mxu0 0.0
    %1251 = vmatprep.subr.mxu0 0.0
    %1252 = vmatpush1.msra.mxu0 0.0
    %1253 = vmatprep.subr.mxu0 0.0
    %1254 = vmatpush1.msra.mxu0 0.0
    %1255 = vmatprep.subr.mxu0 0.0
    %1256 = vmatpush1.msra.mxu0 0.0
    %1257 = vmatprep.subr.mxu0 0.0
    %1258 = vmatpush1.msra.mxu0 0.0
    %1259 = vmatprep.subr.mxu0 0.0
    %1260 = vmatpush1.msra.mxu0 0.0
    %1261 = vmatprep.subr.mxu0 0.0
    %1262 = vmatpush1.msra.mxu0 0.0
    %1263 = vmatprep.subr.mxu0 0.0
    %1264 = vmatpush1.msra.mxu0 0.0
    %1265 = vmatprep.subr.mxu0 0.0
    %1266 = vmatpush1.msra.mxu0 0.0
    %1267 = vmatprep.subr.mxu0 0.0
    %1268 = vmatpush1.msra.mxu0 0.0
    %1269 = vmatprep.subr.mxu0 0.0
    %1270 = vmatpush1.msra.mxu0 0.0
    %1271 = vmatprep.subr.mxu0 0.0
    %1272 = vmatpush1.msra.mxu0 0.0
    %1273 = vmatprep.subr.mxu0 0.0
    %1274 = vmatpush1.msra.mxu0 0.0
    %1275 = vmatprep.subr.mxu0 0.0
    %1276 = vmatpush1.msra.mxu0 0.0
    %1277 = vmatprep.subr.mxu0 0.0
    %1278 = vmatpush1.msra.mxu0 0.0
    %1279 = vmatprep.subr.mxu0 0.0
    %1280 = vmatpush1.msra.mxu0 0.0
    %1281 = vmatprep.subr.mxu0 0.0
    %1282 = vmatpush1.msra.mxu0 0.0
    %1283 = vmatprep.subr.mxu0 0.0
    %1284 = vmatpush1.msra.mxu0 0.0
    %1285 = vmatprep.subr.mxu0 0.0
    %1286 = vmatpush1.msra.mxu0 0.0
    %1287 = vmatprep.subr.mxu0 0.0
    %1288 = vmatpush1.msra.mxu0 0.0
    %1289 = vmatprep.subr.mxu0 0.0
    %1290 = vmatpush1.msra.mxu0 0.0
    %1291 = vmatprep.subr.mxu0 0.0
    %1292 = vmatpush1.msra.mxu0 0.0
    %1293 = vmatprep.subr.mxu0 0.0
    %1294 = vmatpush1.msra.mxu0 0.0
    %1295 = vmatprep.subr.mxu0 0.0
    %1296 = vmatpush1.msra.mxu0 0.0
    %1297 = vmatprep.subr.mxu0 0.0
    %1298 = vmatpush1.msra.mxu0 0.0
    %1299 = vmatprep.subr.mxu0 0.0
    %1300 = vmatpush1.msra.mxu0 0.0
    %1301 = vmatprep.subr.mxu0 0.0
    %1302 = vmatpush1.msra.mxu0 0.0
    %1303 = vmatprep.subr.mxu0 0.0
    %1304 = vmatpush1.msra.mxu0 0.0
    %1305 = vmatprep.mubr.f32.mxu0 0.0
    %1306 = vmatmul.mubr.f32.gmra.mrb[0].mxu0 %v1239
    %v1307 = vpop.f32.mrb[0].mxu0
    %v1308 = vadd.f32 0.0, %v1307
    %v1309 = vpop.f32.mrb[0].mxu0
    %1310 = vdwg.mxu0
    %v1311 = vmax.f32 %v1308, 0.0
    %v1313 = vsel %vm94, %v1235, 0
    %v1316 = vsel %vm94, %v1311, 0
    %1318 = vmatprep.subr.mxu0 0.0
    %1319 = vmatpush1.msra.mxu0 %v1077
    %1320 = vmatprep.subr.mxu0 0.0
    %1321 = vmatpush1.msra.mxu0 %v1078
    %1322 = vmatprep.subr.mxu0 0.0
    %1323 = vmatpush1.msra.mxu0 %v1079
    %1324 = vmatprep.subr.mxu0 0.0
    %1325 = vmatpush1.msra.mxu0 %v1080
    %1326 = vmatprep.subr.mxu0 0.0
    %1327 = vmatpush1.msra.mxu0 0.0
    %1328 = vmatprep.subr.mxu0 0.0
    %1329 = vmatpush1.msra.mxu0 0.0
    %1330 = vmatprep.subr.mxu0 0.0
    %1331 = vmatpush1.msra.mxu0 0.0
    %1332 = vmatprep.subr.mxu0 0.0
    %1333 = vmatpush1.msra.mxu0 0.0
    %1334 = vmatprep.subr.mxu0 0.0
    %1335 = vmatpush1.msra.mxu0 0.0
    %1336 = vmatprep.subr.mxu0 0.0
    %1337 = vmatpush1.msra.mxu0 0.0
    %1338 = vmatprep.subr.mxu0 0.0
    %1339 = vmatpush1.msra.mxu0 0.0
    %1340 = vmatprep.subr.mxu0 0.0
    %1341 = vmatpush1.msra.mxu0 0.0
    %1342 = vmatprep.subr.mxu0 0.0
    %1343 = vmatpush1.msra.mxu0 0.0
    %1344 = vmatprep.subr.mxu0 0.0
    %1345 = vmatpush1.msra.mxu0 0.0
    %1346 = vmatprep.subr.mxu0 0.0
    %1347 = vmatpush1.msra.mxu0 0.0
    %1348 = vmatprep.subr.mxu0 0.0
    %1349 = vmatpush1.msra.mxu0 0.0
    %1350 = vmatprep.subr.mxu0 0.0
    %1351 = vmatpush1.msra.mxu0 0.0
    %1352 = vmatprep.subr.mxu0 0.0
    %1353 = vmatpush1.msra.mxu0 0.0
    %1354 = vmatprep.subr.mxu0 0.0
    %1355 = vmatpush1.msra.mxu0 0.0
    %1356 = vmatprep.subr.mxu0 0.0
    %1357 = vmatpush1.msra.mxu0 0.0
    %1358 = vmatprep.subr.mxu0 0.0
    %1359 = vmatpush1.msra.mxu0 0.0
    %1360 = vmatprep.subr.mxu0 0.0
    %1361 = vmatpush1.msra.mxu0 0.0
    %1362 = vmatprep.subr.mxu0 0.0
    %1363 = vmatpush1.msra.mxu0 0.0
    %1364 = vmatprep.subr.mxu0 0.0
    %1365 = vmatpush1.msra.mxu0 0.0
    %1366 = vmatprep.subr.mxu0 0.0
    %1367 = vmatpush1.msra.mxu0 0.0
    %1368 = vmatprep.subr.mxu0 0.0
    %1369 = vmatpush1.msra.mxu0 0.0
    %1370 = vmatprep.subr.mxu0 0.0
    %1371 = vmatpush1.msra.mxu0 0.0
    %1372 = vmatprep.subr.mxu0 0.0
    %1373 = vmatpush1.msra.mxu0 0.0
    %1374 = vmatprep.subr.mxu0 0.0
    %1375 = vmatpush1.msra.mxu0 0.0
    %1376 = vmatprep.subr.mxu0 0.0
    %1377 = vmatpush1.msra.mxu0 0.0
    %1378 = vmatprep.subr.mxu0 0.0
    %1379 = vmatpush1.msra.mxu0 0.0
    %1380 = vmatprep.subr.mxu0 0.0
    %1381 = vmatpush1.msra.mxu0 0.0
    %1382 = vmatprep.mubr.f32.mxu0 0.0
    %1383 = vmatmul.mubr.f32.gmra.mrb[0].mxu0 %v1313
    %v1384 = vpop.f32.mrb[0].mxu0
    %v1385 = vadd.f32 0.0, %v1384
    %v1386 = vpop.f32.mrb[0].mxu0
    %1387 = vmatprep.mubr.f32.mxu0 0.0
    %1388 = vmatmul.mubr.f32.gmra.mrb[0].mxu0 %v1316
    %v1389 = vpop.f32.mrb[0].mxu0
    %v1390 = vadd.f32 0.0, %v1389
    %v1391 = vpop.f32.mrb[0].mxu0
    %1392 = vdwg.mxu0
    %1393 = vmatprep.subr.mxu0 0.0
    %1394 = vmatpush1.msra.mxu0 %v1385
    %1395 = vmatprep.subr.mxu0 0.0
    %1396 = vmatpush1.msra.mxu0 0.0
    %1397 = vmatprep.subr.mxu0 0.0
    %1398 = vmatpush1.msra.mxu0 0.0
    %1399 = vmatprep.subr.mxu0 0.0
    %1400 = vmatpush1.msra.mxu0 0.0
    %1401 = vmatprep.subr.mxu0 0.0
    %1402 = vmatpush1.msra.mxu0 0.0
    %1403 = vmatprep.subr.mxu0 0.0
    %1404 = vmatpush1.msra.mxu0 0.0
    %1405 = vmatprep.subr.mxu0 0.0
    %1406 = vmatpush1.msra.mxu0 0.0
    %1407 = vmatprep.subr.mxu0 0.0
    %1408 = vmatpush1.msra.mxu0 0.0
    %1409 = vmatprep.subr.mxu0 0.0
    %1410 = vmatpush1.msra.mxu0 0.0
    %1411 = vmatprep.subr.mxu0 0.0
    %1412 = vmatpush1.msra.mxu0 0.0
    %1413 = vmatprep.subr.mxu0 0.0
    %1414 = vmatpush1.msra.mxu0 0.0
    %1415 = vmatprep.subr.mxu0 0.0
    %1416 = vmatpush1.msra.mxu0 0.0
    %1417 = vmatprep.subr.mxu0 0.0
    %1418 = vmatpush1.msra.mxu0 0.0
    %1419 = vmatprep.subr.mxu0 0.0
    %1420 = vmatpush1.msra.mxu0 0.0
    %1421 = vmatprep.subr.mxu0 0.0
    %1422 = vmatpush1.msra.mxu0 0.0
    %1423 = vmatprep.subr.mxu0 0.0
    %1424 = vmatpush1.msra.mxu0 0.0
    %1425 = vmatprep.subr.mxu0 0.0
    %1426 = vmatpush1.msra.mxu0 0.0
    %1427 = vmatprep.subr.mxu0 0.0
    %1428 = vmatpush1.msra.mxu0 0.0
    %1429 = vmatprep.subr.mxu0 0.0
    %1430 = vmatpush1.msra.mxu0 0.0
    %1431 = vmatprep.subr.mxu0 0.0
    %1432 = vmatpush1.msra.mxu0 0.0
    %1433 = vmatprep.subr.mxu0 0.0
    %1434 = vmatpush1.msra.mxu0 0.0
    %1435 = vmatprep.subr.mxu0 0.0
    %1436 = vmatpush1.msra.mxu0 0.0
    %1437 = vmatprep.subr.mxu0 0.0
    %1438 = vmatpush1.msra.mxu0 0.0
    %1439 = vmatprep.subr.mxu0 0.0
    %1440 = vmatpush1.msra.mxu0 0.0
    %1441 = vmatprep.subr.mxu0 0.0
    %1442 = vmatpush1.msra.mxu0 0.0
    %1443 = vmatprep.subr.mxu0 0.0
    %1444 = vmatpush1.msra.mxu0 0.0
    %1445 = vmatprep.subr.mxu0 0.0
    %1446 = vmatpush1.msra.mxu0 0.0
    %1447 = vmatprep.subr.mxu0 0.0
    %1448 = vmatpush1.msra.mxu0 0.0
    %1449 = vmatprep.subr.mxu0 0.0
    %1450 = vmatpush1.msra.mxu0 0.0
    %1451 = vmatprep.subr.mxu0 0.0
    %1452 = vmatpush1.msra.mxu0 0.0
    %1453 = vmatprep.subr.mxu0 0.0
    %1454 = vmatpush1.msra.mxu0 0.0
    %1455 = vmatprep.subr.mxu0 0.0
    %1456 = vmatpush1.msra.mxu0 0.0
    %1457 = vmatprep.mubr.f32.mxu0 0.0
    %1458 = vmatmul.mubr.f32.gmra.mrb[0].mxu0 %v1163
    %v1459 = vpop.f32.mrb[0].mxu0
    %v1460 = vadd.f32 0.0, %v1459
    %v1461 = vpop.f32.mrb[0].mxu0
    %1462 = vdwg.mxu0
    %v1464 = vsel %vm94, %v1460, 0
    %1466 = vmatprep.subr.mxu0 0.0
    %1467 = vmatpush1.xpose.msra.mxu0 %v1464
    %1468 = vmatprep.subr.mxu0 0.0
    %1469 = vmatpush1.xpose.msra.mxu0 0.0
    %1470 = vmatprep.subr.mxu0 0.0
    %1471 = vmatpush1.xpose.msra.mxu0 0.0
    %1472 = vmatprep.subr.mxu0 0.0
    %1473 = vmatpush1.xpose.msra.mxu0 0.0
    %1474 = vmatprep.subr.mxu0 0.0
    %1475 = vmatpush1.xpose.msra.mxu0 0.0
    %1476 = vmatprep.subr.mxu0 0.0
    %1477 = vmatpush1.xpose.msra.mxu0 0.0
    %1478 = vmatprep.subr.mxu0 0.0
    %1479 = vmatpush1.xpose.msra.mxu0 0.0
    %1480 = vmatprep.subr.mxu0 0.0
    %1481 = vmatpush1.xpose.msra.mxu0 0.0
    %1482 = vmatprep.subr.mxu0 0.0
    %1483 = vmatpush1.xpose.msra.mxu0 0.0
    %1484 = vmatprep.subr.mxu0 0.0
    %1485 = vmatpush1.xpose.msra.mxu0 0.0
    %1486 = vmatprep.subr.mxu0 0.0
    %1487 = vmatpush1.xpose.msra.mxu0 0.0
    %1488 = vmatprep.subr.mxu0 0.0
    %1489 = vmatpush1.xpose.msra.mxu0 0.0
    %1490 = vmatprep.subr.mxu0 0.0
    %1491 = vmatpush1.xpose.msra.mxu0 0.0
    %1492 = vmatprep.subr.mxu0 0.0
    %1493 = vmatpush1.xpose.msra.mxu0 0.0
    %1494 = vmatprep.subr.mxu0 0.0
    %1495 = vmatpush1.xpose.msra.mxu0 0.0
    %1496 = vmatprep.subr.mxu0 0.0
    %1497 = vmatpush1.xpose.msra.mxu0 0.0
    %1498 = vmatprep.subr.mxu0 0.0
    %1499 = vmatpush1.xpose.msra.mxu0 0.0
    %1500 = vmatprep.subr.mxu0 0.0
    %1501 = vmatpush1.xpose.msra.mxu0 0.0
    %1502 = vmatprep.subr.mxu0 0.0
    %1503 = vmatpush1.xpose.msra.mxu0 0.0
    %1504 = vmatprep.subr.mxu0 0.0
    %1505 = vmatpush1.xpose.msra.mxu0 0.0
    %1506 = vmatprep.subr.mxu0 0.0
    %1507 = vmatpush1.xpose.msra.mxu0 0.0
    %1508 = vmatprep.subr.mxu0 0.0
    %1509 = vmatpush1.xpose.msra.mxu0 0.0
    %1510 = vmatprep.subr.mxu0 0.0
    %1511 = vmatpush1.xpose.msra.mxu0 0.0
    %1512 = vmatprep.subr.mxu0 0.0
    %1513 = vmatpush1.xpose.msra.mxu0 0.0
    %1514 = vmatprep.subr.mxu0 0.0
    %1515 = vmatpush1.xpose.msra.mxu0 0.0
    %1516 = vmatprep.subr.mxu0 0.0
    %1517 = vmatpush1.xpose.msra.mxu0 0.0
    %1518 = vmatprep.subr.mxu0 0.0
    %1519 = vmatpush1.xpose.msra.mxu0 0.0
    %1520 = vmatprep.subr.mxu0 0.0
    %1521 = vmatpush1.xpose.msra.mxu0 0.0
    %1522 = vmatprep.subr.mxu0 0.0
    %1523 = vmatpush1.xpose.msra.mxu0 0.0
    %1524 = vmatprep.subr.mxu0 0.0
    %1525 = vmatpush1.xpose.msra.mxu0 0.0
    %1526 = vmatprep.subr.mxu0 0.0
    %1527 = vmatpush1.xpose.msra.mxu0 0.0
    %1528 = vmatprep.subr.mxu0 0.0
    %1529 = vmatpush1.xpose.msra.mxu0 0.0
    %1530 = vmatprep.mubr.f32.mxu0 0.0
    %1531 = vmatmul.mubr.f32.gmra.mrb[0].mxu0 %v1464
    %v1532 = vpop.f32.mrb[0].mxu0
    %v1533 = vadd.f32 0.0, %v1532
    %v1534 = vpop.f32.mrb[0].mxu0
    %1535 = vdwg.mxu0
    %v1536 = vsub.f32 0.0, %v1533
    %v1537 = vmul.f32 %v1536, 1.442695
    %v1538 = vpow.pop %v1537
    %v1539 = vadd.f32 %v1538, 1.0
    %v1540 = vrcp.pop %v1539
    %1541 = vmatprep.subr.mxu0 0.0
    %1542 = vmatpush1.msra.mxu0 %v1390
    %1543 = vmatprep.subr.mxu0 0.0
    %1544 = vmatpush1.msra.mxu0 0.0
    %1545 = vmatprep.subr.mxu0 0.0
    %1546 = vmatpush1.msra.mxu0 0.0
    %1547 = vmatprep.subr.mxu0 0.0
    %1548 = vmatpush1.msra.mxu0 0.0
    %1549 = vmatprep.subr.mxu0 0.0
    %1550 = vmatpush1.msra.mxu0 0.0
    %1551 = vmatprep.subr.mxu0 0.0
    %1552 = vmatpush1.msra.mxu0 0.0
    %1553 = vmatprep.subr.mxu0 0.0
    %1554 = vmatpush1.msra.mxu0 0.0
    %1555 = vmatprep.subr.mxu0 0.0
    %1556 = vmatpush1.msra.mxu0 0.0
    %1557 = vmatprep.subr.mxu0 0.0
    %1558 = vmatpush1.msra.mxu0 0.0
    %1559 = vmatprep.subr.mxu0 0.0
    %1560 = vmatpush1.msra.mxu0 0.0
    %1561 = vmatprep.subr.mxu0 0.0
    %1562 = vmatpush1.msra.mxu0 0.0
    %1563 = vmatprep.subr.mxu0 0.0
    %1564 = vmatpush1.msra.mxu0 0.0
    %1565 = vmatprep.subr.mxu0 0.0
    %1566 = vmatpush1.msra.mxu0 0.0
    %1567 = vmatprep.subr.mxu0 0.0
    %1568 = vmatpush1.msra.mxu0 0.0
    %1569 = vmatprep.subr.mxu0 0.0
    %1570 = vmatpush1.msra.mxu0 0.0
    %1571 = vmatprep.subr.mxu0 0.0
    %1572 = vmatpush1.msra.mxu0 0.0
    %1573 = vmatprep.subr.mxu0 0.0
    %1574 = vmatpush1.msra.mxu0 0.0
    %1575 = vmatprep.subr.mxu0 0.0
    %1576 = vmatpush1.msra.mxu0 0.0
    %1577 = vmatprep.subr.mxu0 0.0
    %1578 = vmatpush1.msra.mxu0 0.0
    %1579 = vmatprep.subr.mxu0 0.0
    %1580 = vmatpush1.msra.mxu0 0.0
    %1581 = vmatprep.subr.mxu0 0.0
    %1582 = vmatpush1.msra.mxu0 0.0
    %1583 = vmatprep.subr.mxu0 0.0
    %1584 = vmatpush1.msra.mxu0 0.0
    %1585 = vmatprep.subr.mxu0 0.0
    %1586 = vmatpush1.msra.mxu0 0.0
    %1587 = vmatprep.subr.mxu0 0.0
    %1588 = vmatpush1.msra.mxu0 0.0
    %1589 = vmatprep.subr.mxu0 0.0
    %1590 = vmatpush1.msra.mxu0 0.0
    %1591 = vmatprep.subr.mxu0 0.0
    %1592 = vmatpush1.msra.mxu0 0.0
    %1593 = vmatprep.subr.mxu0 0.0
    %1594 = vmatpush1.msra.mxu0 0.0
    %1595 = vmatprep.subr.mxu0 0.0
    %1596 = vmatpush1.msra.mxu0 0.0
    %1597 = vmatprep.subr.mxu0 0.0
    %1598 = vmatpush1.msra.mxu0 0.0
    %1599 = vmatprep.subr.mxu0 0.0
    %1600 = vmatpush1.msra.mxu0 0.0
    %1601 = vmatprep.subr.mxu0 0.0
    %1602 = vmatpush1.msra.mxu0 0.0
    %1603 = vmatprep.subr.mxu0 0.0
    %1604 = vmatpush1.msra.mxu0 0.0
    %1605 = vmatprep.mubr.f32.mxu0 0.0
    %1606 = vmatmul.mubr.f32.gmra.mrb[0].mxu0 %v1239
    %v1607 = vpop.f32.mrb[0].mxu0
    %v1608 = vadd.f32 0.0, %v1607
    %v1609 = vpop.f32.mrb[0].mxu0
    %1610 = vdwg.mxu0
    %v1612 = vsel %vm94, %v1608, 0
    %1614 = vmatprep.subr.mxu0 0.0
    %1615 = vmatpush1.xpose.msra.mxu0 %v1612
    %1616 = vmatprep.subr.mxu0 0.0
    %1617 = vmatpush1.xpose.msra.mxu0 0.0
    %1618 = vmatprep.subr.mxu0 0.0
    %1619 = vmatpush1.xpose.msra.mxu0 0.0
    %1620 = vmatprep.subr.mxu0 0.0
    %1621 = vmatpush1.xpose.msra.mxu0 0.0
    %1622 = vmatprep.subr.mxu0 0.0
    %1623 = vmatpush1.xpose.msra.mxu0 0.0
    %1624 = vmatprep.subr.mxu0 0.0
    %1625 = vmatpush1.xpose.msra.mxu0 0.0
    %1626 = vmatprep.subr.mxu0 0.0
    %1627 = vmatpush1.xpose.msra.mxu0 0.0
    %1628 = vmatprep.subr.mxu0 0.0
    %1629 = vmatpush1.xpose.msra.mxu0 0.0
    %1630 = vmatprep.subr.mxu0 0.0
    %1631 = vmatpush1.xpose.msra.mxu0 0.0
    %1632 = vmatprep.subr.mxu0 0.0
    %1633 = vmatpush1.xpose.msra.mxu0 0.0
    %1634 = vmatprep.subr.mxu0 0.0
    %1635 = vmatpush1.xpose.msra.mxu0 0.0
    %1636 = vmatprep.subr.mxu0 0.0
    %1637 = vmatpush1.xpose.msra.mxu0 0.0
    %1638 = vmatprep.subr.mxu0 0.0
    %1639 = vmatpush1.xpose.msra.mxu0 0.0
    %1640 = vmatprep.subr.mxu0 0.0
    %1641 = vmatpush1.xpose.msra.mxu0 0.0
    %1642 = vmatprep.subr.mxu0 0.0
    %1643 = vmatpush1.xpose.msra.mxu0 0.0
    %1644 = vmatprep.subr.mxu0 0.0
    %1645 = vmatpush1.xpose.msra.mxu0 0.0
    %1646 = vmatprep.subr.mxu0 0.0
    %1647 = vmatpush1.xpose.msra.mxu0 0.0
    %1648 = vmatprep.subr.mxu0 0.0
    %1649 = vmatpush1.xpose.msra.mxu0 0.0
    %1650 = vmatprep.subr.mxu0 0.0
    %1651 = vmatpush1.xpose.msra.mxu0 0.0
    %1652 = vmatprep.subr.mxu0 0.0
    %1653 = vmatpush1.xpose.msra.mxu0 0.0
    %1654 = vmatprep.subr.mxu0 0.0
    %1655 = vmatpush1.xpose.msra.mxu0 0.0
    %1656 = vmatprep.subr.mxu0 0.0
    %1657 = vmatpush1.xpose.msra.mxu0 0.0
    %1658 = vmatprep.subr.mxu0 0.0
    %1659 = vmatpush1.xpose.msra.mxu0 0.0
    %1660 = vmatprep.subr.mxu0 0.0
    %1661 = vmatpush1.xpose.msra.mxu0 0.0
    %1662 = vmatprep.subr.mxu0 0.0
    %1663 = vmatpush1.xpose.msra.mxu0 0.0
    %1664 = vmatprep.subr.mxu0 0.0
    %1665 = vmatpush1.xpose.msra.mxu0 0.0
    %1666 = vmatprep.subr.mxu0 0.0
    %1667 = vmatpush1.xpose.msra.mxu0 0.0
    %1668 = vmatprep.subr.mxu0 0.0
    %1669 = vmatpush1.xpose.msra.mxu0 0.0
    %1670 = vmatprep.subr.mxu0 0.0
    %1671 = vmatpush1.xpose.msra.mxu0 0.0
    %1672 = vmatprep.subr.mxu0 0.0
    %1673 = vmatpush1.xpose.msra.mxu0 0.0
    %1674 = vmatprep.subr.mxu0 0.0
    %1675 = vmatpush1.xpose.msra.mxu0 0.0
    %1676 = vmatprep.subr.mxu0 0.0
    %1677 = vmatpush1.xpose.msra.mxu0 0.0
    %1678 = vmatprep.mubr.f32.mxu0 0.0
    %1679 = vmatmul.mubr.f32.gmra.mrb[0].mxu0 %v1612
    %v1680 = vpop.f32.mrb[0].mxu0
    %v1681 = vadd.f32 0.0, %v1680
    %v1682 = vpop.f32.mrb[0].mxu0
    %1683 = vdwg.mxu0
    %v1684 = vsub.f32 0.0, %v1681
    %v1685 = vmul.f32 %v1684, 1.442695
    %v1686 = vpow.pop %v1685
    %v1687 = vadd.f32 %v1686, 1.0
    %v1688 = vrcp.pop %v1687
    %v1689 = vld [vmem:[%s10] sm:$0xff]
    %v1690 = vld [vmem:[%s10 + $0x8] sm:$0xff]
    %v1691 = vld [vmem:[%s10 + $0x10] sm:$0xff]
    %v1692 = vld [vmem:[%s10 + $0x18] sm:$0xff]
    %1693 = vmatprep.subr.mxu0 0.0
    %1694 = vmatpush1.msra.mxu0 %v1689
    %1695 = vmatprep.subr.mxu0 0.0
    %1696 = vmatpush1.msra.mxu0 %v1690
    %1697 = vmatprep.subr.mxu0 0.0
    %1698 = vmatpush1.msra.mxu0 %v1691
    %1699 = vmatprep.subr.mxu0 0.0
    %1700 = vmatpush1.msra.mxu0 %v1692
    %1701 = vmatprep.subr.mxu0 0.0
    %1702 = vmatpush1.msra.mxu0 0.0
    %1703 = vmatprep.subr.mxu0 0.0
    %1704 = vmatpush1.msra.mxu0 0.0
    %1705 = vmatprep.subr.mxu0 0.0
    %1706 = vmatpush1.msra.mxu0 0.0
    %1707 = vmatprep.subr.mxu0 0.0
    %1708 = vmatpush1.msra.mxu0 0.0
    %1709 = vmatprep.subr.mxu0 0.0
    %1710 = vmatpush1.msra.mxu0 0.0
    %1711 = vmatprep.subr.mxu0 0.0
    %1712 = vmatpush1.msra.mxu0 0.0
    %1713 = vmatprep.subr.mxu0 0.0
    %1714 = vmatpush1.msra.mxu0 0.0
    %1715 = vmatprep.subr.mxu0 0.0
    %1716 = vmatpush1.msra.mxu0 0.0
    %1717 = vmatprep.subr.mxu0 0.0
    %1718 = vmatpush1.msra.mxu0 0.0
    %1719 = vmatprep.subr.mxu0 0.0
    %1720 = vmatpush1.msra.mxu0 0.0
    %1721 = vmatprep.subr.mxu0 0.0
    %1722 = vmatpush1.msra.mxu0 0.0
    %1723 = vmatprep.subr.mxu0 0.0
    %1724 = vmatpush1.msra.mxu0 0.0
    %1725 = vmatprep.subr.mxu0 0.0
    %1726 = vmatpush1.msra.mxu0 0.0
    %1727 = vmatprep.subr.mxu0 0.0
    %1728 = vmatpush1.msra.mxu0 0.0
    %1729 = vmatprep.subr.mxu0 0.0
    %1730 = vmatpush1.msra.mxu0 0.0
    %1731 = vmatprep.subr.mxu0 0.0
    %1732 = vmatpush1.msra.mxu0 0.0
    %1733 = vmatprep.subr.mxu0 0.0
    %1734 = vmatpush1.msra.mxu0 0.0
    %1735 = vmatprep.subr.mxu0 0.0
    %1736 = vmatpush1.msra.mxu0 0.0
    %1737 = vmatprep.subr.mxu0 0.0
    %1738 = vmatpush1.msra.mxu0 0.0
    %1739 = vmatprep.subr.mxu0 0.0
    %1740 = vmatpush1.msra.mxu0 0.0
    %1741 = vmatprep.subr.mxu0 0.0
    %1742 = vmatpush1.msra.mxu0 0.0
    %1743 = vmatprep.subr.mxu0 0.0
    %1744 = vmatpush1.msra.mxu0 0.0
    %1745 = vmatprep.subr.mxu0 0.0
    %1746 = vmatpush1.msra.mxu0 0.0
    %1747 = vmatprep.subr.mxu0 0.0
    %1748 = vmatpush1.msra.mxu0 0.0
    %1749 = vmatprep.subr.mxu0 0.0
    %1750 = vmatpush1.msra.mxu0 0.0
    %1751 = vmatprep.subr.mxu0 0.0
    %1752 = vmatpush1.msra.mxu0 0.0
    %1753 = vmatprep.subr.mxu0 0.0
    %1754 = vmatpush1.msra.mxu0 0.0
    %1755 = vmatprep.subr.mxu0 0.0
    %1756 = vmatpush1.msra.mxu0 0.0
    %1757 = vmatprep.mubr.f32.mxu0 0.0
    %1758 = vmatmul.mubr.f32.gmra.mrb[0].mxu0 %v183
    %v1759 = vpop.f32.mrb[0].mxu0
    %v1760 = vadd.f32 0.0, %v1759
    %v1761 = vpop.f32.mrb[0].mxu0
    %1762 = vmatprep.mubr.f32.mxu0 0.0
    %1763 = vmatmul.mubr.f32.gmra.mrb[0].mxu0 %v186
    %v1764 = vpop.f32.mrb[0].mxu0
    %v1765 = vadd.f32 0.0, %v1764
    %v1766 = vpop.f32.mrb[0].mxu0
    %1767 = vdwg.mxu0
    %v1768 = vld [vmem:[%s11] sm:$0x1]
    %v1770 = vlaneseq
    %v1771 = vshrl.u32 %v1770, 7
    %v1772 = vsub.s32 0, %v1771
    %v1773 = vrot.slane %v1768, %v1772
    %v1776 = vsel %vm1161, %v1540, 0
    %1778 = vmatprep.subr.mxu0 0.0
    %1779 = vmatpush1.msra.mxu0 %v1760
    %1780 = vmatprep.subr.mxu0 0.0
    %1781 = vmatpush1.msra.mxu0 0.0
    %1782 = vmatprep.subr.mxu0 0.0
    %1783 = vmatpush1.msra.mxu0 0.0
    %1784 = vmatprep.subr.mxu0 0.0
    %1785 = vmatpush1.msra.mxu0 0.0
    %1786 = vmatprep.subr.mxu0 0.0
    %1787 = vmatpush1.msra.mxu0 0.0
    %1788 = vmatprep.subr.mxu0 0.0
    %1789 = vmatpush1.msra.mxu0 0.0
    %1790 = vmatprep.subr.mxu0 0.0
    %1791 = vmatpush1.msra.mxu0 0.0
    %1792 = vmatprep.subr.mxu0 0.0
    %1793 = vmatpush1.msra.mxu0 0.0
    %1794 = vmatprep.subr.mxu0 0.0
    %1795 = vmatpush1.msra.mxu0 0.0
    %1796 = vmatprep.subr.mxu0 0.0
    %1797 = vmatpush1.msra.mxu0 0.0
    %1798 = vmatprep.subr.mxu0 0.0
    %1799 = vmatpush1.msra.mxu0 0.0
    %1800 = vmatprep.subr.mxu0 0.0
    %1801 = vmatpush1.msra.mxu0 0.0
    %1802 = vmatprep.subr.mxu0 0.0
    %1803 = vmatpush1.msra.mxu0 0.0
    %1804 = vmatprep.subr.mxu0 0.0
    %1805 = vmatpush1.msra.mxu0 0.0
    %1806 = vmatprep.subr.mxu0 0.0
    %1807 = vmatpush1.msra.mxu0 0.0
    %1808 = vmatprep.subr.mxu0 0.0
    %1809 = vmatpush1.msra.mxu0 0.0
    %1810 = vmatprep.subr.mxu0 0.0
    %1811 = vmatpush1.msra.mxu0 0.0
    %1812 = vmatprep.subr.mxu0 0.0
    %1813 = vmatpush1.msra.mxu0 0.0
    %1814 = vmatprep.subr.mxu0 0.0
    %1815 = vmatpush1.msra.mxu0 0.0
    %1816 = vmatprep.subr.mxu0 0.0
    %1817 = vmatpush1.msra.mxu0 0.0
    %1818 = vmatprep.subr.mxu0 0.0
    %1819 = vmatpush1.msra.mxu0 0.0
    %1820 = vmatprep.subr.mxu0 0.0
    %1821 = vmatpush1.msra.mxu0 0.0
    %1822 = vmatprep.subr.mxu0 0.0
    %1823 = vmatpush1.msra.mxu0 0.0
    %1824 = vmatprep.subr.mxu0 0.0
    %1825 = vmatpush1.msra.mxu0 0.0
    %1826 = vmatprep.subr.mxu0 0.0
    %1827 = vmatpush1.msra.mxu0 0.0
    %1828 = vmatprep.subr.mxu0 0.0
    %1829 = vmatpush1.msra.mxu0 0.0
    %1830 = vmatprep.subr.mxu0 0.0
    %1831 = vmatpush1.msra.mxu0 0.0
    %1832 = vmatprep.subr.mxu0 0.0
    %1833 = vmatpush1.msra.mxu0 0.0
    %1834 = vmatprep.subr.mxu0 0.0
    %1835 = vmatpush1.msra.mxu0 0.0
    %1836 = vmatprep.subr.mxu0 0.0
    %1837 = vmatpush1.msra.mxu0 0.0
    %1838 = vmatprep.subr.mxu0 0.0
    %1839 = vmatpush1.msra.mxu0 0.0
    %1840 = vmatprep.subr.mxu0 0.0
    %1841 = vmatpush1.msra.mxu0 0.0
    %1842 = vmatprep.mubr.f32.mxu0 0.0
    %1843 = vmatmul.mubr.f32.gmra.mrb[0].mxu0 %v1776
    %v1844 = vpop.f32.mrb[0].mxu0
    %v1845 = vadd.f32 %v1773, %v1844
    %v1846 = vpop.f32.mrb[0].mxu0
    %1847 = vdwg.mxu0
    %v1849 = vsel %vm1161, %v1688, 0
    %1851 = vmatprep.subr.mxu0 0.0
    %1852 = vmatpush1.msra.mxu0 %v1765
    %1853 = vmatprep.subr.mxu0 0.0
    %1854 = vmatpush1.msra.mxu0 0.0
    %1855 = vmatprep.subr.mxu0 0.0
    %1856 = vmatpush1.msra.mxu0 0.0
    %1857 = vmatprep.subr.mxu0 0.0
    %1858 = vmatpush1.msra.mxu0 0.0
    %1859 = vmatprep.subr.mxu0 0.0
    %1860 = vmatpush1.msra.mxu0 0.0
    %1861 = vmatprep.subr.mxu0 0.0
    %1862 = vmatpush1.msra.mxu0 0.0
    %1863 = vmatprep.subr.mxu0 0.0
    %1864 = vmatpush1.msra.mxu0 0.0
    %1865 = vmatprep.subr.mxu0 0.0
    %1866 = vmatpush1.msra.mxu0 0.0
    %1867 = vmatprep.subr.mxu0 0.0
    %1868 = vmatpush1.msra.mxu0 0.0
    %1869 = vmatprep.subr.mxu0 0.0
    %1870 = vmatpush1.msra.mxu0 0.0
    %1871 = vmatprep.subr.mxu0 0.0
    %1872 = vmatpush1.msra.mxu0 0.0
    %1873 = vmatprep.subr.mxu0 0.0
    %1874 = vmatpush1.msra.mxu0 0.0
    %1875 = vmatprep.subr.mxu0 0.0
    %1876 = vmatpush1.msra.mxu0 0.0
    %1877 = vmatprep.subr.mxu0 0.0
    %1878 = vmatpush1.msra.mxu0 0.0
    %1879 = vmatprep.subr.mxu0 0.0
    %1880 = vmatpush1.msra.mxu0 0.0
    %1881 = vmatprep.subr.mxu0 0.0
    %1882 = vmatpush1.msra.mxu0 0.0
    %1883 = vmatprep.subr.mxu0 0.0
    %1884 = vmatpush1.msra.mxu0 0.0
    %1885 = vmatprep.subr.mxu0 0.0
    %1886 = vmatpush1.msra.mxu0 0.0
    %1887 = vmatprep.subr.mxu0 0.0
    %1888 = vmatpush1.msra.mxu0 0.0
    %1889 = vmatprep.subr.mxu0 0.0
    %1890 = vmatpush1.msra.mxu0 0.0
    %1891 = vmatprep.subr.mxu0 0.0
    %1892 = vmatpush1.msra.mxu0 0.0
    %1893 = vmatprep.subr.mxu0 0.0
    %1894 = vmatpush1.msra.mxu0 0.0
    %1895 = vmatprep.subr.mxu0 0.0
    %1896 = vmatpush1.msra.mxu0 0.0
    %1897 = vmatprep.subr.mxu0 0.0
    %1898 = vmatpush1.msra.mxu0 0.0
    %1899 = vmatprep.subr.mxu0 0.0
    %1900 = vmatpush1.msra.mxu0 0.0
    %1901 = vmatprep.subr.mxu0 0.0
    %1902 = vmatpush1.msra.mxu0 0.0
    %1903 = vmatprep.subr.mxu0 0.0
    %1904 = vmatpush1.msra.mxu0 0.0
    %1905 = vmatprep.subr.mxu0 0.0
    %1906 = vmatpush1.msra.mxu0 0.0
    %1907 = vmatprep.subr.mxu0 0.0
    %1908 = vmatpush1.msra.mxu0 0.0
    %1909 = vmatprep.subr.mxu0 0.0
    %1910 = vmatpush1.msra.mxu0 0.0
    %1911 = vmatprep.subr.mxu0 0.0
    %1912 = vmatpush1.msra.mxu0 0.0
    %1913 = vmatprep.subr.mxu0 0.0
    %1914 = vmatpush1.msra.mxu0 0.0
    %1915 = vmatprep.mubr.f32.mxu0 0.0
    %1916 = vmatmul.mubr.f32.gmra.mrb[0].mxu0 %v1849
    %v1917 = vpop.f32.mrb[0].mxu0
    %v1918 = vadd.f32 %v1773, %v1917
    %v1919 = vpop.f32.mrb[0].mxu0
    %1920 = vdwg.mxu0
    %v1922 = vsel %vm94, %v1845, 0
    %v1925 = vsel %vm94, %v1918, 0
    %1927 = vmatprep.subr.mxu0 0.0
    %1928 = vmatpush1.msra.mxu0 %v1073
    %1929 = vmatprep.subr.mxu0 0.0
    %1930 = vmatpush1.msra.mxu0 %v1074
    %1931 = vmatprep.subr.mxu0 0.0
    %1932 = vmatpush1.msra.mxu0 %v1075
    %1933 = vmatprep.subr.mxu0 0.0
    %1934 = vmatpush1.msra.mxu0 %v1076
    %1935 = vmatprep.subr.mxu0 0.0
    %1936 = vmatpush1.msra.mxu0 0.0
    %1937 = vmatprep.subr.mxu0 0.0
    %1938 = vmatpush1.msra.mxu0 0.0
    %1939 = vmatprep.subr.mxu0 0.0
    %1940 = vmatpush1.msra.mxu0 0.0
    %1941 = vmatprep.subr.mxu0 0.0
    %1942 = vmatpush1.msra.mxu0 0.0
    %1943 = vmatprep.subr.mxu0 0.0
    %1944 = vmatpush1.msra.mxu0 0.0
    %1945 = vmatprep.subr.mxu0 0.0
    %1946 = vmatpush1.msra.mxu0 0.0
    %1947 = vmatprep.subr.mxu0 0.0
    %1948 = vmatpush1.msra.mxu0 0.0
    %1949 = vmatprep.subr.mxu0 0.0
    %1950 = vmatpush1.msra.mxu0 0.0
    %1951 = vmatprep.subr.mxu0 0.0
    %1952 = vmatpush1.msra.mxu0 0.0
    %1953 = vmatprep.subr.mxu0 0.0
    %1954 = vmatpush1.msra.mxu0 0.0
    %1955 = vmatprep.subr.mxu0 0.0
    %1956 = vmatpush1.msra.mxu0 0.0
    %1957 = vmatprep.subr.mxu0 0.0
    %1958 = vmatpush1.msra.mxu0 0.0
    %1959 = vmatprep.subr.mxu0 0.0
    %1960 = vmatpush1.msra.mxu0 0.0
    %1961 = vmatprep.subr.mxu0 0.0
    %1962 = vmatpush1.msra.mxu0 0.0
    %1963 = vmatprep.subr.mxu0 0.0
    %1964 = vmatpush1.msra.mxu0 0.0
    %1965 = vmatprep.subr.mxu0 0.0
    %1966 = vmatpush1.msra.mxu0 0.0
    %1967 = vmatprep.subr.mxu0 0.0
    %1968 = vmatpush1.msra.mxu0 0.0
    %1969 = vmatprep.subr.mxu0 0.0
    %1970 = vmatpush1.msra.mxu0 0.0
    %1971 = vmatprep.subr.mxu0 0.0
    %1972 = vmatpush1.msra.mxu0 0.0
    %1973 = vmatprep.subr.mxu0 0.0
    %1974 = vmatpush1.msra.mxu0 0.0
    %1975 = vmatprep.subr.mxu0 0.0
    %1976 = vmatpush1.msra.mxu0 0.0
    %1977 = vmatprep.subr.mxu0 0.0
    %1978 = vmatpush1.msra.mxu0 0.0
    %1979 = vmatprep.subr.mxu0 0.0
    %1980 = vmatpush1.msra.mxu0 0.0
    %1981 = vmatprep.subr.mxu0 0.0
    %1982 = vmatpush1.msra.mxu0 0.0
    %1983 = vmatprep.subr.mxu0 0.0
    %1984 = vmatpush1.msra.mxu0 0.0
    %1985 = vmatprep.subr.mxu0 0.0
    %1986 = vmatpush1.msra.mxu0 0.0
    %1987 = vmatprep.subr.mxu0 0.0
    %1988 = vmatpush1.msra.mxu0 0.0
    %1989 = vmatprep.subr.mxu0 0.0
    %1990 = vmatpush1.msra.mxu0 0.0
    %1991 = vmatprep.mubr.f32.mxu0 0.0
    %1992 = vmatmul.mubr.f32.gmra.mrb[0].mxu0 %v1922
    %v1993 = vpop.f32.mrb[0].mxu0
    %v1994 = vadd.f32 0.0, %v1993
    %v1995 = vpop.f32.mrb[0].mxu0
    %1996 = vmatprep.mubr.f32.mxu0 0.0
    %1997 = vmatmul.mubr.f32.gmra.mrb[0].mxu0 %v1925
    %v1998 = vpop.f32.mrb[0].mxu0
    %v1999 = vadd.f32 0.0, %v1998
    %v2000 = vpop.f32.mrb[0].mxu0
    %2001 = vdwg.mxu0
    %2002 = vmatprep.subr.mxu0 0.0
    %2003 = vmatpush1.msra.mxu0 %v1994
    %2004 = vmatprep.subr.mxu0 0.0
    %2005 = vmatpush1.msra.mxu0 0.0
    %2006 = vmatprep.subr.mxu0 0.0
    %2007 = vmatpush1.msra.mxu0 0.0
    %2008 = vmatprep.subr.mxu0 0.0
    %2009 = vmatpush1.msra.mxu0 0.0
    %2010 = vmatprep.subr.mxu0 0.0
    %2011 = vmatpush1.msra.mxu0 0.0
    %2012 = vmatprep.subr.mxu0 0.0
    %2013 = vmatpush1.msra.mxu0 0.0
    %2014 = vmatprep.subr.mxu0 0.0
    %2015 = vmatpush1.msra.mxu0 0.0
    %2016 = vmatprep.subr.mxu0 0.0
    %2017 = vmatpush1.msra.mxu0 0.0
    %2018 = vmatprep.subr.mxu0 0.0
    %2019 = vmatpush1.msra.mxu0 0.0
    %2020 = vmatprep.subr.mxu0 0.0
    %2021 = vmatpush1.msra.mxu0 0.0
    %2022 = vmatprep.subr.mxu0 0.0
    %2023 = vmatpush1.msra.mxu0 0.0
    %2024 = vmatprep.subr.mxu0 0.0
    %2025 = vmatpush1.msra.mxu0 0.0
    %2026 = vmatprep.subr.mxu0 0.0
    %2027 = vmatpush1.msra.mxu0 0.0
    %2028 = vmatprep.subr.mxu0 0.0
    %2029 = vmatpush1.msra.mxu0 0.0
    %2030 = vmatprep.subr.mxu0 0.0
    %2031 = vmatpush1.msra.mxu0 0.0
    %2032 = vmatprep.subr.mxu0 0.0
    %2033 = vmatpush1.msra.mxu0 0.0
    %2034 = vmatprep.subr.mxu0 0.0
    %2035 = vmatpush1.msra.mxu0 0.0
    %2036 = vmatprep.subr.mxu0 0.0
    %2037 = vmatpush1.msra.mxu0 0.0
    %2038 = vmatprep.subr.mxu0 0.0
    %2039 = vmatpush1.msra.mxu0 0.0
    %2040 = vmatprep.subr.mxu0 0.0
    %2041 = vmatpush1.msra.mxu0 0.0
    %2042 = vmatprep.subr.mxu0 0.0
    %2043 = vmatpush1.msra.mxu0 0.0
    %2044 = vmatprep.subr.mxu0 0.0
    %2045 = vmatpush1.msra.mxu0 0.0
    %2046 = vmatprep.subr.mxu0 0.0
    %2047 = vmatpush1.msra.mxu0 0.0
    %2048 = vmatprep.subr.mxu0 0.0
    %2049 = vmatpush1.msra.mxu0 0.0
    %2050 = vmatprep.subr.mxu0 0.0
    %2051 = vmatpush1.msra.mxu0 0.0
    %2052 = vmatprep.subr.mxu0 0.0
    %2053 = vmatpush1.msra.mxu0 0.0
    %2054 = vmatprep.subr.mxu0 0.0
    %2055 = vmatpush1.msra.mxu0 0.0
    %2056 = vmatprep.subr.mxu0 0.0
    %2057 = vmatpush1.msra.mxu0 0.0
    %2058 = vmatprep.subr.mxu0 0.0
    %2059 = vmatpush1.msra.mxu0 0.0
    %2060 = vmatprep.subr.mxu0 0.0
    %2061 = vmatpush1.msra.mxu0 0.0
    %2062 = vmatprep.subr.mxu0 0.0
    %2063 = vmatpush1.msra.mxu0 0.0
    %2064 = vmatprep.subr.mxu0 0.0
    %2065 = vmatpush1.msra.mxu0 0.0
    %2066 = vmatprep.mubr.f32.mxu0 0.0
    %2067 = vmatmul.mubr.f32.gmra.mrb[0].mxu0 %v1163
    %v2068 = vpop.f32.mrb[0].mxu0
    %v2069 = vadd.f32 0.0, %v2068
    %v2070 = vpop.f32.mrb[0].mxu0
    %2071 = vdwg.mxu0
    %v2072 = vmax.f32 %v2069, 0.0
    %2073 = vmatprep.subr.mxu0 0.0
    %2074 = vmatpush1.msra.mxu0 %v1999
    %2075 = vmatprep.subr.mxu0 0.0
    %2076 = vmatpush1.msra.mxu0 0.0
    %2077 = vmatprep.subr.mxu0 0.0
    %2078 = vmatpush1.msra.mxu0 0.0
    %2079 = vmatprep.subr.mxu0 0.0
    %2080 = vmatpush1.msra.mxu0 0.0
    %2081 = vmatprep.subr.mxu0 0.0
    %2082 = vmatpush1.msra.mxu0 0.0
    %2083 = vmatprep.subr.mxu0 0.0
    %2084 = vmatpush1.msra.mxu0 0.0
    %2085 = vmatprep.subr.mxu0 0.0
    %2086 = vmatpush1.msra.mxu0 0.0
    %2087 = vmatprep.subr.mxu0 0.0
    %2088 = vmatpush1.msra.mxu0 0.0
    %2089 = vmatprep.subr.mxu0 0.0
    %2090 = vmatpush1.msra.mxu0 0.0
    %2091 = vmatprep.subr.mxu0 0.0
    %2092 = vmatpush1.msra.mxu0 0.0
    %2093 = vmatprep.subr.mxu0 0.0
    %2094 = vmatpush1.msra.mxu0 0.0
    %2095 = vmatprep.subr.mxu0 0.0
    %2096 = vmatpush1.msra.mxu0 0.0
    %2097 = vmatprep.subr.mxu0 0.0
    %2098 = vmatpush1.msra.mxu0 0.0
    %2099 = vmatprep.subr.mxu0 0.0
    %2100 = vmatpush1.msra.mxu0 0.0
    %2101 = vmatprep.subr.mxu0 0.0
    %2102 = vmatpush1.msra.mxu0 0.0
    %2103 = vmatprep.subr.mxu0 0.0
    %2104 = vmatpush1.msra.mxu0 0.0
    %2105 = vmatprep.subr.mxu0 0.0
    %2106 = vmatpush1.msra.mxu0 0.0
    %2107 = vmatprep.subr.mxu0 0.0
    %2108 = vmatpush1.msra.mxu0 0.0
    %2109 = vmatprep.subr.mxu0 0.0
    %2110 = vmatpush1.msra.mxu0 0.0
    %2111 = vmatprep.subr.mxu0 0.0
    %2112 = vmatpush1.msra.mxu0 0.0
    %2113 = vmatprep.subr.mxu0 0.0
    %2114 = vmatpush1.msra.mxu0 0.0
    %2115 = vmatprep.subr.mxu0 0.0
    %2116 = vmatpush1.msra.mxu0 0.0
    %2117 = vmatprep.subr.mxu0 0.0
    %2118 = vmatpush1.msra.mxu0 0.0
    %2119 = vmatprep.subr.mxu0 0.0
    %2120 = vmatpush1.msra.mxu0 0.0
    %2121 = vmatprep.subr.mxu0 0.0
    %2122 = vmatpush1.msra.mxu0 0.0
    %2123 = vmatprep.subr.mxu0 0.0
    %2124 = vmatpush1.msra.mxu0 0.0
    %2125 = vmatprep.subr.mxu0 0.0
    %2126 = vmatpush1.msra.mxu0 0.0
    %2127 = vmatprep.subr.mxu0 0.0
    %2128 = vmatpush1.msra.mxu0 0.0
    %2129 = vmatprep.subr.mxu0 0.0
    %2130 = vmatpush1.msra.mxu0 0.0
    %2131 = vmatprep.subr.mxu0 0.0
    %2132 = vmatpush1.msra.mxu0 0.0
    %2133 = vmatprep.subr.mxu0 0.0
    %2134 = vmatpush1.msra.mxu0 0.0
    %2135 = vmatprep.subr.mxu0 0.0
    %2136 = vmatpush1.msra.mxu0 0.0
    %2137 = vmatprep.mubr.f32.mxu0 0.0
    %2138 = vmatmul.mubr.f32.gmra.mrb[0].mxu0 %v1239
    %v2139 = vpop.f32.mrb[0].mxu0
    %v2140 = vadd.f32 0.0, %v2139
    %v2141 = vpop.f32.mrb[0].mxu0
    %2142 = vdwg.mxu0
    %v2143 = vmax.f32 %v2140, 0.0
    %v2145 = vsel %vm94, %v2072, 0
    %v2148 = vsel %vm94, %v2143, 0
    %2150 = vmatprep.subr.mxu0 0.0
    %2151 = vmatpush1.msra.mxu0 %v1081
    %2152 = vmatprep.subr.mxu0 0.0
    %2153 = vmatpush1.msra.mxu0 %v1082
    %2154 = vmatprep.subr.mxu0 0.0
    %2155 = vmatpush1.msra.mxu0 %v1083
    %2156 = vmatprep.subr.mxu0 0.0
    %2157 = vmatpush1.msra.mxu0 %v1084
    %2158 = vmatprep.subr.mxu0 0.0
    %2159 = vmatpush1.msra.mxu0 0.0
    %2160 = vmatprep.subr.mxu0 0.0
    %2161 = vmatpush1.msra.mxu0 0.0
    %2162 = vmatprep.subr.mxu0 0.0
    %2163 = vmatpush1.msra.mxu0 0.0
    %2164 = vmatprep.subr.mxu0 0.0
    %2165 = vmatpush1.msra.mxu0 0.0
    %2166 = vmatprep.subr.mxu0 0.0
    %2167 = vmatpush1.msra.mxu0 0.0
    %2168 = vmatprep.subr.mxu0 0.0
    %2169 = vmatpush1.msra.mxu0 0.0
    %2170 = vmatprep.subr.mxu0 0.0
    %2171 = vmatpush1.msra.mxu0 0.0
    %2172 = vmatprep.subr.mxu0 0.0
    %2173 = vmatpush1.msra.mxu0 0.0
    %2174 = vmatprep.subr.mxu0 0.0
    %2175 = vmatpush1.msra.mxu0 0.0
    %2176 = vmatprep.subr.mxu0 0.0
    %2177 = vmatpush1.msra.mxu0 0.0
    %2178 = vmatprep.subr.mxu0 0.0
    %2179 = vmatpush1.msra.mxu0 0.0
    %2180 = vmatprep.subr.mxu0 0.0
    %2181 = vmatpush1.msra.mxu0 0.0
    %2182 = vmatprep.subr.mxu0 0.0
    %2183 = vmatpush1.msra.mxu0 0.0
    %2184 = vmatprep.subr.mxu0 0.0
    %2185 = vmatpush1.msra.mxu0 0.0
    %2186 = vmatprep.subr.mxu0 0.0
    %2187 = vmatpush1.msra.mxu0 0.0
    %2188 = vmatprep.subr.mxu0 0.0
    %2189 = vmatpush1.msra.mxu0 0.0
    %2190 = vmatprep.subr.mxu0 0.0
    %2191 = vmatpush1.msra.mxu0 0.0
    %2192 = vmatprep.subr.mxu0 0.0
    %2193 = vmatpush1.msra.mxu0 0.0
    %2194 = vmatprep.subr.mxu0 0.0
    %2195 = vmatpush1.msra.mxu0 0.0
    %2196 = vmatprep.subr.mxu0 0.0
    %2197 = vmatpush1.msra.mxu0 0.0
    %2198 = vmatprep.subr.mxu0 0.0
    %2199 = vmatpush1.msra.mxu0 0.0
    %2200 = vmatprep.subr.mxu0 0.0
    %2201 = vmatpush1.msra.mxu0 0.0
    %2202 = vmatprep.subr.mxu0 0.0
    %2203 = vmatpush1.msra.mxu0 0.0
    %2204 = vmatprep.subr.mxu0 0.0
    %2205 = vmatpush1.msra.mxu0 0.0
    %2206 = vmatprep.subr.mxu0 0.0
    %2207 = vmatpush1.msra.mxu0 0.0
    %2208 = vmatprep.subr.mxu0 0.0
    %2209 = vmatpush1.msra.mxu0 0.0
    %2210 = vmatprep.subr.mxu0 0.0
    %2211 = vmatpush1.msra.mxu0 0.0
    %2212 = vmatprep.subr.mxu0 0.0
    %2213 = vmatpush1.msra.mxu0 0.0
    %2214 = vmatprep.mubr.f32.mxu0 0.0
    %2215 = vmatmul.mubr.f32.gmra.mrb[0].mxu0 %v2145
    %v2216 = vpop.f32.mrb[0].mxu0
    %v2217 = vadd.f32 0.0, %v2216
    %v2218 = vpop.f32.mrb[0].mxu0
    %2219 = vmatprep.mubr.f32.mxu0 0.0
    %2220 = vmatmul.mubr.f32.gmra.mrb[0].mxu0 %v2148
    %v2221 = vpop.f32.mrb[0].mxu0
    %v2222 = vadd.f32 0.0, %v2221
    %v2223 = vpop.f32.mrb[0].mxu0
    %2224 = vdwg.mxu0
    %2225 = vmatprep.subr.mxu0 0.0
    %2226 = vmatpush1.msra.mxu0 %v2217
    %2227 = vmatprep.subr.mxu0 0.0
    %2228 = vmatpush1.msra.mxu0 0.0
    %2229 = vmatprep.subr.mxu0 0.0
    %2230 = vmatpush1.msra.mxu0 0.0
    %2231 = vmatprep.subr.mxu0 0.0
    %2232 = vmatpush1.msra.mxu0 0.0
    %2233 = vmatprep.subr.mxu0 0.0
    %2234 = vmatpush1.msra.mxu0 0.0
    %2235 = vmatprep.subr.mxu0 0.0
    %2236 = vmatpush1.msra.mxu0 0.0
    %2237 = vmatprep.subr.mxu0 0.0
    %2238 = vmatpush1.msra.mxu0 0.0
    %2239 = vmatprep.subr.mxu0 0.0
    %2240 = vmatpush1.msra.mxu0 0.0
    %2241 = vmatprep.subr.mxu0 0.0
    %2242 = vmatpush1.msra.mxu0 0.0
    %2243 = vmatprep.subr.mxu0 0.0
    %2244 = vmatpush1.msra.mxu0 0.0
    %2245 = vmatprep.subr.mxu0 0.0
    %2246 = vmatpush1.msra.mxu0 0.0
    %2247 = vmatprep.subr.mxu0 0.0
    %2248 = vmatpush1.msra.mxu0 0.0
    %2249 = vmatprep.subr.mxu0 0.0
    %2250 = vmatpush1.msra.mxu0 0.0
    %2251 = vmatprep.subr.mxu0 0.0
    %2252 = vmatpush1.msra.mxu0 0.0
    %2253 = vmatprep.subr.mxu0 0.0
    %2254 = vmatpush1.msra.mxu0 0.0
    %2255 = vmatprep.subr.mxu0 0.0
    %2256 = vmatpush1.msra.mxu0 0.0
    %2257 = vmatprep.subr.mxu0 0.0
    %2258 = vmatpush1.msra.mxu0 0.0
    %2259 = vmatprep.subr.mxu0 0.0
    %2260 = vmatpush1.msra.mxu0 0.0
    %2261 = vmatprep.subr.mxu0 0.0
    %2262 = vmatpush1.msra.mxu0 0.0
    %2263 = vmatprep.subr.mxu0 0.0
    %2264 = vmatpush1.msra.mxu0 0.0
    %2265 = vmatprep.subr.mxu0 0.0
    %2266 = vmatpush1.msra.mxu0 0.0
    %2267 = vmatprep.subr.mxu0 0.0
    %2268 = vmatpush1.msra.mxu0 0.0
    %2269 = vmatprep.subr.mxu0 0.0
    %2270 = vmatpush1.msra.mxu0 0.0
    %2271 = vmatprep.subr.mxu0 0.0
    %2272 = vmatpush1.msra.mxu0 0.0
    %2273 = vmatprep.subr.mxu0 0.0
    %2274 = vmatpush1.msra.mxu0 0.0
    %2275 = vmatprep.subr.mxu0 0.0
    %2276 = vmatpush1.msra.mxu0 0.0
    %2277 = vmatprep.subr.mxu0 0.0
    %2278 = vmatpush1.msra.mxu0 0.0
    %2279 = vmatprep.subr.mxu0 0.0
    %2280 = vmatpush1.msra.mxu0 0.0
    %2281 = vmatprep.subr.mxu0 0.0
    %2282 = vmatpush1.msra.mxu0 0.0
    %2283 = vmatprep.subr.mxu0 0.0
    %2284 = vmatpush1.msra.mxu0 0.0
    %2285 = vmatprep.subr.mxu0 0.0
    %2286 = vmatpush1.msra.mxu0 0.0
    %2287 = vmatprep.subr.mxu0 0.0
    %2288 = vmatpush1.msra.mxu0 0.0
    %2289 = vmatprep.mubr.f32.mxu0 0.0
    %2290 = vmatmul.mubr.f32.gmra.mrb[0].mxu0 %v1163
    %v2291 = vpop.f32.mrb[0].mxu0
    %v2292 = vadd.f32 0.0, %v2291
    %v2293 = vpop.f32.mrb[0].mxu0
    %2294 = vdwg.mxu0
    %v2296 = vsel %vm94, %v2292, 0
    %2298 = vmatprep.subr.mxu0 0.0
    %2299 = vmatpush1.xpose.msra.mxu0 %v2296
    %2300 = vmatprep.subr.mxu0 0.0
    %2301 = vmatpush1.xpose.msra.mxu0 0.0
    %2302 = vmatprep.subr.mxu0 0.0
    %2303 = vmatpush1.xpose.msra.mxu0 0.0
    %2304 = vmatprep.subr.mxu0 0.0
    %2305 = vmatpush1.xpose.msra.mxu0 0.0
    %2306 = vmatprep.subr.mxu0 0.0
    %2307 = vmatpush1.xpose.msra.mxu0 0.0
    %2308 = vmatprep.subr.mxu0 0.0
    %2309 = vmatpush1.xpose.msra.mxu0 0.0
    %2310 = vmatprep.subr.mxu0 0.0
    %2311 = vmatpush1.xpose.msra.mxu0 0.0
    %2312 = vmatprep.subr.mxu0 0.0
    %2313 = vmatpush1.xpose.msra.mxu0 0.0
    %2314 = vmatprep.subr.mxu0 0.0
    %2315 = vmatpush1.xpose.msra.mxu0 0.0
    %2316 = vmatprep.subr.mxu0 0.0
    %2317 = vmatpush1.xpose.msra.mxu0 0.0
    %2318 = vmatprep.subr.mxu0 0.0
    %2319 = vmatpush1.xpose.msra.mxu0 0.0
    %2320 = vmatprep.subr.mxu0 0.0
    %2321 = vmatpush1.xpose.msra.mxu0 0.0
    %2322 = vmatprep.subr.mxu0 0.0
    %2323 = vmatpush1.xpose.msra.mxu0 0.0
    %2324 = vmatprep.subr.mxu0 0.0
    %2325 = vmatpush1.xpose.msra.mxu0 0.0
    %2326 = vmatprep.subr.mxu0 0.0
    %2327 = vmatpush1.xpose.msra.mxu0 0.0
    %2328 = vmatprep.subr.mxu0 0.0
    %2329 = vmatpush1.xpose.msra.mxu0 0.0
    %2330 = vmatprep.subr.mxu0 0.0
    %2331 = vmatpush1.xpose.msra.mxu0 0.0
    %2332 = vmatprep.subr.mxu0 0.0
    %2333 = vmatpush1.xpose.msra.mxu0 0.0
    %2334 = vmatprep.subr.mxu0 0.0
    %2335 = vmatpush1.xpose.msra.mxu0 0.0
    %2336 = vmatprep.subr.mxu0 0.0
    %2337 = vmatpush1.xpose.msra.mxu0 0.0
    %2338 = vmatprep.subr.mxu0 0.0
    %2339 = vmatpush1.xpose.msra.mxu0 0.0
    %2340 = vmatprep.subr.mxu0 0.0
    %2341 = vmatpush1.xpose.msra.mxu0 0.0
    %2342 = vmatprep.subr.mxu0 0.0
    %2343 = vmatpush1.xpose.msra.mxu0 0.0
    %2344 = vmatprep.subr.mxu0 0.0
    %2345 = vmatpush1.xpose.msra.mxu0 0.0
    %2346 = vmatprep.subr.mxu0 0.0
    %2347 = vmatpush1.xpose.msra.mxu0 0.0
    %2348 = vmatprep.subr.mxu0 0.0
    %2349 = vmatpush1.xpose.msra.mxu0 0.0
    %2350 = vmatprep.subr.mxu0 0.0
    %2351 = vmatpush1.xpose.msra.mxu0 0.0
    %2352 = vmatprep.subr.mxu0 0.0
    %2353 = vmatpush1.xpose.msra.mxu0 0.0
    %2354 = vmatprep.subr.mxu0 0.0
    %2355 = vmatpush1.xpose.msra.mxu0 0.0
    %2356 = vmatprep.subr.mxu0 0.0
    %2357 = vmatpush1.xpose.msra.mxu0 0.0
    %2358 = vmatprep.subr.mxu0 0.0
    %2359 = vmatpush1.xpose.msra.mxu0 0.0
    %2360 = vmatprep.subr.mxu0 0.0
    %2361 = vmatpush1.xpose.msra.mxu0 0.0
    %2362 = vmatprep.mubr.f32.mxu0 0.0
    %2363 = vmatmul.mubr.f32.gmra.mrb[0].mxu0 %v2296
    %v2364 = vpop.f32.mrb[0].mxu0
    %v2365 = vadd.f32 0.0, %v2364
    %v2366 = vpop.f32.mrb[0].mxu0
    %2367 = vdwg.mxu0
    %v2368 = vsub.f32 0.0, %v2365
    %v2369 = vmul.f32 %v2368, 1.442695
    %v2370 = vpow.pop %v2369
    %v2371 = vadd.f32 %v2370, 1.0
    %v2372 = vrcp.pop %v2371
    %2373 = vmatprep.subr.mxu0 0.0
    %2374 = vmatpush1.msra.mxu0 %v2222
    %2375 = vmatprep.subr.mxu0 0.0
    %2376 = vmatpush1.msra.mxu0 0.0
    %2377 = vmatprep.subr.mxu0 0.0
    %2378 = vmatpush1.msra.mxu0 0.0
    %2379 = vmatprep.subr.mxu0 0.0
    %2380 = vmatpush1.msra.mxu0 0.0
    %2381 = vmatprep.subr.mxu0 0.0
    %2382 = vmatpush1.msra.mxu0 0.0
    %2383 = vmatprep.subr.mxu0 0.0
    %2384 = vmatpush1.msra.mxu0 0.0
    %2385 = vmatprep.subr.mxu0 0.0
    %2386 = vmatpush1.msra.mxu0 0.0
    %2387 = vmatprep.subr.mxu0 0.0
    %2388 = vmatpush1.msra.mxu0 0.0
    %2389 = vmatprep.subr.mxu0 0.0
    %2390 = vmatpush1.msra.mxu0 0.0
    %2391 = vmatprep.subr.mxu0 0.0
    %2392 = vmatpush1.msra.mxu0 0.0
    %2393 = vmatprep.subr.mxu0 0.0
    %2394 = vmatpush1.msra.mxu0 0.0
    %2395 = vmatprep.subr.mxu0 0.0
    %2396 = vmatpush1.msra.mxu0 0.0
    %2397 = vmatprep.subr.mxu0 0.0
    %2398 = vmatpush1.msra.mxu0 0.0
    %2399 = vmatprep.subr.mxu0 0.0
    %2400 = vmatpush1.msra.mxu0 0.0
    %2401 = vmatprep.subr.mxu0 0.0
    %2402 = vmatpush1.msra.mxu0 0.0
    %2403 = vmatprep.subr.mxu0 0.0
    %2404 = vmatpush1.msra.mxu0 0.0
    %2405 = vmatprep.subr.mxu0 0.0
    %2406 = vmatpush1.msra.mxu0 0.0
    %2407 = vmatprep.subr.mxu0 0.0
    %2408 = vmatpush1.msra.mxu0 0.0
    %2409 = vmatprep.subr.mxu0 0.0
    %2410 = vmatpush1.msra.mxu0 0.0
    %2411 = vmatprep.subr.mxu0 0.0
    %2412 = vmatpush1.msra.mxu0 0.0
    %2413 = vmatprep.subr.mxu0 0.0
    %2414 = vmatpush1.msra.mxu0 0.0
    %2415 = vmatprep.subr.mxu0 0.0
    %2416 = vmatpush1.msra.mxu0 0.0
    %2417 = vmatprep.subr.mxu0 0.0
    %2418 = vmatpush1.msra.mxu0 0.0
    %2419 = vmatprep.subr.mxu0 0.0
    %2420 = vmatpush1.msra.mxu0 0.0
    %2421 = vmatprep.subr.mxu0 0.0
    %2422 = vmatpush1.msra.mxu0 0.0
    %2423 = vmatprep.subr.mxu0 0.0
    %2424 = vmatpush1.msra.mxu0 0.0
    %2425 = vmatprep.subr.mxu0 0.0
    %2426 = vmatpush1.msra.mxu0 0.0
    %2427 = vmatprep.subr.mxu0 0.0
    %2428 = vmatpush1.msra.mxu0 0.0
    %2429 = vmatprep.subr.mxu0 0.0
    %2430 = vmatpush1.msra.mxu0 0.0
    %2431 = vmatprep.subr.mxu0 0.0
    %2432 = vmatpush1.msra.mxu0 0.0
    %2433 = vmatprep.subr.mxu0 0.0
    %2434 = vmatpush1.msra.mxu0 0.0
    %2435 = vmatprep.subr.mxu0 0.0
    %2436 = vmatpush1.msra.mxu0 0.0
    %2437 = vmatprep.mubr.f32.mxu0 0.0
    %2438 = vmatmul.mubr.f32.gmra.mrb[0].mxu0 %v1239
    %v2439 = vpop.f32.mrb[0].mxu0
    %v2440 = vadd.f32 0.0, %v2439
    %v2441 = vpop.f32.mrb[0].mxu0
    %2442 = vdwg.mxu0
    %v2444 = vsel %vm94, %v2440, 0
    %2446 = vmatprep.subr.mxu0 0.0
    %2447 = vmatpush1.xpose.msra.mxu0 %v2444
    %2448 = vmatprep.subr.mxu0 0.0
    %2449 = vmatpush1.xpose.msra.mxu0 0.0
    %2450 = vmatprep.subr.mxu0 0.0
    %2451 = vmatpush1.xpose.msra.mxu0 0.0
    %2452 = vmatprep.subr.mxu0 0.0
    %2453 = vmatpush1.xpose.msra.mxu0 0.0
    %2454 = vmatprep.subr.mxu0 0.0
    %2455 = vmatpush1.xpose.msra.mxu0 0.0
    %2456 = vmatprep.subr.mxu0 0.0
    %2457 = vmatpush1.xpose.msra.mxu0 0.0
    %2458 = vmatprep.subr.mxu0 0.0
    %2459 = vmatpush1.xpose.msra.mxu0 0.0
    %2460 = vmatprep.subr.mxu0 0.0
    %2461 = vmatpush1.xpose.msra.mxu0 0.0
    %2462 = vmatprep.subr.mxu0 0.0
    %2463 = vmatpush1.xpose.msra.mxu0 0.0
    %2464 = vmatprep.subr.mxu0 0.0
    %2465 = vmatpush1.xpose.msra.mxu0 0.0
    %2466 = vmatprep.subr.mxu0 0.0
    %2467 = vmatpush1.xpose.msra.mxu0 0.0
    %2468 = vmatprep.subr.mxu0 0.0
    %2469 = vmatpush1.xpose.msra.mxu0 0.0
    %2470 = vmatprep.subr.mxu0 0.0
    %2471 = vmatpush1.xpose.msra.mxu0 0.0
    %2472 = vmatprep.subr.mxu0 0.0
    %2473 = vmatpush1.xpose.msra.mxu0 0.0
    %2474 = vmatprep.subr.mxu0 0.0
    %2475 = vmatpush1.xpose.msra.mxu0 0.0
    %2476 = vmatprep.subr.mxu0 0.0
    %2477 = vmatpush1.xpose.msra.mxu0 0.0
    %2478 = vmatprep.subr.mxu0 0.0
    %2479 = vmatpush1.xpose.msra.mxu0 0.0
    %2480 = vmatprep.subr.mxu0 0.0
    %2481 = vmatpush1.xpose.msra.mxu0 0.0
    %2482 = vmatprep.subr.mxu0 0.0
    %2483 = vmatpush1.xpose.msra.mxu0 0.0
    %2484 = vmatprep.subr.mxu0 0.0
    %2485 = vmatpush1.xpose.msra.mxu0 0.0
    %2486 = vmatprep.subr.mxu0 0.0
    %2487 = vmatpush1.xpose.msra.mxu0 0.0
    %2488 = vmatprep.subr.mxu0 0.0
    %2489 = vmatpush1.xpose.msra.mxu0 0.0
    %2490 = vmatprep.subr.mxu0 0.0
    %2491 = vmatpush1.xpose.msra.mxu0 0.0
    %2492 = vmatprep.subr.mxu0 0.0
    %2493 = vmatpush1.xpose.msra.mxu0 0.0
    %2494 = vmatprep.subr.mxu0 0.0
    %2495 = vmatpush1.xpose.msra.mxu0 0.0
    %2496 = vmatprep.subr.mxu0 0.0
    %2497 = vmatpush1.xpose.msra.mxu0 0.0
    %2498 = vmatprep.subr.mxu0 0.0
    %2499 = vmatpush1.xpose.msra.mxu0 0.0
    %2500 = vmatprep.subr.mxu0 0.0
    %2501 = vmatpush1.xpose.msra.mxu0 0.0
    %2502 = vmatprep.subr.mxu0 0.0
    %2503 = vmatpush1.xpose.msra.mxu0 0.0
    %2504 = vmatprep.subr.mxu0 0.0
    %2505 = vmatpush1.xpose.msra.mxu0 0.0
    %2506 = vmatprep.subr.mxu0 0.0
    %2507 = vmatpush1.xpose.msra.mxu0 0.0
    %2508 = vmatprep.subr.mxu0 0.0
    %2509 = vmatpush1.xpose.msra.mxu0 0.0
    %2510 = vmatprep.mubr.f32.mxu0 0.0
    %2511 = vmatmul.mubr.f32.gmra.mrb[0].mxu0 %v2444
    %v2512 = vpop.f32.mrb[0].mxu0
    %v2513 = vadd.f32 0.0, %v2512
    %v2514 = vpop.f32.mrb[0].mxu0
    %2515 = vdwg.mxu0
    %v2516 = vsub.f32 0.0, %v2513
    %v2517 = vmul.f32 %v2516, 1.442695
    %v2518 = vpow.pop %v2517
    %v2519 = vadd.f32 %v2518, 1.0
    %v2520 = vrcp.pop %v2519
    %v2521 = vld [vmem:[%s14] sm:$0xff]
    %v2522 = vld [vmem:[%s14 + $0x8] sm:$0xff]
    %v2523 = vld [vmem:[%s14 + $0x10] sm:$0xff]
    %v2524 = vld [vmem:[%s14 + $0x18] sm:$0xff]
    %2525 = vmatprep.subr.mxu0 0.0
    %2526 = vmatpush1.msra.mxu0 %v2521
    %2527 = vmatprep.subr.mxu0 0.0
    %2528 = vmatpush1.msra.mxu0 %v2522
    %2529 = vmatprep.subr.mxu0 0.0
    %2530 = vmatpush1.msra.mxu0 %v2523
    %2531 = vmatprep.subr.mxu0 0.0
    %2532 = vmatpush1.msra.mxu0 %v2524
    %2533 = vmatprep.subr.mxu0 0.0
    %2534 = vmatpush1.msra.mxu0 0.0
    %2535 = vmatprep.subr.mxu0 0.0
    %2536 = vmatpush1.msra.mxu0 0.0
    %2537 = vmatprep.subr.mxu0 0.0
    %2538 = vmatpush1.msra.mxu0 0.0
    %2539 = vmatprep.subr.mxu0 0.0
    %2540 = vmatpush1.msra.mxu0 0.0
    %2541 = vmatprep.subr.mxu0 0.0
    %2542 = vmatpush1.msra.mxu0 0.0
    %2543 = vmatprep.subr.mxu0 0.0
    %2544 = vmatpush1.msra.mxu0 0.0
    %2545 = vmatprep.subr.mxu0 0.0
    %2546 = vmatpush1.msra.mxu0 0.0
    %2547 = vmatprep.subr.mxu0 0.0
    %2548 = vmatpush1.msra.mxu0 0.0
    %2549 = vmatprep.subr.mxu0 0.0
    %2550 = vmatpush1.msra.mxu0 0.0
    %2551 = vmatprep.subr.mxu0 0.0
    %2552 = vmatpush1.msra.mxu0 0.0
    %2553 = vmatprep.subr.mxu0 0.0
    %2554 = vmatpush1.msra.mxu0 0.0
    %2555 = vmatprep.subr.mxu0 0.0
    %2556 = vmatpush1.msra.mxu0 0.0
    %2557 = vmatprep.subr.mxu0 0.0
    %2558 = vmatpush1.msra.mxu0 0.0
    %2559 = vmatprep.subr.mxu0 0.0
    %2560 = vmatpush1.msra.mxu0 0.0
    %2561 = vmatprep.subr.mxu0 0.0
    %2562 = vmatpush1.msra.mxu0 0.0
    %2563 = vmatprep.subr.mxu0 0.0
    %2564 = vmatpush1.msra.mxu0 0.0
    %2565 = vmatprep.subr.mxu0 0.0
    %2566 = vmatpush1.msra.mxu0 0.0
    %2567 = vmatprep.subr.mxu0 0.0
    %2568 = vmatpush1.msra.mxu0 0.0
    %2569 = vmatprep.subr.mxu0 0.0
    %2570 = vmatpush1.msra.mxu0 0.0
    %2571 = vmatprep.subr.mxu0 0.0
    %2572 = vmatpush1.msra.mxu0 0.0
    %2573 = vmatprep.subr.mxu0 0.0
    %2574 = vmatpush1.msra.mxu0 0.0
    %2575 = vmatprep.subr.mxu0 0.0
    %2576 = vmatpush1.msra.mxu0 0.0
    %2577 = vmatprep.subr.mxu0 0.0
    %2578 = vmatpush1.msra.mxu0 0.0
    %2579 = vmatprep.subr.mxu0 0.0
    %2580 = vmatpush1.msra.mxu0 0.0
    %2581 = vmatprep.subr.mxu0 0.0
    %2582 = vmatpush1.msra.mxu0 0.0
    %2583 = vmatprep.subr.mxu0 0.0
    %2584 = vmatpush1.msra.mxu0 0.0
    %2585 = vmatprep.subr.mxu0 0.0
    %2586 = vmatpush1.msra.mxu0 0.0
    %2587 = vmatprep.subr.mxu0 0.0
    %2588 = vmatpush1.msra.mxu0 0.0
    %2589 = vmatprep.mubr.f32.mxu0 0.0
    %2590 = vmatmul.mubr.f32.gmra.mrb[0].mxu0 %v1922
    %v2591 = vpop.f32.mrb[0].mxu0
    %v2592 = vadd.f32 0.0, %v2591
    %v2593 = vpop.f32.mrb[0].mxu0
    %2594 = vmatprep.mubr.f32.mxu0 0.0
    %2595 = vmatmul.mubr.f32.gmra.mrb[0].mxu0 %v1925
    %v2596 = vpop.f32.mrb[0].mxu0
    %v2597 = vadd.f32 0.0, %v2596
    %v2598 = vpop.f32.mrb[0].mxu0
    %2599 = vdwg.mxu0
    %v2600 = vld [vmem:[%s12] sm:$0xff]
    %v2601 = vld [vmem:[%s12 + $0x8] sm:$0xff]
    %v2602 = vld [vmem:[%s12 + $0x10] sm:$0xff]
    %v2603 = vld [vmem:[%s12 + $0x18] sm:$0xff]
    %v2604 = vld [vmem:[%s13] sm:$0x1]
    %v2606 = vlaneseq
    %v2607 = vshrl.u32 %v2606, 7
    %v2608 = vsub.s32 0, %v2607
    %v2609 = vrot.slane %v2604, %v2608
    %2611 = vmatprep.subr.mxu0 0.0
    %2612 = vmatpush1.msra.mxu0 %v2600
    %2613 = vmatprep.subr.mxu0 0.0
    %2614 = vmatpush1.msra.mxu0 %v2601
    %2615 = vmatprep.subr.mxu0 0.0
    %2616 = vmatpush1.msra.mxu0 %v2602
    %2617 = vmatprep.subr.mxu0 0.0
    %2618 = vmatpush1.msra.mxu0 %v2603
    %2619 = vmatprep.subr.mxu0 0.0
    %2620 = vmatpush1.msra.mxu0 0.0
    %2621 = vmatprep.subr.mxu0 0.0
    %2622 = vmatpush1.msra.mxu0 0.0
    %2623 = vmatprep.subr.mxu0 0.0
    %2624 = vmatpush1.msra.mxu0 0.0
    %2625 = vmatprep.subr.mxu0 0.0
    %2626 = vmatpush1.msra.mxu0 0.0
    %2627 = vmatprep.subr.mxu0 0.0
    %2628 = vmatpush1.msra.mxu0 0.0
    %2629 = vmatprep.subr.mxu0 0.0
    %2630 = vmatpush1.msra.mxu0 0.0
    %2631 = vmatprep.subr.mxu0 0.0
    %2632 = vmatpush1.msra.mxu0 0.0
    %2633 = vmatprep.subr.mxu0 0.0
    %2634 = vmatpush1.msra.mxu0 0.0
    %2635 = vmatprep.subr.mxu0 0.0
    %2636 = vmatpush1.msra.mxu0 0.0
    %2637 = vmatprep.subr.mxu0 0.0
    %2638 = vmatpush1.msra.mxu0 0.0
    %2639 = vmatprep.subr.mxu0 0.0
    %2640 = vmatpush1.msra.mxu0 0.0
    %2641 = vmatprep.subr.mxu0 0.0
    %2642 = vmatpush1.msra.mxu0 0.0
    %2643 = vmatprep.subr.mxu0 0.0
    %2644 = vmatpush1.msra.mxu0 0.0
    %2645 = vmatprep.subr.mxu0 0.0
    %2646 = vmatpush1.msra.mxu0 0.0
    %2647 = vmatprep.subr.mxu0 0.0
    %2648 = vmatpush1.msra.mxu0 0.0
    %2649 = vmatprep.subr.mxu0 0.0
    %2650 = vmatpush1.msra.mxu0 0.0
    %2651 = vmatprep.subr.mxu0 0.0
    %2652 = vmatpush1.msra.mxu0 0.0
    %2653 = vmatprep.subr.mxu0 0.0
    %2654 = vmatpush1.msra.mxu0 0.0
    %2655 = vmatprep.subr.mxu0 0.0
    %2656 = vmatpush1.msra.mxu0 0.0
    %2657 = vmatprep.subr.mxu0 0.0
    %2658 = vmatpush1.msra.mxu0 0.0
    %2659 = vmatprep.subr.mxu0 0.0
    %2660 = vmatpush1.msra.mxu0 0.0
    %2661 = vmatprep.subr.mxu0 0.0
    %2662 = vmatpush1.msra.mxu0 0.0
    %2663 = vmatprep.subr.mxu0 0.0
    %2664 = vmatpush1.msra.mxu0 0.0
    %2665 = vmatprep.subr.mxu0 0.0
    %2666 = vmatpush1.msra.mxu0 0.0
    %2667 = vmatprep.subr.mxu0 0.0
    %2668 = vmatpush1.msra.mxu0 0.0
    %2669 = vmatprep.subr.mxu0 0.0
    %2670 = vmatpush1.msra.mxu0 0.0
    %2671 = vmatprep.subr.mxu0 0.0
    %2672 = vmatpush1.msra.mxu0 0.0
    %2673 = vmatprep.subr.mxu0 0.0
    %2674 = vmatpush1.msra.mxu0 0.0
    %2675 = vmatprep.mubr.f32.mxu0 0.0
    %2676 = vmatmul.mubr.f32.gmra.mrb[0].mxu0 %v1922
    %v2677 = vpop.f32.mrb[0].mxu0
    %v2678 = vadd.f32 %v2609, %v2677
    %v2679 = vpop.f32.mrb[0].mxu0
    %2680 = vmatprep.mubr.f32.mxu0 0.0
    %2681 = vmatmul.mubr.f32.gmra.mrb[0].mxu0 %v1925
    %v2682 = vpop.f32.mrb[0].mxu0
    %v2683 = vadd.f32 %v2609, %v2682
    %v2684 = vpop.f32.mrb[0].mxu0
    %2685 = vdwg.mxu0
    %v2687 = vsel %vm94, %v2592, 0
    %2689 = vmatprep.subr.mxu0 0.0
    %2690 = vmatpush1.xpose.msra.mxu0 %v2687
    %2691 = vmatprep.subr.mxu0 0.0
    %2692 = vmatpush1.xpose.msra.mxu0 0.0
    %2693 = vmatprep.subr.mxu0 0.0
    %2694 = vmatpush1.xpose.msra.mxu0 0.0
    %2695 = vmatprep.subr.mxu0 0.0
    %2696 = vmatpush1.xpose.msra.mxu0 0.0
    %2697 = vmatprep.subr.mxu0 0.0
    %2698 = vmatpush1.xpose.msra.mxu0 0.0
    %2699 = vmatprep.subr.mxu0 0.0
    %2700 = vmatpush1.xpose.msra.mxu0 0.0
    %2701 = vmatprep.subr.mxu0 0.0
    %2702 = vmatpush1.xpose.msra.mxu0 0.0
    %2703 = vmatprep.subr.mxu0 0.0
    %2704 = vmatpush1.xpose.msra.mxu0 0.0
    %2705 = vmatprep.subr.mxu0 0.0
    %2706 = vmatpush1.xpose.msra.mxu0 0.0
    %2707 = vmatprep.subr.mxu0 0.0
    %2708 = vmatpush1.xpose.msra.mxu0 0.0
    %2709 = vmatprep.subr.mxu0 0.0
    %2710 = vmatpush1.xpose.msra.mxu0 0.0
    %2711 = vmatprep.subr.mxu0 0.0
    %2712 = vmatpush1.xpose.msra.mxu0 0.0
    %2713 = vmatprep.subr.mxu0 0.0
    %2714 = vmatpush1.xpose.msra.mxu0 0.0
    %2715 = vmatprep.subr.mxu0 0.0
    %2716 = vmatpush1.xpose.msra.mxu0 0.0
    %2717 = vmatprep.subr.mxu0 0.0
    %2718 = vmatpush1.xpose.msra.mxu0 0.0
    %2719 = vmatprep.subr.mxu0 0.0
    %2720 = vmatpush1.xpose.msra.mxu0 0.0
    %2721 = vmatprep.subr.mxu0 0.0
    %2722 = vmatpush1.xpose.msra.mxu0 0.0
    %2723 = vmatprep.subr.mxu0 0.0
    %2724 = vmatpush1.xpose.msra.mxu0 0.0
    %2725 = vmatprep.subr.mxu0 0.0
    %2726 = vmatpush1.xpose.msra.mxu0 0.0
    %2727 = vmatprep.subr.mxu0 0.0
    %2728 = vmatpush1.xpose.msra.mxu0 0.0
    %2729 = vmatprep.subr.mxu0 0.0
    %2730 = vmatpush1.xpose.msra.mxu0 0.0
    %2731 = vmatprep.subr.mxu0 0.0
    %2732 = vmatpush1.xpose.msra.mxu0 0.0
    %2733 = vmatprep.subr.mxu0 0.0
    %2734 = vmatpush1.xpose.msra.mxu0 0.0
    %2735 = vmatprep.subr.mxu0 0.0
    %2736 = vmatpush1.xpose.msra.mxu0 0.0
    %2737 = vmatprep.subr.mxu0 0.0
    %2738 = vmatpush1.xpose.msra.mxu0 0.0
    %2739 = vmatprep.subr.mxu0 0.0
    %2740 = vmatpush1.xpose.msra.mxu0 0.0
    %2741 = vmatprep.subr.mxu0 0.0
    %2742 = vmatpush1.xpose.msra.mxu0 0.0
    %2743 = vmatprep.subr.mxu0 0.0
    %2744 = vmatpush1.xpose.msra.mxu0 0.0
    %2745 = vmatprep.subr.mxu0 0.0
    %2746 = vmatpush1.xpose.msra.mxu0 0.0
    %2747 = vmatprep.subr.mxu0 0.0
    %2748 = vmatpush1.xpose.msra.mxu0 0.0
    %2749 = vmatprep.subr.mxu0 0.0
    %2750 = vmatpush1.xpose.msra.mxu0 0.0
    %2751 = vmatprep.subr.mxu0 0.0
    %2752 = vmatpush1.xpose.msra.mxu0 0.0
    %2753 = vmatprep.mubr.f32.mxu0 0.0
    %2754 = vmatmul.mubr.f32.gmra.mrb[0].mxu0 %v2687
    %v2755 = vpop.f32.mrb[0].mxu0
    %v2756 = vadd.f32 0.0, %v2755
    %v2757 = vpop.f32.mrb[0].mxu0
    %2758 = vdwg.mxu0
    %v2759 = vmul.f32 %v2756, 0.17677669
    %vm2760 = vcmp.gt.f32.partialorder %v2759, 0.0
    %v2761 = vmul.f32 %v2759, 0.1
    %v2762 = vsel %vm2760, %v2759, %v2761
    %vm2763 = vcmp.gt.f32.partialorder %v2372, 0.0
    %v2764 = vsel %vm2763, %v2762, -1e+09
    %v2765 = vsel %vm1161, %v2764, -inf
    %2766 = vmax.xlane.f32.xlu0 %v2765
    %v2767 = vpop.xlane.xlu0 %2766
    %v2768 = vsub.f32 %v2764, %v2767
    %v2769 = vmul.f32 %v2768, 1.442695
    %v2770 = vpow.pop %v2769
    %v2771 = vsel %vm1161, %v2770, 0.0
    %2772 = vadd.xlane.f32.xlu0 %v2771
    %v2773 = vpop.xlane.xlu0 %2772
    %v2774 = vrcp.pop %v2773
    %v2775 = vmul.f32 %v2770, %v2774
    %v2777 = vsel %vm1161, %v2775, 0
    %2779 = vmatprep.subr.mxu0 0.0
    %2780 = vmatpush1.msra.mxu0 %v2678
    %2781 = vmatprep.subr.mxu0 0.0
    %2782 = vmatpush1.msra.mxu0 0.0
    %2783 = vmatprep.subr.mxu0 0.0
    %2784 = vmatpush1.msra.mxu0 0.0
    %2785 = vmatprep.subr.mxu0 0.0
    %2786 = vmatpush1.msra.mxu0 0.0
    %2787 = vmatprep.subr.mxu0 0.0
    %2788 = vmatpush1.msra.mxu0 0.0
    %2789 = vmatprep.subr.mxu0 0.0
    %2790 = vmatpush1.msra.mxu0 0.0
    %2791 = vmatprep.subr.mxu0 0.0
    %2792 = vmatpush1.msra.mxu0 0.0
    %2793 = vmatprep.subr.mxu0 0.0
    %2794 = vmatpush1.msra.mxu0 0.0
    %2795 = vmatprep.subr.mxu0 0.0
    %2796 = vmatpush1.msra.mxu0 0.0
    %2797 = vmatprep.subr.mxu0 0.0
    %2798 = vmatpush1.msra.mxu0 0.0
    %2799 = vmatprep.subr.mxu0 0.0
    %2800 = vmatpush1.msra.mxu0 0.0
    %2801 = vmatprep.subr.mxu0 0.0
    %2802 = vmatpush1.msra.mxu0 0.0
    %2803 = vmatprep.subr.mxu0 0.0
    %2804 = vmatpush1.msra.mxu0 0.0
    %2805 = vmatprep.subr.mxu0 0.0
    %2806 = vmatpush1.msra.mxu0 0.0
    %2807 = vmatprep.subr.mxu0 0.0
    %2808 = vmatpush1.msra.mxu0 0.0
    %2809 = vmatprep.subr.mxu0 0.0
    %2810 = vmatpush1.msra.mxu0 0.0
    %2811 = vmatprep.subr.mxu0 0.0
    %2812 = vmatpush1.msra.mxu0 0.0
    %2813 = vmatprep.subr.mxu0 0.0
    %2814 = vmatpush1.msra.mxu0 0.0
    %2815 = vmatprep.subr.mxu0 0.0
    %2816 = vmatpush1.msra.mxu0 0.0
    %2817 = vmatprep.subr.mxu0 0.0
    %2818 = vmatpush1.msra.mxu0 0.0
    %2819 = vmatprep.subr.mxu0 0.0
    %2820 = vmatpush1.msra.mxu0 0.0
    %2821 = vmatprep.subr.mxu0 0.0
    %2822 = vmatpush1.msra.mxu0 0.0
    %2823 = vmatprep.subr.mxu0 0.0
    %2824 = vmatpush1.msra.mxu0 0.0
    %2825 = vmatprep.subr.mxu0 0.0
    %2826 = vmatpush1.msra.mxu0 0.0
    %2827 = vmatprep.subr.mxu0 0.0
    %2828 = vmatpush1.msra.mxu0 0.0
    %2829 = vmatprep.subr.mxu0 0.0
    %2830 = vmatpush1.msra.mxu0 0.0
    %2831 = vmatprep.subr.mxu0 0.0
    %2832 = vmatpush1.msra.mxu0 0.0
    %2833 = vmatprep.subr.mxu0 0.0
    %2834 = vmatpush1.msra.mxu0 0.0
    %2835 = vmatprep.subr.mxu0 0.0
    %2836 = vmatpush1.msra.mxu0 0.0
    %2837 = vmatprep.subr.mxu0 0.0
    %2838 = vmatpush1.msra.mxu0 0.0
    %2839 = vmatprep.subr.mxu0 0.0
    %2840 = vmatpush1.msra.mxu0 0.0
    %2841 = vmatprep.subr.mxu0 0.0
    %2842 = vmatpush1.msra.mxu0 0.0
    %2843 = vmatprep.mubr.f32.mxu0 0.0
    %2844 = vmatmul.mubr.f32.gmra.mrb[0].mxu0 %v2777
    %v2845 = vpop.f32.mrb[0].mxu0
    %v2846 = vadd.f32 0.0, %v2845
    %v2847 = vpop.f32.mrb[0].mxu0
    %2848 = vdwg.mxu0
    %v2849 = vld [vmem:[%s15] sm:$0xff]
    %v2850 = vld [vmem:[%s15 + $0x8] sm:$0xff]
    %v2851 = vld [vmem:[%s15 + $0x10] sm:$0xff]
    %v2852 = vld [vmem:[%s15 + $0x18] sm:$0xff]
    %v2854 = vsel %vm94, %v2846, 0
    %2856 = vmatprep.subr.mxu0 0.0
    %2857 = vmatpush1.msra.mxu0 %v2849
    %2858 = vmatprep.subr.mxu0 0.0
    %2859 = vmatpush1.msra.mxu0 %v2850
    %2860 = vmatprep.subr.mxu0 0.0
    %2861 = vmatpush1.msra.mxu0 %v2851
    %2862 = vmatprep.subr.mxu0 0.0
    %2863 = vmatpush1.msra.mxu0 %v2852
    %2864 = vmatprep.subr.mxu0 0.0
    %2865 = vmatpush1.msra.mxu0 0.0
    %2866 = vmatprep.subr.mxu0 0.0
    %2867 = vmatpush1.msra.mxu0 0.0
    %2868 = vmatprep.subr.mxu0 0.0
    %2869 = vmatpush1.msra.mxu0 0.0
    %2870 = vmatprep.subr.mxu0 0.0
    %2871 = vmatpush1.msra.mxu0 0.0
    %2872 = vmatprep.subr.mxu0 0.0
    %2873 = vmatpush1.msra.mxu0 0.0
    %2874 = vmatprep.subr.mxu0 0.0
    %2875 = vmatpush1.msra.mxu0 0.0
    %2876 = vmatprep.subr.mxu0 0.0
    %2877 = vmatpush1.msra.mxu0 0.0
    %2878 = vmatprep.subr.mxu0 0.0
    %2879 = vmatpush1.msra.mxu0 0.0
    %2880 = vmatprep.subr.mxu0 0.0
    %2881 = vmatpush1.msra.mxu0 0.0
    %2882 = vmatprep.subr.mxu0 0.0
    %2883 = vmatpush1.msra.mxu0 0.0
    %2884 = vmatprep.subr.mxu0 0.0
    %2885 = vmatpush1.msra.mxu0 0.0
    %2886 = vmatprep.subr.mxu0 0.0
    %2887 = vmatpush1.msra.mxu0 0.0
    %2888 = vmatprep.subr.mxu0 0.0
    %2889 = vmatpush1.msra.mxu0 0.0
    %2890 = vmatprep.subr.mxu0 0.0
    %2891 = vmatpush1.msra.mxu0 0.0
    %2892 = vmatprep.subr.mxu0 0.0
    %2893 = vmatpush1.msra.mxu0 0.0
    %2894 = vmatprep.subr.mxu0 0.0
    %2895 = vmatpush1.msra.mxu0 0.0
    %2896 = vmatprep.subr.mxu0 0.0
    %2897 = vmatpush1.msra.mxu0 0.0
    %2898 = vmatprep.subr.mxu0 0.0
    %2899 = vmatpush1.msra.mxu0 0.0
    %2900 = vmatprep.subr.mxu0 0.0
    %2901 = vmatpush1.msra.mxu0 0.0
    %2902 = vmatprep.subr.mxu0 0.0
    %2903 = vmatpush1.msra.mxu0 0.0
    %2904 = vmatprep.subr.mxu0 0.0
    %2905 = vmatpush1.msra.mxu0 0.0
    %2906 = vmatprep.subr.mxu0 0.0
    %2907 = vmatpush1.msra.mxu0 0.0
    %2908 = vmatprep.subr.mxu0 0.0
    %2909 = vmatpush1.msra.mxu0 0.0
    %2910 = vmatprep.subr.mxu0 0.0
    %2911 = vmatpush1.msra.mxu0 0.0
    %2912 = vmatprep.subr.mxu0 0.0
    %2913 = vmatpush1.msra.mxu0 0.0
    %2914 = vmatprep.subr.mxu0 0.0
    %2915 = vmatpush1.msra.mxu0 0.0
    %2916 = vmatprep.subr.mxu0 0.0
    %2917 = vmatpush1.msra.mxu0 0.0
    %2918 = vmatprep.subr.mxu0 0.0
    %2919 = vmatpush1.msra.mxu0 0.0
    %2920 = vmatprep.mubr.f32.mxu0 0.0
    %2921 = vmatmul.mubr.f32.gmra.mrb[0].mxu0 %v2854
    %v2922 = vpop.f32.mrb[0].mxu0
    %v2923 = vadd.f32 0.0, %v2922
    %v2924 = vpop.f32.mrb[0].mxu0
    %2925 = vdwg.mxu0
    %v2927 = vsel %vm94, %v2923, 0
    %2929 = vmatprep.subr.mxu0 0.0
    %2930 = vmatpush1.xpose.msra.mxu0 %v2927
    %2931 = vmatprep.subr.mxu0 0.0
    %2932 = vmatpush1.xpose.msra.mxu0 0.0
    %2933 = vmatprep.subr.mxu0 0.0
    %2934 = vmatpush1.xpose.msra.mxu0 0.0
    %2935 = vmatprep.subr.mxu0 0.0
    %2936 = vmatpush1.xpose.msra.mxu0 0.0
    %2937 = vmatprep.subr.mxu0 0.0
    %2938 = vmatpush1.xpose.msra.mxu0 0.0
    %2939 = vmatprep.subr.mxu0 0.0
    %2940 = vmatpush1.xpose.msra.mxu0 0.0
    %2941 = vmatprep.subr.mxu0 0.0
    %2942 = vmatpush1.xpose.msra.mxu0 0.0
    %2943 = vmatprep.subr.mxu0 0.0
    %2944 = vmatpush1.xpose.msra.mxu0 0.0
    %2945 = vmatprep.subr.mxu0 0.0
    %2946 = vmatpush1.xpose.msra.mxu0 0.0
    %2947 = vmatprep.subr.mxu0 0.0
    %2948 = vmatpush1.xpose.msra.mxu0 0.0
    %2949 = vmatprep.subr.mxu0 0.0
    %2950 = vmatpush1.xpose.msra.mxu0 0.0
    %2951 = vmatprep.subr.mxu0 0.0
    %2952 = vmatpush1.xpose.msra.mxu0 0.0
    %2953 = vmatprep.subr.mxu0 0.0
    %2954 = vmatpush1.xpose.msra.mxu0 0.0
    %2955 = vmatprep.subr.mxu0 0.0
    %2956 = vmatpush1.xpose.msra.mxu0 0.0
    %2957 = vmatprep.subr.mxu0 0.0
    %2958 = vmatpush1.xpose.msra.mxu0 0.0
    %2959 = vmatprep.subr.mxu0 0.0
    %2960 = vmatpush1.xpose.msra.mxu0 0.0
    %2961 = vmatprep.subr.mxu0 0.0
    %2962 = vmatpush1.xpose.msra.mxu0 0.0
    %2963 = vmatprep.subr.mxu0 0.0
    %2964 = vmatpush1.xpose.msra.mxu0 0.0
    %2965 = vmatprep.subr.mxu0 0.0
    %2966 = vmatpush1.xpose.msra.mxu0 0.0
    %2967 = vmatprep.subr.mxu0 0.0
    %2968 = vmatpush1.xpose.msra.mxu0 0.0
    %2969 = vmatprep.subr.mxu0 0.0
    %2970 = vmatpush1.xpose.msra.mxu0 0.0
    %2971 = vmatprep.subr.mxu0 0.0
    %2972 = vmatpush1.xpose.msra.mxu0 0.0
    %2973 = vmatprep.subr.mxu0 0.0
    %2974 = vmatpush1.xpose.msra.mxu0 0.0
    %2975 = vmatprep.subr.mxu0 0.0
    %2976 = vmatpush1.xpose.msra.mxu0 0.0
    %2977 = vmatprep.subr.mxu0 0.0
    %2978 = vmatpush1.xpose.msra.mxu0 0.0
    %2979 = vmatprep.subr.mxu0 0.0
    %2980 = vmatpush1.xpose.msra.mxu0 0.0
    %2981 = vmatprep.subr.mxu0 0.0
    %2982 = vmatpush1.xpose.msra.mxu0 0.0
    %2983 = vmatprep.subr.mxu0 0.0
    %2984 = vmatpush1.xpose.msra.mxu0 0.0
    %2985 = vmatprep.subr.mxu0 0.0
    %2986 = vmatpush1.xpose.msra.mxu0 0.0
    %2987 = vmatprep.subr.mxu0 0.0
    %2988 = vmatpush1.xpose.msra.mxu0 0.0
    %2989 = vmatprep.subr.mxu0 0.0
    %2990 = vmatpush1.xpose.msra.mxu0 0.0
    %2991 = vmatprep.subr.mxu0 0.0
    %2992 = vmatpush1.xpose.msra.mxu0 0.0
    %2993 = vmatprep.mubr.f32.mxu0 0.0
    %2994 = vmatmul.mubr.f32.gmra.mrb[0].mxu0 %v2687
    %v2995 = vpop.f32.mrb[0].mxu0
    %v2996 = vadd.f32 0.0, %v2995
    %v2997 = vpop.f32.mrb[0].mxu0
    %2998 = vdwg.mxu0
    %v2999 = vmul.f32 %v2996, 0.17677669
    %vm3000 = vcmp.gt.f32.partialorder %v2999, 0.0
    %v3001 = vmul.f32 %v2999, 0.1
    %v3002 = vsel %vm3000, %v2999, %v3001
    %v3003 = vsel %vm2763, %v3002, -1e+09
    %v3004 = vsel %vm1161, %v3003, -inf
    %3005 = vmax.xlane.f32.xlu0 %v3004
    %v3006 = vpop.xlane.xlu0 %3005
    %v3007 = vsub.f32 %v3003, %v3006
    %v3008 = vmul.f32 %v3007, 1.442695
    %v3009 = vpow.pop %v3008
    %v3010 = vsel %vm1161, %v3009, 0.0
    %3011 = vadd.xlane.f32.xlu0 %v3010
    %v3012 = vpop.xlane.xlu0 %3011
    %v3013 = vrcp.pop %v3012
    %v3014 = vmul.f32 %v3009, %v3013
    %v3016 = vsel %vm1161, %v3014, 0
    %3018 = vmatprep.subr.mxu0 0.0
    %3019 = vmatpush1.msra.mxu0 %v2846
    %3020 = vmatprep.subr.mxu0 0.0
    %3021 = vmatpush1.msra.mxu0 0.0
    %3022 = vmatprep.subr.mxu0 0.0
    %3023 = vmatpush1.msra.mxu0 0.0
    %3024 = vmatprep.subr.mxu0 0.0
    %3025 = vmatpush1.msra.mxu0 0.0
    %3026 = vmatprep.subr.mxu0 0.0
    %3027 = vmatpush1.msra.mxu0 0.0
    %3028 = vmatprep.subr.mxu0 0.0
    %3029 = vmatpush1.msra.mxu0 0.0
    %3030 = vmatprep.subr.mxu0 0.0
    %3031 = vmatpush1.msra.mxu0 0.0
    %3032 = vmatprep.subr.mxu0 0.0
    %3033 = vmatpush1.msra.mxu0 0.0
    %3034 = vmatprep.subr.mxu0 0.0
    %3035 = vmatpush1.msra.mxu0 0.0
    %3036 = vmatprep.subr.mxu0 0.0
    %3037 = vmatpush1.msra.mxu0 0.0
    %3038 = vmatprep.subr.mxu0 0.0
    %3039 = vmatpush1.msra.mxu0 0.0
    %3040 = vmatprep.subr.mxu0 0.0
    %3041 = vmatpush1.msra.mxu0 0.0
    %3042 = vmatprep.subr.mxu0 0.0
    %3043 = vmatpush1.msra.mxu0 0.0
    %3044 = vmatprep.subr.mxu0 0.0
    %3045 = vmatpush1.msra.mxu0 0.0
    %3046 = vmatprep.subr.mxu0 0.0
    %3047 = vmatpush1.msra.mxu0 0.0
    %3048 = vmatprep.subr.mxu0 0.0
    %3049 = vmatpush1.msra.mxu0 0.0
    %3050 = vmatprep.subr.mxu0 0.0
    %3051 = vmatpush1.msra.mxu0 0.0
    %3052 = vmatprep.subr.mxu0 0.0
    %3053 = vmatpush1.msra.mxu0 0.0
    %3054 = vmatprep.subr.mxu0 0.0
    %3055 = vmatpush1.msra.mxu0 0.0
    %3056 = vmatprep.subr.mxu0 0.0
    %3057 = vmatpush1.msra.mxu0 0.0
    %3058 = vmatprep.subr.mxu0 0.0
    %3059 = vmatpush1.msra.mxu0 0.0
    %3060 = vmatprep.subr.mxu0 0.0
    %3061 = vmatpush1.msra.mxu0 0.0
    %3062 = vmatprep.subr.mxu0 0.0
    %3063 = vmatpush1.msra.mxu0 0.0
    %3064 = vmatprep.subr.mxu0 0.0
    %3065 = vmatpush1.msra.mxu0 0.0
    %3066 = vmatprep.subr.mxu0 0.0
    %3067 = vmatpush1.msra.mxu0 0.0
    %3068 = vmatprep.subr.mxu0 0.0
    %3069 = vmatpush1.msra.mxu0 0.0
    %3070 = vmatprep.subr.mxu0 0.0
    %3071 = vmatpush1.msra.mxu0 0.0
    %3072 = vmatprep.subr.mxu0 0.0
    %3073 = vmatpush1.msra.mxu0 0.0
    %3074 = vmatprep.subr.mxu0 0.0
    %3075 = vmatpush1.msra.mxu0 0.0
    %3076 = vmatprep.subr.mxu0 0.0
    %3077 = vmatpush1.msra.mxu0 0.0
    %3078 = vmatprep.subr.mxu0 0.0
    %3079 = vmatpush1.msra.mxu0 0.0
    %3080 = vmatprep.subr.mxu0 0.0
    %3081 = vmatpush1.msra.mxu0 0.0
    %3082 = vmatprep.mubr.f32.mxu0 0.0
    %3083 = vmatmul.mubr.f32.gmra.mrb[0].mxu0 %v3016
    %v3084 = vpop.f32.mrb[0].mxu0
    %v3085 = vadd.f32 0.0, %v3084
    %v3086 = vpop.f32.mrb[0].mxu0
    %3087 = vdwg.mxu0
    %vm3088 = vcmp.gt.f32.partialorder %v3085, 0.0
    %v3089 = vmin.f32 %v3085, 0.0
    %v3090 = vmul.f32 %v3089, 1.442695
    %v3091 = vpow.pop %v3090
    %v3092 = vsub.f32 %v3091, 1.0
    %v3093 = vsel %vm3088, %v3085, %v3092
    %v3095 = vsel %vm94, %v2597, 0
    %3097 = vmatprep.subr.mxu0 0.0
    %3098 = vmatpush1.xpose.msra.mxu0 %v3095
    %3099 = vmatprep.subr.mxu0 0.0
    %3100 = vmatpush1.xpose.msra.mxu0 0.0
    %3101 = vmatprep.subr.mxu0 0.0
    %3102 = vmatpush1.xpose.msra.mxu0 0.0
    %3103 = vmatprep.subr.mxu0 0.0
    %3104 = vmatpush1.xpose.msra.mxu0 0.0
    %3105 = vmatprep.subr.mxu0 0.0
    %3106 = vmatpush1.xpose.msra.mxu0 0.0
    %3107 = vmatprep.subr.mxu0 0.0
    %3108 = vmatpush1.xpose.msra.mxu0 0.0
    %3109 = vmatprep.subr.mxu0 0.0
    %3110 = vmatpush1.xpose.msra.mxu0 0.0
    %3111 = vmatprep.subr.mxu0 0.0
    %3112 = vmatpush1.xpose.msra.mxu0 0.0
    %3113 = vmatprep.subr.mxu0 0.0
    %3114 = vmatpush1.xpose.msra.mxu0 0.0
    %3115 = vmatprep.subr.mxu0 0.0
    %3116 = vmatpush1.xpose.msra.mxu0 0.0
    %3117 = vmatprep.subr.mxu0 0.0
    %3118 = vmatpush1.xpose.msra.mxu0 0.0
    %3119 = vmatprep.subr.mxu0 0.0
    %3120 = vmatpush1.xpose.msra.mxu0 0.0
    %3121 = vmatprep.subr.mxu0 0.0
    %3122 = vmatpush1.xpose.msra.mxu0 0.0
    %3123 = vmatprep.subr.mxu0 0.0
    %3124 = vmatpush1.xpose.msra.mxu0 0.0
    %3125 = vmatprep.subr.mxu0 0.0
    %3126 = vmatpush1.xpose.msra.mxu0 0.0
    %3127 = vmatprep.subr.mxu0 0.0
    %3128 = vmatpush1.xpose.msra.mxu0 0.0
    %3129 = vmatprep.subr.mxu0 0.0
    %3130 = vmatpush1.xpose.msra.mxu0 0.0
    %3131 = vmatprep.subr.mxu0 0.0
    %3132 = vmatpush1.xpose.msra.mxu0 0.0
    %3133 = vmatprep.subr.mxu0 0.0
    %3134 = vmatpush1.xpose.msra.mxu0 0.0
    %3135 = vmatprep.subr.mxu0 0.0
    %3136 = vmatpush1.xpose.msra.mxu0 0.0
    %3137 = vmatprep.subr.mxu0 0.0
    %3138 = vmatpush1.xpose.msra.mxu0 0.0
    %3139 = vmatprep.subr.mxu0 0.0
    %3140 = vmatpush1.xpose.msra.mxu0 0.0
    %3141 = vmatprep.subr.mxu0 0.0
    %3142 = vmatpush1.xpose.msra.mxu0 0.0
    %3143 = vmatprep.subr.mxu0 0.0
    %3144 = vmatpush1.xpose.msra.mxu0 0.0
    %3145 = vmatprep.subr.mxu0 0.0
    %3146 = vmatpush1.xpose.msra.mxu0 0.0
    %3147 = vmatprep.subr.mxu0 0.0
    %3148 = vmatpush1.xpose.msra.mxu0 0.0
    %3149 = vmatprep.subr.mxu0 0.0
    %3150 = vmatpush1.xpose.msra.mxu0 0.0
    %3151 = vmatprep.subr.mxu0 0.0
    %3152 = vmatpush1.xpose.msra.mxu0 0.0
    %3153 = vmatprep.subr.mxu0 0.0
    %3154 = vmatpush1.xpose.msra.mxu0 0.0
    %3155 = vmatprep.subr.mxu0 0.0
    %3156 = vmatpush1.xpose.msra.mxu0 0.0
    %3157 = vmatprep.subr.mxu0 0.0
    %3158 = vmatpush1.xpose.msra.mxu0 0.0
    %3159 = vmatprep.subr.mxu0 0.0
    %3160 = vmatpush1.xpose.msra.mxu0 0.0
    %3161 = vmatprep.mubr.f32.mxu0 0.0
    %3162 = vmatmul.mubr.f32.gmra.mrb[0].mxu0 %v3095
    %v3163 = vpop.f32.mrb[0].mxu0
    %v3164 = vadd.f32 0.0, %v3163
    %v3165 = vpop.f32.mrb[0].mxu0
    %3166 = vdwg.mxu0
    %v3167 = vmul.f32 %v3164, 0.17677669
    %vm3168 = vcmp.gt.f32.partialorder %v3167, 0.0
    %v3169 = vmul.f32 %v3167, 0.1
    %v3170 = vsel %vm3168, %v3167, %v3169
    %vm3171 = vcmp.gt.f32.partialorder %v2520, 0.0
    %v3172 = vsel %vm3171, %v3170, -1e+09
    %v3173 = vsel %vm1161, %v3172, -inf
    %3174 = vmax.xlane.f32.xlu0 %v3173
    %v3175 = vpop.xlane.xlu0 %3174
    %v3176 = vsub.f32 %v3172, %v3175
    %v3177 = vmul.f32 %v3176, 1.442695
    %v3178 = vpow.pop %v3177
    %v3179 = vsel %vm1161, %v3178, 0.0
    %3180 = vadd.xlane.f32.xlu0 %v3179
    %v3181 = vpop.xlane.xlu0 %3180
    %v3182 = vrcp.pop %v3181
    %v3183 = vmul.f32 %v3178, %v3182
    %v3185 = vsel %vm1161, %v3183, 0
    %3187 = vmatprep.subr.mxu0 0.0
    %3188 = vmatpush1.msra.mxu0 %v2683
    %3189 = vmatprep.subr.mxu0 0.0
    %3190 = vmatpush1.msra.mxu0 0.0
    %3191 = vmatprep.subr.mxu0 0.0
    %3192 = vmatpush1.msra.mxu0 0.0
    %3193 = vmatprep.subr.mxu0 0.0
    %3194 = vmatpush1.msra.mxu0 0.0
    %3195 = vmatprep.subr.mxu0 0.0
    %3196 = vmatpush1.msra.mxu0 0.0
    %3197 = vmatprep.subr.mxu0 0.0
    %3198 = vmatpush1.msra.mxu0 0.0
    %3199 = vmatprep.subr.mxu0 0.0
    %3200 = vmatpush1.msra.mxu0 0.0
    %3201 = vmatprep.subr.mxu0 0.0
    %3202 = vmatpush1.msra.mxu0 0.0
    %3203 = vmatprep.subr.mxu0 0.0
    %3204 = vmatpush1.msra.mxu0 0.0
    %3205 = vmatprep.subr.mxu0 0.0
    %3206 = vmatpush1.msra.mxu0 0.0
    %3207 = vmatprep.subr.mxu0 0.0
    %3208 = vmatpush1.msra.mxu0 0.0
    %3209 = vmatprep.subr.mxu0 0.0
    %3210 = vmatpush1.msra.mxu0 0.0
    %3211 = vmatprep.subr.mxu0 0.0
    %3212 = vmatpush1.msra.mxu0 0.0
    %3213 = vmatprep.subr.mxu0 0.0
    %3214 = vmatpush1.msra.mxu0 0.0
    %3215 = vmatprep.subr.mxu0 0.0
    %3216 = vmatpush1.msra.mxu0 0.0
    %3217 = vmatprep.subr.mxu0 0.0
    %3218 = vmatpush1.msra.mxu0 0.0
    %3219 = vmatprep.subr.mxu0 0.0
    %3220 = vmatpush1.msra.mxu0 0.0
    %3221 = vmatprep.subr.mxu0 0.0
    %3222 = vmatpush1.msra.mxu0 0.0
    %3223 = vmatprep.subr.mxu0 0.0
    %3224 = vmatpush1.msra.mxu0 0.0
    %3225 = vmatprep.subr.mxu0 0.0
    %3226 = vmatpush1.msra.mxu0 0.0
    %3227 = vmatprep.subr.mxu0 0.0
    %3228 = vmatpush1.msra.mxu0 0.0
    %3229 = vmatprep.subr.mxu0 0.0
    %3230 = vmatpush1.msra.mxu0 0.0
    %3231 = vmatprep.subr.mxu0 0.0
    %3232 = vmatpush1.msra.mxu0 0.0
    %3233 = vmatprep.subr.mxu0 0.0
    %3234 = vmatpush1.msra.mxu0 0.0
    %3235 = vmatprep.subr.mxu0 0.0
    %3236 = vmatpush1.msra.mxu0 0.0
    %3237 = vmatprep.subr.mxu0 0.0
    %3238 = vmatpush1.msra.mxu0 0.0
    %3239 = vmatprep.subr.mxu0 0.0
    %3240 = vmatpush1.msra.mxu0 0.0
    %3241 = vmatprep.subr.mxu0 0.0
    %3242 = vmatpush1.msra.mxu0 0.0
    %3243 = vmatprep.subr.mxu0 0.0
    %3244 = vmatpush1.msra.mxu0 0.0
    %3245 = vmatprep.subr.mxu0 0.0
    %3246 = vmatpush1.msra.mxu0 0.0
    %3247 = vmatprep.subr.mxu0 0.0
    %3248 = vmatpush1.msra.mxu0 0.0
    %3249 = vmatprep.subr.mxu0 0.0
    %3250 = vmatpush1.msra.mxu0 0.0
    %3251 = vmatprep.mubr.f32.mxu0 0.0
    %3252 = vmatmul.mubr.f32.gmra.mrb[0].mxu0 %v3185
    %v3253 = vpop.f32.mrb[0].mxu0
    %v3254 = vadd.f32 0.0, %v3253
    %v3255 = vpop.f32.mrb[0].mxu0
    %3256 = vdwg.mxu0
    %v3258 = vsel %vm94, %v3254, 0
    %3260 = vmatprep.subr.mxu0 0.0
    %3261 = vmatpush1.msra.mxu0 %v2849
    %3262 = vmatprep.subr.mxu0 0.0
    %3263 = vmatpush1.msra.mxu0 %v2850
    %3264 = vmatprep.subr.mxu0 0.0
    %3265 = vmatpush1.msra.mxu0 %v2851
    %3266 = vmatprep.subr.mxu0 0.0
    %3267 = vmatpush1.msra.mxu0 %v2852
    %3268 = vmatprep.subr.mxu0 0.0
    %3269 = vmatpush1.msra.mxu0 0.0
    %3270 = vmatprep.subr.mxu0 0.0
    %3271 = vmatpush1.msra.mxu0 0.0
    %3272 = vmatprep.subr.mxu0 0.0
    %3273 = vmatpush1.msra.mxu0 0.0
    %3274 = vmatprep.subr.mxu0 0.0
    %3275 = vmatpush1.msra.mxu0 0.0
    %3276 = vmatprep.subr.mxu0 0.0
    %3277 = vmatpush1.msra.mxu0 0.0
    %3278 = vmatprep.subr.mxu0 0.0
    %3279 = vmatpush1.msra.mxu0 0.0
    %3280 = vmatprep.subr.mxu0 0.0
    %3281 = vmatpush1.msra.mxu0 0.0
    %3282 = vmatprep.subr.mxu0 0.0
    %3283 = vmatpush1.msra.mxu0 0.0
    %3284 = vmatprep.subr.mxu0 0.0
    %3285 = vmatpush1.msra.mxu0 0.0
    %3286 = vmatprep.subr.mxu0 0.0
    %3287 = vmatpush1.msra.mxu0 0.0
    %3288 = vmatprep.subr.mxu0 0.0
    %3289 = vmatpush1.msra.mxu0 0.0
    %3290 = vmatprep.subr.mxu0 0.0
    %3291 = vmatpush1.msra.mxu0 0.0
    %3292 = vmatprep.subr.mxu0 0.0
    %3293 = vmatpush1.msra.mxu0 0.0
    %3294 = vmatprep.subr.mxu0 0.0
    %3295 = vmatpush1.msra.mxu0 0.0
    %3296 = vmatprep.subr.mxu0 0.0
    %3297 = vmatpush1.msra.mxu0 0.0
    %3298 = vmatprep.subr.mxu0 0.0
    %3299 = vmatpush1.msra.mxu0 0.0
    %3300 = vmatprep.subr.mxu0 0.0
    %3301 = vmatpush1.msra.mxu0 0.0
    %3302 = vmatprep.subr.mxu0 0.0
    %3303 = vmatpush1.msra.mxu0 0.0
    %3304 = vmatprep.subr.mxu0 0.0
    %3305 = vmatpush1.msra.mxu0 0.0
    %3306 = vmatprep.subr.mxu0 0.0
    %3307 = vmatpush1.msra.mxu0 0.0
    %3308 = vmatprep.subr.mxu0 0.0
    %3309 = vmatpush1.msra.mxu0 0.0
    %3310 = vmatprep.subr.mxu0 0.0
    %3311 = vmatpush1.msra.mxu0 0.0
    %3312 = vmatprep.subr.mxu0 0.0
    %3313 = vmatpush1.msra.mxu0 0.0
    %3314 = vmatprep.subr.mxu0 0.0
    %3315 = vmatpush1.msra.mxu0 0.0
    %3316 = vmatprep.subr.mxu0 0.0
    %3317 = vmatpush1.msra.mxu0 0.0
    %3318 = vmatprep.subr.mxu0 0.0
    %3319 = vmatpush1.msra.mxu0 0.0
    %3320 = vmatprep.subr.mxu0 0.0
    %3321 = vmatpush1.msra.mxu0 0.0
    %3322 = vmatprep.subr.mxu0 0.0
    %3323 = vmatpush1.msra.mxu0 0.0
    %3324 = vmatprep.mubr.f32.mxu0 0.0
    %3325 = vmatmul.mubr.f32.gmra.mrb[0].mxu0 %v3258
    %v3326 = vpop.f32.mrb[0].mxu0
    %v3327 = vadd.f32 0.0, %v3326
    %v3328 = vpop.f32.mrb[0].mxu0
    %3329 = vdwg.mxu0
    %v3331 = vsel %vm94, %v3327, 0
    %3333 = vmatprep.subr.mxu0 0.0
    %3334 = vmatpush1.xpose.msra.mxu0 %v3331
    %3335 = vmatprep.subr.mxu0 0.0
    %3336 = vmatpush1.xpose.msra.mxu0 0.0
    %3337 = vmatprep.subr.mxu0 0.0
    %3338 = vmatpush1.xpose.msra.mxu0 0.0
    %3339 = vmatprep.subr.mxu0 0.0
    %3340 = vmatpush1.xpose.msra.mxu0 0.0
    %3341 = vmatprep.subr.mxu0 0.0
    %3342 = vmatpush1.xpose.msra.mxu0 0.0
    %3343 = vmatprep.subr.mxu0 0.0
    %3344 = vmatpush1.xpose.msra.mxu0 0.0
    %3345 = vmatprep.subr.mxu0 0.0
    %3346 = vmatpush1.xpose.msra.mxu0 0.0
    %3347 = vmatprep.subr.mxu0 0.0
    %3348 = vmatpush1.xpose.msra.mxu0 0.0
    %3349 = vmatprep.subr.mxu0 0.0
    %3350 = vmatpush1.xpose.msra.mxu0 0.0
    %3351 = vmatprep.subr.mxu0 0.0
    %3352 = vmatpush1.xpose.msra.mxu0 0.0
    %3353 = vmatprep.subr.mxu0 0.0
    %3354 = vmatpush1.xpose.msra.mxu0 0.0
    %3355 = vmatprep.subr.mxu0 0.0
    %3356 = vmatpush1.xpose.msra.mxu0 0.0
    %3357 = vmatprep.subr.mxu0 0.0
    %3358 = vmatpush1.xpose.msra.mxu0 0.0
    %3359 = vmatprep.subr.mxu0 0.0
    %3360 = vmatpush1.xpose.msra.mxu0 0.0
    %3361 = vmatprep.subr.mxu0 0.0
    %3362 = vmatpush1.xpose.msra.mxu0 0.0
    %3363 = vmatprep.subr.mxu0 0.0
    %3364 = vmatpush1.xpose.msra.mxu0 0.0
    %3365 = vmatprep.subr.mxu0 0.0
    %3366 = vmatpush1.xpose.msra.mxu0 0.0
    %3367 = vmatprep.subr.mxu0 0.0
    %3368 = vmatpush1.xpose.msra.mxu0 0.0
    %3369 = vmatprep.subr.mxu0 0.0
    %3370 = vmatpush1.xpose.msra.mxu0 0.0
    %3371 = vmatprep.subr.mxu0 0.0
    %3372 = vmatpush1.xpose.msra.mxu0 0.0
    %3373 = vmatprep.subr.mxu0 0.0
    %3374 = vmatpush1.xpose.msra.mxu0 0.0
    %3375 = vmatprep.subr.mxu0 0.0
    %3376 = vmatpush1.xpose.msra.mxu0 0.0
    %3377 = vmatprep.subr.mxu0 0.0
    %3378 = vmatpush1.xpose.msra.mxu0 0.0
    %3379 = vmatprep.subr.mxu0 0.0
    %3380 = vmatpush1.xpose.msra.mxu0 0.0
    %3381 = vmatprep.subr.mxu0 0.0
    %3382 = vmatpush1.xpose.msra.mxu0 0.0
    %3383 = vmatprep.subr.mxu0 0.0
    %3384 = vmatpush1.xpose.msra.mxu0 0.0
    %3385 = vmatprep.subr.mxu0 0.0
    %3386 = vmatpush1.xpose.msra.mxu0 0.0
    %3387 = vmatprep.subr.mxu0 0.0
    %3388 = vmatpush1.xpose.msra.mxu0 0.0
    %3389 = vmatprep.subr.mxu0 0.0
    %3390 = vmatpush1.xpose.msra.mxu0 0.0
    %3391 = vmatprep.subr.mxu0 0.0
    %3392 = vmatpush1.xpose.msra.mxu0 0.0
    %3393 = vmatprep.subr.mxu0 0.0
    %3394 = vmatpush1.xpose.msra.mxu0 0.0
    %3395 = vmatprep.subr.mxu0 0.0
    %3396 = vmatpush1.xpose.msra.mxu0 0.0
    %3397 = vmatprep.mubr.f32.mxu0 0.0
    %3398 = vmatmul.mubr.f32.gmra.mrb[0].mxu0 %v3095
    %v3399 = vpop.f32.mrb[0].mxu0
    %v3400 = vadd.f32 0.0, %v3399
    %v3401 = vpop.f32.mrb[0].mxu0
    %3402 = vdwg.mxu0
    %v3403 = vmul.f32 %v3400, 0.17677669
    %vm3404 = vcmp.gt.f32.partialorder %v3403, 0.0
    %v3405 = vmul.f32 %v3403, 0.1
    %v3406 = vsel %vm3404, %v3403, %v3405
    %v3407 = vsel %vm3171, %v3406, -1e+09
    %v3408 = vsel %vm1161, %v3407, -inf
    %3409 = vmax.xlane.f32.xlu0 %v3408
    %v3410 = vpop.xlane.xlu0 %3409
    %v3411 = vsub.f32 %v3407, %v3410
    %v3412 = vmul.f32 %v3411, 1.442695
    %v3413 = vpow.pop %v3412
    %v3414 = vsel %vm1161, %v3413, 0.0
    %3415 = vadd.xlane.f32.xlu0 %v3414
    %v3416 = vpop.xlane.xlu0 %3415
    %v3417 = vrcp.pop %v3416
    %v3418 = vmul.f32 %v3413, %v3417
    %v3420 = vsel %vm1161, %v3418, 0
    %3422 = vmatprep.subr.mxu0 0.0
    %3423 = vmatpush1.msra.mxu0 %v3254
    %3424 = vmatprep.subr.mxu0 0.0
    %3425 = vmatpush1.msra.mxu0 0.0
    %3426 = vmatprep.subr.mxu0 0.0
    %3427 = vmatpush1.msra.mxu0 0.0
    %3428 = vmatprep.subr.mxu0 0.0
    %3429 = vmatpush1.msra.mxu0 0.0
    %3430 = vmatprep.subr.mxu0 0.0
    %3431 = vmatpush1.msra.mxu0 0.0
    %3432 = vmatprep.subr.mxu0 0.0
    %3433 = vmatpush1.msra.mxu0 0.0
    %3434 = vmatprep.subr.mxu0 0.0
    %3435 = vmatpush1.msra.mxu0 0.0
    %3436 = vmatprep.subr.mxu0 0.0
    %3437 = vmatpush1.msra.mxu0 0.0
    %3438 = vmatprep.subr.mxu0 0.0
    %3439 = vmatpush1.msra.mxu0 0.0
    %3440 = vmatprep.subr.mxu0 0.0
    %3441 = vmatpush1.msra.mxu0 0.0
    %3442 = vmatprep.subr.mxu0 0.0
    %3443 = vmatpush1.msra.mxu0 0.0
    %3444 = vmatprep.subr.mxu0 0.0
    %3445 = vmatpush1.msra.mxu0 0.0
    %3446 = vmatprep.subr.mxu0 0.0
    %3447 = vmatpush1.msra.mxu0 0.0
    %3448 = vmatprep.subr.mxu0 0.0
    %3449 = vmatpush1.msra.mxu0 0.0
    %3450 = vmatprep.subr.mxu0 0.0
    %3451 = vmatpush1.msra.mxu0 0.0
    %3452 = vmatprep.subr.mxu0 0.0
    %3453 = vmatpush1.msra.mxu0 0.0
    %3454 = vmatprep.subr.mxu0 0.0
    %3455 = vmatpush1.msra.mxu0 0.0
    %3456 = vmatprep.subr.mxu0 0.0
    %3457 = vmatpush1.msra.mxu0 0.0
    %3458 = vmatprep.subr.mxu0 0.0
    %3459 = vmatpush1.msra.mxu0 0.0
    %3460 = vmatprep.subr.mxu0 0.0
    %3461 = vmatpush1.msra.mxu0 0.0
    %3462 = vmatprep.subr.mxu0 0.0
    %3463 = vmatpush1.msra.mxu0 0.0
    %3464 = vmatprep.subr.mxu0 0.0
    %3465 = vmatpush1.msra.mxu0 0.0
    %3466 = vmatprep.subr.mxu0 0.0
    %3467 = vmatpush1.msra.mxu0 0.0
    %3468 = vmatprep.subr.mxu0 0.0
    %3469 = vmatpush1.msra.mxu0 0.0
    %3470 = vmatprep.subr.mxu0 0.0
    %3471 = vmatpush1.msra.mxu0 0.0
    %3472 = vmatprep.subr.mxu0 0.0
    %3473 = vmatpush1.msra.mxu0 0.0
    %3474 = vmatprep.subr.mxu0 0.0
    %3475 = vmatpush1.msra.mxu0 0.0
    %3476 = vmatprep.subr.mxu0 0.0
    %3477 = vmatpush1.msra.mxu0 0.0
    %3478 = vmatprep.subr.mxu0 0.0
    %3479 = vmatpush1.msra.mxu0 0.0
    %3480 = vmatprep.subr.mxu0 0.0
    %3481 = vmatpush1.msra.mxu0 0.0
    %3482 = vmatprep.subr.mxu0 0.0
    %3483 = vmatpush1.msra.mxu0 0.0
    %3484 = vmatprep.subr.mxu0 0.0
    %3485 = vmatpush1.msra.mxu0 0.0
    %3486 = vmatprep.mubr.f32.mxu0 0.0
    %3487 = vmatmul.mubr.f32.gmra.mrb[0].mxu0 %v3420
    %v3488 = vpop.f32.mrb[0].mxu0
    %v3489 = vadd.f32 0.0, %v3488
    %v3490 = vpop.f32.mrb[0].mxu0
    %3491 = vdwg.mxu0
    %vm3492 = vcmp.gt.f32.partialorder %v3489, 0.0
    %v3493 = vmin.f32 %v3489, 0.0
    %v3494 = vmul.f32 %v3493, 1.442695
    %v3495 = vpow.pop %v3494
    %v3496 = vsub.f32 %v3495, 1.0
    %v3497 = vsel %vm3492, %v3489, %v3496
    %v3498 = vld [vmem:[%s5] sm:$0xff]
    %v3499 = vld [vmem:[%s5 + $0x8] sm:$0xff]
    %v3500 = vld [vmem:[%s5 + $0x10] sm:$0xff]
    %v3501 = vld [vmem:[%s5 + $0x18] sm:$0xff]
    %v3503 = vsel %vm94, %v3093, 0
    %v3506 = vsel %vm94, %v3497, 0
    %3508 = vmatprep.subr.mxu0 0.0
    %3509 = vmatpush1.msra.mxu0 %v3498
    %3510 = vmatprep.subr.mxu0 0.0
    %3511 = vmatpush1.msra.mxu0 %v3499
    %3512 = vmatprep.subr.mxu0 0.0
    %3513 = vmatpush1.msra.mxu0 %v3500
    %3514 = vmatprep.subr.mxu0 0.0
    %3515 = vmatpush1.msra.mxu0 %v3501
    %3516 = vmatprep.subr.mxu0 0.0
    %3517 = vmatpush1.msra.mxu0 0.0
    %3518 = vmatprep.subr.mxu0 0.0
    %3519 = vmatpush1.msra.mxu0 0.0
    %3520 = vmatprep.subr.mxu0 0.0
    %3521 = vmatpush1.msra.mxu0 0.0
    %3522 = vmatprep.subr.mxu0 0.0
    %3523 = vmatpush1.msra.mxu0 0.0
    %3524 = vmatprep.subr.mxu0 0.0
    %3525 = vmatpush1.msra.mxu0 0.0
    %3526 = vmatprep.subr.mxu0 0.0
    %3527 = vmatpush1.msra.mxu0 0.0
    %3528 = vmatprep.subr.mxu0 0.0
    %3529 = vmatpush1.msra.mxu0 0.0
    %3530 = vmatprep.subr.mxu0 0.0
    %3531 = vmatpush1.msra.mxu0 0.0
    %3532 = vmatprep.subr.mxu0 0.0
    %3533 = vmatpush1.msra.mxu0 0.0
    %3534 = vmatprep.subr.mxu0 0.0
    %3535 = vmatpush1.msra.mxu0 0.0
    %3536 = vmatprep.subr.mxu0 0.0
    %3537 = vmatpush1.msra.mxu0 0.0
    %3538 = vmatprep.subr.mxu0 0.0
    %3539 = vmatpush1.msra.mxu0 0.0
    %3540 = vmatprep.subr.mxu0 0.0
    %3541 = vmatpush1.msra.mxu0 0.0
    %3542 = vmatprep.subr.mxu0 0.0
    %3543 = vmatpush1.msra.mxu0 0.0
    %3544 = vmatprep.subr.mxu0 0.0
    %3545 = vmatpush1.msra.mxu0 0.0
    %3546 = vmatprep.subr.mxu0 0.0
    %3547 = vmatpush1.msra.mxu0 0.0
    %3548 = vmatprep.subr.mxu0 0.0
    %3549 = vmatpush1.msra.mxu0 0.0
    %3550 = vmatprep.subr.mxu0 0.0
    %3551 = vmatpush1.msra.mxu0 0.0
    %3552 = vmatprep.subr.mxu0 0.0
    %3553 = vmatpush1.msra.mxu0 0.0
    %3554 = vmatprep.subr.mxu0 0.0
    %3555 = vmatpush1.msra.mxu0 0.0
    %3556 = vmatprep.subr.mxu0 0.0
    %3557 = vmatpush1.msra.mxu0 0.0
    %3558 = vmatprep.subr.mxu0 0.0
    %3559 = vmatpush1.msra.mxu0 0.0
    %3560 = vmatprep.subr.mxu0 0.0
    %3561 = vmatpush1.msra.mxu0 0.0
    %3562 = vmatprep.subr.mxu0 0.0
    %3563 = vmatpush1.msra.mxu0 0.0
    %3564 = vmatprep.subr.mxu0 0.0
    %3565 = vmatpush1.msra.mxu0 0.0
    %3566 = vmatprep.subr.mxu0 0.0
    %3567 = vmatpush1.msra.mxu0 0.0
    %3568 = vmatprep.subr.mxu0 0.0
    %3569 = vmatpush1.msra.mxu0 0.0
    %3570 = vmatprep.subr.mxu0 0.0
    %3571 = vmatpush1.msra.mxu0 0.0
    %3572 = vmatprep.mubr.f32.mxu0 0.0
    %3573 = vmatmul.mubr.f32.gmra.mrb[0].mxu0 %v3503
    %v3574 = vpop.f32.mrb[0].mxu0
    %v3575 = vadd.f32 0.0, %v3574
    %v3576 = vpop.f32.mrb[0].mxu0
    %3577 = vmatprep.mubr.f32.mxu0 0.0
    %3578 = vmatmul.mubr.f32.gmra.mrb[0].mxu0 %v3506
    %v3579 = vpop.f32.mrb[0].mxu0
    %v3580 = vadd.f32 0.0, %v3579
    %v3581 = vpop.f32.mrb[0].mxu0
    %3582 = vdwg.mxu0
    %v3583 = vmul.f32 %v267, %v3575
    %v3584 = vsel %vm94, %v3583, 0.0
    %v3585 = vrot.slane %v3584, 4
    %v3586 = vadd.f32 %v3584, %v3585
    %v3587 = vrot.slane %v3586, 2
    %v3588 = vadd.f32 %v3586, %v3587
    %v3589 = vrot.slane %v3588, 1
    %v3590 = vadd.f32 %v3588, %v3589
    %v3591 = vsel %vm276, %v3583, 0.0
    %v3592 = vrot.slane %v3591, 4
    %v3593 = vadd.f32 %v3591, %v3592
    %v3594 = vrot.slane %v3593, 2
    %v3595 = vadd.f32 %v3593, %v3594
    %v3596 = vrot.slane %v3595, 1
    %v3597 = vadd.f32 %v3595, %v3596
    %v3598 = vsel %vm284, %v3583, 0.0
    %v3599 = vrot.slane %v3598, 4
    %v3600 = vadd.f32 %v3598, %v3599
    %v3601 = vrot.slane %v3600, 2
    %v3602 = vadd.f32 %v3600, %v3601
    %v3603 = vrot.slane %v3602, 1
    %v3604 = vadd.f32 %v3602, %v3603
    %v3605 = vsel %vm292, %v3583, 0.0
    %v3606 = vrot.slane %v3605, 4
    %v3607 = vadd.f32 %v3605, %v3606
    %v3608 = vrot.slane %v3607, 2
    %v3609 = vadd.f32 %v3607, %v3608
    %v3610 = vrot.slane %v3609, 1
    %v3611 = vadd.f32 %v3609, %v3610
    %v3612 = vmul.f32 %v3590, %v3590
    %v3613 = vsel %vm94, %v3612, 0.0
    %3614 = vadd.xlane.f32.xlu0 %v3613
    %v3615 = vpop.xlane.xlu0 %3614
    %v3616 = vadd.f32 %v3615, 1.0
    %v3617 = vrcp.pop %v3616
    %v3618 = vmul.f32 %v3615, %v3617
    %v3619 = vadd.f32 %v3615, 1e-08
    %v3620 = vrsqrt.pop %v3619
    %v3621 = vmul.f32 %v3618, %v3620
    %v3622 = vmul.f32 %v3621, %v3590
    %v3623 = vmul.f32 %v3597, %v3597
    %3625 = vrot.lane.b32.xlu0 %v3623, 96
    %v3626 = vpop.permute.xlu0 %3625
    %v3628 = vsel %vm94, %v3626, 0.0
    %3629 = vadd.xlane.f32.xlu0 %v3628
    %v3630 = vpop.xlane.xlu0 %3629
    %v3631 = vadd.f32 %v3630, 1.0
    %v3632 = vrcp.pop %v3631
    %v3633 = vmul.f32 %v3630, %v3632
    %v3634 = vadd.f32 %v3630, 1e-08
    %v3635 = vrsqrt.pop %v3634
    %v3636 = vmul.f32 %v3633, %v3635
    %v3637 = vmul.f32 %v3636, %v3597
    %v3638 = vmul.f32 %v3604, %v3604
    %3640 = vrot.lane.b32.xlu0 %v3638, 64
    %v3641 = vpop.permute.xlu0 %3640
    %v3643 = vsel %vm94, %v3641, 0.0
    %3644 = vadd.xlane.f32.xlu0 %v3643
    %v3645 = vpop.xlane.xlu0 %3644
    %v3646 = vadd.f32 %v3645, 1.0
    %v3647 = vrcp.pop %v3646
    %v3648 = vmul.f32 %v3645, %v3647
    %v3649 = vadd.f32 %v3645, 1e-08
    %v3650 = vrsqrt.pop %v3649
    %v3651 = vmul.f32 %v3648, %v3650
    %v3652 = vmul.f32 %v3651, %v3604
    %v3653 = vmul.f32 %v3611, %v3611
    %3655 = vrot.lane.b32.xlu0 %v3653, 32
    %v3656 = vpop.permute.xlu0 %3655
    %v3658 = vsel %vm94, %v3656, 0.0
    %3659 = vadd.xlane.f32.xlu0 %v3658
    %v3660 = vpop.xlane.xlu0 %3659
    %v3661 = vadd.f32 %v3660, 1.0
    %v3662 = vrcp.pop %v3661
    %v3663 = vmul.f32 %v3660, %v3662
    %v3664 = vadd.f32 %v3660, 1e-08
    %v3665 = vrsqrt.pop %v3664
    %v3666 = vmul.f32 %v3663, %v3665
    %v3667 = vmul.f32 %v3666, %v3611
    %v3668 = vmul.f32 %v3575, %v3622
    %v3669 = vsel %vm94, %v3668, 0.0
    %3670 = vadd.xlane.f32.xlu0 %v3669
    %v3671 = vpop.xlane.xlu0 %3670
    %v3672 = vmul.f32 %v3575, %v3637
    %3674 = vrot.lane.b32.xlu0 %v3672, 96
    %v3675 = vpop.permute.xlu0 %3674
    %v3677 = vsel %vm94, %v3675, 0.0
    %3678 = vadd.xlane.f32.xlu0 %v3677
    %v3679 = vpop.xlane.xlu0 %3678
    %v3680 = vmul.f32 %v3575, %v3652
    %3682 = vrot.lane.b32.xlu0 %v3680, 64
    %v3683 = vpop.permute.xlu0 %3682
    %v3685 = vsel %vm94, %v3683, 0.0
    %3686 = vadd.xlane.f32.xlu0 %v3685
    %v3687 = vpop.xlane.xlu0 %3686
    %v3688 = vmul.f32 %v3575, %v3667
    %3690 = vrot.lane.b32.xlu0 %v3688, 32
    %v3691 = vpop.permute.xlu0 %3690
    %v3693 = vsel %vm94, %v3691, 0.0
    %3694 = vadd.xlane.f32.xlu0 %v3693
    %v3695 = vpop.xlane.xlu0 %3694
    %v3696 = vsel %vm384, %v3671, %v3679
    %v3697 = vsel %vm386, %v3696, %v3687
    %v3698 = vsel %vm388, %v3697, %v3695
    %v3699 = vadd.f32 %v3698, 0.0
    %v3700 = vsel %vm263, %v3699, -inf
    %3701 = vmax.xlane.f32.xlu0 %v3700
    %v3702 = vpop.xlane.xlu0 %3701
    %v3703 = vsub.f32 %v3699, %v3702
    %v3704 = vmul.f32 %v3703, 1.442695
    %v3705 = vpow.pop %v3704
    %v3706 = vsel %vm263, %v3705, 0.0
    %3707 = vadd.xlane.f32.xlu0 %v3706
    %v3708 = vpop.xlane.xlu0 %3707
    %v3709 = vrcp.pop %v3708
    %v3710 = vmul.f32 %v3705, %v3709
    %3712 = vset.pattern.permute.xlu0 0
    %3713 = vperm.xlu0 %3712, %v3710
    %v3714 = vpop.permute.xlu0 %3713
    %v3716 = vmul.f32 %v3714, %v3575
    %v3717 = vsel %vm94, %v3716, 0.0
    %v3718 = vrot.slane %v3717, 4
    %v3719 = vadd.f32 %v3717, %v3718
    %v3720 = vrot.slane %v3719, 2
    %v3721 = vadd.f32 %v3719, %v3720
    %v3722 = vrot.slane %v3721, 1
    %v3723 = vadd.f32 %v3721, %v3722
    %3724 = vset.pattern.permute.xlu0 1
    %3725 = vperm.xlu0 %3724, %v3710
    %v3726 = vpop.permute.xlu0 %3725
    %v3728 = vmul.f32 %v3726, %v3575
    %v3729 = vsel %vm276, %v3728, 0.0
    %v3730 = vrot.slane %v3729, 4
    %v3731 = vadd.f32 %v3729, %v3730
    %v3732 = vrot.slane %v3731, 2
    %v3733 = vadd.f32 %v3731, %v3732
    %v3734 = vrot.slane %v3733, 1
    %v3735 = vadd.f32 %v3733, %v3734
    %3736 = vset.pattern.permute.xlu0 2
    %3737 = vperm.xlu0 %3736, %v3710
    %v3738 = vpop.permute.xlu0 %3737
    %v3740 = vmul.f32 %v3738, %v3575
    %v3741 = vsel %vm284, %v3740, 0.0
    %v3742 = vrot.slane %v3741, 4
    %v3743 = vadd.f32 %v3741, %v3742
    %v3744 = vrot.slane %v3743, 2
    %v3745 = vadd.f32 %v3743, %v3744
    %v3746 = vrot.slane %v3745, 1
    %v3747 = vadd.f32 %v3745, %v3746
    %3748 = vset.pattern.permute.xlu0 3
    %3749 = vperm.xlu0 %3748, %v3710
    %v3750 = vpop.permute.xlu0 %3749
    %v3752 = vmul.f32 %v3750, %v3575
    %v3753 = vsel %vm292, %v3752, 0.0
    %v3754 = vrot.slane %v3753, 4
    %v3755 = vadd.f32 %v3753, %v3754
    %v3756 = vrot.slane %v3755, 2
    %v3757 = vadd.f32 %v3755, %v3756
    %v3758 = vrot.slane %v3757, 1
    %v3759 = vadd.f32 %v3757, %v3758
    %v3760 = vmul.f32 %v3723, %v3723
    %v3761 = vsel %vm94, %v3760, 0.0
    %3762 = vadd.xlane.f32.xlu0 %v3761
    %v3763 = vpop.xlane.xlu0 %3762
    %v3764 = vadd.f32 %v3763, 1.0
    %v3765 = vrcp.pop %v3764
    %v3766 = vmul.f32 %v3763, %v3765
    %v3767 = vadd.f32 %v3763, 1e-08
    %v3768 = vrsqrt.pop %v3767
    %v3769 = vmul.f32 %v3766, %v3768
    %v3770 = vmul.f32 %v3769, %v3723
    %v3771 = vmul.f32 %v3735, %v3735
    %3773 = vrot.lane.b32.xlu0 %v3771, 96
    %v3774 = vpop.permute.xlu0 %3773
    %v3776 = vsel %vm94, %v3774, 0.0
    %3777 = vadd.xlane.f32.xlu0 %v3776
    %v3778 = vpop.xlane.xlu0 %3777
    %v3779 = vadd.f32 %v3778, 1.0
    %v3780 = vrcp.pop %v3779
    %v3781 = vmul.f32 %v3778, %v3780
    %v3782 = vadd.f32 %v3778, 1e-08
    %v3783 = vrsqrt.pop %v3782
    %v3784 = vmul.f32 %v3781, %v3783
    %v3785 = vmul.f32 %v3784, %v3735
    %v3786 = vmul.f32 %v3747, %v3747
    %3788 = vrot.lane.b32.xlu0 %v3786, 64
    %v3789 = vpop.permute.xlu0 %3788
    %v3791 = vsel %vm94, %v3789, 0.0
    %3792 = vadd.xlane.f32.xlu0 %v3791
    %v3793 = vpop.xlane.xlu0 %3792
    %v3794 = vadd.f32 %v3793, 1.0
    %v3795 = vrcp.pop %v3794
    %v3796 = vmul.f32 %v3793, %v3795
    %v3797 = vadd.f32 %v3793, 1e-08
    %v3798 = vrsqrt.pop %v3797
    %v3799 = vmul.f32 %v3796, %v3798
    %v3800 = vmul.f32 %v3799, %v3747
    %v3801 = vmul.f32 %v3759, %v3759
    %3803 = vrot.lane.b32.xlu0 %v3801, 32
    %v3804 = vpop.permute.xlu0 %3803
    %v3806 = vsel %vm94, %v3804, 0.0
    %3807 = vadd.xlane.f32.xlu0 %v3806
    %v3808 = vpop.xlane.xlu0 %3807
    %v3809 = vadd.f32 %v3808, 1.0
    %v3810 = vrcp.pop %v3809
    %v3811 = vmul.f32 %v3808, %v3810
    %v3812 = vadd.f32 %v3808, 1e-08
    %v3813 = vrsqrt.pop %v3812
    %v3814 = vmul.f32 %v3811, %v3813
    %v3815 = vmul.f32 %v3814, %v3759
    %v3816 = vmul.f32 %v3575, %v3770
    %v3817 = vsel %vm94, %v3816, 0.0
    %3818 = vadd.xlane.f32.xlu0 %v3817
    %v3819 = vpop.xlane.xlu0 %3818
    %v3820 = vmul.f32 %v3575, %v3785
    %3822 = vrot.lane.b32.xlu0 %v3820, 96
    %v3823 = vpop.permute.xlu0 %3822
    %v3825 = vsel %vm94, %v3823, 0.0
    %3826 = vadd.xlane.f32.xlu0 %v3825
    %v3827 = vpop.xlane.xlu0 %3826
    %v3828 = vmul.f32 %v3575, %v3800
    %3830 = vrot.lane.b32.xlu0 %v3828, 64
    %v3831 = vpop.permute.xlu0 %3830
    %v3833 = vsel %vm94, %v3831, 0.0
    %3834 = vadd.xlane.f32.xlu0 %v3833
    %v3835 = vpop.xlane.xlu0 %3834
    %v3836 = vmul.f32 %v3575, %v3815
    %3838 = vrot.lane.b32.xlu0 %v3836, 32
    %v3839 = vpop.permute.xlu0 %3838
    %v3841 = vsel %vm94, %v3839, 0.0
    %3842 = vadd.xlane.f32.xlu0 %v3841
    %v3843 = vpop.xlane.xlu0 %3842
    %v3844 = vsel %vm384, %v3819, %v3827
    %v3845 = vsel %vm386, %v3844, %v3835
    %v3846 = vsel %vm388, %v3845, %v3843
    %v3847 = vadd.f32 %v3699, %v3846
    %v3848 = vsel %vm263, %v3847, -inf
    %3849 = vmax.xlane.f32.xlu0 %v3848
    %v3850 = vpop.xlane.xlu0 %3849
    %v3851 = vsub.f32 %v3847, %v3850
    %v3852 = vmul.f32 %v3851, 1.442695
    %v3853 = vpow.pop %v3852
    %v3854 = vsel %vm263, %v3853, 0.0
    %3855 = vadd.xlane.f32.xlu0 %v3854
    %v3856 = vpop.xlane.xlu0 %3855
    %v3857 = vrcp.pop %v3856
    %v3858 = vmul.f32 %v3853, %v3857
    %3860 = vset.pattern.permute.xlu0 0
    %3861 = vperm.xlu0 %3860, %v3858
    %v3862 = vpop.permute.xlu0 %3861
    %v3864 = vmul.f32 %v3862, %v3575
    %v3865 = vsel %vm94, %v3864, 0.0
    %v3866 = vrot.slane %v3865, 4
    %v3867 = vadd.f32 %v3865, %v3866
    %v3868 = vrot.slane %v3867, 2
    %v3869 = vadd.f32 %v3867, %v3868
    %v3870 = vrot.slane %v3869, 1
    %v3871 = vadd.f32 %v3869, %v3870
    %3872 = vset.pattern.permute.xlu0 1
    %3873 = vperm.xlu0 %3872, %v3858
    %v3874 = vpop.permute.xlu0 %3873
    %v3876 = vmul.f32 %v3874, %v3575
    %v3877 = vsel %vm276, %v3876, 0.0
    %v3878 = vrot.slane %v3877, 4
    %v3879 = vadd.f32 %v3877, %v3878
    %v3880 = vrot.slane %v3879, 2
    %v3881 = vadd.f32 %v3879, %v3880
    %v3882 = vrot.slane %v3881, 1
    %v3883 = vadd.f32 %v3881, %v3882
    %3884 = vset.pattern.permute.xlu0 2
    %3885 = vperm.xlu0 %3884, %v3858
    %v3886 = vpop.permute.xlu0 %3885
    %v3888 = vmul.f32 %v3886, %v3575
    %v3889 = vsel %vm284, %v3888, 0.0
    %v3890 = vrot.slane %v3889, 4
    %v3891 = vadd.f32 %v3889, %v3890
    %v3892 = vrot.slane %v3891, 2
    %v3893 = vadd.f32 %v3891, %v3892
    %v3894 = vrot.slane %v3893, 1
    %v3895 = vadd.f32 %v3893, %v3894
    %3896 = vset.pattern.permute.xlu0 3
    %3897 = vperm.xlu0 %3896, %v3858
    %v3898 = vpop.permute.xlu0 %3897
    %v3900 = vmul.f32 %v3898, %v3575
    %v3901 = vsel %vm292, %v3900, 0.0
    %v3902 = vrot.slane %v3901, 4
    %v3903 = vadd.f32 %v3901, %v3902
    %v3904 = vrot.slane %v3903, 2
    %v3905 = vadd.f32 %v3903, %v3904
    %v3906 = vrot.slane %v3905, 1
    %v3907 = vadd.f32 %v3905, %v3906
    %v3908 = vmul.f32 %v3871, %v3871
    %v3909 = vsel %vm94, %v3908, 0.0
    %3910 = vadd.xlane.f32.xlu0 %v3909
    %v3911 = vpop.xlane.xlu0 %3910
    %v3912 = vadd.f32 %v3911, 1.0
    %v3913 = vrcp.pop %v3912
    %v3914 = vmul.f32 %v3911, %v3913
    %v3915 = vadd.f32 %v3911, 1e-08
    %v3916 = vrsqrt.pop %v3915
    %v3917 = vmul.f32 %v3914, %v3916
    %v3918 = vmul.f32 %v3917, %v3871
    %v3919 = vmul.f32 %v3883, %v3883
    %3921 = vrot.lane.b32.xlu0 %v3919, 96
    %v3922 = vpop.permute.xlu0 %3921
    %v3924 = vsel %vm94, %v3922, 0.0
    %3925 = vadd.xlane.f32.xlu0 %v3924
    %v3926 = vpop.xlane.xlu0 %3925
    %v3927 = vadd.f32 %v3926, 1.0
    %v3928 = vrcp.pop %v3927
    %v3929 = vmul.f32 %v3926, %v3928
    %v3930 = vadd.f32 %v3926, 1e-08
    %v3931 = vrsqrt.pop %v3930
    %v3932 = vmul.f32 %v3929, %v3931
    %v3933 = vmul.f32 %v3932, %v3883
    %v3934 = vmul.f32 %v3895, %v3895
    %3936 = vrot.lane.b32.xlu0 %v3934, 64
    %v3937 = vpop.permute.xlu0 %3936
    %v3939 = vsel %vm94, %v3937, 0.0
    %3940 = vadd.xlane.f32.xlu0 %v3939
    %v3941 = vpop.xlane.xlu0 %3940
    %v3942 = vadd.f32 %v3941, 1.0
    %v3943 = vrcp.pop %v3942
    %v3944 = vmul.f32 %v3941, %v3943
    %v3945 = vadd.f32 %v3941, 1e-08
    %v3946 = vrsqrt.pop %v3945
    %v3947 = vmul.f32 %v3944, %v3946
    %v3948 = vmul.f32 %v3947, %v3895
    %v3949 = vmul.f32 %v3907, %v3907
    %3951 = vrot.lane.b32.xlu0 %v3949, 32
    %v3952 = vpop.permute.xlu0 %3951
    %v3954 = vsel %vm94, %v3952, 0.0
    %3955 = vadd.xlane.f32.xlu0 %v3954
    %v3956 = vpop.xlane.xlu0 %3955
    %v3957 = vadd.f32 %v3956, 1.0
    %v3958 = vrcp.pop %v3957
    %v3959 = vmul.f32 %v3956, %v3958
    %v3960 = vadd.f32 %v3956, 1e-08
    %v3961 = vrsqrt.pop %v3960
    %v3962 = vmul.f32 %v3959, %v3961
    %v3963 = vmul.f32 %v3962, %v3907
    %3965 = vrot.lane.b32.xlu0 %v3933, 96
    %v3966 = vpop.permute.xlu0 %3965
    %3969 = vrot.lane.b32.xlu0 %v3948, 64
    %v3970 = vpop.permute.xlu0 %3969
    %3973 = vrot.lane.b32.xlu0 %v3963, 32
    %v3974 = vpop.permute.xlu0 %3973
    %v3976 = vsel %vm667, %v3918, %v3966
    %v3977 = vsel %vm669, %v3976, %v3970
    %v3978 = vsel %vm671, %v3977, %v3974
    %v3979 = vmul.f32 %v267, %v3580
    %v3980 = vsel %vm94, %v3979, 0.0
    %v3981 = vrot.slane %v3980, 4
    %v3982 = vadd.f32 %v3980, %v3981
    %v3983 = vrot.slane %v3982, 2
    %v3984 = vadd.f32 %v3982, %v3983
    %v3985 = vrot.slane %v3984, 1
    %v3986 = vadd.f32 %v3984, %v3985
    %v3987 = vsel %vm276, %v3979, 0.0
    %v3988 = vrot.slane %v3987, 4
    %v3989 = vadd.f32 %v3987, %v3988
    %v3990 = vrot.slane %v3989, 2
    %v3991 = vadd.f32 %v3989, %v3990
    %v3992 = vrot.slane %v3991, 1
    %v3993 = vadd.f32 %v3991, %v3992
    %v3994 = vsel %vm284, %v3979, 0.0
    %v3995 = vrot.slane %v3994, 4
    %v3996 = vadd.f32 %v3994, %v3995
    %v3997 = vrot.slane %v3996, 2
    %v3998 = vadd.f32 %v3996, %v3997
    %v3999 = vrot.slane %v3998, 1
    %v4000 = vadd.f32 %v3998, %v3999
    %v4001 = vsel %vm292, %v3979, 0.0
    %v4002 = vrot.slane %v4001, 4
    %v4003 = vadd.f32 %v4001, %v4002
    %v4004 = vrot.slane %v4003, 2
    %v4005 = vadd.f32 %v4003, %v4004
    %v4006 = vrot.slane %v4005, 1
    %v4007 = vadd.f32 %v4005, %v4006
    %v4008 = vmul.f32 %v3986, %v3986
    %v4009 = vsel %vm94, %v4008, 0.0
    %4010 = vadd.xlane.f32.xlu0 %v4009
    %v4011 = vpop.xlane.xlu0 %4010
    %v4012 = vadd.f32 %v4011, 1.0
    %v4013 = vrcp.pop %v4012
    %v4014 = vmul.f32 %v4011, %v4013
    %v4015 = vadd.f32 %v4011, 1e-08
    %v4016 = vrsqrt.pop %v4015
    %v4017 = vmul.f32 %v4014, %v4016
    %v4018 = vmul.f32 %v4017, %v3986
    %v4019 = vmul.f32 %v3993, %v3993
    %4021 = vrot.lane.b32.xlu0 %v4019, 96
    %v4022 = vpop.permute.xlu0 %4021
    %v4024 = vsel %vm94, %v4022, 0.0
    %4025 = vadd.xlane.f32.xlu0 %v4024
    %v4026 = vpop.xlane.xlu0 %4025
    %v4027 = vadd.f32 %v4026, 1.0
    %v4028 = vrcp.pop %v4027
    %v4029 = vmul.f32 %v4026, %v4028
    %v4030 = vadd.f32 %v4026, 1e-08
    %v4031 = vrsqrt.pop %v4030
    %v4032 = vmul.f32 %v4029, %v4031
    %v4033 = vmul.f32 %v4032, %v3993
    %v4034 = vmul.f32 %v4000, %v4000
    %4036 = vrot.lane.b32.xlu0 %v4034, 64
    %v4037 = vpop.permute.xlu0 %4036
    %v4039 = vsel %vm94, %v4037, 0.0
    %4040 = vadd.xlane.f32.xlu0 %v4039
    %v4041 = vpop.xlane.xlu0 %4040
    %v4042 = vadd.f32 %v4041, 1.0
    %v4043 = vrcp.pop %v4042
    %v4044 = vmul.f32 %v4041, %v4043
    %v4045 = vadd.f32 %v4041, 1e-08
    %v4046 = vrsqrt.pop %v4045
    %v4047 = vmul.f32 %v4044, %v4046
    %v4048 = vmul.f32 %v4047, %v4000
    %v4049 = vmul.f32 %v4007, %v4007
    %4051 = vrot.lane.b32.xlu0 %v4049, 32
    %v4052 = vpop.permute.xlu0 %4051
    %v4054 = vsel %vm94, %v4052, 0.0
    %4055 = vadd.xlane.f32.xlu0 %v4054
    %v4056 = vpop.xlane.xlu0 %4055
    %v4057 = vadd.f32 %v4056, 1.0
    %v4058 = vrcp.pop %v4057
    %v4059 = vmul.f32 %v4056, %v4058
    %v4060 = vadd.f32 %v4056, 1e-08
    %v4061 = vrsqrt.pop %v4060
    %v4062 = vmul.f32 %v4059, %v4061
    %v4063 = vmul.f32 %v4062, %v4007
    %v4064 = vmul.f32 %v3580, %v4018
    %v4065 = vsel %vm94, %v4064, 0.0
    %4066 = vadd.xlane.f32.xlu0 %v4065
    %v4067 = vpop.xlane.xlu0 %4066
    %v4068 = vmul.f32 %v3580, %v4033
    %4070 = vrot.lane.b32.xlu0 %v4068, 96
    %v4071 = vpop.permute.xlu0 %4070
    %v4073 = vsel %vm94, %v4071, 0.0
    %4074 = vadd.xlane.f32.xlu0 %v4073
    %v4075 = vpop.xlane.xlu0 %4074
    %v4076 = vmul.f32 %v3580, %v4048
    %4078 = vrot.lane.b32.xlu0 %v4076, 64
    %v4079 = vpop.permute.xlu0 %4078
    %v4081 = vsel %vm94, %v4079, 0.0
    %4082 = vadd.xlane.f32.xlu0 %v4081
    %v4083 = vpop.xlane.xlu0 %4082
    %v4084 = vmul.f32 %v3580, %v4063
    %4086 = vrot.lane.b32.xlu0 %v4084, 32
    %v4087 = vpop.permute.xlu0 %4086
    %v4089 = vsel %vm94, %v4087, 0.0
    %4090 = vadd.xlane.f32.xlu0 %v4089
    %v4091 = vpop.xlane.xlu0 %4090
    %v4092 = vsel %vm384, %v4067, %v4075
    %v4093 = vsel %vm386, %v4092, %v4083
    %v4094 = vsel %vm388, %v4093, %v4091
    %v4095 = vadd.f32 %v4094, 0.0
    %v4096 = vsel %vm263, %v4095, -inf
    %4097 = vmax.xlane.f32.xlu0 %v4096
    %v4098 = vpop.xlane.xlu0 %4097
    %v4099 = vsub.f32 %v4095, %v4098
    %v4100 = vmul.f32 %v4099, 1.442695
    %v4101 = vpow.pop %v4100
    %v4102 = vsel %vm263, %v4101, 0.0
    %4103 = vadd.xlane.f32.xlu0 %v4102
    %v4104 = vpop.xlane.xlu0 %4103
    %v4105 = vrcp.pop %v4104
    %v4106 = vmul.f32 %v4101, %v4105
    %4108 = vset.pattern.permute.xlu0 0
    %4109 = vperm.xlu0 %4108, %v4106
    %v4110 = vpop.permute.xlu0 %4109
    %v4112 = vmul.f32 %v4110, %v3580
    %v4113 = vsel %vm94, %v4112, 0.0
    %v4114 = vrot.slane %v4113, 4
    %v4115 = vadd.f32 %v4113, %v4114
    %v4116 = vrot.slane %v4115, 2
    %v4117 = vadd.f32 %v4115, %v4116
    %v4118 = vrot.slane %v4117, 1
    %v4119 = vadd.f32 %v4117, %v4118
    %4120 = vset.pattern.permute.xlu0 1
    %4121 = vperm.xlu0 %4120, %v4106
    %v4122 = vpop.permute.xlu0 %4121
    %v4124 = vmul.f32 %v4122, %v3580
    %v4125 = vsel %vm276, %v4124, 0.0
    %v4126 = vrot.slane %v4125, 4
    %v4127 = vadd.f32 %v4125, %v4126
    %v4128 = vrot.slane %v4127, 2
    %v4129 = vadd.f32 %v4127, %v4128
    %v4130 = vrot.slane %v4129, 1
    %v4131 = vadd.f32 %v4129, %v4130
    %4132 = vset.pattern.permute.xlu0 2
    %4133 = vperm.xlu0 %4132, %v4106
    %v4134 = vpop.permute.xlu0 %4133
    %v4136 = vmul.f32 %v4134, %v3580
    %v4137 = vsel %vm284, %v4136, 0.0
    %v4138 = vrot.slane %v4137, 4
    %v4139 = vadd.f32 %v4137, %v4138
    %v4140 = vrot.slane %v4139, 2
    %v4141 = vadd.f32 %v4139, %v4140
    %v4142 = vrot.slane %v4141, 1
    %v4143 = vadd.f32 %v4141, %v4142
    %4144 = vset.pattern.permute.xlu0 3
    %4145 = vperm.xlu0 %4144, %v4106
    %v4146 = vpop.permute.xlu0 %4145
    %v4148 = vmul.f32 %v4146, %v3580
    %v4149 = vsel %vm292, %v4148, 0.0
    %v4150 = vrot.slane %v4149, 4
    %v4151 = vadd.f32 %v4149, %v4150
    %v4152 = vrot.slane %v4151, 2
    %v4153 = vadd.f32 %v4151, %v4152
    %v4154 = vrot.slane %v4153, 1
    %v4155 = vadd.f32 %v4153, %v4154
    %v4156 = vmul.f32 %v4119, %v4119
    %v4157 = vsel %vm94, %v4156, 0.0
    %4158 = vadd.xlane.f32.xlu0 %v4157
    %v4159 = vpop.xlane.xlu0 %4158
    %v4160 = vadd.f32 %v4159, 1.0
    %v4161 = vrcp.pop %v4160
    %v4162 = vmul.f32 %v4159, %v4161
    %v4163 = vadd.f32 %v4159, 1e-08
    %v4164 = vrsqrt.pop %v4163
    %v4165 = vmul.f32 %v4162, %v4164
    %v4166 = vmul.f32 %v4165, %v4119
    %v4167 = vmul.f32 %v4131, %v4131
    %4169 = vrot.lane.b32.xlu0 %v4167, 96
    %v4170 = vpop.permute.xlu0 %4169
    %v4172 = vsel %vm94, %v4170, 0.0
    %4173 = vadd.xlane.f32.xlu0 %v4172
    %v4174 = vpop.xlane.xlu0 %4173
    %v4175 = vadd.f32 %v4174, 1.0
    %v4176 = vrcp.pop %v4175
    %v4177 = vmul.f32 %v4174, %v4176
    %v4178 = vadd.f32 %v4174, 1e-08
    %v4179 = vrsqrt.pop %v4178
    %v4180 = vmul.f32 %v4177, %v4179
    %v4181 = vmul.f32 %v4180, %v4131
    %v4182 = vmul.f32 %v4143, %v4143
    %4184 = vrot.lane.b32.xlu0 %v4182, 64
    %v4185 = vpop.permute.xlu0 %4184
    %v4187 = vsel %vm94, %v4185, 0.0
    %4188 = vadd.xlane.f32.xlu0 %v4187
    %v4189 = vpop.xlane.xlu0 %4188
    %v4190 = vadd.f32 %v4189, 1.0
    %v4191 = vrcp.pop %v4190
    %v4192 = vmul.f32 %v4189, %v4191
    %v4193 = vadd.f32 %v4189, 1e-08
    %v4194 = vrsqrt.pop %v4193
    %v4195 = vmul.f32 %v4192, %v4194
    %v4196 = vmul.f32 %v4195, %v4143
    %v4197 = vmul.f32 %v4155, %v4155
    %4199 = vrot.lane.b32.xlu0 %v4197, 32
    %v4200 = vpop.permute.xlu0 %4199
    %v4202 = vsel %vm94, %v4200, 0.0
    %4203 = vadd.xlane.f32.xlu0 %v4202
    %v4204 = vpop.xlane.xlu0 %4203
    %v4205 = vadd.f32 %v4204, 1.0
    %v4206 = vrcp.pop %v4205
    %v4207 = vmul.f32 %v4204, %v4206
    %v4208 = vadd.f32 %v4204, 1e-08
    %v4209 = vrsqrt.pop %v4208
    %v4210 = vmul.f32 %v4207, %v4209
    %v4211 = vmul.f32 %v4210, %v4155
    %v4212 = vmul.f32 %v3580, %v4166
    %v4213 = vsel %vm94, %v4212, 0.0
    %4214 = vadd.xlane.f32.xlu0 %v4213
    %v4215 = vpop.xlane.xlu0 %4214
    %v4216 = vmul.f32 %v3580, %v4181
    %4218 = vrot.lane.b32.xlu0 %v4216, 96
    %v4219 = vpop.permute.xlu0 %4218
    %v4221 = vsel %vm94, %v4219, 0.0
    %4222 = vadd.xlane.f32.xlu0 %v4221
    %v4223 = vpop.xlane.xlu0 %4222
    %v4224 = vmul.f32 %v3580, %v4196
    %4226 = vrot.lane.b32.xlu0 %v4224, 64
    %v4227 = vpop.permute.xlu0 %4226
    %v4229 = vsel %vm94, %v4227, 0.0
    %4230 = vadd.xlane.f32.xlu0 %v4229
    %v4231 = vpop.xlane.xlu0 %4230
    %v4232 = vmul.f32 %v3580, %v4211
    %4234 = vrot.lane.b32.xlu0 %v4232, 32
    %v4235 = vpop.permute.xlu0 %4234
    %v4237 = vsel %vm94, %v4235, 0.0
    %4238 = vadd.xlane.f32.xlu0 %v4237
    %v4239 = vpop.xlane.xlu0 %4238
    %v4240 = vsel %vm384, %v4215, %v4223
    %v4241 = vsel %vm386, %v4240, %v4231
    %v4242 = vsel %vm388, %v4241, %v4239
    %v4243 = vadd.f32 %v4095, %v4242
    %v4244 = vsel %vm263, %v4243, -inf
    %4245 = vmax.xlane.f32.xlu0 %v4244
    %v4246 = vpop.xlane.xlu0 %4245
    %v4247 = vsub.f32 %v4243, %v4246
    %v4248 = vmul.f32 %v4247, 1.442695
    %v4249 = vpow.pop %v4248
    %v4250 = vsel %vm263, %v4249, 0.0
    %4251 = vadd.xlane.f32.xlu0 %v4250
    %v4252 = vpop.xlane.xlu0 %4251
    %v4253 = vrcp.pop %v4252
    %v4254 = vmul.f32 %v4249, %v4253
    %4256 = vset.pattern.permute.xlu0 0
    %4257 = vperm.xlu0 %4256, %v4254
    %v4258 = vpop.permute.xlu0 %4257
    %v4260 = vmul.f32 %v4258, %v3580
    %v4261 = vsel %vm94, %v4260, 0.0
    %v4262 = vrot.slane %v4261, 4
    %v4263 = vadd.f32 %v4261, %v4262
    %v4264 = vrot.slane %v4263, 2
    %v4265 = vadd.f32 %v4263, %v4264
    %v4266 = vrot.slane %v4265, 1
    %v4267 = vadd.f32 %v4265, %v4266
    %4268 = vset.pattern.permute.xlu0 1
    %4269 = vperm.xlu0 %4268, %v4254
    %v4270 = vpop.permute.xlu0 %4269
    %v4272 = vmul.f32 %v4270, %v3580
    %v4273 = vsel %vm276, %v4272, 0.0
    %v4274 = vrot.slane %v4273, 4
    %v4275 = vadd.f32 %v4273, %v4274
    %v4276 = vrot.slane %v4275, 2
    %v4277 = vadd.f32 %v4275, %v4276
    %v4278 = vrot.slane %v4277, 1
    %v4279 = vadd.f32 %v4277, %v4278
    %4280 = vset.pattern.permute.xlu0 2
    %4281 = vperm.xlu0 %4280, %v4254
    %v4282 = vpop.permute.xlu0 %4281
    %v4284 = vmul.f32 %v4282, %v3580
    %v4285 = vsel %vm284, %v4284, 0.0
    %v4286 = vrot.slane %v4285, 4
    %v4287 = vadd.f32 %v4285, %v4286
    %v4288 = vrot.slane %v4287, 2
    %v4289 = vadd.f32 %v4287, %v4288
    %v4290 = vrot.slane %v4289, 1
    %v4291 = vadd.f32 %v4289, %v4290
    %4292 = vset.pattern.permute.xlu0 3
    %4293 = vperm.xlu0 %4292, %v4254
    %v4294 = vpop.permute.xlu0 %4293
    %v4296 = vmul.f32 %v4294, %v3580
    %v4297 = vsel %vm292, %v4296, 0.0
    %v4298 = vrot.slane %v4297, 4
    %v4299 = vadd.f32 %v4297, %v4298
    %v4300 = vrot.slane %v4299, 2
    %v4301 = vadd.f32 %v4299, %v4300
    %v4302 = vrot.slane %v4301, 1
    %v4303 = vadd.f32 %v4301, %v4302
    %v4304 = vmul.f32 %v4267, %v4267
    %v4305 = vsel %vm94, %v4304, 0.0
    %4306 = vadd.xlane.f32.xlu0 %v4305
    %v4307 = vpop.xlane.xlu0 %4306
    %v4308 = vadd.f32 %v4307, 1.0
    %v4309 = vrcp.pop %v4308
    %v4310 = vmul.f32 %v4307, %v4309
    %v4311 = vadd.f32 %v4307, 1e-08
    %v4312 = vrsqrt.pop %v4311
    %v4313 = vmul.f32 %v4310, %v4312
    %v4314 = vmul.f32 %v4313, %v4267
    %v4315 = vmul.f32 %v4279, %v4279
    %4317 = vrot.lane.b32.xlu0 %v4315, 96
    %v4318 = vpop.permute.xlu0 %4317
    %v4320 = vsel %vm94, %v4318, 0.0
    %4321 = vadd.xlane.f32.xlu0 %v4320
    %v4322 = vpop.xlane.xlu0 %4321
    %v4323 = vadd.f32 %v4322, 1.0
    %v4324 = vrcp.pop %v4323
    %v4325 = vmul.f32 %v4322, %v4324
    %v4326 = vadd.f32 %v4322, 1e-08
    %v4327 = vrsqrt.pop %v4326
    %v4328 = vmul.f32 %v4325, %v4327
    %v4329 = vmul.f32 %v4328, %v4279
    %v4330 = vmul.f32 %v4291, %v4291
    %4332 = vrot.lane.b32.xlu0 %v4330, 64
    %v4333 = vpop.permute.xlu0 %4332
    %v4335 = vsel %vm94, %v4333, 0.0
    %4336 = vadd.xlane.f32.xlu0 %v4335
    %v4337 = vpop.xlane.xlu0 %4336
    %v4338 = vadd.f32 %v4337, 1.0
    %v4339 = vrcp.pop %v4338
    %v4340 = vmul.f32 %v4337, %v4339
    %v4341 = vadd.f32 %v4337, 1e-08
    %v4342 = vrsqrt.pop %v4341
    %v4343 = vmul.f32 %v4340, %v4342
    %v4344 = vmul.f32 %v4343, %v4291
    %v4345 = vmul.f32 %v4303, %v4303
    %4347 = vrot.lane.b32.xlu0 %v4345, 32
    %v4348 = vpop.permute.xlu0 %4347
    %v4350 = vsel %vm94, %v4348, 0.0
    %4351 = vadd.xlane.f32.xlu0 %v4350
    %v4352 = vpop.xlane.xlu0 %4351
    %v4353 = vadd.f32 %v4352, 1.0
    %v4354 = vrcp.pop %v4353
    %v4355 = vmul.f32 %v4352, %v4354
    %v4356 = vadd.f32 %v4352, 1e-08
    %v4357 = vrsqrt.pop %v4356
    %v4358 = vmul.f32 %v4355, %v4357
    %v4359 = vmul.f32 %v4358, %v4303
    %4361 = vrot.lane.b32.xlu0 %v4329, 96
    %v4362 = vpop.permute.xlu0 %4361
    %4365 = vrot.lane.b32.xlu0 %v4344, 64
    %v4366 = vpop.permute.xlu0 %4365
    %4369 = vrot.lane.b32.xlu0 %v4359, 32
    %v4370 = vpop.permute.xlu0 %4369
    %v4372 = vsel %vm667, %v4314, %v4362
    %v4373 = vsel %vm669, %v4372, %v4366
    %v4374 = vsel %vm671, %v4373, %v4370
    %v4375 = vld [vmem:[%s16] sm:$0xff]
    %v4376 = vld [vmem:[%s16 + $0x8] sm:$0xff]
    %v4377 = vld [vmem:[%s16 + $0x10] sm:$0xff]
    %v4378 = vld [vmem:[%s16 + $0x18] sm:$0xff]
    %v4379 = vld [vmem:[%s17] sm:$0x1]
    %v4381 = vlaneseq
    %v4382 = vshrl.u32 %v4381, 7
    %v4383 = vsub.s32 0, %v4382
    %v4384 = vrot.slane %v4379, %v4383
    %v4387 = vsel %vm94, %v3978, 0
    %4389 = vmatprep.subr.mxu0 0.0
    %4390 = vmatpush1.msra.mxu0 %v4375
    %4391 = vmatprep.subr.mxu0 0.0
    %4392 = vmatpush1.msra.mxu0 %v4376
    %4393 = vmatprep.subr.mxu0 0.0
    %4394 = vmatpush1.msra.mxu0 %v4377
    %4395 = vmatprep.subr.mxu0 0.0
    %4396 = vmatpush1.msra.mxu0 %v4378
    %4397 = vmatprep.subr.mxu0 0.0
    %4398 = vmatpush1.msra.mxu0 0.0
    %4399 = vmatprep.subr.mxu0 0.0
    %4400 = vmatpush1.msra.mxu0 0.0
    %4401 = vmatprep.subr.mxu0 0.0
    %4402 = vmatpush1.msra.mxu0 0.0
    %4403 = vmatprep.subr.mxu0 0.0
    %4404 = vmatpush1.msra.mxu0 0.0
    %4405 = vmatprep.subr.mxu0 0.0
    %4406 = vmatpush1.msra.mxu0 0.0
    %4407 = vmatprep.subr.mxu0 0.0
    %4408 = vmatpush1.msra.mxu0 0.0
    %4409 = vmatprep.subr.mxu0 0.0
    %4410 = vmatpush1.msra.mxu0 0.0
    %4411 = vmatprep.subr.mxu0 0.0
    %4412 = vmatpush1.msra.mxu0 0.0
    %4413 = vmatprep.subr.mxu0 0.0
    %4414 = vmatpush1.msra.mxu0 0.0
    %4415 = vmatprep.subr.mxu0 0.0
    %4416 = vmatpush1.msra.mxu0 0.0
    %4417 = vmatprep.subr.mxu0 0.0
    %4418 = vmatpush1.msra.mxu0 0.0
    %4419 = vmatprep.subr.mxu0 0.0
    %4420 = vmatpush1.msra.mxu0 0.0
    %4421 = vmatprep.subr.mxu0 0.0
    %4422 = vmatpush1.msra.mxu0 0.0
    %4423 = vmatprep.subr.mxu0 0.0
    %4424 = vmatpush1.msra.mxu0 0.0
    %4425 = vmatprep.subr.mxu0 0.0
    %4426 = vmatpush1.msra.mxu0 0.0
    %4427 = vmatprep.subr.mxu0 0.0
    %4428 = vmatpush1.msra.mxu0 0.0
    %4429 = vmatprep.subr.mxu0 0.0
    %4430 = vmatpush1.msra.mxu0 0.0
    %4431 = vmatprep.subr.mxu0 0.0
    %4432 = vmatpush1.msra.mxu0 0.0
    %4433 = vmatprep.subr.mxu0 0.0
    %4434 = vmatpush1.msra.mxu0 0.0
    %4435 = vmatprep.subr.mxu0 0.0
    %4436 = vmatpush1.msra.mxu0 0.0
    %4437 = vmatprep.subr.mxu0 0.0
    %4438 = vmatpush1.msra.mxu0 0.0
    %4439 = vmatprep.subr.mxu0 0.0
    %4440 = vmatpush1.msra.mxu0 0.0
    %4441 = vmatprep.subr.mxu0 0.0
    %4442 = vmatpush1.msra.mxu0 0.0
    %4443 = vmatprep.subr.mxu0 0.0
    %4444 = vmatpush1.msra.mxu0 0.0
    %4445 = vmatprep.subr.mxu0 0.0
    %4446 = vmatpush1.msra.mxu0 0.0
    %4447 = vmatprep.subr.mxu0 0.0
    %4448 = vmatpush1.msra.mxu0 0.0
    %4449 = vmatprep.subr.mxu0 0.0
    %4450 = vmatpush1.msra.mxu0 0.0
    %4451 = vmatprep.subr.mxu0 0.0
    %4452 = vmatpush1.msra.mxu0 0.0
    %4453 = vmatprep.mubr.f32.mxu0 0.0
    %4454 = vmatmul.mubr.f32.gmra.mrb[0].mxu0 %v4387
    %v4455 = vpop.f32.mrb[0].mxu0
    %v4456 = vadd.f32 %v4384, %v4455
    %v4457 = vpop.f32.mrb[0].mxu0
    %4458 = vdwg.mxu0
    %v4459 = vld [vmem:[%s18] sm:$0xff]
    %v4460 = vld [vmem:[%s18 + $0x8] sm:$0xff]
    %v4461 = vld [vmem:[%s18 + $0x10] sm:$0xff]
    %v4462 = vld [vmem:[%s18 + $0x18] sm:$0xff]
    %v4463 = vld [vmem:[%s19] sm:$0x1]
    %v4465 = vlaneseq
    %v4466 = vshrl.u32 %v4465, 7
    %v4467 = vsub.s32 0, %v4466
    %v4468 = vrot.slane %v4463, %v4467
    %v4471 = vsel %vm94, %v672, 0
    %4473 = vmatprep.subr.mxu0 0.0
    %4474 = vmatpush1.msra.mxu0 %v4459
    %4475 = vmatprep.subr.mxu0 0.0
    %4476 = vmatpush1.msra.mxu0 %v4460
    %4477 = vmatprep.subr.mxu0 0.0
    %4478 = vmatpush1.msra.mxu0 %v4461
    %4479 = vmatprep.subr.mxu0 0.0
    %4480 = vmatpush1.msra.mxu0 %v4462
    %4481 = vmatprep.subr.mxu0 0.0
    %4482 = vmatpush1.msra.mxu0 0.0
    %4483 = vmatprep.subr.mxu0 0.0
    %4484 = vmatpush1.msra.mxu0 0.0
    %4485 = vmatprep.subr.mxu0 0.0
    %4486 = vmatpush1.msra.mxu0 0.0
    %4487 = vmatprep.subr.mxu0 0.0
    %4488 = vmatpush1.msra.mxu0 0.0
    %4489 = vmatprep.subr.mxu0 0.0
    %4490 = vmatpush1.msra.mxu0 0.0
    %4491 = vmatprep.subr.mxu0 0.0
    %4492 = vmatpush1.msra.mxu0 0.0
    %4493 = vmatprep.subr.mxu0 0.0
    %4494 = vmatpush1.msra.mxu0 0.0
    %4495 = vmatprep.subr.mxu0 0.0
    %4496 = vmatpush1.msra.mxu0 0.0
    %4497 = vmatprep.subr.mxu0 0.0
    %4498 = vmatpush1.msra.mxu0 0.0
    %4499 = vmatprep.subr.mxu0 0.0
    %4500 = vmatpush1.msra.mxu0 0.0
    %4501 = vmatprep.subr.mxu0 0.0
    %4502 = vmatpush1.msra.mxu0 0.0
    %4503 = vmatprep.subr.mxu0 0.0
    %4504 = vmatpush1.msra.mxu0 0.0
    %4505 = vmatprep.subr.mxu0 0.0
    %4506 = vmatpush1.msra.mxu0 0.0
    %4507 = vmatprep.subr.mxu0 0.0
    %4508 = vmatpush1.msra.mxu0 0.0
    %4509 = vmatprep.subr.mxu0 0.0
    %4510 = vmatpush1.msra.mxu0 0.0
    %4511 = vmatprep.subr.mxu0 0.0
    %4512 = vmatpush1.msra.mxu0 0.0
    %4513 = vmatprep.subr.mxu0 0.0
    %4514 = vmatpush1.msra.mxu0 0.0
    %4515 = vmatprep.subr.mxu0 0.0
    %4516 = vmatpush1.msra.mxu0 0.0
    %4517 = vmatprep.subr.mxu0 0.0
    %4518 = vmatpush1.msra.mxu0 0.0
    %4519 = vmatprep.subr.mxu0 0.0
    %4520 = vmatpush1.msra.mxu0 0.0
    %4521 = vmatprep.subr.mxu0 0.0
    %4522 = vmatpush1.msra.mxu0 0.0
    %4523 = vmatprep.subr.mxu0 0.0
    %4524 = vmatpush1.msra.mxu0 0.0
    %4525 = vmatprep.subr.mxu0 0.0
    %4526 = vmatpush1.msra.mxu0 0.0
    %4527 = vmatprep.subr.mxu0 0.0
    %4528 = vmatpush1.msra.mxu0 0.0
    %4529 = vmatprep.subr.mxu0 0.0
    %4530 = vmatpush1.msra.mxu0 0.0
    %4531 = vmatprep.subr.mxu0 0.0
    %4532 = vmatpush1.msra.mxu0 0.0
    %4533 = vmatprep.subr.mxu0 0.0
    %4534 = vmatpush1.msra.mxu0 0.0
    %4535 = vmatprep.subr.mxu0 0.0
    %4536 = vmatpush1.msra.mxu0 0.0
    %4537 = vmatprep.mubr.f32.mxu0 0.0
    %4538 = vmatmul.mubr.f32.gmra.mrb[0].mxu0 %v4471
    %v4539 = vpop.f32.mrb[0].mxu0
    %v4540 = vadd.f32 %v4468, %v4539
    %v4541 = vpop.f32.mrb[0].mxu0
    %4542 = vdwg.mxu0
    %v4544 = vsel %vm94, %v4456, 0
    %v4547 = vsel %vm94, %v4540, 0
    %4549 = vmatprep.subr.mxu0 0.0
    %4550 = vmatpush1.xpose.msra.mxu0 %v4547
    %4551 = vmatprep.subr.mxu0 0.0
    %4552 = vmatpush1.xpose.msra.mxu0 0.0
    %4553 = vmatprep.subr.mxu0 0.0
    %4554 = vmatpush1.xpose.msra.mxu0 0.0
    %4555 = vmatprep.subr.mxu0 0.0
    %4556 = vmatpush1.xpose.msra.mxu0 0.0
    %4557 = vmatprep.subr.mxu0 0.0
    %4558 = vmatpush1.xpose.msra.mxu0 0.0
    %4559 = vmatprep.subr.mxu0 0.0
    %4560 = vmatpush1.xpose.msra.mxu0 0.0
    %4561 = vmatprep.subr.mxu0 0.0
    %4562 = vmatpush1.xpose.msra.mxu0 0.0
    %4563 = vmatprep.subr.mxu0 0.0
    %4564 = vmatpush1.xpose.msra.mxu0 0.0
    %4565 = vmatprep.subr.mxu0 0.0
    %4566 = vmatpush1.xpose.msra.mxu0 0.0
    %4567 = vmatprep.subr.mxu0 0.0
    %4568 = vmatpush1.xpose.msra.mxu0 0.0
    %4569 = vmatprep.subr.mxu0 0.0
    %4570 = vmatpush1.xpose.msra.mxu0 0.0
    %4571 = vmatprep.subr.mxu0 0.0
    %4572 = vmatpush1.xpose.msra.mxu0 0.0
    %4573 = vmatprep.subr.mxu0 0.0
    %4574 = vmatpush1.xpose.msra.mxu0 0.0
    %4575 = vmatprep.subr.mxu0 0.0
    %4576 = vmatpush1.xpose.msra.mxu0 0.0
    %4577 = vmatprep.subr.mxu0 0.0
    %4578 = vmatpush1.xpose.msra.mxu0 0.0
    %4579 = vmatprep.subr.mxu0 0.0
    %4580 = vmatpush1.xpose.msra.mxu0 0.0
    %4581 = vmatprep.subr.mxu0 0.0
    %4582 = vmatpush1.xpose.msra.mxu0 0.0
    %4583 = vmatprep.subr.mxu0 0.0
    %4584 = vmatpush1.xpose.msra.mxu0 0.0
    %4585 = vmatprep.subr.mxu0 0.0
    %4586 = vmatpush1.xpose.msra.mxu0 0.0
    %4587 = vmatprep.subr.mxu0 0.0
    %4588 = vmatpush1.xpose.msra.mxu0 0.0
    %4589 = vmatprep.subr.mxu0 0.0
    %4590 = vmatpush1.xpose.msra.mxu0 0.0
    %4591 = vmatprep.subr.mxu0 0.0
    %4592 = vmatpush1.xpose.msra.mxu0 0.0
    %4593 = vmatprep.subr.mxu0 0.0
    %4594 = vmatpush1.xpose.msra.mxu0 0.0
    %4595 = vmatprep.subr.mxu0 0.0
    %4596 = vmatpush1.xpose.msra.mxu0 0.0
    %4597 = vmatprep.subr.mxu0 0.0
    %4598 = vmatpush1.xpose.msra.mxu0 0.0
    %4599 = vmatprep.subr.mxu0 0.0
    %4600 = vmatpush1.xpose.msra.mxu0 0.0
    %4601 = vmatprep.subr.mxu0 0.0
    %4602 = vmatpush1.xpose.msra.mxu0 0.0
    %4603 = vmatprep.subr.mxu0 0.0
    %4604 = vmatpush1.xpose.msra.mxu0 0.0
    %4605 = vmatprep.subr.mxu0 0.0
    %4606 = vmatpush1.xpose.msra.mxu0 0.0
    %4607 = vmatprep.subr.mxu0 0.0
    %4608 = vmatpush1.xpose.msra.mxu0 0.0
    %4609 = vmatprep.subr.mxu0 0.0
    %4610 = vmatpush1.xpose.msra.mxu0 0.0
    %4611 = vmatprep.subr.mxu0 0.0
    %4612 = vmatpush1.xpose.msra.mxu0 0.0
    %4613 = vmatprep.mubr.f32.mxu0 0.0
    %4614 = vmatmul.mubr.f32.gmra.mrb[0].mxu0 %v4544
    %v4615 = vpop.f32.mrb[0].mxu0
    %v4616 = vadd.f32 0.0, %v4615
    %v4617 = vpop.f32.mrb[0].mxu0
    %4618 = vdwg.mxu0
    %v4619 = vmul.f32 %v4616, 0.17677669
    %vm4620 = vcmask 27648
    %v4621 = vsel %vm4620, %v4619, -inf
    %4622 = vmax.xlane.f32.xlu0 %v4621
    %v4623 = vpop.xlane.xlu0 %4622
    %v4624 = vsub.f32 %v4619, %v4623
    %v4625 = vmul.f32 %v4624, 1.442695
    %v4626 = vpow.pop %v4625
    %v4627 = vsel %vm4620, %v4626, 0.0
    %4628 = vadd.xlane.f32.xlu0 %v4627
    %v4629 = vpop.xlane.xlu0 %4628
    %v4630 = vrcp.pop %v4629
    %v4631 = vmul.f32 %v4626, %v4630
    %4632 = vrot.lane.b32.xlu0 %v4540, 96
    %v4633 = vpop.permute.xlu0 %4632
    %v4635 = vsel %vm263, %v4631, 0
    %vm4637 = vcmask 1043456
    %v4638 = vsel %vm4637, %v4633, 0
    %4640 = vmatprep.subr.mxu0 0.0
    %4641 = vmatpush1.msra.mxu0 %v4638
    %4642 = vmatprep.subr.mxu0 0.0
    %4643 = vmatpush1.msra.mxu0 0.0
    %4644 = vmatprep.subr.mxu0 0.0
    %4645 = vmatpush1.msra.mxu0 0.0
    %4646 = vmatprep.subr.mxu0 0.0
    %4647 = vmatpush1.msra.mxu0 0.0
    %4648 = vmatprep.subr.mxu0 0.0
    %4649 = vmatpush1.msra.mxu0 0.0
    %4650 = vmatprep.subr.mxu0 0.0
    %4651 = vmatpush1.msra.mxu0 0.0
    %4652 = vmatprep.subr.mxu0 0.0
    %4653 = vmatpush1.msra.mxu0 0.0
    %4654 = vmatprep.subr.mxu0 0.0
    %4655 = vmatpush1.msra.mxu0 0.0
    %4656 = vmatprep.subr.mxu0 0.0
    %4657 = vmatpush1.msra.mxu0 0.0
    %4658 = vmatprep.subr.mxu0 0.0
    %4659 = vmatpush1.msra.mxu0 0.0
    %4660 = vmatprep.subr.mxu0 0.0
    %4661 = vmatpush1.msra.mxu0 0.0
    %4662 = vmatprep.subr.mxu0 0.0
    %4663 = vmatpush1.msra.mxu0 0.0
    %4664 = vmatprep.subr.mxu0 0.0
    %4665 = vmatpush1.msra.mxu0 0.0
    %4666 = vmatprep.subr.mxu0 0.0
    %4667 = vmatpush1.msra.mxu0 0.0
    %4668 = vmatprep.subr.mxu0 0.0
    %4669 = vmatpush1.msra.mxu0 0.0
    %4670 = vmatprep.subr.mxu0 0.0
    %4671 = vmatpush1.msra.mxu0 0.0
    %4672 = vmatprep.subr.mxu0 0.0
    %4673 = vmatpush1.msra.mxu0 0.0
    %4674 = vmatprep.subr.mxu0 0.0
    %4675 = vmatpush1.msra.mxu0 0.0
    %4676 = vmatprep.subr.mxu0 0.0
    %4677 = vmatpush1.msra.mxu0 0.0
    %4678 = vmatprep.subr.mxu0 0.0
    %4679 = vmatpush1.msra.mxu0 0.0
    %4680 = vmatprep.subr.mxu0 0.0
    %4681 = vmatpush1.msra.mxu0 0.0
    %4682 = vmatprep.subr.mxu0 0.0
    %4683 = vmatpush1.msra.mxu0 0.0
    %4684 = vmatprep.subr.mxu0 0.0
    %4685 = vmatpush1.msra.mxu0 0.0
    %4686 = vmatprep.subr.mxu0 0.0
    %4687 = vmatpush1.msra.mxu0 0.0
    %4688 = vmatprep.subr.mxu0 0.0
    %4689 = vmatpush1.msra.mxu0 0.0
    %4690 = vmatprep.subr.mxu0 0.0
    %4691 = vmatpush1.msra.mxu0 0.0
    %4692 = vmatprep.subr.mxu0 0.0
    %4693 = vmatpush1.msra.mxu0 0.0
    %4694 = vmatprep.subr.mxu0 0.0
    %4695 = vmatpush1.msra.mxu0 0.0
    %4696 = vmatprep.subr.mxu0 0.0
    %4697 = vmatpush1.msra.mxu0 0.0
    %4698 = vmatprep.subr.mxu0 0.0
    %4699 = vmatpush1.msra.mxu0 0.0
    %4700 = vmatprep.subr.mxu0 0.0
    %4701 = vmatpush1.msra.mxu0 0.0
    %4702 = vmatprep.subr.mxu0 0.0
    %4703 = vmatpush1.msra.mxu0 0.0
    %4704 = vmatprep.mubr.f32.mxu0 0.0
    %4705 = vmatmul.mubr.f32.gmra.mrb[0].mxu0 %v4635
    %v4706 = vpop.f32.mrb[0].mxu0
    %v4707 = vadd.f32 0.0, %v4706
    %v4708 = vpop.f32.mrb[0].mxu0
    %4709 = vdwg.mxu0
    %4710 = vst.msk [vmem:[#allocation4] sm:$0xf] %vm4620, %v4631
    %v4711 = vmul.f32 %v4707, %v3978
    %v4712 = vsub.f32 %v4707, %v3978
    %4713 = vrot.lane.b32.xlu0 %v3978, 32
    %v4714 = vpop.permute.xlu0 %4713
    %4717 = vrot.lane.b32.xlu0 %v4711, 64
    %v4718 = vpop.permute.xlu0 %4717
    %4721 = vrot.lane.b32.xlu0 %v4712, 96
    %v4722 = vpop.permute.xlu0 %4721
    %v4724 = vsel %vm94, %v4707, %v4714
    %vm4725 = vcmask 523264
    %v4726 = vsel %vm4725, %v4724, %v4718
    %vm4727 = vcmask 785408
    %v4728 = vsel %vm4727, %v4726, %v4722
    %v4729 = vld [vmem:[%s20] sm:$0xff]
    %v4730 = vld [vmem:[%s20 + $0x8] sm:$0xff]
    %v4731 = vld [vmem:[%s20 + $0x10] sm:$0xff]
    %v4732 = vld [vmem:[%s20 + $0x18] sm:$0xff]
    %v4733 = vld [vmem:[%s20 + $0x20] sm:$0xff]
    %v4734 = vld [vmem:[%s20 + $0x28] sm:$0xff]
    %v4735 = vld [vmem:[%s20 + $0x30] sm:$0xff]
    %v4736 = vld [vmem:[%s20 + $0x38] sm:$0xff]
    %v4737 = vld [vmem:[%s20 + $0x40] sm:$0xff]
    %v4738 = vld [vmem:[%s20 + $0x48] sm:$0xff]
    %v4739 = vld [vmem:[%s20 + $0x50] sm:$0xff]
    %v4740 = vld [vmem:[%s20 + $0x58] sm:$0xff]
    %v4741 = vld [vmem:[%s20 + $0x60] sm:$0xff]
    %v4742 = vld [vmem:[%s20 + $0x68] sm:$0xff]
    %v4743 = vld [vmem:[%s20 + $0x70] sm:$0xff]
    %v4744 = vld [vmem:[%s20 + $0x78] sm:$0xff]
    %v4745 = vld [vmem:[%s21] sm:$0x1]
    %v4747 = vlaneseq
    %v4748 = vshrl.u32 %v4747, 7
    %v4749 = vsub.s32 0, %v4748
    %v4750 = vrot.slane %v4745, %v4749
    %4752 = vmatprep.subr.mxu0 0.0
    %4753 = vmatpush1.msra.mxu0 %v4729
    %4754 = vmatprep.subr.mxu0 0.0
    %4755 = vmatpush1.msra.mxu0 %v4730
    %4756 = vmatprep.subr.mxu0 0.0
    %4757 = vmatpush1.msra.mxu0 %v4731
    %4758 = vmatprep.subr.mxu0 0.0
    %4759 = vmatpush1.msra.mxu0 %v4732
    %4760 = vmatprep.subr.mxu0 0.0
    %4761 = vmatpush1.msra.mxu0 %v4733
    %4762 = vmatprep.subr.mxu0 0.0
    %4763 = vmatpush1.msra.mxu0 %v4734
    %4764 = vmatprep.subr.mxu0 0.0
    %4765 = vmatpush1.msra.mxu0 %v4735
    %4766 = vmatprep.subr.mxu0 0.0
    %4767 = vmatpush1.msra.mxu0 %v4736
    %4768 = vmatprep.subr.mxu0 0.0
    %4769 = vmatpush1.msra.mxu0 %v4737
    %4770 = vmatprep.subr.mxu0 0.0
    %4771 = vmatpush1.msra.mxu0 %v4738
    %4772 = vmatprep.subr.mxu0 0.0
    %4773 = vmatpush1.msra.mxu0 %v4739
    %4774 = vmatprep.subr.mxu0 0.0
    %4775 = vmatpush1.msra.mxu0 %v4740
    %4776 = vmatprep.subr.mxu0 0.0
    %4777 = vmatpush1.msra.mxu0 %v4741
    %4778 = vmatprep.subr.mxu0 0.0
    %4779 = vmatpush1.msra.mxu0 %v4742
    %4780 = vmatprep.subr.mxu0 0.0
    %4781 = vmatpush1.msra.mxu0 %v4743
    %4782 = vmatprep.subr.mxu0 0.0
    %4783 = vmatpush1.msra.mxu0 %v4744
    %4784 = vmatprep.subr.mxu0 0.0
    %4785 = vmatpush1.msra.mxu0 0.0
    %4786 = vmatprep.subr.mxu0 0.0
    %4787 = vmatpush1.msra.mxu0 0.0
    %4788 = vmatprep.subr.mxu0 0.0
    %4789 = vmatpush1.msra.mxu0 0.0
    %4790 = vmatprep.subr.mxu0 0.0
    %4791 = vmatpush1.msra.mxu0 0.0
    %4792 = vmatprep.subr.mxu0 0.0
    %4793 = vmatpush1.msra.mxu0 0.0
    %4794 = vmatprep.subr.mxu0 0.0
    %4795 = vmatpush1.msra.mxu0 0.0
    %4796 = vmatprep.subr.mxu0 0.0
    %4797 = vmatpush1.msra.mxu0 0.0
    %4798 = vmatprep.subr.mxu0 0.0
    %4799 = vmatpush1.msra.mxu0 0.0
    %4800 = vmatprep.subr.mxu0 0.0
    %4801 = vmatpush1.msra.mxu0 0.0
    %4802 = vmatprep.subr.mxu0 0.0
    %4803 = vmatpush1.msra.mxu0 0.0
    %4804 = vmatprep.subr.mxu0 0.0
    %4805 = vmatpush1.msra.mxu0 0.0
    %4806 = vmatprep.subr.mxu0 0.0
    %4807 = vmatpush1.msra.mxu0 0.0
    %4808 = vmatprep.subr.mxu0 0.0
    %4809 = vmatpush1.msra.mxu0 0.0
    %4810 = vmatprep.subr.mxu0 0.0
    %4811 = vmatpush1.msra.mxu0 0.0
    %4812 = vmatprep.subr.mxu0 0.0
    %4813 = vmatpush1.msra.mxu0 0.0
    %4814 = vmatprep.subr.mxu0 0.0
    %4815 = vmatpush1.msra.mxu0 0.0
    %4816 = vmatprep.mubr.f32.mxu0 0.0
    %4817 = vmatmul.mubr.f32.gmra.mrb[0].mxu0 %v4728
    %v4818 = vpop.f32.mrb[0].mxu0
    %v4819 = vadd.f32 %v4750, %v4818
    %v4820 = vpop.f32.mrb[0].mxu0
    %4821 = vdwg.mxu0
    %v4822 = vsub.f32 0.0, %v4819
    %v4823 = vmul.f32 %v4822, 1.442695
    %v4824 = vpow.pop %v4823
    %v4825 = vadd.f32 %v4824, 1.0
    %v4826 = vrcp.pop %v4825
    %v4827 = vtanh.pop %v4819
    %4829 = vrot.lane.b32.xlu0 %v4827, 96
    %v4830 = vpop.permute.xlu0 %4829
    %v4832 = vmul.f32 %v4826, %v4830
    %v4833 = vsub.f32 1.0, %v4826
    %v4834 = vmul.f32 %v4833, %v4707
    %v4835 = vadd.f32 %v4832, %v4834
    %vm4836 = vcmask 257024
    %v4837 = vsel %vm4836, %v4835, 0.0
    %v4838 = vrot.slane %v4837, 4
    %v4839 = vadd.f32 %v4837, %v4838
    %v4840 = vrot.slane %v4839, 2
    %v4841 = vadd.f32 %v4839, %v4840
    %v4842 = vrot.slane %v4841, 1
    %v4843 = vadd.f32 %v4841, %v4842
    %v4844 = vld [vmem:[%s22] sm:$0xff]
    %v4845 = vld [vmem:[%s22 + $0x8] sm:$0xff]
    %v4846 = vld [vmem:[%s22 + $0x10] sm:$0xff]
    %v4847 = vld [vmem:[%s22 + $0x18] sm:$0xff]
    %v4848 = vld [vmem:[%s23] sm:$0x1]
    %v4850 = vsel %vm94, %v4843, 0
    %4852 = vmatprep.subr.mxu0 0.0
    %4853 = vmatpush1.msra.mxu0 %v4844
    %4854 = vmatprep.subr.mxu0 0.0
    %4855 = vmatpush1.msra.mxu0 %v4845
    %4856 = vmatprep.subr.mxu0 0.0
    %4857 = vmatpush1.msra.mxu0 %v4846
    %4858 = vmatprep.subr.mxu0 0.0
    %4859 = vmatpush1.msra.mxu0 %v4847
    %4860 = vmatprep.subr.mxu0 0.0
    %4861 = vmatpush1.msra.mxu0 0.0
    %4862 = vmatprep.subr.mxu0 0.0
    %4863 = vmatpush1.msra.mxu0 0.0
    %4864 = vmatprep.subr.mxu0 0.0
    %4865 = vmatpush1.msra.mxu0 0.0
    %4866 = vmatprep.subr.mxu0 0.0
    %4867 = vmatpush1.msra.mxu0 0.0
    %4868 = vmatprep.subr.mxu0 0.0
    %4869 = vmatpush1.msra.mxu0 0.0
    %4870 = vmatprep.subr.mxu0 0.0
    %4871 = vmatpush1.msra.mxu0 0.0
    %4872 = vmatprep.subr.mxu0 0.0
    %4873 = vmatpush1.msra.mxu0 0.0
    %4874 = vmatprep.subr.mxu0 0.0
    %4875 = vmatpush1.msra.mxu0 0.0
    %4876 = vmatprep.subr.mxu0 0.0
    %4877 = vmatpush1.msra.mxu0 0.0
    %4878 = vmatprep.subr.mxu0 0.0
    %4879 = vmatpush1.msra.mxu0 0.0
    %4880 = vmatprep.subr.mxu0 0.0
    %4881 = vmatpush1.msra.mxu0 0.0
    %4882 = vmatprep.subr.mxu0 0.0
    %4883 = vmatpush1.msra.mxu0 0.0
    %4884 = vmatprep.subr.mxu0 0.0
    %4885 = vmatpush1.msra.mxu0 0.0
    %4886 = vmatprep.subr.mxu0 0.0
    %4887 = vmatpush1.msra.mxu0 0.0
    %4888 = vmatprep.subr.mxu0 0.0
    %4889 = vmatpush1.msra.mxu0 0.0
    %4890 = vmatprep.subr.mxu0 0.0
    %4891 = vmatpush1.msra.mxu0 0.0
    %4892 = vmatprep.subr.mxu0 0.0
    %4893 = vmatpush1.msra.mxu0 0.0
    %4894 = vmatprep.subr.mxu0 0.0
    %4895 = vmatpush1.msra.mxu0 0.0
    %4896 = vmatprep.subr.mxu0 0.0
    %4897 = vmatpush1.msra.mxu0 0.0
    %4898 = vmatprep.subr.mxu0 0.0
    %4899 = vmatpush1.msra.mxu0 0.0
    %4900 = vmatprep.subr.mxu0 0.0
    %4901 = vmatpush1.msra.mxu0 0.0
    %4902 = vmatprep.subr.mxu0 0.0
    %4903 = vmatpush1.msra.mxu0 0.0
    %4904 = vmatprep.subr.mxu0 0.0
    %4905 = vmatpush1.msra.mxu0 0.0
    %4906 = vmatprep.subr.mxu0 0.0
    %4907 = vmatpush1.msra.mxu0 0.0
    %4908 = vmatprep.subr.mxu0 0.0
    %4909 = vmatpush1.msra.mxu0 0.0
    %4910 = vmatprep.subr.mxu0 0.0
    %4911 = vmatpush1.msra.mxu0 0.0
    %4912 = vmatprep.subr.mxu0 0.0
    %4913 = vmatpush1.msra.mxu0 0.0
    %4914 = vmatprep.subr.mxu0 0.0
    %4915 = vmatpush1.msra.mxu0 0.0
    %4916 = vmatprep.mubr.f32.mxu0 0.0
    %4917 = vmatmul.mubr.f32.gmra.mrb[0].mxu0 %v4850
    %v4918 = vpop.f32.mrb[0].mxu0
    %v4919 = vadd.f32 %v4848, %v4918
    %v4920 = vpop.f32.mrb[0].mxu0
    %4921 = vdwg.mxu0
    %vm4922 = vcmask 32768
    %v4923 = vsel %vm4922, %v4919, -inf
    %4924 = vmax.xlane.f32.xlu0 %v4923
    %v4925 = vpop.xlane.xlu0 %4924
    %v4926 = vsub.f32 %v4919, %v4925
    %v4927 = vmul.f32 %v4926, 1.442695
    %v4928 = vpow.pop %v4927
    %v4929 = vsel %vm4922, %v4928, 0.0
    %4930 = vadd.xlane.f32.xlu0 %v4929
    %v4931 = vpop.xlane.xlu0 %4930
    %v4932 = vlog2.pop %v4931
    %v4933 = vmul.f32 %v4932, 0.6931472
    %v4934 = vsub.f32 %v4926, %v4933
    %4935 = vst.msk [vmem:[#allocation2] sm:$0x1] %vm4922, %v4934
    %v4936 = vld [vmem:[%s16] sm:$0xff]
    %v4937 = vld [vmem:[%s16 + $0x8] sm:$0xff]
    %v4938 = vld [vmem:[%s16 + $0x10] sm:$0xff]
    %v4939 = vld [vmem:[%s16 + $0x18] sm:$0xff]
    %v4940 = vld [vmem:[%s17] sm:$0x1]
    %v4942 = vlaneseq
    %v4943 = vshrl.u32 %v4942, 7
    %v4944 = vsub.s32 0, %v4943
    %v4945 = vrot.slane %v4940, %v4944
    %v4948 = vsel %vm94, %v4374, 0
    %4950 = vmatprep.subr.mxu0 0.0
    %4951 = vmatpush1.msra.mxu0 %v4936
    %4952 = vmatprep.subr.mxu0 0.0
    %4953 = vmatpush1.msra.mxu0 %v4937
    %4954 = vmatprep.subr.mxu0 0.0
    %4955 = vmatpush1.msra.mxu0 %v4938
    %4956 = vmatprep.subr.mxu0 0.0
    %4957 = vmatpush1.msra.mxu0 %v4939
    %4958 = vmatprep.subr.mxu0 0.0
    %4959 = vmatpush1.msra.mxu0 0.0
    %4960 = vmatprep.subr.mxu0 0.0
    %4961 = vmatpush1.msra.mxu0 0.0
    %4962 = vmatprep.subr.mxu0 0.0
    %4963 = vmatpush1.msra.mxu0 0.0
    %4964 = vmatprep.subr.mxu0 0.0
    %4965 = vmatpush1.msra.mxu0 0.0
    %4966 = vmatprep.subr.mxu0 0.0
    %4967 = vmatpush1.msra.mxu0 0.0
    %4968 = vmatprep.subr.mxu0 0.0
    %4969 = vmatpush1.msra.mxu0 0.0
    %4970 = vmatprep.subr.mxu0 0.0
    %4971 = vmatpush1.msra.mxu0 0.0
    %4972 = vmatprep.subr.mxu0 0.0
    %4973 = vmatpush1.msra.mxu0 0.0
    %4974 = vmatprep.subr.mxu0 0.0
    %4975 = vmatpush1.msra.mxu0 0.0
    %4976 = vmatprep.subr.mxu0 0.0
    %4977 = vmatpush1.msra.mxu0 0.0
    %4978 = vmatprep.subr.mxu0 0.0
    %4979 = vmatpush1.msra.mxu0 0.0
    %4980 = vmatprep.subr.mxu0 0.0
    %4981 = vmatpush1.msra.mxu0 0.0
    %4982 = vmatprep.subr.mxu0 0.0
    %4983 = vmatpush1.msra.mxu0 0.0
    %4984 = vmatprep.subr.mxu0 0.0
    %4985 = vmatpush1.msra.mxu0 0.0
    %4986 = vmatprep.subr.mxu0 0.0
    %4987 = vmatpush1.msra.mxu0 0.0
    %4988 = vmatprep.subr.mxu0 0.0
    %4989 = vmatpush1.msra.mxu0 0.0
    %4990 = vmatprep.subr.mxu0 0.0
    %4991 = vmatpush1.msra.mxu0 0.0
    %4992 = vmatprep.subr.mxu0 0.0
    %4993 = vmatpush1.msra.mxu0 0.0
    %4994 = vmatprep.subr.mxu0 0.0
    %4995 = vmatpush1.msra.mxu0 0.0
    %4996 = vmatprep.subr.mxu0 0.0
    %4997 = vmatpush1.msra.mxu0 0.0
    %4998 = vmatprep.subr.mxu0 0.0
    %4999 = vmatpush1.msra.mxu0 0.0
    %5000 = vmatprep.subr.mxu0 0.0
    %5001 = vmatpush1.msra.mxu0 0.0
    %5002 = vmatprep.subr.mxu0 0.0
    %5003 = vmatpush1.msra.mxu0 0.0
    %5004 = vmatprep.subr.mxu0 0.0
    %5005 = vmatpush1.msra.mxu0 0.0
    %5006 = vmatprep.subr.mxu0 0.0
    %5007 = vmatpush1.msra.mxu0 0.0
    %5008 = vmatprep.subr.mxu0 0.0
    %5009 = vmatpush1.msra.mxu0 0.0
    %5010 = vmatprep.subr.mxu0 0.0
    %5011 = vmatpush1.msra.mxu0 0.0
    %5012 = vmatprep.subr.mxu0 0.0
    %5013 = vmatpush1.msra.mxu0 0.0
    %5014 = vmatprep.mubr.f32.mxu0 0.0
    %5015 = vmatmul.mubr.f32.gmra.mrb[0].mxu0 %v4948
    %v5016 = vpop.f32.mrb[0].mxu0
    %v5017 = vadd.f32 %v4945, %v5016
    %v5018 = vpop.f32.mrb[0].mxu0
    %5019 = vdwg.mxu0
    %v5020 = vld [vmem:[%s18] sm:$0xff]
    %v5021 = vld [vmem:[%s18 + $0x8] sm:$0xff]
    %v5022 = vld [vmem:[%s18 + $0x10] sm:$0xff]
    %v5023 = vld [vmem:[%s18 + $0x18] sm:$0xff]
    %v5024 = vld [vmem:[%s19] sm:$0x1]
    %v5026 = vlaneseq
    %v5027 = vshrl.u32 %v5026, 7
    %v5028 = vsub.s32 0, %v5027
    %v5029 = vrot.slane %v5024, %v5028
    %v5032 = vsel %vm94, %v1068, 0
    %5034 = vmatprep.subr.mxu0 0.0
    %5035 = vmatpush1.msra.mxu0 %v5020
    %5036 = vmatprep.subr.mxu0 0.0
    %5037 = vmatpush1.msra.mxu0 %v5021
    %5038 = vmatprep.subr.mxu0 0.0
    %5039 = vmatpush1.msra.mxu0 %v5022
    %5040 = vmatprep.subr.mxu0 0.0
    %5041 = vmatpush1.msra.mxu0 %v5023
    %5042 = vmatprep.subr.mxu0 0.0
    %5043 = vmatpush1.msra.mxu0 0.0
    %5044 = vmatprep.subr.mxu0 0.0
    %5045 = vmatpush1.msra.mxu0 0.0
    %5046 = vmatprep.subr.mxu0 0.0
    %5047 = vmatpush1.msra.mxu0 0.0
    %5048 = vmatprep.subr.mxu0 0.0
    %5049 = vmatpush1.msra.mxu0 0.0
    %5050 = vmatprep.subr.mxu0 0.0
    %5051 = vmatpush1.msra.mxu0 0.0
    %5052 = vmatprep.subr.mxu0 0.0
    %5053 = vmatpush1.msra.mxu0 0.0
    %5054 = vmatprep.subr.mxu0 0.0
    %5055 = vmatpush1.msra.mxu0 0.0
    %5056 = vmatprep.subr.mxu0 0.0
    %5057 = vmatpush1.msra.mxu0 0.0
    %5058 = vmatprep.subr.mxu0 0.0
    %5059 = vmatpush1.msra.mxu0 0.0
    %5060 = vmatprep.subr.mxu0 0.0
    %5061 = vmatpush1.msra.mxu0 0.0
    %5062 = vmatprep.subr.mxu0 0.0
    %5063 = vmatpush1.msra.mxu0 0.0
    %5064 = vmatprep.subr.mxu0 0.0
    %5065 = vmatpush1.msra.mxu0 0.0
    %5066 = vmatprep.subr.mxu0 0.0
    %5067 = vmatpush1.msra.mxu0 0.0
    %5068 = vmatprep.subr.mxu0 0.0
    %5069 = vmatpush1.msra.mxu0 0.0
    %5070 = vmatprep.subr.mxu0 0.0
    %5071 = vmatpush1.msra.mxu0 0.0
    %5072 = vmatprep.subr.mxu0 0.0
    %5073 = vmatpush1.msra.mxu0 0.0
    %5074 = vmatprep.subr.mxu0 0.0
    %5075 = vmatpush1.msra.mxu0 0.0
    %5076 = vmatprep.subr.mxu0 0.0
    %5077 = vmatpush1.msra.mxu0 0.0
    %5078 = vmatprep.subr.mxu0 0.0
    %5079 = vmatpush1.msra.mxu0 0.0
    %5080 = vmatprep.subr.mxu0 0.0
    %5081 = vmatpush1.msra.mxu0 0.0
    %5082 = vmatprep.subr.mxu0 0.0
    %5083 = vmatpush1.msra.mxu0 0.0
    %5084 = vmatprep.subr.mxu0 0.0
    %5085 = vmatpush1.msra.mxu0 0.0
    %5086 = vmatprep.subr.mxu0 0.0
    %5087 = vmatpush1.msra.mxu0 0.0
    %5088 = vmatprep.subr.mxu0 0.0
    %5089 = vmatpush1.msra.mxu0 0.0
    %5090 = vmatprep.subr.mxu0 0.0
    %5091 = vmatpush1.msra.mxu0 0.0
    %5092 = vmatprep.subr.mxu0 0.0
    %5093 = vmatpush1.msra.mxu0 0.0
    %5094 = vmatprep.subr.mxu0 0.0
    %5095 = vmatpush1.msra.mxu0 0.0
    %5096 = vmatprep.subr.mxu0 0.0
    %5097 = vmatpush1.msra.mxu0 0.0
    %5098 = vmatprep.mubr.f32.mxu0 0.0
    %5099 = vmatmul.mubr.f32.gmra.mrb[0].mxu0 %v5032
    %v5100 = vpop.f32.mrb[0].mxu0
    %v5101 = vadd.f32 %v5029, %v5100
    %v5102 = vpop.f32.mrb[0].mxu0
    %5103 = vdwg.mxu0
    %v5105 = vsel %vm94, %v5017, 0
    %v5108 = vsel %vm94, %v5101, 0
    %5110 = vmatprep.subr.mxu0 0.0
    %5111 = vmatpush1.xpose.msra.mxu0 %v5108
    %5112 = vmatprep.subr.mxu0 0.0
    %5113 = vmatpush1.xpose.msra.mxu0 0.0
    %5114 = vmatprep.subr.mxu0 0.0
    %5115 = vmatpush1.xpose.msra.mxu0 0.0
    %5116 = vmatprep.subr.mxu0 0.0
    %5117 = vmatpush1.xpose.msra.mxu0 0.0
    %5118 = vmatprep.subr.mxu0 0.0
    %5119 = vmatpush1.xpose.msra.mxu0 0.0
    %5120 = vmatprep.subr.mxu0 0.0
    %5121 = vmatpush1.xpose.msra.mxu0 0.0
    %5122 = vmatprep.subr.mxu0 0.0
    %5123 = vmatpush1.xpose.msra.mxu0 0.0
    %5124 = vmatprep.subr.mxu0 0.0
    %5125 = vmatpush1.xpose.msra.mxu0 0.0
    %5126 = vmatprep.subr.mxu0 0.0
    %5127 = vmatpush1.xpose.msra.mxu0 0.0
    %5128 = vmatprep.subr.mxu0 0.0
    %5129 = vmatpush1.xpose.msra.mxu0 0.0
    %5130 = vmatprep.subr.mxu0 0.0
    %5131 = vmatpush1.xpose.msra.mxu0 0.0
    %5132 = vmatprep.subr.mxu0 0.0
    %5133 = vmatpush1.xpose.msra.mxu0 0.0
    %5134 = vmatprep.subr.mxu0 0.0
    %5135 = vmatpush1.xpose.msra.mxu0 0.0
    %5136 = vmatprep.subr.mxu0 0.0
    %5137 = vmatpush1.xpose.msra.mxu0 0.0
    %5138 = vmatprep.subr.mxu0 0.0
    %5139 = vmatpush1.xpose.msra.mxu0 0.0
    %5140 = vmatprep.subr.mxu0 0.0
    %5141 = vmatpush1.xpose.msra.mxu0 0.0
    %5142 = vmatprep.subr.mxu0 0.0
    %5143 = vmatpush1.xpose.msra.mxu0 0.0
    %5144 = vmatprep.subr.mxu0 0.0
    %5145 = vmatpush1.xpose.msra.mxu0 0.0
    %5146 = vmatprep.subr.mxu0 0.0
    %5147 = vmatpush1.xpose.msra.mxu0 0.0
    %5148 = vmatprep.subr.mxu0 0.0
    %5149 = vmatpush1.xpose.msra.mxu0 0.0
    %5150 = vmatprep.subr.mxu0 0.0
    %5151 = vmatpush1.xpose.msra.mxu0 0.0
    %5152 = vmatprep.subr.mxu0 0.0
    %5153 = vmatpush1.xpose.msra.mxu0 0.0
    %5154 = vmatprep.subr.mxu0 0.0
    %5155 = vmatpush1.xpose.msra.mxu0 0.0
    %5156 = vmatprep.subr.mxu0 0.0
    %5157 = vmatpush1.xpose.msra.mxu0 0.0
    %5158 = vmatprep.subr.mxu0 0.0
    %5159 = vmatpush1.xpose.msra.mxu0 0.0
    %5160 = vmatprep.subr.mxu0 0.0
    %5161 = vmatpush1.xpose.msra.mxu0 0.0
    %5162 = vmatprep.subr.mxu0 0.0
    %5163 = vmatpush1.xpose.msra.mxu0 0.0
    %5164 = vmatprep.subr.mxu0 0.0
    %5165 = vmatpush1.xpose.msra.mxu0 0.0
    %5166 = vmatprep.subr.mxu0 0.0
    %5167 = vmatpush1.xpose.msra.mxu0 0.0
    %5168 = vmatprep.subr.mxu0 0.0
    %5169 = vmatpush1.xpose.msra.mxu0 0.0
    %5170 = vmatprep.subr.mxu0 0.0
    %5171 = vmatpush1.xpose.msra.mxu0 0.0
    %5172 = vmatprep.subr.mxu0 0.0
    %5173 = vmatpush1.xpose.msra.mxu0 0.0
    %5174 = vmatprep.mubr.f32.mxu0 0.0
    %5175 = vmatmul.mubr.f32.gmra.mrb[0].mxu0 %v5105
    %v5176 = vpop.f32.mrb[0].mxu0
    %v5177 = vadd.f32 0.0, %v5176
    %v5178 = vpop.f32.mrb[0].mxu0
    %5179 = vdwg.mxu0
    %v5180 = vmul.f32 %v5177, 0.17677669
    %v5181 = vsel %vm4620, %v5180, -inf
    %5182 = vmax.xlane.f32.xlu0 %v5181
    %v5183 = vpop.xlane.xlu0 %5182
    %v5184 = vsub.f32 %v5180, %v5183
    %v5185 = vmul.f32 %v5184, 1.442695
    %v5186 = vpow.pop %v5185
    %v5187 = vsel %vm4620, %v5186, 0.0
    %5188 = vadd.xlane.f32.xlu0 %v5187
    %v5189 = vpop.xlane.xlu0 %5188
    %v5190 = vrcp.pop %v5189
    %v5191 = vmul.f32 %v5186, %v5190
    %5192 = vrot.lane.b32.xlu0 %v5101, 96
    %v5193 = vpop.permute.xlu0 %5192
    %v5195 = vsel %vm263, %v5191, 0
    %v5197 = vsel %vm4637, %v5193, 0
    %5199 = vmatprep.subr.mxu0 0.0
    %5200 = vmatpush1.msra.mxu0 %v5197
    %5201 = vmatprep.subr.mxu0 0.0
    %5202 = vmatpush1.msra.mxu0 0.0
    %5203 = vmatprep.subr.mxu0 0.0
    %5204 = vmatpush1.msra.mxu0 0.0
    %5205 = vmatprep.subr.mxu0 0.0
    %5206 = vmatpush1.msra.mxu0 0.0
    %5207 = vmatprep.subr.mxu0 0.0
    %5208 = vmatpush1.msra.mxu0 0.0
    %5209 = vmatprep.subr.mxu0 0.0
    %5210 = vmatpush1.msra.mxu0 0.0
    %5211 = vmatprep.subr.mxu0 0.0
    %5212 = vmatpush1.msra.mxu0 0.0
    %5213 = vmatprep.subr.mxu0 0.0
    %5214 = vmatpush1.msra.mxu0 0.0
    %5215 = vmatprep.subr.mxu0 0.0
    %5216 = vmatpush1.msra.mxu0 0.0
    %5217 = vmatprep.subr.mxu0 0.0
    %5218 = vmatpush1.msra.mxu0 0.0
    %5219 = vmatprep.subr.mxu0 0.0
    %5220 = vmatpush1.msra.mxu0 0.0
    %5221 = vmatprep.subr.mxu0 0.0
    %5222 = vmatpush1.msra.mxu0 0.0
    %5223 = vmatprep.subr.mxu0 0.0
    %5224 = vmatpush1.msra.mxu0 0.0
    %5225 = vmatprep.subr.mxu0 0.0
    %5226 = vmatpush1.msra.mxu0 0.0
    %5227 = vmatprep.subr.mxu0 0.0
    %5228 = vmatpush1.msra.mxu0 0.0
    %5229 = vmatprep.subr.mxu0 0.0
    %5230 = vmatpush1.msra.mxu0 0.0
    %5231 = vmatprep.subr.mxu0 0.0
    %5232 = vmatpush1.msra.mxu0 0.0
    %5233 = vmatprep.subr.mxu0 0.0
    %5234 = vmatpush1.msra.mxu0 0.0
    %5235 = vmatprep.subr.mxu0 0.0
    %5236 = vmatpush1.msra.mxu0 0.0
    %5237 = vmatprep.subr.mxu0 0.0
    %5238 = vmatpush1.msra.mxu0 0.0
    %5239 = vmatprep.subr.mxu0 0.0
    %5240 = vmatpush1.msra.mxu0 0.0
    %5241 = vmatprep.subr.mxu0 0.0
    %5242 = vmatpush1.msra.mxu0 0.0
    %5243 = vmatprep.subr.mxu0 0.0
    %5244 = vmatpush1.msra.mxu0 0.0
    %5245 = vmatprep.subr.mxu0 0.0
    %5246 = vmatpush1.msra.mxu0 0.0
    %5247 = vmatprep.subr.mxu0 0.0
    %5248 = vmatpush1.msra.mxu0 0.0
    %5249 = vmatprep.subr.mxu0 0.0
    %5250 = vmatpush1.msra.mxu0 0.0
    %5251 = vmatprep.subr.mxu0 0.0
    %5252 = vmatpush1.msra.mxu0 0.0
    %5253 = vmatprep.subr.mxu0 0.0
    %5254 = vmatpush1.msra.mxu0 0.0
    %5255 = vmatprep.subr.mxu0 0.0
    %5256 = vmatpush1.msra.mxu0 0.0
    %5257 = vmatprep.subr.mxu0 0.0
    %5258 = vmatpush1.msra.mxu0 0.0
    %5259 = vmatprep.subr.mxu0 0.0
    %5260 = vmatpush1.msra.mxu0 0.0
    %5261 = vmatprep.subr.mxu0 0.0
    %5262 = vmatpush1.msra.mxu0 0.0
    %5263 = vmatprep.mubr.f32.mxu0 0.0
    %5264 = vmatmul.mubr.f32.gmra.mrb[0].mxu0 %v5195
    %v5265 = vpop.f32.mrb[0].mxu0
    %v5266 = vadd.f32 0.0, %v5265
    %v5267 = vpop.f32.mrb[0].mxu0
    %5268 = vdwg.mxu0
    %s5269 = scalar_lea.vmem [#allocation4], 4
    %5270 = vst.msk [vmem:[%s5269] sm:$0xf] %vm4620, %v5191
    %v5271 = vmul.f32 %v5266, %v4374
    %v5272 = vsub.f32 %v5266, %v4374
    %5273 = vrot.lane.b32.xlu0 %v4374, 32
    %v5274 = vpop.permute.xlu0 %5273
    %5277 = vrot.lane.b32.xlu0 %v5271, 64
    %v5278 = vpop.permute.xlu0 %5277
    %5281 = vrot.lane.b32.xlu0 %v5272, 96
    %v5282 = vpop.permute.xlu0 %5281
    %v5284 = vsel %vm94, %v5266, %v5274
    %v5285 = vsel %vm4725, %v5284, %v5278
    %v5286 = vsel %vm4727, %v5285, %v5282
    %v5287 = vld [vmem:[%s20] sm:$0xff]
    %v5288 = vld [vmem:[%s20 + $0x8] sm:$0xff]
    %v5289 = vld [vmem:[%s20 + $0x10] sm:$0xff]
    %v5290 = vld [vmem:[%s20 + $0x18] sm:$0xff]
    %v5291 = vld [vmem:[%s20 + $0x20] sm:$0xff]
    %v5292 = vld [vmem:[%s20 + $0x28] sm:$0xff]
    %v5293 = vld [vmem:[%s20 + $0x30] sm:$0xff]
    %v5294 = vld [vmem:[%s20 + $0x38] sm:$0xff]
    %v5295 = vld [vmem:[%s20 + $0x40] sm:$0xff]
    %v5296 = vld [vmem:[%s20 + $0x48] sm:$0xff]
    %v5297 = vld [vmem:[%s20 + $0x50] sm:$0xff]
    %v5298 = vld [vmem:[%s20 + $0x58] sm:$0xff]
    %v5299 = vld [vmem:[%s20 + $0x60] sm:$0xff]
    %v5300 = vld [vmem:[%s20 + $0x68] sm:$0xff]
    %v5301 = vld [vmem:[%s20 + $0x70] sm:$0xff]
    %v5302 = vld [vmem:[%s20 + $0x78] sm:$0xff]
    %v5303 = vld [vmem:[%s21] sm:$0x1]
    %v5305 = vlaneseq
    %v5306 = vshrl.u32 %v5305, 7
    %v5307 = vsub.s32 0, %v5306
    %v5308 = vrot.slane %v5303, %v5307
    %5310 = vmatprep.subr.mxu0 0.0
    %5311 = vmatpush1.msra.mxu0 %v5287
    %5312 = vmatprep.subr.mxu0 0.0
    %5313 = vmatpush1.msra.mxu0 %v5288
    %5314 = vmatprep.subr.mxu0 0.0
    %5315 = vmatpush1.msra.mxu0 %v5289
    %5316 = vmatprep.subr.mxu0 0.0
    %5317 = vmatpush1.msra.mxu0 %v5290
    %5318 = vmatprep.subr.mxu0 0.0
    %5319 = vmatpush1.msra.mxu0 %v5291
    %5320 = vmatprep.subr.mxu0 0.0
    %5321 = vmatpush1.msra.mxu0 %v5292
    %5322 = vmatprep.subr.mxu0 0.0
    %5323 = vmatpush1.msra.mxu0 %v5293
    %5324 = vmatprep.subr.mxu0 0.0
    %5325 = vmatpush1.msra.mxu0 %v5294
    %5326 = vmatprep.subr.mxu0 0.0
    %5327 = vmatpush1.msra.mxu0 %v5295
    %5328 = vmatprep.subr.mxu0 0.0
    %5329 = vmatpush1.msra.mxu0 %v5296
    %5330 = vmatprep.subr.mxu0 0.0
    %5331 = vmatpush1.msra.mxu0 %v5297
    %5332 = vmatprep.subr.mxu0 0.0
    %5333 = vmatpush1.msra.mxu0 %v5298
    %5334 = vmatprep.subr.mxu0 0.0
    %5335 = vmatpush1.msra.mxu0 %v5299
    %5336 = vmatprep.subr.mxu0 0.0
    %5337 = vmatpush1.msra.mxu0 %v5300
    %5338 = vmatprep.subr.mxu0 0.0
    %5339 = vmatpush1.msra.mxu0 %v5301
    %5340 = vmatprep.subr.mxu0 0.0
    %5341 = vmatpush1.msra.mxu0 %v5302
    %5342 = vmatprep.subr.mxu0 0.0
    %5343 = vmatpush1.msra.mxu0 0.0
    %5344 = vmatprep.subr.mxu0 0.0
    %5345 = vmatpush1.msra.mxu0 0.0
    %5346 = vmatprep.subr.mxu0 0.0
    %5347 = vmatpush1.msra.mxu0 0.0
    %5348 = vmatprep.subr.mxu0 0.0
    %5349 = vmatpush1.msra.mxu0 0.0
    %5350 = vmatprep.subr.mxu0 0.0
    %5351 = vmatpush1.msra.mxu0 0.0
    %5352 = vmatprep.subr.mxu0 0.0
    %5353 = vmatpush1.msra.mxu0 0.0
    %5354 = vmatprep.subr.mxu0 0.0
    %5355 = vmatpush1.msra.mxu0 0.0
    %5356 = vmatprep.subr.mxu0 0.0
    %5357 = vmatpush1.msra.mxu0 0.0
    %5358 = vmatprep.subr.mxu0 0.0
    %5359 = vmatpush1.msra.mxu0 0.0
    %5360 = vmatprep.subr.mxu0 0.0
    %5361 = vmatpush1.msra.mxu0 0.0
    %5362 = vmatprep.subr.mxu0 0.0
    %5363 = vmatpush1.msra.mxu0 0.0
    %5364 = vmatprep.subr.mxu0 0.0
    %5365 = vmatpush1.msra.mxu0 0.0
    %5366 = vmatprep.subr.mxu0 0.0
    %5367 = vmatpush1.msra.mxu0 0.0
    %5368 = vmatprep.subr.mxu0 0.0
    %5369 = vmatpush1.msra.mxu0 0.0
    %5370 = vmatprep.subr.mxu0 0.0
    %5371 = vmatpush1.msra.mxu0 0.0
    %5372 = vmatprep.subr.mxu0 0.0
    %5373 = vmatpush1.msra.mxu0 0.0
    %5374 = vmatprep.mubr.f32.mxu0 0.0
    %5375 = vmatmul.mubr.f32.gmra.mrb[0].mxu0 %v5286
    %v5376 = vpop.f32.mrb[0].mxu0
    %v5377 = vadd.f32 %v5308, %v5376
    %v5378 = vpop.f32.mrb[0].mxu0
    %5379 = vdwg.mxu0
    %v5380 = vsub.f32 0.0, %v5377
    %v5381 = vmul.f32 %v5380, 1.442695
    %v5382 = vpow.pop %v5381
    %v5383 = vadd.f32 %v5382, 1.0
    %v5384 = vrcp.pop %v5383
    %v5385 = vtanh.pop %v5377
    %5387 = vrot.lane.b32.xlu0 %v5385, 96
    %v5388 = vpop.permute.xlu0 %5387
    %v5390 = vmul.f32 %v5384, %v5388
    %v5391 = vsub.f32 1.0, %v5384
    %v5392 = vmul.f32 %v5391, %v5266
    %v5393 = vadd.f32 %v5390, %v5392
    %v5394 = vsel %vm4836, %v5393, 0.0
    %v5395 = vrot.slane %v5394, 4
    %v5396 = vadd.f32 %v5394, %v5395
    %v5397 = vrot.slane %v5396, 2
    %v5398 = vadd.f32 %v5396, %v5397
    %v5399 = vrot.slane %v5398, 1
    %v5400 = vadd.f32 %v5398, %v5399
    %v5401 = vld [vmem:[%s22] sm:$0xff]
    %v5402 = vld [vmem:[%s22 + $0x8] sm:$0xff]
    %v5403 = vld [vmem:[%s22 + $0x10] sm:$0xff]
    %v5404 = vld [vmem:[%s22 + $0x18] sm:$0xff]
    %v5405 = vld [vmem:[%s23] sm:$0x1]
    %v5407 = vsel %vm94, %v5400, 0
    %5409 = vmatprep.subr.mxu0 0.0
    %5410 = vmatpush1.msra.mxu0 %v5401
    %5411 = vmatprep.subr.mxu0 0.0
    %5412 = vmatpush1.msra.mxu0 %v5402
    %5413 = vmatprep.subr.mxu0 0.0
    %5414 = vmatpush1.msra.mxu0 %v5403
    %5415 = vmatprep.subr.mxu0 0.0
    %5416 = vmatpush1.msra.mxu0 %v5404
    %5417 = vmatprep.subr.mxu0 0.0
    %5418 = vmatpush1.msra.mxu0 0.0
    %5419 = vmatprep.subr.mxu0 0.0
    %5420 = vmatpush1.msra.mxu0 0.0
    %5421 = vmatprep.subr.mxu0 0.0
    %5422 = vmatpush1.msra.mxu0 0.0
    %5423 = vmatprep.subr.mxu0 0.0
    %5424 = vmatpush1.msra.mxu0 0.0
    %5425 = vmatprep.subr.mxu0 0.0
    %5426 = vmatpush1.msra.mxu0 0.0
    %5427 = vmatprep.subr.mxu0 0.0
    %5428 = vmatpush1.msra.mxu0 0.0
    %5429 = vmatprep.subr.mxu0 0.0
    %5430 = vmatpush1.msra.mxu0 0.0
    %5431 = vmatprep.subr.mxu0 0.0
    %5432 = vmatpush1.msra.mxu0 0.0
    %5433 = vmatprep.subr.mxu0 0.0
    %5434 = vmatpush1.msra.mxu0 0.0
    %5435 = vmatprep.subr.mxu0 0.0
    %5436 = vmatpush1.msra.mxu0 0.0
    %5437 = vmatprep.subr.mxu0 0.0
    %5438 = vmatpush1.msra.mxu0 0.0
    %5439 = vmatprep.subr.mxu0 0.0
    %5440 = vmatpush1.msra.mxu0 0.0
    %5441 = vmatprep.subr.mxu0 0.0
    %5442 = vmatpush1.msra.mxu0 0.0
    %5443 = vmatprep.subr.mxu0 0.0
    %5444 = vmatpush1.msra.mxu0 0.0
    %5445 = vmatprep.subr.mxu0 0.0
    %5446 = vmatpush1.msra.mxu0 0.0
    %5447 = vmatprep.subr.mxu0 0.0
    %5448 = vmatpush1.msra.mxu0 0.0
    %5449 = vmatprep.subr.mxu0 0.0
    %5450 = vmatpush1.msra.mxu0 0.0
    %5451 = vmatprep.subr.mxu0 0.0
    %5452 = vmatpush1.msra.mxu0 0.0
    %5453 = vmatprep.subr.mxu0 0.0
    %5454 = vmatpush1.msra.mxu0 0.0
    %5455 = vmatprep.subr.mxu0 0.0
    %5456 = vmatpush1.msra.mxu0 0.0
    %5457 = vmatprep.subr.mxu0 0.0
    %5458 = vmatpush1.msra.mxu0 0.0
    %5459 = vmatprep.subr.mxu0 0.0
    %5460 = vmatpush1.msra.mxu0 0.0
    %5461 = vmatprep.subr.mxu0 0.0
    %5462 = vmatpush1.msra.mxu0 0.0
    %5463 = vmatprep.subr.mxu0 0.0
    %5464 = vmatpush1.msra.mxu0 0.0
    %5465 = vmatprep.subr.mxu0 0.0
    %5466 = vmatpush1.msra.mxu0 0.0
    %5467 = vmatprep.subr.mxu0 0.0
    %5468 = vmatpush1.msra.mxu0 0.0
    %5469 = vmatprep.subr.mxu0 0.0
    %5470 = vmatpush1.msra.mxu0 0.0
    %5471 = vmatprep.subr.mxu0 0.0
    %5472 = vmatpush1.msra.mxu0 0.0
    %5473 = vmatprep.mubr.f32.mxu0 0.0
    %5474 = vmatmul.mubr.f32.gmra.mrb[0].mxu0 %v5407
    %v5475 = vpop.f32.mrb[0].mxu0
    %v5476 = vadd.f32 %v5405, %v5475
    %v5477 = vpop.f32.mrb[0].mxu0
    %5478 = vdwg.mxu0
    %v5479 = vsel %vm4922, %v5476, -inf
    %5480 = vmax.xlane.f32.xlu0 %v5479
    %v5481 = vpop.xlane.xlu0 %5480
    %v5482 = vsub.f32 %v5476, %v5481
    %v5483 = vmul.f32 %v5482, 1.442695
    %v5484 = vpow.pop %v5483
    %v5485 = vsel %vm4922, %v5484, 0.0
    %5486 = vadd.xlane.f32.xlu0 %v5485
    %v5487 = vpop.xlane.xlu0 %5486
    %v5488 = vlog2.pop %v5487
    %v5489 = vmul.f32 %v5488, 0.6931472
    %v5490 = vsub.f32 %v5482, %v5489
    %s5491 = scalar_lea.vmem [#allocation2], 1
    %5492 = vst.msk [vmem:[%s5491] sm:$0x1] %vm4922, %v5490
    // Predicated region
    $region98: #{escaps_hgat_forward.1} parent=1 // pred_check
      _
    $region99: #{escaps_hgat_forward.1} parent=1 // pred_check_branch
      %5494 = sbr.rel (0) target = $region101
    $region100: #{escaps_hgat_forward.1} parent=1 // pred_region
      %s5496 = ssub.s32 32, 32
      %5497 = vsyncadd [#allocation3], %s5496
      %s5498 = sshll.u32 [#allocation2], 4
      %s5499 = int_to_ptr.vmem [resolvable:$true] %s5498
      %5504 = dma.vmem_to_hbm [thread:$0]  %s5499, 32, %s24, [#allocation3], 16, 16, 1
    $region101: #{escaps_hgat_forward.1} parent=1 // pred_fallthru
      _
    // Predicated region
    $region102: #{escaps_hgat_forward.1} parent=1 // pred_check
      _
    $region103: #{escaps_hgat_forward.1} parent=1 // pred_check_branch
      %5506 = sbr.rel (0) target = $region105
    $region104: #{escaps_hgat_forward.1} parent=1 // pred_region
      %s5508 = ssub.s32 128, 128
      %5509 = vsyncadd [#allocation5], %s5508
      %s5510 = sshll.u32 [#allocation4], 4
      %s5511 = int_to_ptr.vmem [resolvable:$true] %s5510
      %5516 = dma.vmem_to_hbm [thread:$0]  %s5511, 128, %s25, [#allocation5], 64, 64, 4
    $region105: #{escaps_hgat_forward.1} parent=1 // pred_fallthru
      _
    // Predicated region
    $region106: #{escaps_hgat_forward.1} parent=1 // pred_check
      _
    $region107: #{escaps_hgat_forward.1} parent=1 // pred_check_branch
      %5518 = sbr.rel (0) target = $region109
    $region108: #{escaps_hgat_forward.1} parent=1 // pred_region
      %5519 = dma.done [#allocation3], 32
    $region109: #{escaps_hgat_forward.1} parent=1 // pred_fallthru
      _
    // Predicated region
    $region110: #{escaps_hgat_forward.1} parent=1 // pred_check
      _
    $region111: #{escaps_hgat_forward.1} parent=1 // pred_check_branch
      %5521 = sbr.rel (0) target = $region113
    $region112: #{escaps_hgat_forward.1} parent=1 // pred_region
      %5522 = dma.done [#allocation5], 128
    $region113: #{escaps_hgat_forward.1} parent=1 // pred_fallthru
      _
    %5523 = vsyncpa [#allocation3], 1
    %5524 = vsyncpa [#allocation5], 1

</llo_original>
